<compile_context>
chip_gen: v5e
topology: v5e:2x2
jax: 0.10.0
libtpu: 0.0.40
codegen_flags: <defaults>
</compile_context>

<pallas_src>
import jax
import jax.numpy as jnp
from jax.experimental import pallas as pl
from jax.experimental.pallas import tpu as pltpu

HID = 32     # args.hidden_sizes (LSTM hidden size)
FEAT = 256   # LSTM_Encoder input feature dim (hard-coded 256 in the module)


def _sigmoid(x):
    # numerically stable sigmoid on the EUP via tanh (no exp overflow).
    return 0.5 * (jnp.tanh(0.5 * x) + 1.0)


def _full_block(a):
    nd = a.ndim
    return pl.BlockSpec(a.shape, lambda i, _nd=nd: (0,) * _nd)


def _conv_out(n, k, s, p):
    return (n + 2 * p - k) // s + 1


# ---------------------------------------------------------------------------
# Kernel 1: video frontend + LSTM encoder (single pallas_call, unrolled time)
# ---------------------------------------------------------------------------

def lstm_encoder(params, video2d, lengths, B, T):
    """video2d: (B*T, Hf*Wf) bf16, rows in (b, t) order.
    Returns (T, B, HID) f32, zero-masked for t >= lengths[b]
    (pack_padded_sequence / pad_packed_sequence semantics)."""
    Fin = video2d.shape[1]
    F = params['w_front'].shape[1]
    H = HID
    G = 4 * H

    def kernel(len_ref, x_ref, wf_ref, bf_ref, wih_ref, bg_ref, whh_ref,
               out_ref, gx_ref):
        # frontend projection + LSTM input projection (bf16 MXU, f32 acc).
        feat = jnp.dot(x_ref[...], wf_ref[...],
                       preferred_element_type=jnp.float32) + bf_ref[...]
        gx_ref[...] = jnp.dot(feat.astype(jnp.bfloat16), wih_ref[...],
                              preferred_element_type=jnp.float32) + bg_ref[...]
        whh = whh_ref[...]
        h = jnp.zeros((B, H), jnp.float32)
        c = jnp.zeros((B, H), jnp.float32)
        for t in range(T):                                   # static unroll
            # gather the B gate rows for time t (rows stored in (b, t) order).
            g_x = jnp.concatenate(
                [gx_ref[pl.ds(b * T + t, 1), :] for b in range(B)], axis=0)
            gates = g_x + jnp.dot(h.astype(jnp.bfloat16), whh,
                                  preferred_element_type=jnp.float32)
            i_g = _sigmoid(gates[:, 0 * H:1 * H])
            f_g = _sigmoid(gates[:, 1 * H:2 * H])
            g_g = jnp.tanh(gates[:, 2 * H:3 * H])
            o_g = _sigmoid(gates[:, 3 * H:4 * H])
            c = f_g * c + i_g * g_g
            h = o_g * jnp.tanh(c)
            # pack/pad_packed semantics: emitted output is zero for t >= len[b]
            # (h, c keep updating but the final state is never consumed).
            out_ref[t] = jnp.concatenate(
                [h[b:b + 1] * (len_ref[b] > t).astype(jnp.float32)
                 for b in range(B)], axis=0)

    grid_spec = pltpu.PrefetchScalarGridSpec(
        num_scalar_prefetch=1,                      # lengths -> SMEM scalars
        grid=(1,),
        in_specs=[
            pl.BlockSpec((B * T, Fin), lambda i, L: (0, 0)),
            pl.BlockSpec((Fin, F), lambda i, L: (0, 0)),
            pl.BlockSpec((1, F), lambda i, L: (0, 0)),
            pl.BlockSpec((F, G), lambda i, L: (0, 0)),
            pl.BlockSpec((1, G), lambda i, L: (0, 0)),
            pl.BlockSpec((H, G), lambda i, L: (0, 0)),
        ],
        out_specs=pl.BlockSpec((T, B, H), lambda i, L: (0, 0, 0)),
        scratch_shapes=[pltpu.VMEM((B * T, G), jnp.float32)],
    )
    return pl.pallas_call(
        kernel,
        out_shape=jax.ShapeDtypeStruct((T, B, H), jnp.float32),
        grid_spec=grid_spec,
        compiler_params=pltpu.CompilerParams(
            dimension_semantics=("arbitrary",)),
    )(lengths, video2d, params['w_front'], params['b_front'],
      params['w_ih'], params['b_gates'], params['w_hh'])


# ---------------------------------------------------------------------------
# Generic GEMM + bias kernel (used for conv1 / conv2 im2col GEMMs)
# ---------------------------------------------------------------------------

def _gemm_bias_kernel(x_ref, w_ref, b_ref, o_ref):
    o_ref[...] = (jnp.dot(x_ref[...], w_ref[...],
                          preferred_element_type=jnp.float32)
                  + b_ref[...]).astype(o_ref.dtype)


def gemm_bias(x, w, b, out_dtype=jnp.float32, m_blocks=1):
    """(M,K) @ (K,N) + b.  Optional parallel M-split (v7x second TensorCore)."""
    M, K = x.shape
    _, N = w.shape
    if M % m_blocks:
        m_blocks = 1
    bm = M // m_blocks
    b2 = b if b.ndim == 2 else b.reshape(1, N)
    return pl.pallas_call(
        _gemm_bias_kernel,
        out_shape=jax.ShapeDtypeStruct((M, N), out_dtype),
        grid=(m_blocks,),
        in_specs=[pl.BlockSpec((bm, K), lambda i: (i, 0)),
                  pl.BlockSpec((K, N), lambda i: (0, 0)),
                  pl.BlockSpec((1, N), lambda i: (0, 0))],
        out_specs=pl.BlockSpec((bm, N), lambda i: (i, 0)),
        compiler_params=pltpu.CompilerParams(
            dimension_semantics=("parallel",)),
    )(x, w, b2)


# ---------------------------------------------------------------------------
# Kernel 3: conv3 GEMM + fc1 + fc2 + fc3 + final MaxPool2d((S,1)), fully fused
# ---------------------------------------------------------------------------

def fc_head(params, pmean, B, S):
    """pmean: (B*S, 25*128) bf16 = height-averaged conv3 im2col rows.
    Returns (B, 1); all intermediates stay in VMEM."""

    def kernel(pm_ref, w3_ref, b3_ref, wf1_ref, bf1_ref, wf2_ref, bf2_ref,
               wf3_ref, bf3_ref, o_ref):
        x = jnp.dot(pm_ref[...], w3_ref[...],
                    preferred_element_type=jnp.float32) + b3_ref[...]
        # nn.Dropout(0.5) layers are identity at inference time.
        x = jnp.dot(x.astype(jnp.bfloat16), wf1_ref[...],
                    preferred_element_type=jnp.float32) + bf1_ref[...]
        x = jnp.dot(x.astype(jnp.bfloat16), wf2_ref[...],
                    preferred_element_type=jnp.float32) + bf2_ref[...]
        # fc3 (256 -> 1) as multiply + lane reduction (avoids an N=1 matmul).
        s = jnp.sum(x * wf3_ref[...], axis=1, keepdims=True) + bf3_ref[...]
        # final MaxPool2d((S, 1)) over the S sequence positions of each batch.
        outs = []
        for b in range(B):
            m = s[b * S:b * S + 1, :]
            for k in range(1, S):
                m = jnp.maximum(m, s[b * S + k:b * S + k + 1, :])
            outs.append(m)
        o_ref[...] = jnp.concatenate(outs, axis=0) if B > 1 else outs[0]

    args = (pmean, params['w3'], params['b3'], params['wf1'], params['bf1'],
            params['wf2'], params['bf2'], params['wf3'], params['bf3'])
    return pl.pallas_call(
        kernel,
        out_shape=jax.ShapeDtypeStruct((B, 1), jnp.float32),
        grid=(1,),
        in_specs=[_full_block(a) for a in args],
        out_specs=pl.BlockSpec((B, 1), lambda i: (0, 0)),
    )(*args)


# --------------------- conv = im2col (small XLA glue) + Pallas GEMM ---------

def _im2col(xpad, kh, kw, sh, sw, Ho, Wo):
    """xpad: (B, Hp, Wp, C) padded NHWC -> (B, Ho, Wo, kh*kw*C) patches.
    Patch channel order matches w.reshape(kh*kw*C, Cout)."""
    cols = []
    for i in range(kh):
        for j in range(kw):
            cols.append(xpad[:, i:i + sh * (Ho - 1) + 1:sh,
                             j:j + sw * (Wo - 1) + 1:sw, :])
    patches = jnp.stack(cols, axis=3)            # (B, Ho, Wo, kh*kw, C)
    Bq, _, _, C = xpad.shape
    return patches.reshape(Bq, Ho, Wo, kh * kw * C)


# ------------------------------- parameters --------------------------------

def init_params(key):
    ks = jax.random.split(key, 11)

    def dense(k, fan_in, shape):
        return jax.random.normal(k, shape, jnp.float32) / jnp.sqrt(float(fan_in))

    p = {}
    # TODO(synk): VideoFrontend is undefined in the reference; stand-in is a
    #             per-frame linear projection flatten(H*W) -> 256.
    p['w_front'] = dense(ks[0], 16 * 16, (16 * 16, FEAT))
    p['b_front'] = jnp.zeros((FEAT,), jnp.float32)
    # LSTM (single layer, unidirectional), stored transposed: (in, 4H), (H, 4H)
    p['w_ih'] = dense(ks[1], FEAT, (FEAT, 4 * HID))
    p['w_hh'] = dense(ks[2], HID, (HID, 4 * HID))
    p['b_ih'] = dense(ks[3], HID, (4 * HID,))
    p['b_hh'] = dense(ks[4], HID, (4 * HID,))
    # convs: (kh, kw, Cin, Cout)
    p['w1'] = dense(ks[5], 25 * 1, (5, 5, 1, 32));      p['b1'] = jnp.zeros((32,), jnp.float32)
    p['w2'] = dense(ks[6], 25 * 32, (5, 5, 32, 128));   p['b2'] = jnp.zeros((128,), jnp.float32)
    p['w3'] = dense(ks[7], 25 * 128, (5, 5, 128, 256)); p['b3'] = jnp.zeros((256,), jnp.float32)
    # fully-connected head (stored as (in, out))
    p['wf1'] = dense(ks[8], 256, (256, 512));  p['bf1'] = jnp.zeros((512,), jnp.float32)
    p['wf2'] = dense(ks[9], 512, (512, 256));  p['bf2'] = jnp.zeros((256,), jnp.float32)
    p['wf3'] = dense(ks[10], 256, (256, 1));   p['bf3'] = jnp.zeros((1,), jnp.float32)
    return p


def prepare_params(p):
    """One-time (outside jit) weight preprocessing: flatten conv kernels for the
    im2col GEMMs, fold the two LSTM biases, reshape biases to (1, N), and cast
    all MXU operands to bf16 (accumulation stays f32 inside the kernels)."""
    f32, bf16 = jnp.float32, jnp.bfloat16
    q = {}
    q['w_front'] = p['w_front'].astype(bf16)
    q['b_front'] = p['b_front'].reshape(1, -1).astype(f32)
    q['w_ih'] = p['w_ih'].astype(bf16)
    q['b_gates'] = (p['b_ih'] + p['b_hh']).reshape(1, -1).astype(f32)
    q['w_hh'] = p['w_hh'].astype(bf16)
    q['w1'] = p['w1'].reshape(-1, p['w1'].shape[-1]).astype(bf16)
    q['b1'] = p['b1'].reshape(1, -1).astype(f32)
    q['w2'] = p['w2'].reshape(-1, p['w2'].shape[-1]).astype(bf16)
    q['b2'] = p['b2'].reshape(1, -1).astype(f32)
    q['w3'] = p['w3'].reshape(-1, p['w3'].shape[-1]).astype(bf16)
    q['b3'] = p['b3'].reshape(1, -1).astype(f32)
    q['wf1'] = p['wf1'].astype(bf16)
    q['bf1'] = p['bf1'].reshape(1, -1).astype(f32)
    q['wf2'] = p['wf2'].astype(bf16)
    q['bf2'] = p['bf2'].reshape(1, -1).astype(f32)
    q['wf3'] = p['wf3'].reshape(1, -1).astype(f32)    # row vector for fc3
    q['bf3'] = p['bf3'].reshape(1, 1).astype(f32)
    return q


# ------------------------------- forward pass ------------------------------

def kws_net_forward(params, video, current_frame):
    B, T, Hf, Wf = video.shape
    H = HID

    # ---- VideoFrontend + LSTM encoder: one Pallas call ---------------------
    # The reference's video.permute(1,0,2,3) / lip.permute(1,0,2) round trip
    # nets out to the LSTM consuming time-major frames; the kernel indexes the
    # (b, t)-ordered rows directly, so no transposes are emitted here.
    video2d = video.reshape(B * T, Hf * Wf).astype(jnp.bfloat16)
    rnn_out = lstm_encoder(params, video2d, current_frame.astype(jnp.int32), B, T)

    # encoder_output.permute(1,2,0).unsqueeze(1): NCHW (B,1,H,T) == NHWC (B,H,T,1)
    img = jnp.transpose(rnn_out, (1, 2, 0))[..., None]

    # conv1 (1->32, 5x5, s1, p2): tiny XLA im2col + Pallas GEMM (bf16 MXU)
    H1 = _conv_out(H, 5, 1, 2)
    W1 = _conv_out(T, 5, 1, 2)
    pA = _im2col(jnp.pad(img, ((0, 0), (2, 2), (2, 2), (0, 0))), 5, 5, 1, 1, H1, W1)
    c1 = gemm_bias(pA.reshape(B * H1 * W1, -1).astype(jnp.bfloat16),
                   params['w1'], params['b1'], out_dtype=jnp.bfloat16)
    c1 = c1.reshape(B, H1, W1, 32)

    # conv2 (32->128, 5x5, s2, p2); GEMM split over M ("parallel") for v7x
    H2 = _conv_out(H1, 5, 2, 2)
    W2 = _conv_out(W1, 5, 2, 2)
    pB = _im2col(jnp.pad(c1, ((0, 0), (2, 2), (2, 2), (0, 0))), 5, 5, 2, 2, H2, W2)
    c2 = gemm_bias(pB.reshape(B * H2 * W2, -1).astype(jnp.bfloat16),
                   params['w2'], params['b2'], out_dtype=jnp.bfloat16, m_blocks=2)
    c2 = c2.reshape(B, H2, W2, 128)

    # max_pool1: kernel 2, stride (1, 2)
    Hp = H2 - 1
    Wp = (W2 - 2) // 2 + 1
    ph = jnp.maximum(c2[:, :Hp], c2[:, 1:Hp + 1])
    pool = jnp.maximum(ph[:, :, 0:2 * Wp:2, :], ph[:, :, 1:2 * Wp:2, :])

    # conv3 (128->256, 5x5, s(1,2), p2) followed by .mean(-2): the mean over the
    # output height commutes with the (purely linear) conv3 + constant bias, so
    # average the im2col rows before the GEMM (exact, 15x fewer MXU rows).
    H3 = _conv_out(Hp, 5, 1, 2)
    W3 = _conv_out(Wp, 5, 2, 2)
    pC = _im2col(jnp.pad(pool, ((0, 0), (2, 2), (2, 2), (0, 0))), 5, 5, 1, 2, H3, W3)
    pmean = pC.astype(jnp.float32).mean(axis=1).reshape(B * W3, -1)

    # conv3 GEMM + fc1 + fc2 + fc3 (dropout = identity) + MaxPool2d((W3, 1)).
    return fc_head(params, pmean.astype(jnp.bfloat16), B, W3)


# ----------------------------------- main -----------------------------------

if __name__ == "__main__":
    key = jax.random.PRNGKey(0)
    k_param, k_data = jax.random.split(key)
    params = prepare_params(init_params(k_param))

    B, T, Hf, Wf = 2, 16, 16, 16
    video = jax.random.normal(k_data, (B, T, Hf, Wf), jnp.float32)
    # lengths must be descending (pack_padded_sequence enforce_sorted=True)
    current_frame = jnp.array([16, 12], dtype=jnp.int32)

    fwd = jax.jit(kws_net_forward)
    out = jax.block_until_ready(fwd(params, video, current_frame))
    assert out.shape == (B, 1), out.shape
    assert bool(jnp.all(jnp.isfinite(out)))
    print("KERNEL_OK")
</pallas_src>

<mosaic_0001>
module attributes {stable_mosaic.version = 11 : i64} {
  func.func @kernel(%arg0: i32, %arg1: memref<2xi32, #tpu.memory_space<smem>>, %arg2: memref<32x256xbf16, #tpu.memory_space<vmem>>, %arg3: memref<256x256xbf16, #tpu.memory_space<vmem>>, %arg4: memref<1x256xf32, #tpu.memory_space<vmem>>, %arg5: memref<256x128xbf16, #tpu.memory_space<vmem>>, %arg6: memref<1x128xf32, #tpu.memory_space<vmem>>, %arg7: memref<32x128xbf16, #tpu.memory_space<vmem>>, %arg8: memref<16x2x32xf32, #tpu.memory_space<vmem>>, %arg9: memref<32x128xf32, #tpu.memory_space<vmem>>) attributes {dimension_semantics = [#tpu.dimension_semantics<arbitrary>], iteration_bounds = array<i64: 1>, scalar_prefetch = 1 : i64, scratch_operands = 1 : i64, tpu.core_type = #tpu.core_type<tc>, window_params = [{pipeline_mode = #tpu.pipeline_mode<synchronous>, transform_indices = @transform_0, window_bounds = array<i64: 32, 256>}, {pipeline_mode = #tpu.pipeline_mode<synchronous>, transform_indices = @transform_1, window_bounds = array<i64: 256, 256>}, {pipeline_mode = #tpu.pipeline_mode<synchronous>, transform_indices = @transform_2, window_bounds = array<i64: 1, 256>}, {pipeline_mode = #tpu.pipeline_mode<synchronous>, transform_indices = @transform_3, window_bounds = array<i64: 256, 128>}, {pipeline_mode = #tpu.pipeline_mode<synchronous>, transform_indices = @transform_4, window_bounds = array<i64: 1, 128>}, {pipeline_mode = #tpu.pipeline_mode<synchronous>, transform_indices = @transform_5, window_bounds = array<i64: 32, 128>}, {pipeline_mode = #tpu.pipeline_mode<synchronous>, transform_indices = @transform_6, window_bounds = array<i64: 16, 2, 32>}]} {
    %c0 = arith.constant 0 : index
    %c0_0 = arith.constant 0 : index
    %0 = vector.load %arg2[%c0, %c0_0] : memref<32x256xbf16, #tpu.memory_space<vmem>>, vector<32x256xbf16>
    %c0_1 = arith.constant 0 : index
    %c0_2 = arith.constant 0 : index
    %1 = vector.load %arg3[%c0_1, %c0_2] : memref<256x256xbf16, #tpu.memory_space<vmem>>, vector<256x256xbf16>
    %cst = arith.constant dense<0.000000e+00> : vector<32x256xf32>
    %2 = tpu.matmul %0, %1, %cst {dimension_numbers = #tpu.dot_dimension_numbers<[1], [0], [0], [1], [0, 0, 1, 1], [], []>} : vector<32x256xbf16>, vector<256x256xbf16>, vector<32x256xf32> -> vector<32x256xf32>
    %c0_3 = arith.constant 0 : index
    %c0_4 = arith.constant 0 : index
    %3 = vector.load %arg4[%c0_3, %c0_4] : memref<1x256xf32, #tpu.memory_space<vmem>>, vector<1x256xf32>
    %4 = vector.broadcast %3 : vector<1x256xf32> to vector<32x256xf32>
    %5 = arith.addf %2, %4 : vector<32x256xf32>
    %6 = arith.truncf %5 : vector<32x256xf32> to vector<32x256xbf16>
    %c0_5 = arith.constant 0 : index
    %c0_6 = arith.constant 0 : index
    %7 = vector.load %arg5[%c0_5, %c0_6] : memref<256x128xbf16, #tpu.memory_space<vmem>>, vector<256x128xbf16>
    %cst_7 = arith.constant dense<0.000000e+00> : vector<32x128xf32>
    %8 = tpu.matmul %6, %7, %cst_7 {dimension_numbers = #tpu.dot_dimension_numbers<[1], [0], [0], [1], [0, 0, 1, 1], [], []>} : vector<32x256xbf16>, vector<256x128xbf16>, vector<32x128xf32> -> vector<32x128xf32>
    %c0_8 = arith.constant 0 : index
    %c0_9 = arith.constant 0 : index
    %9 = vector.load %arg6[%c0_8, %c0_9] : memref<1x128xf32, #tpu.memory_space<vmem>>, vector<1x128xf32>
    %10 = vector.broadcast %9 : vector<1x128xf32> to vector<32x128xf32>
    %11 = arith.addf %8, %10 : vector<32x128xf32>
    %c0_10 = arith.constant 0 : index
    %c0_11 = arith.constant 0 : index
    %12 = vector.load %arg9[%c0_10, %c0_11] : memref<32x128xf32, #tpu.memory_space<vmem>>, vector<32x128xf32>
    tpu.vector_store %arg9[%c0_10, %c0_11], %11 {strides = array<i32>} : memref<32x128xf32, #tpu.memory_space<vmem>>, vector<32x128xf32>,
    %c0_12 = arith.constant 0 : index
    %c0_13 = arith.constant 0 : index
    %13 = vector.load %arg7[%c0_12, %c0_13] : memref<32x128xbf16, #tpu.memory_space<vmem>>, vector<32x128xbf16>
    %cst_14 = arith.constant 0.000000e+00 : f32
    %14 = vector.broadcast %cst_14 : f32 to vector<2x32xf32>
    %cst_15 = arith.constant 0.000000e+00 : f32
    %15 = vector.broadcast %cst_15 : f32 to vector<2x32xf32>
    %c0_16 = arith.constant 0 : index
    %c0_17 = arith.constant 0 : index
    %16 = vector.load %arg9[%c0_16, %c0_17] : memref<32x128xf32, #tpu.memory_space<vmem>>, vector<1x128xf32>
    %c16 = arith.constant 16 : index
    %c0_18 = arith.constant 0 : index
    %17 = vector.load %arg9[%c16, %c0_18] : memref<32x128xf32, #tpu.memory_space<vmem>>, vector<1x128xf32>
    %18 = tpu.concatenate %16, %17 in 0 : vector<1x128xf32>, vector<1x128xf32> -> vector<2x128xf32>
    %19 = arith.truncf %14 : vector<2x32xf32> to vector<2x32xbf16>
    %cst_19 = arith.constant dense<0.000000e+00> : vector<2x128xf32>
    %20 = tpu.matmul %19, %13, %cst_19 {dimension_numbers = #tpu.dot_dimension_numbers<[1], [0], [0], [1], [0, 0, 1, 1], [], []>} : vector<2x32xbf16>, vector<32x128xbf16>, vector<2x128xf32> -> vector<2x128xf32>
    %21 = arith.addf %18, %20 : vector<2x128xf32>
    %22 = vector.extract_strided_slice %21 {offsets = [0, 0], sizes = [2, 32], strides = [1, 1]} : vector<2x128xf32> to vector<2x32xf32>
    %cst_20 = arith.constant 5.000000e-01 : f32
    %23 = vector.broadcast %cst_20 : f32 to vector<2x32xf32>
    %24 = arith.mulf %23, %22 : vector<2x32xf32>
    %25 = math.tanh %24 : vector<2x32xf32>
    %cst_21 = arith.constant 1.000000e+00 : f32
    %26 = vector.broadcast %cst_21 : f32 to vector<2x32xf32>
    %27 = arith.addf %25, %26 : vector<2x32xf32>
    %cst_22 = arith.constant 5.000000e-01 : f32
    %28 = vector.broadcast %cst_22 : f32 to vector<2x32xf32>
    %29 = arith.mulf %28, %27 : vector<2x32xf32>
    %30 = vector.extract_strided_slice %21 {offsets = [0, 32], sizes = [2, 32], strides = [1, 1]} : vector<2x128xf32> to vector<2x32xf32>
    %cst_23 = arith.constant 5.000000e-01 : f32
    %31 = vector.broadcast %cst_23 : f32 to vector<2x32xf32>
    %32 = arith.mulf %31, %30 : vector<2x32xf32>
    %33 = math.tanh %32 : vector<2x32xf32>
    %cst_24 = arith.constant 1.000000e+00 : f32
    %34 = vector.broadcast %cst_24 : f32 to vector<2x32xf32>
    %35 = arith.addf %33, %34 : vector<2x32xf32>
    %cst_25 = arith.constant 5.000000e-01 : f32
    %36 = vector.broadcast %cst_25 : f32 to vector<2x32xf32>
    %37 = arith.mulf %36, %35 : vector<2x32xf32>
    %38 = vector.extract_strided_slice %21 {offsets = [0, 64], sizes = [2, 32], strides = [1, 1]} : vector<2x128xf32> to vector<2x32xf32>
    %39 = math.tanh %38 : vector<2x32xf32>
    %40 = vector.extract_strided_slice %21 {offsets = [0, 96], sizes = [2, 32], strides = [1, 1]} : vector<2x128xf32> to vector<2x32xf32>
    %cst_26 = arith.constant 5.000000e-01 : f32
    %41 = vector.broadcast %cst_26 : f32 to vector<2x32xf32>
    %42 = arith.mulf %41, %40 : vector<2x32xf32>
    %43 = math.tanh %42 : vector<2x32xf32>
    %cst_27 = arith.constant 1.000000e+00 : f32
    %44 = vector.broadcast %cst_27 : f32 to vector<2x32xf32>
    %45 = arith.addf %43, %44 : vector<2x32xf32>
    %cst_28 = arith.constant 5.000000e-01 : f32
    %46 = vector.broadcast %cst_28 : f32 to vector<2x32xf32>
    %47 = arith.mulf %46, %45 : vector<2x32xf32>
    %48 = arith.mulf %37, %15 : vector<2x32xf32>
    %49 = arith.mulf %29, %39 : vector<2x32xf32>
    %50 = arith.addf %48, %49 : vector<2x32xf32>
    %51 = math.tanh %50 : vector<2x32xf32>
    %52 = arith.mulf %47, %51 : vector<2x32xf32>
    %53 = vector.extract_strided_slice %52 {offsets = [0, 0], sizes = [1, 32], strides = [1, 1]} : vector<2x32xf32> to vector<1x32xf32>
    %c0_29 = arith.constant 0 : index
    %54 = memref.load %arg1[%c0_29] : memref<2xi32, #tpu.memory_space<smem>>
    %c0_i32 = arith.constant 0 : i32
    %55 = arith.cmpi sgt, %54, %c0_i32 : i32
    %56 = arith.extui %55 : i1 to i32
    %57 = arith.sitofp %56 : i32 to f32
    %58 = vector.broadcast %57 : f32 to vector<1x32xf32>
    %59 = arith.mulf %53, %58 : vector<1x32xf32>
    %60 = vector.extract_strided_slice %52 {offsets = [1, 0], sizes = [1, 32], strides = [1, 1]} : vector<2x32xf32> to vector<1x32xf32>
    %c1 = arith.constant 1 : index
    %61 = memref.load %arg1[%c1] : memref<2xi32, #tpu.memory_space<smem>>
    %c0_i32_30 = arith.constant 0 : i32
    %62 = arith.cmpi sgt, %61, %c0_i32_30 : i32
    %63 = arith.extui %62 : i1 to i32
    %64 = arith.sitofp %63 : i32 to f32
    %65 = vector.broadcast %64 : f32 to vector<1x32xf32>
    %66 = arith.mulf %60, %65 : vector<1x32xf32>
    %67 = tpu.concatenate %59, %66 in 0 : vector<1x32xf32>, vector<1x32xf32> -> vector<2x32xf32>
    %c0_31 = arith.constant 0 : index
    %c0_32 = arith.constant 0 : index
    %c0_33 = arith.constant 0 : index
    %68 = vector.load %arg8[%c0_31, %c0_32, %c0_33] : memref<16x2x32xf32, #tpu.memory_space<vmem>>, vector<1x2x32xf32>
    %69 = vector.shape_cast %68 : vector<1x2x32xf32> to vector<2x32xf32>
    %70 = vector.shape_cast %67 : vector<2x32xf32> to vector<1x2x32xf32>
    tpu.vector_store %arg8[%c0_31, %c0_32, %c0_33], %70 {strides = array<i32>} : memref<16x2x32xf32, #tpu.memory_space<vmem>>, vector<1x2x32xf32>,
    %c1_34 = arith.constant 1 : index
    %c0_35 = arith.constant 0 : index
    %71 = vector.load %arg9[%c1_34, %c0_35] : memref<32x128xf32, #tpu.memory_space<vmem>>, vector<1x128xf32>
    %c17 = arith.constant 17 : index
    %c0_36 = arith.constant 0 : index
    %72 = vector.load %arg9[%c17, %c0_36] : memref<32x128xf32, #tpu.memory_space<vmem>>, vector<1x128xf32>
    %73 = tpu.concatenate %71, %72 in 0 : vector<1x128xf32>, vector<1x128xf32> -> vector<2x128xf32>
    %74 = arith.truncf %52 : vector<2x32xf32> to vector<2x32xbf16>
    %cst_37 = arith.constant dense<0.000000e+00> : vector<2x128xf32>
    %75 = tpu.matmul %74, %13, %cst_37 {dimension_numbers = #tpu.dot_dimension_numbers<[1], [0], [0], [1], [0, 0, 1, 1], [], []>} : vector<2x32xbf16>, vector<32x128xbf16>, vector<2x128xf32> -> vector<2x128xf32>
    %76 = arith.addf %73, %75 : vector<2x128xf32>
    %77 = vector.extract_strided_slice %76 {offsets = [0, 0], sizes = [2, 32], strides = [1, 1]} : vector<2x128xf32> to vector<2x32xf32>
    %cst_38 = arith.constant 5.000000e-01 : f32
    %78 = vector.broadcast %cst_38 : f32 to vector<2x32xf32>
    %79 = arith.mulf %78, %77 : vector<2x32xf32>
    %80 = math.tanh %79 : vector<2x32xf32>
    %cst_39 = arith.constant 1.000000e+00 : f32
    %81 = vector.broadcast %cst_39 : f32 to vector<2x32xf32>
    %82 = arith.addf %80, %81 : vector<2x32xf32>
    %cst_40 = arith.constant 5.000000e-01 : f32
    %83 = vector.broadcast %cst_40 : f32 to vector<2x32xf32>
    %84 = arith.mulf %83, %82 : vector<2x32xf32>
    %85 = vector.extract_strided_slice %76 {offsets = [0, 32], sizes = [2, 32], strides = [1, 1]} : vector<2x128xf32> to vector<2x32xf32>
    %cst_41 = arith.constant 5.000000e-01 : f32
    %86 = vector.broadcast %cst_41 : f32 to vector<2x32xf32>
    %87 = arith.mulf %86, %85 : vector<2x32xf32>
    %88 = math.tanh %87 : vector<2x32xf32>
    %cst_42 = arith.constant 1.000000e+00 : f32
    %89 = vector.broadcast %cst_42 : f32 to vector<2x32xf32>
    %90 = arith.addf %88, %89 : vector<2x32xf32>
    %cst_43 = arith.constant 5.000000e-01 : f32
    %91 = vector.broadcast %cst_43 : f32 to vector<2x32xf32>
    %92 = arith.mulf %91, %90 : vector<2x32xf32>
    %93 = vector.extract_strided_slice %76 {offsets = [0, 64], sizes = [2, 32], strides = [1, 1]} : vector<2x128xf32> to vector<2x32xf32>
    %94 = math.tanh %93 : vector<2x32xf32>
    %95 = vector.extract_strided_slice %76 {offsets = [0, 96], sizes = [2, 32], strides = [1, 1]} : vector<2x128xf32> to vector<2x32xf32>
    %cst_44 = arith.constant 5.000000e-01 : f32
    %96 = vector.broadcast %cst_44 : f32 to vector<2x32xf32>
    %97 = arith.mulf %96, %95 : vector<2x32xf32>
    %98 = math.tanh %97 : vector<2x32xf32>
    %cst_45 = arith.constant 1.000000e+00 : f32
    %99 = vector.broadcast %cst_45 : f32 to vector<2x32xf32>
    %100 = arith.addf %98, %99 : vector<2x32xf32>
    %cst_46 = arith.constant 5.000000e-01 : f32
    %101 = vector.broadcast %cst_46 : f32 to vector<2x32xf32>
    %102 = arith.mulf %101, %100 : vector<2x32xf32>
    %103 = arith.mulf %92, %50 : vector<2x32xf32>
    %104 = arith.mulf %84, %94 : vector<2x32xf32>
    %105 = arith.addf %103, %104 : vector<2x32xf32>
    %106 = math.tanh %105 : vector<2x32xf32>
    %107 = arith.mulf %102, %106 : vector<2x32xf32>
    %108 = vector.extract_strided_slice %107 {offsets = [0, 0], sizes = [1, 32], strides = [1, 1]} : vector<2x32xf32> to vector<1x32xf32>
    %c0_47 = arith.constant 0 : index
    %109 = memref.load %arg1[%c0_47] : memref<2xi32, #tpu.memory_space<smem>>
    %c1_i32 = arith.constant 1 : i32
    %110 = arith.cmpi sgt, %109, %c1_i32 : i32
    %111 = arith.extui %110 : i1 to i32
    %112 = arith.sitofp %111 : i32 to f32
    %113 = vector.broadcast %112 : f32 to vector<1x32xf32>
    %114 = arith.mulf %108, %113 : vector<1x32xf32>
    %115 = vector.extract_strided_slice %107 {offsets = [1, 0], sizes = [1, 32], strides = [1, 1]} : vector<2x32xf32> to vector<1x32xf32>
    %c1_48 = arith.constant 1 : index
    %116 = memref.load %arg1[%c1_48] : memref<2xi32, #tpu.memory_space<smem>>
    %c1_i32_49 = arith.constant 1 : i32
    %117 = arith.cmpi sgt, %116, %c1_i32_49 : i32
    %118 = arith.extui %117 : i1 to i32
    %119 = arith.sitofp %118 : i32 to f32
    %120 = vector.broadcast %119 : f32 to vector<1x32xf32>
    %121 = arith.mulf %115, %120 : vector<1x32xf32>
    %122 = tpu.concatenate %114, %121 in 0 : vector<1x32xf32>, vector<1x32xf32> -> vector<2x32xf32>
    %c1_50 = arith.constant 1 : index
    %c0_51 = arith.constant 0 : index
    %c0_52 = arith.constant 0 : index
    %123 = vector.load %arg8[%c1_50, %c0_51, %c0_52] : memref<16x2x32xf32, #tpu.memory_space<vmem>>, vector<1x2x32xf32>
    %124 = vector.shape_cast %123 : vector<1x2x32xf32> to vector<2x32xf32>
    %125 = vector.shape_cast %122 : vector<2x32xf32> to vector<1x2x32xf32>
    tpu.vector_store %arg8[%c1_50, %c0_51, %c0_52], %125 {strides = array<i32>} : memref<16x2x32xf32, #tpu.memory_space<vmem>>, vector<1x2x32xf32>,
    %c2 = arith.constant 2 : index
    %c0_53 = arith.constant 0 : index
    %126 = vector.load %arg9[%c2, %c0_53] : memref<32x128xf32, #tpu.memory_space<vmem>>, vector<1x128xf32>
    %c18 = arith.constant 18 : index
    %c0_54 = arith.constant 0 : index
    %127 = vector.load %arg9[%c18, %c0_54] : memref<32x128xf32, #tpu.memory_space<vmem>>, vector<1x128xf32>
    %128 = tpu.concatenate %126, %127 in 0 : vector<1x128xf32>, vector<1x128xf32> -> vector<2x128xf32>
    %129 = arith.truncf %107 : vector<2x32xf32> to vector<2x32xbf16>
    %cst_55 = arith.constant dense<0.000000e+00> : vector<2x128xf32>
    %130 = tpu.matmul %129, %13, %cst_55 {dimension_numbers = #tpu.dot_dimension_numbers<[1], [0], [0], [1], [0, 0, 1, 1], [], []>} : vector<2x32xbf16>, vector<32x128xbf16>, vector<2x128xf32> -> vector<2x128xf32>
    %131 = arith.addf %128, %130 : vector<2x128xf32>
    %132 = vector.extract_strided_slice %131 {offsets = [0, 0], sizes = [2, 32], strides = [1, 1]} : vector<2x128xf32> to vector<2x32xf32>
    %cst_56 = arith.constant 5.000000e-01 : f32
    %133 = vector.broadcast %cst_56 : f32 to vector<2x32xf32>
    %134 = arith.mulf %133, %132 : vector<2x32xf32>
    %135 = math.tanh %134 : vector<2x32xf32>
    %cst_57 = arith.constant 1.000000e+00 : f32
    %136 = vector.broadcast %cst_57 : f32 to vector<2x32xf32>
    %137 = arith.addf %135, %136 : vector<2x32xf32>
    %cst_58 = arith.constant 5.000000e-01 : f32
    %138 = vector.broadcast %cst_58 : f32 to vector<2x32xf32>
    %139 = arith.mulf %138, %137 : vector<2x32xf32>
    %140 = vector.extract_strided_slice %131 {offsets = [0, 32], sizes = [2, 32], strides = [1, 1]} : vector<2x128xf32> to vector<2x32xf32>
    %cst_59 = arith.constant 5.000000e-01 : f32
    %141 = vector.broadcast %cst_59 : f32 to vector<2x32xf32>
    %142 = arith.mulf %141, %140 : vector<2x32xf32>
    %143 = math.tanh %142 : vector<2x32xf32>
    %cst_60 = arith.constant 1.000000e+00 : f32
    %144 = vector.broadcast %cst_60 : f32 to vector<2x32xf32>
    %145 = arith.addf %143, %144 : vector<2x32xf32>
    %cst_61 = arith.constant 5.000000e-01 : f32
    %146 = vector.broadcast %cst_61 : f32 to vector<2x32xf32>
    %147 = arith.mulf %146, %145 : vector<2x32xf32>
    %148 = vector.extract_strided_slice %131 {offsets = [0, 64], sizes = [2, 32], strides = [1, 1]} : vector<2x128xf32> to vector<2x32xf32>
    %149 = math.tanh %148 : vector<2x32xf32>
    %150 = vector.extract_strided_slice %131 {offsets = [0, 96], sizes = [2, 32], strides = [1, 1]} : vector<2x128xf32> to vector<2x32xf32>
    %cst_62 = arith.constant 5.000000e-01 : f32
    %151 = vector.broadcast %cst_62 : f32 to vector<2x32xf32>
    %152 = arith.mulf %151, %150 : vector<2x32xf32>
    %153 = math.tanh %152 : vector<2x32xf32>
    %cst_63 = arith.constant 1.000000e+00 : f32
    %154 = vector.broadcast %cst_63 : f32 to vector<2x32xf32>
    %155 = arith.addf %153, %154 : vector<2x32xf32>
    %cst_64 = arith.constant 5.000000e-01 : f32
    %156 = vector.broadcast %cst_64 : f32 to vector<2x32xf32>
    %157 = arith.mulf %156, %155 : vector<2x32xf32>
    %158 = arith.mulf %147, %105 : vector<2x32xf32>
    %159 = arith.mulf %139, %149 : vector<2x32xf32>
    %160 = arith.addf %158, %159 : vector<2x32xf32>
    %161 = math.tanh %160 : vector<2x32xf32>
    %162 = arith.mulf %157, %161 : vector<2x32xf32>
    %163 = vector.extract_strided_slice %162 {offsets = [0, 0], sizes = [1, 32], strides = [1, 1]} : vector<2x32xf32> to vector<1x32xf32>
    %c0_65 = arith.constant 0 : index
    %164 = memref.load %arg1[%c0_65] : memref<2xi32, #tpu.memory_space<smem>>
    %c2_i32 = arith.constant 2 : i32
    %165 = arith.cmpi sgt, %164, %c2_i32 : i32
    %166 = arith.extui %165 : i1 to i32
    %167 = arith.sitofp %166 : i32 to f32
    %168 = vector.broadcast %167 : f32 to vector<1x32xf32>
    %169 = arith.mulf %163, %168 : vector<1x32xf32>
    %170 = vector.extract_strided_slice %162 {offsets = [1, 0], sizes = [1, 32], strides = [1, 1]} : vector<2x32xf32> to vector<1x32xf32>
    %c1_66 = arith.constant 1 : index
    %171 = memref.load %arg1[%c1_66] : memref<2xi32, #tpu.memory_space<smem>>
    %c2_i32_67 = arith.constant 2 : i32
    %172 = arith.cmpi sgt, %171, %c2_i32_67 : i32
    %173 = arith.extui %172 : i1 to i32
    %174 = arith.sitofp %173 : i32 to f32
    %175 = vector.broadcast %174 : f32 to vector<1x32xf32>
    %176 = arith.mulf %170, %175 : vector<1x32xf32>
    %177 = tpu.concatenate %169, %176 in 0 : vector<1x32xf32>, vector<1x32xf32> -> vector<2x32xf32>
    %c2_68 = arith.constant 2 : index
    %c0_69 = arith.constant 0 : index
    %c0_70 = arith.constant 0 : index
    %178 = vector.load %arg8[%c2_68, %c0_69, %c0_70] : memref<16x2x32xf32, #tpu.memory_space<vmem>>, vector<1x2x32xf32>
    %179 = vector.shape_cast %178 : vector<1x2x32xf32> to vector<2x32xf32>
    %180 = vector.shape_cast %177 : vector<2x32xf32> to vector<1x2x32xf32>
    tpu.vector_store %arg8[%c2_68, %c0_69, %c0_70], %180 {strides = array<i32>} : memref<16x2x32xf32, #tpu.memory_space<vmem>>, vector<1x2x32xf32>,
    %c3 = arith.constant 3 : index
    %c0_71 = arith.constant 0 : index
    %181 = vector.load %arg9[%c3, %c0_71] : memref<32x128xf32, #tpu.memory_space<vmem>>, vector<1x128xf32>
    %c19 = arith.constant 19 : index
    %c0_72 = arith.constant 0 : index
    %182 = vector.load %arg9[%c19, %c0_72] : memref<32x128xf32, #tpu.memory_space<vmem>>, vector<1x128xf32>
    %183 = tpu.concatenate %181, %182 in 0 : vector<1x128xf32>, vector<1x128xf32> -> vector<2x128xf32>
    %184 = arith.truncf %162 : vector<2x32xf32> to vector<2x32xbf16>
    %cst_73 = arith.constant dense<0.000000e+00> : vector<2x128xf32>
    %185 = tpu.matmul %184, %13, %cst_73 {dimension_numbers = #tpu.dot_dimension_numbers<[1], [0], [0], [1], [0, 0, 1, 1], [], []>} : vector<2x32xbf16>, vector<32x128xbf16>, vector<2x128xf32> -> vector<2x128xf32>
    %186 = arith.addf %183, %185 : vector<2x128xf32>
    %187 = vector.extract_strided_slice %186 {offsets = [0, 0], sizes = [2, 32], strides = [1, 1]} : vector<2x128xf32> to vector<2x32xf32>
    %cst_74 = arith.constant 5.000000e-01 : f32
    %188 = vector.broadcast %cst_74 : f32 to vector<2x32xf32>
    %189 = arith.mulf %188, %187 : vector<2x32xf32>
    %190 = math.tanh %189 : vector<2x32xf32>
    %cst_75 = arith.constant 1.000000e+00 : f32
    %191 = vector.broadcast %cst_75 : f32 to vector<2x32xf32>
    %192 = arith.addf %190, %191 : vector<2x32xf32>
    %cst_76 = arith.constant 5.000000e-01 : f32
    %193 = vector.broadcast %cst_76 : f32 to vector<2x32xf32>
    %194 = arith.mulf %193, %192 : vector<2x32xf32>
    %195 = vector.extract_strided_slice %186 {offsets = [0, 32], sizes = [2, 32], strides = [1, 1]} : vector<2x128xf32> to vector<2x32xf32>
    %cst_77 = arith.constant 5.000000e-01 : f32
    %196 = vector.broadcast %cst_77 : f32 to vector<2x32xf32>
    %197 = arith.mulf %196, %195 : vector<2x32xf32>
    %198 = math.tanh %197 : vector<2x32xf32>
    %cst_78 = arith.constant 1.000000e+00 : f32
    %199 = vector.broadcast %cst_78 : f32 to vector<2x32xf32>
    %200 = arith.addf %198, %199 : vector<2x32xf32>
    %cst_79 = arith.constant 5.000000e-01 : f32
    %201 = vector.broadcast %cst_79 : f32 to vector<2x32xf32>
    %202 = arith.mulf %201, %200 : vector<2x32xf32>
    %203 = vector.extract_strided_slice %186 {offsets = [0, 64], sizes = [2, 32], strides = [1, 1]} : vector<2x128xf32> to vector<2x32xf32>
    %204 = math.tanh %203 : vector<2x32xf32>
    %205 = vector.extract_strided_slice %186 {offsets = [0, 96], sizes = [2, 32], strides = [1, 1]} : vector<2x128xf32> to vector<2x32xf32>
    %cst_80 = arith.constant 5.000000e-01 : f32
    %206 = vector.broadcast %cst_80 : f32 to vector<2x32xf32>
    %207 = arith.mulf %206, %205 : vector<2x32xf32>
    %208 = math.tanh %207 : vector<2x32xf32>
    %cst_81 = arith.constant 1.000000e+00 : f32
    %209 = vector.broadcast %cst_81 : f32 to vector<2x32xf32>
    %210 = arith.addf %208, %209 : vector<2x32xf32>
    %cst_82 = arith.constant 5.000000e-01 : f32
    %211 = vector.broadcast %cst_82 : f32 to vector<2x32xf32>
    %212 = arith.mulf %211, %210 : vector<2x32xf32>
    %213 = arith.mulf %202, %160 : vector<2x32xf32>
    %214 = arith.mulf %194, %204 : vector<2x32xf32>
    %215 = arith.addf %213, %214 : vector<2x32xf32>
    %216 = math.tanh %215 : vector<2x32xf32>
    %217 = arith.mulf %212, %216 : vector<2x32xf32>
    %218 = vector.extract_strided_slice %217 {offsets = [0, 0], sizes = [1, 32], strides = [1, 1]} : vector<2x32xf32> to vector<1x32xf32>
    %c0_83 = arith.constant 0 : index
    %219 = memref.load %arg1[%c0_83] : memref<2xi32, #tpu.memory_space<smem>>
    %c3_i32 = arith.constant 3 : i32
    %220 = arith.cmpi sgt, %219, %c3_i32 : i32
    %221 = arith.extui %220 : i1 to i32
    %222 = arith.sitofp %221 : i32 to f32
    %223 = vector.broadcast %222 : f32 to vector<1x32xf32>
    %224 = arith.mulf %218, %223 : vector<1x32xf32>
    %225 = vector.extract_strided_slice %217 {offsets = [1, 0], sizes = [1, 32], strides = [1, 1]} : vector<2x32xf32> to vector<1x32xf32>
    %c1_84 = arith.constant 1 : index
    %226 = memref.load %arg1[%c1_84] : memref<2xi32, #tpu.memory_space<smem>>
    %c3_i32_85 = arith.constant 3 : i32
    %227 = arith.cmpi sgt, %226, %c3_i32_85 : i32
    %228 = arith.extui %227 : i1 to i32
    %229 = arith.sitofp %228 : i32 to f32
    %230 = vector.broadcast %229 : f32 to vector<1x32xf32>
    %231 = arith.mulf %225, %230 : vector<1x32xf32>
    %232 = tpu.concatenate %224, %231 in 0 : vector<1x32xf32>, vector<1x32xf32> -> vector<2x32xf32>
    %c3_86 = arith.constant 3 : index
    %c0_87 = arith.constant 0 : index
    %c0_88 = arith.constant 0 : index
    %233 = vector.load %arg8[%c3_86, %c0_87, %c0_88] : memref<16x2x32xf32, #tpu.memory_space<vmem>>, vector<1x2x32xf32>
    %234 = vector.shape_cast %233 : vector<1x2x32xf32> to vector<2x32xf32>
    %235 = vector.shape_cast %232 : vector<2x32xf32> to vector<1x2x32xf32>
    tpu.vector_store %arg8[%c3_86, %c0_87, %c0_88], %235 {strides = array<i32>} : memref<16x2x32xf32, #tpu.memory_space<vmem>>, vector<1x2x32xf32>,
    %c4 = arith.constant 4 : index
    %c0_89 = arith.constant 0 : index
    %236 = vector.load %arg9[%c4, %c0_89] : memref<32x128xf32, #tpu.memory_space<vmem>>, vector<1x128xf32>
    %c20 = arith.constant 20 : index
    %c0_90 = arith.constant 0 : index
    %237 = vector.load %arg9[%c20, %c0_90] : memref<32x128xf32, #tpu.memory_space<vmem>>, vector<1x128xf32>
    %238 = tpu.concatenate %236, %237 in 0 : vector<1x128xf32>, vector<1x128xf32> -> vector<2x128xf32>
    %239 = arith.truncf %217 : vector<2x32xf32> to vector<2x32xbf16>
    %cst_91 = arith.constant dense<0.000000e+00> : vector<2x128xf32>
    %240 = tpu.matmul %239, %13, %cst_91 {dimension_numbers = #tpu.dot_dimension_numbers<[1], [0], [0], [1], [0, 0, 1, 1], [], []>} : vector<2x32xbf16>, vector<32x128xbf16>, vector<2x128xf32> -> vector<2x128xf32>
    %241 = arith.addf %238, %240 : vector<2x128xf32>
    %242 = vector.extract_strided_slice %241 {offsets = [0, 0], sizes = [2, 32], strides = [1, 1]} : vector<2x128xf32> to vector<2x32xf32>
    %cst_92 = arith.constant 5.000000e-01 : f32
    %243 = vector.broadcast %cst_92 : f32 to vector<2x32xf32>
    %244 = arith.mulf %243, %242 : vector<2x32xf32>
    %245 = math.tanh %244 : vector<2x32xf32>
    %cst_93 = arith.constant 1.000000e+00 : f32
    %246 = vector.broadcast %cst_93 : f32 to vector<2x32xf32>
    %247 = arith.addf %245, %246 : vector<2x32xf32>
    %cst_94 = arith.constant 5.000000e-01 : f32
    %248 = vector.broadcast %cst_94 : f32 to vector<2x32xf32>
    %249 = arith.mulf %248, %247 : vector<2x32xf32>
    %250 = vector.extract_strided_slice %241 {offsets = [0, 32], sizes = [2, 32], strides = [1, 1]} : vector<2x128xf32> to vector<2x32xf32>
    %cst_95 = arith.constant 5.000000e-01 : f32
    %251 = vector.broadcast %cst_95 : f32 to vector<2x32xf32>
    %252 = arith.mulf %251, %250 : vector<2x32xf32>
    %253 = math.tanh %252 : vector<2x32xf32>
    %cst_96 = arith.constant 1.000000e+00 : f32
    %254 = vector.broadcast %cst_96 : f32 to vector<2x32xf32>
    %255 = arith.addf %253, %254 : vector<2x32xf32>
    %cst_97 = arith.constant 5.000000e-01 : f32
    %256 = vector.broadcast %cst_97 : f32 to vector<2x32xf32>
    %257 = arith.mulf %256, %255 : vector<2x32xf32>
    %258 = vector.extract_strided_slice %241 {offsets = [0, 64], sizes = [2, 32], strides = [1, 1]} : vector<2x128xf32> to vector<2x32xf32>
    %259 = math.tanh %258 : vector<2x32xf32>
    %260 = vector.extract_strided_slice %241 {offsets = [0, 96], sizes = [2, 32], strides = [1, 1]} : vector<2x128xf32> to vector<2x32xf32>
    %cst_98 = arith.constant 5.000000e-01 : f32
    %261 = vector.broadcast %cst_98 : f32 to vector<2x32xf32>
    %262 = arith.mulf %261, %260 : vector<2x32xf32>
    %263 = math.tanh %262 : vector<2x32xf32>
    %cst_99 = arith.constant 1.000000e+00 : f32
    %264 = vector.broadcast %cst_99 : f32 to vector<2x32xf32>
    %265 = arith.addf %263, %264 : vector<2x32xf32>
    %cst_100 = arith.constant 5.000000e-01 : f32
    %266 = vector.broadcast %cst_100 : f32 to vector<2x32xf32>
    %267 = arith.mulf %266, %265 : vector<2x32xf32>
    %268 = arith.mulf %257, %215 : vector<2x32xf32>
    %269 = arith.mulf %249, %259 : vector<2x32xf32>
    %270 = arith.addf %268, %269 : vector<2x32xf32>
    %271 = math.tanh %270 : vector<2x32xf32>
    %272 = arith.mulf %267, %271 : vector<2x32xf32>
    %273 = vector.extract_strided_slice %272 {offsets = [0, 0], sizes = [1, 32], strides = [1, 1]} : vector<2x32xf32> to vector<1x32xf32>
    %c0_101 = arith.constant 0 : index
    %274 = memref.load %arg1[%c0_101] : memref<2xi32, #tpu.memory_space<smem>>
    %c4_i32 = arith.constant 4 : i32
    %275 = arith.cmpi sgt, %274, %c4_i32 : i32
    %276 = arith.extui %275 : i1 to i32
    %277 = arith.sitofp %276 : i32 to f32
    %278 = vector.broadcast %277 : f32 to vector<1x32xf32>
    %279 = arith.mulf %273, %278 : vector<1x32xf32>
    %280 = vector.extract_strided_slice %272 {offsets = [1, 0], sizes = [1, 32], strides = [1, 1]} : vector<2x32xf32> to vector<1x32xf32>
    %c1_102 = arith.constant 1 : index
    %281 = memref.load %arg1[%c1_102] : memref<2xi32, #tpu.memory_space<smem>>
    %c4_i32_103 = arith.constant 4 : i32
    %282 = arith.cmpi sgt, %281, %c4_i32_103 : i32
    %283 = arith.extui %282 : i1 to i32
    %284 = arith.sitofp %283 : i32 to f32
    %285 = vector.broadcast %284 : f32 to vector<1x32xf32>
    %286 = arith.mulf %280, %285 : vector<1x32xf32>
    %287 = tpu.concatenate %279, %286 in 0 : vector<1x32xf32>, vector<1x32xf32> -> vector<2x32xf32>
    %c4_104 = arith.constant 4 : index
    %c0_105 = arith.constant 0 : index
    %c0_106 = arith.constant 0 : index
    %288 = vector.load %arg8[%c4_104, %c0_105, %c0_106] : memref<16x2x32xf32, #tpu.memory_space<vmem>>, vector<1x2x32xf32>
    %289 = vector.shape_cast %288 : vector<1x2x32xf32> to vector<2x32xf32>
    %290 = vector.shape_cast %287 : vector<2x32xf32> to vector<1x2x32xf32>
    tpu.vector_store %arg8[%c4_104, %c0_105, %c0_106], %290 {strides = array<i32>} : memref<16x2x32xf32, #tpu.memory_space<vmem>>, vector<1x2x32xf32>,
    %c5 = arith.constant 5 : index
    %c0_107 = arith.constant 0 : index
    %291 = vector.load %arg9[%c5, %c0_107] : memref<32x128xf32, #tpu.memory_space<vmem>>, vector<1x128xf32>
    %c21 = arith.constant 21 : index
    %c0_108 = arith.constant 0 : index
    %292 = vector.load %arg9[%c21, %c0_108] : memref<32x128xf32, #tpu.memory_space<vmem>>, vector<1x128xf32>
    %293 = tpu.concatenate %291, %292 in 0 : vector<1x128xf32>, vector<1x128xf32> -> vector<2x128xf32>
    %294 = arith.truncf %272 : vector<2x32xf32> to vector<2x32xbf16>
    %cst_109 = arith.constant dense<0.000000e+00> : vector<2x128xf32>
    %295 = tpu.matmul %294, %13, %cst_109 {dimension_numbers = #tpu.dot_dimension_numbers<[1], [0], [0], [1], [0, 0, 1, 1], [], []>} : vector<2x32xbf16>, vector<32x128xbf16>, vector<2x128xf32> -> vector<2x128xf32>
    %296 = arith.addf %293, %295 : vector<2x128xf32>
    %297 = vector.extract_strided_slice %296 {offsets = [0, 0], sizes = [2, 32], strides = [1, 1]} : vector<2x128xf32> to vector<2x32xf32>
    %cst_110 = arith.constant 5.000000e-01 : f32
    %298 = vector.broadcast %cst_110 : f32 to vector<2x32xf32>
    %299 = arith.mulf %298, %297 : vector<2x32xf32>
    %300 = math.tanh %299 : vector<2x32xf32>
    %cst_111 = arith.constant 1.000000e+00 : f32
    %301 = vector.broadcast %cst_111 : f32 to vector<2x32xf32>
    %302 = arith.addf %300, %301 : vector<2x32xf32>
    %cst_112 = arith.constant 5.000000e-01 : f32
    %303 = vector.broadcast %cst_112 : f32 to vector<2x32xf32>
    %304 = arith.mulf %303, %302 : vector<2x32xf32>
    %305 = vector.extract_strided_slice %296 {offsets = [0, 32], sizes = [2, 32], strides = [1, 1]} : vector<2x128xf32> to vector<2x32xf32>
    %cst_113 = arith.constant 5.000000e-01 : f32
    %306 = vector.broadcast %cst_113 : f32 to vector<2x32xf32>
    %307 = arith.mulf %306, %305 : vector<2x32xf32>
    %308 = math.tanh %307 : vector<2x32xf32>
    %cst_114 = arith.constant 1.000000e+00 : f32
    %309 = vector.broadcast %cst_114 : f32 to vector<2x32xf32>
    %310 = arith.addf %308, %309 : vector<2x32xf32>
    %cst_115 = arith.constant 5.000000e-01 : f32
    %311 = vector.broadcast %cst_115 : f32 to vector<2x32xf32>
    %312 = arith.mulf %311, %310 : vector<2x32xf32>
    %313 = vector.extract_strided_slice %296 {offsets = [0, 64], sizes = [2, 32], strides = [1, 1]} : vector<2x128xf32> to vector<2x32xf32>
    %314 = math.tanh %313 : vector<2x32xf32>
    %315 = vector.extract_strided_slice %296 {offsets = [0, 96], sizes = [2, 32], strides = [1, 1]} : vector<2x128xf32> to vector<2x32xf32>
    %cst_116 = arith.constant 5.000000e-01 : f32
    %316 = vector.broadcast %cst_116 : f32 to vector<2x32xf32>
    %317 = arith.mulf %316, %315 : vector<2x32xf32>
    %318 = math.tanh %317 : vector<2x32xf32>
    %cst_117 = arith.constant 1.000000e+00 : f32
    %319 = vector.broadcast %cst_117 : f32 to vector<2x32xf32>
    %320 = arith.addf %318, %319 : vector<2x32xf32>
    %cst_118 = arith.constant 5.000000e-01 : f32
    %321 = vector.broadcast %cst_118 : f32 to vector<2x32xf32>
    %322 = arith.mulf %321, %320 : vector<2x32xf32>
    %323 = arith.mulf %312, %270 : vector<2x32xf32>
    %324 = arith.mulf %304, %314 : vector<2x32xf32>
    %325 = arith.addf %323, %324 : vector<2x32xf32>
    %326 = math.tanh %325 : vector<2x32xf32>
    %327 = arith.mulf %322, %326 : vector<2x32xf32>
    %328 = vector.extract_strided_slice %327 {offsets = [0, 0], sizes = [1, 32], strides = [1, 1]} : vector<2x32xf32> to vector<1x32xf32>
    %c0_119 = arith.constant 0 : index
    %329 = memref.load %arg1[%c0_119] : memref<2xi32, #tpu.memory_space<smem>>
    %c5_i32 = arith.constant 5 : i32
    %330 = arith.cmpi sgt, %329, %c5_i32 : i32
    %331 = arith.extui %330 : i1 to i32
    %332 = arith.sitofp %331 : i32 to f32
    %333 = vector.broadcast %332 : f32 to vector<1x32xf32>
    %334 = arith.mulf %328, %333 : vector<1x32xf32>
    %335 = vector.extract_strided_slice %327 {offsets = [1, 0], sizes = [1, 32], strides = [1, 1]} : vector<2x32xf32> to vector<1x32xf32>
    %c1_120 = arith.constant 1 : index
    %336 = memref.load %arg1[%c1_120] : memref<2xi32, #tpu.memory_space<smem>>
    %c5_i32_121 = arith.constant 5 : i32
    %337 = arith.cmpi sgt, %336, %c5_i32_121 : i32
    %338 = arith.extui %337 : i1 to i32
    %339 = arith.sitofp %338 : i32 to f32
    %340 = vector.broadcast %339 : f32 to vector<1x32xf32>
    %341 = arith.mulf %335, %340 : vector<1x32xf32>
    %342 = tpu.concatenate %334, %341 in 0 : vector<1x32xf32>, vector<1x32xf32> -> vector<2x32xf32>
    %c5_122 = arith.constant 5 : index
    %c0_123 = arith.constant 0 : index
    %c0_124 = arith.constant 0 : index
    %343 = vector.load %arg8[%c5_122, %c0_123, %c0_124] : memref<16x2x32xf32, #tpu.memory_space<vmem>>, vector<1x2x32xf32>
    %344 = vector.shape_cast %343 : vector<1x2x32xf32> to vector<2x32xf32>
    %345 = vector.shape_cast %342 : vector<2x32xf32> to vector<1x2x32xf32>
    tpu.vector_store %arg8[%c5_122, %c0_123, %c0_124], %345 {strides = array<i32>} : memref<16x2x32xf32, #tpu.memory_space<vmem>>, vector<1x2x32xf32>,
    %c6 = arith.constant 6 : index
    %c0_125 = arith.constant 0 : index
    %346 = vector.load %arg9[%c6, %c0_125] : memref<32x128xf32, #tpu.memory_space<vmem>>, vector<1x128xf32>
    %c22 = arith.constant 22 : index
    %c0_126 = arith.constant 0 : index
    %347 = vector.load %arg9[%c22, %c0_126] : memref<32x128xf32, #tpu.memory_space<vmem>>, vector<1x128xf32>
    %348 = tpu.concatenate %346, %347 in 0 : vector<1x128xf32>, vector<1x128xf32> -> vector<2x128xf32>
    %349 = arith.truncf %327 : vector<2x32xf32> to vector<2x32xbf16>
    %cst_127 = arith.constant dense<0.000000e+00> : vector<2x128xf32>
    %350 = tpu.matmul %349, %13, %cst_127 {dimension_numbers = #tpu.dot_dimension_numbers<[1], [0], [0], [1], [0, 0, 1, 1], [], []>} : vector<2x32xbf16>, vector<32x128xbf16>, vector<2x128xf32> -> vector<2x128xf32>
    %351 = arith.addf %348, %350 : vector<2x128xf32>
    %352 = vector.extract_strided_slice %351 {offsets = [0, 0], sizes = [2, 32], strides = [1, 1]} : vector<2x128xf32> to vector<2x32xf32>
    %cst_128 = arith.constant 5.000000e-01 : f32
    %353 = vector.broadcast %cst_128 : f32 to vector<2x32xf32>
    %354 = arith.mulf %353, %352 : vector<2x32xf32>
    %355 = math.tanh %354 : vector<2x32xf32>
    %cst_129 = arith.constant 1.000000e+00 : f32
    %356 = vector.broadcast %cst_129 : f32 to vector<2x32xf32>
    %357 = arith.addf %355, %356 : vector<2x32xf32>
    %cst_130 = arith.constant 5.000000e-01 : f32
    %358 = vector.broadcast %cst_130 : f32 to vector<2x32xf32>
    %359 = arith.mulf %358, %357 : vector<2x32xf32>
    %360 = vector.extract_strided_slice %351 {offsets = [0, 32], sizes = [2, 32], strides = [1, 1]} : vector<2x128xf32> to vector<2x32xf32>
    %cst_131 = arith.constant 5.000000e-01 : f32
    %361 = vector.broadcast %cst_131 : f32 to vector<2x32xf32>
    %362 = arith.mulf %361, %360 : vector<2x32xf32>
    %363 = math.tanh %362 : vector<2x32xf32>
    %cst_132 = arith.constant 1.000000e+00 : f32
    %364 = vector.broadcast %cst_132 : f32 to vector<2x32xf32>
    %365 = arith.addf %363, %364 : vector<2x32xf32>
    %cst_133 = arith.constant 5.000000e-01 : f32
    %366 = vector.broadcast %cst_133 : f32 to vector<2x32xf32>
    %367 = arith.mulf %366, %365 : vector<2x32xf32>
    %368 = vector.extract_strided_slice %351 {offsets = [0, 64], sizes = [2, 32], strides = [1, 1]} : vector<2x128xf32> to vector<2x32xf32>
    %369 = math.tanh %368 : vector<2x32xf32>
    %370 = vector.extract_strided_slice %351 {offsets = [0, 96], sizes = [2, 32], strides = [1, 1]} : vector<2x128xf32> to vector<2x32xf32>
    %cst_134 = arith.constant 5.000000e-01 : f32
    %371 = vector.broadcast %cst_134 : f32 to vector<2x32xf32>
    %372 = arith.mulf %371, %370 : vector<2x32xf32>
    %373 = math.tanh %372 : vector<2x32xf32>
    %cst_135 = arith.constant 1.000000e+00 : f32
    %374 = vector.broadcast %cst_135 : f32 to vector<2x32xf32>
    %375 = arith.addf %373, %374 : vector<2x32xf32>
    %cst_136 = arith.constant 5.000000e-01 : f32
    %376 = vector.broadcast %cst_136 : f32 to vector<2x32xf32>
    %377 = arith.mulf %376, %375 : vector<2x32xf32>
    %378 = arith.mulf %367, %325 : vector<2x32xf32>
    %379 = arith.mulf %359, %369 : vector<2x32xf32>
    %380 = arith.addf %378, %379 : vector<2x32xf32>
    %381 = math.tanh %380 : vector<2x32xf32>
    %382 = arith.mulf %377, %381 : vector<2x32xf32>
    %383 = vector.extract_strided_slice %382 {offsets = [0, 0], sizes = [1, 32], strides = [1, 1]} : vector<2x32xf32> to vector<1x32xf32>
    %c0_137 = arith.constant 0 : index
    %384 = memref.load %arg1[%c0_137] : memref<2xi32, #tpu.memory_space<smem>>
    %c6_i32 = arith.constant 6 : i32
    %385 = arith.cmpi sgt, %384, %c6_i32 : i32
    %386 = arith.extui %385 : i1 to i32
    %387 = arith.sitofp %386 : i32 to f32
    %388 = vector.broadcast %387 : f32 to vector<1x32xf32>
    %389 = arith.mulf %383, %388 : vector<1x32xf32>
    %390 = vector.extract_strided_slice %382 {offsets = [1, 0], sizes = [1, 32], strides = [1, 1]} : vector<2x32xf32> to vector<1x32xf32>
    %c1_138 = arith.constant 1 : index
    %391 = memref.load %arg1[%c1_138] : memref<2xi32, #tpu.memory_space<smem>>
    %c6_i32_139 = arith.constant 6 : i32
    %392 = arith.cmpi sgt, %391, %c6_i32_139 : i32
    %393 = arith.extui %392 : i1 to i32
    %394 = arith.sitofp %393 : i32 to f32
    %395 = vector.broadcast %394 : f32 to vector<1x32xf32>
    %396 = arith.mulf %390, %395 : vector<1x32xf32>
    %397 = tpu.concatenate %389, %396 in 0 : vector<1x32xf32>, vector<1x32xf32> -> vector<2x32xf32>
    %c6_140 = arith.constant 6 : index
    %c0_141 = arith.constant 0 : index
    %c0_142 = arith.constant 0 : index
    %398 = vector.load %arg8[%c6_140, %c0_141, %c0_142] : memref<16x2x32xf32, #tpu.memory_space<vmem>>, vector<1x2x32xf32>
    %399 = vector.shape_cast %398 : vector<1x2x32xf32> to vector<2x32xf32>
    %400 = vector.shape_cast %397 : vector<2x32xf32> to vector<1x2x32xf32>
    tpu.vector_store %arg8[%c6_140, %c0_141, %c0_142], %400 {strides = array<i32>} : memref<16x2x32xf32, #tpu.memory_space<vmem>>, vector<1x2x32xf32>,
    %c7 = arith.constant 7 : index
    %c0_143 = arith.constant 0 : index
    %401 = vector.load %arg9[%c7, %c0_143] : memref<32x128xf32, #tpu.memory_space<vmem>>, vector<1x128xf32>
    %c23 = arith.constant 23 : index
    %c0_144 = arith.constant 0 : index
    %402 = vector.load %arg9[%c23, %c0_144] : memref<32x128xf32, #tpu.memory_space<vmem>>, vector<1x128xf32>
    %403 = tpu.concatenate %401, %402 in 0 : vector<1x128xf32>, vector<1x128xf32> -> vector<2x128xf32>
    %404 = arith.truncf %382 : vector<2x32xf32> to vector<2x32xbf16>
    %cst_145 = arith.constant dense<0.000000e+00> : vector<2x128xf32>
    %405 = tpu.matmul %404, %13, %cst_145 {dimension_numbers = #tpu.dot_dimension_numbers<[1], [0], [0], [1], [0, 0, 1, 1], [], []>} : vector<2x32xbf16>, vector<32x128xbf16>, vector<2x128xf32> -> vector<2x128xf32>
    %406 = arith.addf %403, %405 : vector<2x128xf32>
    %407 = vector.extract_strided_slice %406 {offsets = [0, 0], sizes = [2, 32], strides = [1, 1]} : vector<2x128xf32> to vector<2x32xf32>
    %cst_146 = arith.constant 5.000000e-01 : f32
    %408 = vector.broadcast %cst_146 : f32 to vector<2x32xf32>
    %409 = arith.mulf %408, %407 : vector<2x32xf32>
    %410 = math.tanh %409 : vector<2x32xf32>
    %cst_147 = arith.constant 1.000000e+00 : f32
    %411 = vector.broadcast %cst_147 : f32 to vector<2x32xf32>
    %412 = arith.addf %410, %411 : vector<2x32xf32>
    %cst_148 = arith.constant 5.000000e-01 : f32
    %413 = vector.broadcast %cst_148 : f32 to vector<2x32xf32>
    %414 = arith.mulf %413, %412 : vector<2x32xf32>
    %415 = vector.extract_strided_slice %406 {offsets = [0, 32], sizes = [2, 32], strides = [1, 1]} : vector<2x128xf32> to vector<2x32xf32>
    %cst_149 = arith.constant 5.000000e-01 : f32
    %416 = vector.broadcast %cst_149 : f32 to vector<2x32xf32>
    %417 = arith.mulf %416, %415 : vector<2x32xf32>
    %418 = math.tanh %417 : vector<2x32xf32>
    %cst_150 = arith.constant 1.000000e+00 : f32
    %419 = vector.broadcast %cst_150 : f32 to vector<2x32xf32>
    %420 = arith.addf %418, %419 : vector<2x32xf32>
    %cst_151 = arith.constant 5.000000e-01 : f32
    %421 = vector.broadcast %cst_151 : f32 to vector<2x32xf32>
    %422 = arith.mulf %421, %420 : vector<2x32xf32>
    %423 = vector.extract_strided_slice %406 {offsets = [0, 64], sizes = [2, 32], strides = [1, 1]} : vector<2x128xf32> to vector<2x32xf32>
    %424 = math.tanh %423 : vector<2x32xf32>
    %425 = vector.extract_strided_slice %406 {offsets = [0, 96], sizes = [2, 32], strides = [1, 1]} : vector<2x128xf32> to vector<2x32xf32>
    %cst_152 = arith.constant 5.000000e-01 : f32
    %426 = vector.broadcast %cst_152 : f32 to vector<2x32xf32>
    %427 = arith.mulf %426, %425 : vector<2x32xf32>
    %428 = math.tanh %427 : vector<2x32xf32>
    %cst_153 = arith.constant 1.000000e+00 : f32
    %429 = vector.broadcast %cst_153 : f32 to vector<2x32xf32>
    %430 = arith.addf %428, %429 : vector<2x32xf32>
    %cst_154 = arith.constant 5.000000e-01 : f32
    %431 = vector.broadcast %cst_154 : f32 to vector<2x32xf32>
    %432 = arith.mulf %431, %430 : vector<2x32xf32>
    %433 = arith.mulf %422, %380 : vector<2x32xf32>
    %434 = arith.mulf %414, %424 : vector<2x32xf32>
    %435 = arith.addf %433, %434 : vector<2x32xf32>
    %436 = math.tanh %435 : vector<2x32xf32>
    %437 = arith.mulf %432, %436 : vector<2x32xf32>
    %438 = vector.extract_strided_slice %437 {offsets = [0, 0], sizes = [1, 32], strides = [1, 1]} : vector<2x32xf32> to vector<1x32xf32>
    %c0_155 = arith.constant 0 : index
    %439 = memref.load %arg1[%c0_155] : memref<2xi32, #tpu.memory_space<smem>>
    %c7_i32 = arith.constant 7 : i32
    %440 = arith.cmpi sgt, %439, %c7_i32 : i32
    %441 = arith.extui %440 : i1 to i32
    %442 = arith.sitofp %441 : i32 to f32
    %443 = vector.broadcast %442 : f32 to vector<1x32xf32>
    %444 = arith.mulf %438, %443 : vector<1x32xf32>
    %445 = vector.extract_strided_slice %437 {offsets = [1, 0], sizes = [1, 32], strides = [1, 1]} : vector<2x32xf32> to vector<1x32xf32>
    %c1_156 = arith.constant 1 : index
    %446 = memref.load %arg1[%c1_156] : memref<2xi32, #tpu.memory_space<smem>>
    %c7_i32_157 = arith.constant 7 : i32
    %447 = arith.cmpi sgt, %446, %c7_i32_157 : i32
    %448 = arith.extui %447 : i1 to i32
    %449 = arith.sitofp %448 : i32 to f32
    %450 = vector.broadcast %449 : f32 to vector<1x32xf32>
    %451 = arith.mulf %445, %450 : vector<1x32xf32>
    %452 = tpu.concatenate %444, %451 in 0 : vector<1x32xf32>, vector<1x32xf32> -> vector<2x32xf32>
    %c7_158 = arith.constant 7 : index
    %c0_159 = arith.constant 0 : index
    %c0_160 = arith.constant 0 : index
    %453 = vector.load %arg8[%c7_158, %c0_159, %c0_160] : memref<16x2x32xf32, #tpu.memory_space<vmem>>, vector<1x2x32xf32>
    %454 = vector.shape_cast %453 : vector<1x2x32xf32> to vector<2x32xf32>
    %455 = vector.shape_cast %452 : vector<2x32xf32> to vector<1x2x32xf32>
    tpu.vector_store %arg8[%c7_158, %c0_159, %c0_160], %455 {strides = array<i32>} : memref<16x2x32xf32, #tpu.memory_space<vmem>>, vector<1x2x32xf32>,
    %c8 = arith.constant 8 : index
    %c0_161 = arith.constant 0 : index
    %456 = vector.load %arg9[%c8, %c0_161] : memref<32x128xf32, #tpu.memory_space<vmem>>, vector<1x128xf32>
    %c24 = arith.constant 24 : index
    %c0_162 = arith.constant 0 : index
    %457 = vector.load %arg9[%c24, %c0_162] : memref<32x128xf32, #tpu.memory_space<vmem>>, vector<1x128xf32>
    %458 = tpu.concatenate %456, %457 in 0 : vector<1x128xf32>, vector<1x128xf32> -> vector<2x128xf32>
    %459 = arith.truncf %437 : vector<2x32xf32> to vector<2x32xbf16>
    %cst_163 = arith.constant dense<0.000000e+00> : vector<2x128xf32>
    %460 = tpu.matmul %459, %13, %cst_163 {dimension_numbers = #tpu.dot_dimension_numbers<[1], [0], [0], [1], [0, 0, 1, 1], [], []>} : vector<2x32xbf16>, vector<32x128xbf16>, vector<2x128xf32> -> vector<2x128xf32>
    %461 = arith.addf %458, %460 : vector<2x128xf32>
    %462 = vector.extract_strided_slice %461 {offsets = [0, 0], sizes = [2, 32], strides = [1, 1]} : vector<2x128xf32> to vector<2x32xf32>
    %cst_164 = arith.constant 5.000000e-01 : f32
    %463 = vector.broadcast %cst_164 : f32 to vector<2x32xf32>
    %464 = arith.mulf %463, %462 : vector<2x32xf32>
    %465 = math.tanh %464 : vector<2x32xf32>
    %cst_165 = arith.constant 1.000000e+00 : f32
    %466 = vector.broadcast %cst_165 : f32 to vector<2x32xf32>
    %467 = arith.addf %465, %466 : vector<2x32xf32>
    %cst_166 = arith.constant 5.000000e-01 : f32
    %468 = vector.broadcast %cst_166 : f32 to vector<2x32xf32>
    %469 = arith.mulf %468, %467 : vector<2x32xf32>
    %470 = vector.extract_strided_slice %461 {offsets = [0, 32], sizes = [2, 32], strides = [1, 1]} : vector<2x128xf32> to vector<2x32xf32>
    %cst_167 = arith.constant 5.000000e-01 : f32
    %471 = vector.broadcast %cst_167 : f32 to vector<2x32xf32>
    %472 = arith.mulf %471, %470 : vector<2x32xf32>
    %473 = math.tanh %472 : vector<2x32xf32>
    %cst_168 = arith.constant 1.000000e+00 : f32
    %474 = vector.broadcast %cst_168 : f32 to vector<2x32xf32>
    %475 = arith.addf %473, %474 : vector<2x32xf32>
    %cst_169 = arith.constant 5.000000e-01 : f32
    %476 = vector.broadcast %cst_169 : f32 to vector<2x32xf32>
    %477 = arith.mulf %476, %475 : vector<2x32xf32>
    %478 = vector.extract_strided_slice %461 {offsets = [0, 64], sizes = [2, 32], strides = [1, 1]} : vector<2x128xf32> to vector<2x32xf32>
    %479 = math.tanh %478 : vector<2x32xf32>
    %480 = vector.extract_strided_slice %461 {offsets = [0, 96], sizes = [2, 32], strides = [1, 1]} : vector<2x128xf32> to vector<2x32xf32>
    %cst_170 = arith.constant 5.000000e-01 : f32
    %481 = vector.broadcast %cst_170 : f32 to vector<2x32xf32>
    %482 = arith.mulf %481, %480 : vector<2x32xf32>
    %483 = math.tanh %482 : vector<2x32xf32>
    %cst_171 = arith.constant 1.000000e+00 : f32
    %484 = vector.broadcast %cst_171 : f32 to vector<2x32xf32>
    %485 = arith.addf %483, %484 : vector<2x32xf32>
    %cst_172 = arith.constant 5.000000e-01 : f32
    %486 = vector.broadcast %cst_172 : f32 to vector<2x32xf32>
    %487 = arith.mulf %486, %485 : vector<2x32xf32>
    %488 = arith.mulf %477, %435 : vector<2x32xf32>
    %489 = arith.mulf %469, %479 : vector<2x32xf32>
    %490 = arith.addf %488, %489 : vector<2x32xf32>
    %491 = math.tanh %490 : vector<2x32xf32>
    %492 = arith.mulf %487, %491 : vector<2x32xf32>
    %493 = vector.extract_strided_slice %492 {offsets = [0, 0], sizes = [1, 32], strides = [1, 1]} : vector<2x32xf32> to vector<1x32xf32>
    %c0_173 = arith.constant 0 : index
    %494 = memref.load %arg1[%c0_173] : memref<2xi32, #tpu.memory_space<smem>>
    %c8_i32 = arith.constant 8 : i32
    %495 = arith.cmpi sgt, %494, %c8_i32 : i32
    %496 = arith.extui %495 : i1 to i32
    %497 = arith.sitofp %496 : i32 to f32
    %498 = vector.broadcast %497 : f32 to vector<1x32xf32>
    %499 = arith.mulf %493, %498 : vector<1x32xf32>
    %500 = vector.extract_strided_slice %492 {offsets = [1, 0], sizes = [1, 32], strides = [1, 1]} : vector<2x32xf32> to vector<1x32xf32>
    %c1_174 = arith.constant 1 : index
    %501 = memref.load %arg1[%c1_174] : memref<2xi32, #tpu.memory_space<smem>>
    %c8_i32_175 = arith.constant 8 : i32
    %502 = arith.cmpi sgt, %501, %c8_i32_175 : i32
    %503 = arith.extui %502 : i1 to i32
    %504 = arith.sitofp %503 : i32 to f32
    %505 = vector.broadcast %504 : f32 to vector<1x32xf32>
    %506 = arith.mulf %500, %505 : vector<1x32xf32>
    %507 = tpu.concatenate %499, %506 in 0 : vector<1x32xf32>, vector<1x32xf32> -> vector<2x32xf32>
    %c8_176 = arith.constant 8 : index
    %c0_177 = arith.constant 0 : index
    %c0_178 = arith.constant 0 : index
    %508 = vector.load %arg8[%c8_176, %c0_177, %c0_178] : memref<16x2x32xf32, #tpu.memory_space<vmem>>, vector<1x2x32xf32>
    %509 = vector.shape_cast %508 : vector<1x2x32xf32> to vector<2x32xf32>
    %510 = vector.shape_cast %507 : vector<2x32xf32> to vector<1x2x32xf32>
    tpu.vector_store %arg8[%c8_176, %c0_177, %c0_178], %510 {strides = array<i32>} : memref<16x2x32xf32, #tpu.memory_space<vmem>>, vector<1x2x32xf32>,
    %c9 = arith.constant 9 : index
    %c0_179 = arith.constant 0 : index
    %511 = vector.load %arg9[%c9, %c0_179] : memref<32x128xf32, #tpu.memory_space<vmem>>, vector<1x128xf32>
    %c25 = arith.constant 25 : index
    %c0_180 = arith.constant 0 : index
    %512 = vector.load %arg9[%c25, %c0_180] : memref<32x128xf32, #tpu.memory_space<vmem>>, vector<1x128xf32>
    %513 = tpu.concatenate %511, %512 in 0 : vector<1x128xf32>, vector<1x128xf32> -> vector<2x128xf32>
    %514 = arith.truncf %492 : vector<2x32xf32> to vector<2x32xbf16>
    %cst_181 = arith.constant dense<0.000000e+00> : vector<2x128xf32>
    %515 = tpu.matmul %514, %13, %cst_181 {dimension_numbers = #tpu.dot_dimension_numbers<[1], [0], [0], [1], [0, 0, 1, 1], [], []>} : vector<2x32xbf16>, vector<32x128xbf16>, vector<2x128xf32> -> vector<2x128xf32>
    %516 = arith.addf %513, %515 : vector<2x128xf32>
    %517 = vector.extract_strided_slice %516 {offsets = [0, 0], sizes = [2, 32], strides = [1, 1]} : vector<2x128xf32> to vector<2x32xf32>
    %cst_182 = arith.constant 5.000000e-01 : f32
    %518 = vector.broadcast %cst_182 : f32 to vector<2x32xf32>
    %519 = arith.mulf %518, %517 : vector<2x32xf32>
    %520 = math.tanh %519 : vector<2x32xf32>
    %cst_183 = arith.constant 1.000000e+00 : f32
    %521 = vector.broadcast %cst_183 : f32 to vector<2x32xf32>
    %522 = arith.addf %520, %521 : vector<2x32xf32>
    %cst_184 = arith.constant 5.000000e-01 : f32
    %523 = vector.broadcast %cst_184 : f32 to vector<2x32xf32>
    %524 = arith.mulf %523, %522 : vector<2x32xf32>
    %525 = vector.extract_strided_slice %516 {offsets = [0, 32], sizes = [2, 32], strides = [1, 1]} : vector<2x128xf32> to vector<2x32xf32>
    %cst_185 = arith.constant 5.000000e-01 : f32
    %526 = vector.broadcast %cst_185 : f32 to vector<2x32xf32>
    %527 = arith.mulf %526, %525 : vector<2x32xf32>
    %528 = math.tanh %527 : vector<2x32xf32>
    %cst_186 = arith.constant 1.000000e+00 : f32
    %529 = vector.broadcast %cst_186 : f32 to vector<2x32xf32>
    %530 = arith.addf %528, %529 : vector<2x32xf32>
    %cst_187 = arith.constant 5.000000e-01 : f32
    %531 = vector.broadcast %cst_187 : f32 to vector<2x32xf32>
    %532 = arith.mulf %531, %530 : vector<2x32xf32>
    %533 = vector.extract_strided_slice %516 {offsets = [0, 64], sizes = [2, 32], strides = [1, 1]} : vector<2x128xf32> to vector<2x32xf32>
    %534 = math.tanh %533 : vector<2x32xf32>
    %535 = vector.extract_strided_slice %516 {offsets = [0, 96], sizes = [2, 32], strides = [1, 1]} : vector<2x128xf32> to vector<2x32xf32>
    %cst_188 = arith.constant 5.000000e-01 : f32
    %536 = vector.broadcast %cst_188 : f32 to vector<2x32xf32>
    %537 = arith.mulf %536, %535 : vector<2x32xf32>
    %538 = math.tanh %537 : vector<2x32xf32>
    %cst_189 = arith.constant 1.000000e+00 : f32
    %539 = vector.broadcast %cst_189 : f32 to vector<2x32xf32>
    %540 = arith.addf %538, %539 : vector<2x32xf32>
    %cst_190 = arith.constant 5.000000e-01 : f32
    %541 = vector.broadcast %cst_190 : f32 to vector<2x32xf32>
    %542 = arith.mulf %541, %540 : vector<2x32xf32>
    %543 = arith.mulf %532, %490 : vector<2x32xf32>
    %544 = arith.mulf %524, %534 : vector<2x32xf32>
    %545 = arith.addf %543, %544 : vector<2x32xf32>
    %546 = math.tanh %545 : vector<2x32xf32>
    %547 = arith.mulf %542, %546 : vector<2x32xf32>
    %548 = vector.extract_strided_slice %547 {offsets = [0, 0], sizes = [1, 32], strides = [1, 1]} : vector<2x32xf32> to vector<1x32xf32>
    %c0_191 = arith.constant 0 : index
    %549 = memref.load %arg1[%c0_191] : memref<2xi32, #tpu.memory_space<smem>>
    %c9_i32 = arith.constant 9 : i32
    %550 = arith.cmpi sgt, %549, %c9_i32 : i32
    %551 = arith.extui %550 : i1 to i32
    %552 = arith.sitofp %551 : i32 to f32
    %553 = vector.broadcast %552 : f32 to vector<1x32xf32>
    %554 = arith.mulf %548, %553 : vector<1x32xf32>
    %555 = vector.extract_strided_slice %547 {offsets = [1, 0], sizes = [1, 32], strides = [1, 1]} : vector<2x32xf32> to vector<1x32xf32>
    %c1_192 = arith.constant 1 : index
    %556 = memref.load %arg1[%c1_192] : memref<2xi32, #tpu.memory_space<smem>>
    %c9_i32_193 = arith.constant 9 : i32
    %557 = arith.cmpi sgt, %556, %c9_i32_193 : i32
    %558 = arith.extui %557 : i1 to i32
    %559 = arith.sitofp %558 : i32 to f32
    %560 = vector.broadcast %559 : f32 to vector<1x32xf32>
    %561 = arith.mulf %555, %560 : vector<1x32xf32>
    %562 = tpu.concatenate %554, %561 in 0 : vector<1x32xf32>, vector<1x32xf32> -> vector<2x32xf32>
    %c9_194 = arith.constant 9 : index
    %c0_195 = arith.constant 0 : index
    %c0_196 = arith.constant 0 : index
    %563 = vector.load %arg8[%c9_194, %c0_195, %c0_196] : memref<16x2x32xf32, #tpu.memory_space<vmem>>, vector<1x2x32xf32>
    %564 = vector.shape_cast %563 : vector<1x2x32xf32> to vector<2x32xf32>
    %565 = vector.shape_cast %562 : vector<2x32xf32> to vector<1x2x32xf32>
    tpu.vector_store %arg8[%c9_194, %c0_195, %c0_196], %565 {strides = array<i32>} : memref<16x2x32xf32, #tpu.memory_space<vmem>>, vector<1x2x32xf32>,
    %c10 = arith.constant 10 : index
    %c0_197 = arith.constant 0 : index
    %566 = vector.load %arg9[%c10, %c0_197] : memref<32x128xf32, #tpu.memory_space<vmem>>, vector<1x128xf32>
    %c26 = arith.constant 26 : index
    %c0_198 = arith.constant 0 : index
    %567 = vector.load %arg9[%c26, %c0_198] : memref<32x128xf32, #tpu.memory_space<vmem>>, vector<1x128xf32>
    %568 = tpu.concatenate %566, %567 in 0 : vector<1x128xf32>, vector<1x128xf32> -> vector<2x128xf32>
    %569 = arith.truncf %547 : vector<2x32xf32> to vector<2x32xbf16>
    %cst_199 = arith.constant dense<0.000000e+00> : vector<2x128xf32>
    %570 = tpu.matmul %569, %13, %cst_199 {dimension_numbers = #tpu.dot_dimension_numbers<[1], [0], [0], [1], [0, 0, 1, 1], [], []>} : vector<2x32xbf16>, vector<32x128xbf16>, vector<2x128xf32> -> vector<2x128xf32>
    %571 = arith.addf %568, %570 : vector<2x128xf32>
    %572 = vector.extract_strided_slice %571 {offsets = [0, 0], sizes = [2, 32], strides = [1, 1]} : vector<2x128xf32> to vector<2x32xf32>
    %cst_200 = arith.constant 5.000000e-01 : f32
    %573 = vector.broadcast %cst_200 : f32 to vector<2x32xf32>
    %574 = arith.mulf %573, %572 : vector<2x32xf32>
    %575 = math.tanh %574 : vector<2x32xf32>
    %cst_201 = arith.constant 1.000000e+00 : f32
    %576 = vector.broadcast %cst_201 : f32 to vector<2x32xf32>
    %577 = arith.addf %575, %576 : vector<2x32xf32>
    %cst_202 = arith.constant 5.000000e-01 : f32
    %578 = vector.broadcast %cst_202 : f32 to vector<2x32xf32>
    %579 = arith.mulf %578, %577 : vector<2x32xf32>
    %580 = vector.extract_strided_slice %571 {offsets = [0, 32], sizes = [2, 32], strides = [1, 1]} : vector<2x128xf32> to vector<2x32xf32>
    %cst_203 = arith.constant 5.000000e-01 : f32
    %581 = vector.broadcast %cst_203 : f32 to vector<2x32xf32>
    %582 = arith.mulf %581, %580 : vector<2x32xf32>
    %583 = math.tanh %582 : vector<2x32xf32>
    %cst_204 = arith.constant 1.000000e+00 : f32
    %584 = vector.broadcast %cst_204 : f32 to vector<2x32xf32>
    %585 = arith.addf %583, %584 : vector<2x32xf32>
    %cst_205 = arith.constant 5.000000e-01 : f32
    %586 = vector.broadcast %cst_205 : f32 to vector<2x32xf32>
    %587 = arith.mulf %586, %585 : vector<2x32xf32>
    %588 = vector.extract_strided_slice %571 {offsets = [0, 64], sizes = [2, 32], strides = [1, 1]} : vector<2x128xf32> to vector<2x32xf32>
    %589 = math.tanh %588 : vector<2x32xf32>
    %590 = vector.extract_strided_slice %571 {offsets = [0, 96], sizes = [2, 32], strides = [1, 1]} : vector<2x128xf32> to vector<2x32xf32>
    %cst_206 = arith.constant 5.000000e-01 : f32
    %591 = vector.broadcast %cst_206 : f32 to vector<2x32xf32>
    %592 = arith.mulf %591, %590 : vector<2x32xf32>
    %593 = math.tanh %592 : vector<2x32xf32>
    %cst_207 = arith.constant 1.000000e+00 : f32
    %594 = vector.broadcast %cst_207 : f32 to vector<2x32xf32>
    %595 = arith.addf %593, %594 : vector<2x32xf32>
    %cst_208 = arith.constant 5.000000e-01 : f32
    %596 = vector.broadcast %cst_208 : f32 to vector<2x32xf32>
    %597 = arith.mulf %596, %595 : vector<2x32xf32>
    %598 = arith.mulf %587, %545 : vector<2x32xf32>
    %599 = arith.mulf %579, %589 : vector<2x32xf32>
    %600 = arith.addf %598, %599 : vector<2x32xf32>
    %601 = math.tanh %600 : vector<2x32xf32>
    %602 = arith.mulf %597, %601 : vector<2x32xf32>
    %603 = vector.extract_strided_slice %602 {offsets = [0, 0], sizes = [1, 32], strides = [1, 1]} : vector<2x32xf32> to vector<1x32xf32>
    %c0_209 = arith.constant 0 : index
    %604 = memref.load %arg1[%c0_209] : memref<2xi32, #tpu.memory_space<smem>>
    %c10_i32 = arith.constant 10 : i32
    %605 = arith.cmpi sgt, %604, %c10_i32 : i32
    %606 = arith.extui %605 : i1 to i32
    %607 = arith.sitofp %606 : i32 to f32
    %608 = vector.broadcast %607 : f32 to vector<1x32xf32>
    %609 = arith.mulf %603, %608 : vector<1x32xf32>
    %610 = vector.extract_strided_slice %602 {offsets = [1, 0], sizes = [1, 32], strides = [1, 1]} : vector<2x32xf32> to vector<1x32xf32>
    %c1_210 = arith.constant 1 : index
    %611 = memref.load %arg1[%c1_210] : memref<2xi32, #tpu.memory_space<smem>>
    %c10_i32_211 = arith.constant 10 : i32
    %612 = arith.cmpi sgt, %611, %c10_i32_211 : i32
    %613 = arith.extui %612 : i1 to i32
    %614 = arith.sitofp %613 : i32 to f32
    %615 = vector.broadcast %614 : f32 to vector<1x32xf32>
    %616 = arith.mulf %610, %615 : vector<1x32xf32>
    %617 = tpu.concatenate %609, %616 in 0 : vector<1x32xf32>, vector<1x32xf32> -> vector<2x32xf32>
    %c10_212 = arith.constant 10 : index
    %c0_213 = arith.constant 0 : index
    %c0_214 = arith.constant 0 : index
    %618 = vector.load %arg8[%c10_212, %c0_213, %c0_214] : memref<16x2x32xf32, #tpu.memory_space<vmem>>, vector<1x2x32xf32>
    %619 = vector.shape_cast %618 : vector<1x2x32xf32> to vector<2x32xf32>
    %620 = vector.shape_cast %617 : vector<2x32xf32> to vector<1x2x32xf32>
    tpu.vector_store %arg8[%c10_212, %c0_213, %c0_214], %620 {strides = array<i32>} : memref<16x2x32xf32, #tpu.memory_space<vmem>>, vector<1x2x32xf32>,
    %c11 = arith.constant 11 : index
    %c0_215 = arith.constant 0 : index
    %621 = vector.load %arg9[%c11, %c0_215] : memref<32x128xf32, #tpu.memory_space<vmem>>, vector<1x128xf32>
    %c27 = arith.constant 27 : index
    %c0_216 = arith.constant 0 : index
    %622 = vector.load %arg9[%c27, %c0_216] : memref<32x128xf32, #tpu.memory_space<vmem>>, vector<1x128xf32>
    %623 = tpu.concatenate %621, %622 in 0 : vector<1x128xf32>, vector<1x128xf32> -> vector<2x128xf32>
    %624 = arith.truncf %602 : vector<2x32xf32> to vector<2x32xbf16>
    %cst_217 = arith.constant dense<0.000000e+00> : vector<2x128xf32>
    %625 = tpu.matmul %624, %13, %cst_217 {dimension_numbers = #tpu.dot_dimension_numbers<[1], [0], [0], [1], [0, 0, 1, 1], [], []>} : vector<2x32xbf16>, vector<32x128xbf16>, vector<2x128xf32> -> vector<2x128xf32>
    %626 = arith.addf %623, %625 : vector<2x128xf32>
    %627 = vector.extract_strided_slice %626 {offsets = [0, 0], sizes = [2, 32], strides = [1, 1]} : vector<2x128xf32> to vector<2x32xf32>
    %cst_218 = arith.constant 5.000000e-01 : f32
    %628 = vector.broadcast %cst_218 : f32 to vector<2x32xf32>
    %629 = arith.mulf %628, %627 : vector<2x32xf32>
    %630 = math.tanh %629 : vector<2x32xf32>
    %cst_219 = arith.constant 1.000000e+00 : f32
    %631 = vector.broadcast %cst_219 : f32 to vector<2x32xf32>
    %632 = arith.addf %630, %631 : vector<2x32xf32>
    %cst_220 = arith.constant 5.000000e-01 : f32
    %633 = vector.broadcast %cst_220 : f32 to vector<2x32xf32>
    %634 = arith.mulf %633, %632 : vector<2x32xf32>
    %635 = vector.extract_strided_slice %626 {offsets = [0, 32], sizes = [2, 32], strides = [1, 1]} : vector<2x128xf32> to vector<2x32xf32>
    %cst_221 = arith.constant 5.000000e-01 : f32
    %636 = vector.broadcast %cst_221 : f32 to vector<2x32xf32>
    %637 = arith.mulf %636, %635 : vector<2x32xf32>
    %638 = math.tanh %637 : vector<2x32xf32>
    %cst_222 = arith.constant 1.000000e+00 : f32
    %639 = vector.broadcast %cst_222 : f32 to vector<2x32xf32>
    %640 = arith.addf %638, %639 : vector<2x32xf32>
    %cst_223 = arith.constant 5.000000e-01 : f32
    %641 = vector.broadcast %cst_223 : f32 to vector<2x32xf32>
    %642 = arith.mulf %641, %640 : vector<2x32xf32>
    %643 = vector.extract_strided_slice %626 {offsets = [0, 64], sizes = [2, 32], strides = [1, 1]} : vector<2x128xf32> to vector<2x32xf32>
    %644 = math.tanh %643 : vector<2x32xf32>
    %645 = vector.extract_strided_slice %626 {offsets = [0, 96], sizes = [2, 32], strides = [1, 1]} : vector<2x128xf32> to vector<2x32xf32>
    %cst_224 = arith.constant 5.000000e-01 : f32
    %646 = vector.broadcast %cst_224 : f32 to vector<2x32xf32>
    %647 = arith.mulf %646, %645 : vector<2x32xf32>
    %648 = math.tanh %647 : vector<2x32xf32>
    %cst_225 = arith.constant 1.000000e+00 : f32
    %649 = vector.broadcast %cst_225 : f32 to vector<2x32xf32>
    %650 = arith.addf %648, %649 : vector<2x32xf32>
    %cst_226 = arith.constant 5.000000e-01 : f32
    %651 = vector.broadcast %cst_226 : f32 to vector<2x32xf32>
    %652 = arith.mulf %651, %650 : vector<2x32xf32>
    %653 = arith.mulf %642, %600 : vector<2x32xf32>
    %654 = arith.mulf %634, %644 : vector<2x32xf32>
    %655 = arith.addf %653, %654 : vector<2x32xf32>
    %656 = math.tanh %655 : vector<2x32xf32>
    %657 = arith.mulf %652, %656 : vector<2x32xf32>
    %658 = vector.extract_strided_slice %657 {offsets = [0, 0], sizes = [1, 32], strides = [1, 1]} : vector<2x32xf32> to vector<1x32xf32>
    %c0_227 = arith.constant 0 : index
    %659 = memref.load %arg1[%c0_227] : memref<2xi32, #tpu.memory_space<smem>>
    %c11_i32 = arith.constant 11 : i32
    %660 = arith.cmpi sgt, %659, %c11_i32 : i32
    %661 = arith.extui %660 : i1 to i32
    %662 = arith.sitofp %661 : i32 to f32
    %663 = vector.broadcast %662 : f32 to vector<1x32xf32>
    %664 = arith.mulf %658, %663 : vector<1x32xf32>
    %665 = vector.extract_strided_slice %657 {offsets = [1, 0], sizes = [1, 32], strides = [1, 1]} : vector<2x32xf32> to vector<1x32xf32>
    %c1_228 = arith.constant 1 : index
    %666 = memref.load %arg1[%c1_228] : memref<2xi32, #tpu.memory_space<smem>>
    %c11_i32_229 = arith.constant 11 : i32
    %667 = arith.cmpi sgt, %666, %c11_i32_229 : i32
    %668 = arith.extui %667 : i1 to i32
    %669 = arith.sitofp %668 : i32 to f32
    %670 = vector.broadcast %669 : f32 to vector<1x32xf32>
    %671 = arith.mulf %665, %670 : vector<1x32xf32>
    %672 = tpu.concatenate %664, %671 in 0 : vector<1x32xf32>, vector<1x32xf32> -> vector<2x32xf32>
    %c11_230 = arith.constant 11 : index
    %c0_231 = arith.constant 0 : index
    %c0_232 = arith.constant 0 : index
    %673 = vector.load %arg8[%c11_230, %c0_231, %c0_232] : memref<16x2x32xf32, #tpu.memory_space<vmem>>, vector<1x2x32xf32>
    %674 = vector.shape_cast %673 : vector<1x2x32xf32> to vector<2x32xf32>
    %675 = vector.shape_cast %672 : vector<2x32xf32> to vector<1x2x32xf32>
    tpu.vector_store %arg8[%c11_230, %c0_231, %c0_232], %675 {strides = array<i32>} : memref<16x2x32xf32, #tpu.memory_space<vmem>>, vector<1x2x32xf32>,
    %c12 = arith.constant 12 : index
    %c0_233 = arith.constant 0 : index
    %676 = vector.load %arg9[%c12, %c0_233] : memref<32x128xf32, #tpu.memory_space<vmem>>, vector<1x128xf32>
    %c28 = arith.constant 28 : index
    %c0_234 = arith.constant 0 : index
    %677 = vector.load %arg9[%c28, %c0_234] : memref<32x128xf32, #tpu.memory_space<vmem>>, vector<1x128xf32>
    %678 = tpu.concatenate %676, %677 in 0 : vector<1x128xf32>, vector<1x128xf32> -> vector<2x128xf32>
    %679 = arith.truncf %657 : vector<2x32xf32> to vector<2x32xbf16>
    %cst_235 = arith.constant dense<0.000000e+00> : vector<2x128xf32>
    %680 = tpu.matmul %679, %13, %cst_235 {dimension_numbers = #tpu.dot_dimension_numbers<[1], [0], [0], [1], [0, 0, 1, 1], [], []>} : vector<2x32xbf16>, vector<32x128xbf16>, vector<2x128xf32> -> vector<2x128xf32>
    %681 = arith.addf %678, %680 : vector<2x128xf32>
    %682 = vector.extract_strided_slice %681 {offsets = [0, 0], sizes = [2, 32], strides = [1, 1]} : vector<2x128xf32> to vector<2x32xf32>
    %cst_236 = arith.constant 5.000000e-01 : f32
    %683 = vector.broadcast %cst_236 : f32 to vector<2x32xf32>
    %684 = arith.mulf %683, %682 : vector<2x32xf32>
    %685 = math.tanh %684 : vector<2x32xf32>
    %cst_237 = arith.constant 1.000000e+00 : f32
    %686 = vector.broadcast %cst_237 : f32 to vector<2x32xf32>
    %687 = arith.addf %685, %686 : vector<2x32xf32>
    %cst_238 = arith.constant 5.000000e-01 : f32
    %688 = vector.broadcast %cst_238 : f32 to vector<2x32xf32>
    %689 = arith.mulf %688, %687 : vector<2x32xf32>
    %690 = vector.extract_strided_slice %681 {offsets = [0, 32], sizes = [2, 32], strides = [1, 1]} : vector<2x128xf32> to vector<2x32xf32>
    %cst_239 = arith.constant 5.000000e-01 : f32
    %691 = vector.broadcast %cst_239 : f32 to vector<2x32xf32>
    %692 = arith.mulf %691, %690 : vector<2x32xf32>
    %693 = math.tanh %692 : vector<2x32xf32>
    %cst_240 = arith.constant 1.000000e+00 : f32
    %694 = vector.broadcast %cst_240 : f32 to vector<2x32xf32>
    %695 = arith.addf %693, %694 : vector<2x32xf32>
    %cst_241 = arith.constant 5.000000e-01 : f32
    %696 = vector.broadcast %cst_241 : f32 to vector<2x32xf32>
    %697 = arith.mulf %696, %695 : vector<2x32xf32>
    %698 = vector.extract_strided_slice %681 {offsets = [0, 64], sizes = [2, 32], strides = [1, 1]} : vector<2x128xf32> to vector<2x32xf32>
    %699 = math.tanh %698 : vector<2x32xf32>
    %700 = vector.extract_strided_slice %681 {offsets = [0, 96], sizes = [2, 32], strides = [1, 1]} : vector<2x128xf32> to vector<2x32xf32>
    %cst_242 = arith.constant 5.000000e-01 : f32
    %701 = vector.broadcast %cst_242 : f32 to vector<2x32xf32>
    %702 = arith.mulf %701, %700 : vector<2x32xf32>
    %703 = math.tanh %702 : vector<2x32xf32>
    %cst_243 = arith.constant 1.000000e+00 : f32
    %704 = vector.broadcast %cst_243 : f32 to vector<2x32xf32>
    %705 = arith.addf %703, %704 : vector<2x32xf32>
    %cst_244 = arith.constant 5.000000e-01 : f32
    %706 = vector.broadcast %cst_244 : f32 to vector<2x32xf32>
    %707 = arith.mulf %706, %705 : vector<2x32xf32>
    %708 = arith.mulf %697, %655 : vector<2x32xf32>
    %709 = arith.mulf %689, %699 : vector<2x32xf32>
    %710 = arith.addf %708, %709 : vector<2x32xf32>
    %711 = math.tanh %710 : vector<2x32xf32>
    %712 = arith.mulf %707, %711 : vector<2x32xf32>
    %713 = vector.extract_strided_slice %712 {offsets = [0, 0], sizes = [1, 32], strides = [1, 1]} : vector<2x32xf32> to vector<1x32xf32>
    %c0_245 = arith.constant 0 : index
    %714 = memref.load %arg1[%c0_245] : memref<2xi32, #tpu.memory_space<smem>>
    %c12_i32 = arith.constant 12 : i32
    %715 = arith.cmpi sgt, %714, %c12_i32 : i32
    %716 = arith.extui %715 : i1 to i32
    %717 = arith.sitofp %716 : i32 to f32
    %718 = vector.broadcast %717 : f32 to vector<1x32xf32>
    %719 = arith.mulf %713, %718 : vector<1x32xf32>
    %720 = vector.extract_strided_slice %712 {offsets = [1, 0], sizes = [1, 32], strides = [1, 1]} : vector<2x32xf32> to vector<1x32xf32>
    %c1_246 = arith.constant 1 : index
    %721 = memref.load %arg1[%c1_246] : memref<2xi32, #tpu.memory_space<smem>>
    %c12_i32_247 = arith.constant 12 : i32
    %722 = arith.cmpi sgt, %721, %c12_i32_247 : i32
    %723 = arith.extui %722 : i1 to i32
    %724 = arith.sitofp %723 : i32 to f32
    %725 = vector.broadcast %724 : f32 to vector<1x32xf32>
    %726 = arith.mulf %720, %725 : vector<1x32xf32>
    %727 = tpu.concatenate %719, %726 in 0 : vector<1x32xf32>, vector<1x32xf32> -> vector<2x32xf32>
    %c12_248 = arith.constant 12 : index
    %c0_249 = arith.constant 0 : index
    %c0_250 = arith.constant 0 : index
    %728 = vector.load %arg8[%c12_248, %c0_249, %c0_250] : memref<16x2x32xf32, #tpu.memory_space<vmem>>, vector<1x2x32xf32>
    %729 = vector.shape_cast %728 : vector<1x2x32xf32> to vector<2x32xf32>
    %730 = vector.shape_cast %727 : vector<2x32xf32> to vector<1x2x32xf32>
    tpu.vector_store %arg8[%c12_248, %c0_249, %c0_250], %730 {strides = array<i32>} : memref<16x2x32xf32, #tpu.memory_space<vmem>>, vector<1x2x32xf32>,
    %c13 = arith.constant 13 : index
    %c0_251 = arith.constant 0 : index
    %731 = vector.load %arg9[%c13, %c0_251] : memref<32x128xf32, #tpu.memory_space<vmem>>, vector<1x128xf32>
    %c29 = arith.constant 29 : index
    %c0_252 = arith.constant 0 : index
    %732 = vector.load %arg9[%c29, %c0_252] : memref<32x128xf32, #tpu.memory_space<vmem>>, vector<1x128xf32>
    %733 = tpu.concatenate %731, %732 in 0 : vector<1x128xf32>, vector<1x128xf32> -> vector<2x128xf32>
    %734 = arith.truncf %712 : vector<2x32xf32> to vector<2x32xbf16>
    %cst_253 = arith.constant dense<0.000000e+00> : vector<2x128xf32>
    %735 = tpu.matmul %734, %13, %cst_253 {dimension_numbers = #tpu.dot_dimension_numbers<[1], [0], [0], [1], [0, 0, 1, 1], [], []>} : vector<2x32xbf16>, vector<32x128xbf16>, vector<2x128xf32> -> vector<2x128xf32>
    %736 = arith.addf %733, %735 : vector<2x128xf32>
    %737 = vector.extract_strided_slice %736 {offsets = [0, 0], sizes = [2, 32], strides = [1, 1]} : vector<2x128xf32> to vector<2x32xf32>
    %cst_254 = arith.constant 5.000000e-01 : f32
    %738 = vector.broadcast %cst_254 : f32 to vector<2x32xf32>
    %739 = arith.mulf %738, %737 : vector<2x32xf32>
    %740 = math.tanh %739 : vector<2x32xf32>
    %cst_255 = arith.constant 1.000000e+00 : f32
    %741 = vector.broadcast %cst_255 : f32 to vector<2x32xf32>
    %742 = arith.addf %740, %741 : vector<2x32xf32>
    %cst_256 = arith.constant 5.000000e-01 : f32
    %743 = vector.broadcast %cst_256 : f32 to vector<2x32xf32>
    %744 = arith.mulf %743, %742 : vector<2x32xf32>
    %745 = vector.extract_strided_slice %736 {offsets = [0, 32], sizes = [2, 32], strides = [1, 1]} : vector<2x128xf32> to vector<2x32xf32>
    %cst_257 = arith.constant 5.000000e-01 : f32
    %746 = vector.broadcast %cst_257 : f32 to vector<2x32xf32>
    %747 = arith.mulf %746, %745 : vector<2x32xf32>
    %748 = math.tanh %747 : vector<2x32xf32>
    %cst_258 = arith.constant 1.000000e+00 : f32
    %749 = vector.broadcast %cst_258 : f32 to vector<2x32xf32>
    %750 = arith.addf %748, %749 : vector<2x32xf32>
    %cst_259 = arith.constant 5.000000e-01 : f32
    %751 = vector.broadcast %cst_259 : f32 to vector<2x32xf32>
    %752 = arith.mulf %751, %750 : vector<2x32xf32>
    %753 = vector.extract_strided_slice %736 {offsets = [0, 64], sizes = [2, 32], strides = [1, 1]} : vector<2x128xf32> to vector<2x32xf32>
    %754 = math.tanh %753 : vector<2x32xf32>
    %755 = vector.extract_strided_slice %736 {offsets = [0, 96], sizes = [2, 32], strides = [1, 1]} : vector<2x128xf32> to vector<2x32xf32>
    %cst_260 = arith.constant 5.000000e-01 : f32
    %756 = vector.broadcast %cst_260 : f32 to vector<2x32xf32>
    %757 = arith.mulf %756, %755 : vector<2x32xf32>
    %758 = math.tanh %757 : vector<2x32xf32>
    %cst_261 = arith.constant 1.000000e+00 : f32
    %759 = vector.broadcast %cst_261 : f32 to vector<2x32xf32>
    %760 = arith.addf %758, %759 : vector<2x32xf32>
    %cst_262 = arith.constant 5.000000e-01 : f32
    %761 = vector.broadcast %cst_262 : f32 to vector<2x32xf32>
    %762 = arith.mulf %761, %760 : vector<2x32xf32>
    %763 = arith.mulf %752, %710 : vector<2x32xf32>
    %764 = arith.mulf %744, %754 : vector<2x32xf32>
    %765 = arith.addf %763, %764 : vector<2x32xf32>
    %766 = math.tanh %765 : vector<2x32xf32>
    %767 = arith.mulf %762, %766 : vector<2x32xf32>
    %768 = vector.extract_strided_slice %767 {offsets = [0, 0], sizes = [1, 32], strides = [1, 1]} : vector<2x32xf32> to vector<1x32xf32>
    %c0_263 = arith.constant 0 : index
    %769 = memref.load %arg1[%c0_263] : memref<2xi32, #tpu.memory_space<smem>>
    %c13_i32 = arith.constant 13 : i32
    %770 = arith.cmpi sgt, %769, %c13_i32 : i32
    %771 = arith.extui %770 : i1 to i32
    %772 = arith.sitofp %771 : i32 to f32
    %773 = vector.broadcast %772 : f32 to vector<1x32xf32>
    %774 = arith.mulf %768, %773 : vector<1x32xf32>
    %775 = vector.extract_strided_slice %767 {offsets = [1, 0], sizes = [1, 32], strides = [1, 1]} : vector<2x32xf32> to vector<1x32xf32>
    %c1_264 = arith.constant 1 : index
    %776 = memref.load %arg1[%c1_264] : memref<2xi32, #tpu.memory_space<smem>>
    %c13_i32_265 = arith.constant 13 : i32
    %777 = arith.cmpi sgt, %776, %c13_i32_265 : i32
    %778 = arith.extui %777 : i1 to i32
    %779 = arith.sitofp %778 : i32 to f32
    %780 = vector.broadcast %779 : f32 to vector<1x32xf32>
    %781 = arith.mulf %775, %780 : vector<1x32xf32>
    %782 = tpu.concatenate %774, %781 in 0 : vector<1x32xf32>, vector<1x32xf32> -> vector<2x32xf32>
    %c13_266 = arith.constant 13 : index
    %c0_267 = arith.constant 0 : index
    %c0_268 = arith.constant 0 : index
    %783 = vector.load %arg8[%c13_266, %c0_267, %c0_268] : memref<16x2x32xf32, #tpu.memory_space<vmem>>, vector<1x2x32xf32>
    %784 = vector.shape_cast %783 : vector<1x2x32xf32> to vector<2x32xf32>
    %785 = vector.shape_cast %782 : vector<2x32xf32> to vector<1x2x32xf32>
    tpu.vector_store %arg8[%c13_266, %c0_267, %c0_268], %785 {strides = array<i32>} : memref<16x2x32xf32, #tpu.memory_space<vmem>>, vector<1x2x32xf32>,
    %c14 = arith.constant 14 : index
    %c0_269 = arith.constant 0 : index
    %786 = vector.load %arg9[%c14, %c0_269] : memref<32x128xf32, #tpu.memory_space<vmem>>, vector<1x128xf32>
    %c30 = arith.constant 30 : index
    %c0_270 = arith.constant 0 : index
    %787 = vector.load %arg9[%c30, %c0_270] : memref<32x128xf32, #tpu.memory_space<vmem>>, vector<1x128xf32>
    %788 = tpu.concatenate %786, %787 in 0 : vector<1x128xf32>, vector<1x128xf32> -> vector<2x128xf32>
    %789 = arith.truncf %767 : vector<2x32xf32> to vector<2x32xbf16>
    %cst_271 = arith.constant dense<0.000000e+00> : vector<2x128xf32>
    %790 = tpu.matmul %789, %13, %cst_271 {dimension_numbers = #tpu.dot_dimension_numbers<[1], [0], [0], [1], [0, 0, 1, 1], [], []>} : vector<2x32xbf16>, vector<32x128xbf16>, vector<2x128xf32> -> vector<2x128xf32>
    %791 = arith.addf %788, %790 : vector<2x128xf32>
    %792 = vector.extract_strided_slice %791 {offsets = [0, 0], sizes = [2, 32], strides = [1, 1]} : vector<2x128xf32> to vector<2x32xf32>
    %cst_272 = arith.constant 5.000000e-01 : f32
    %793 = vector.broadcast %cst_272 : f32 to vector<2x32xf32>
    %794 = arith.mulf %793, %792 : vector<2x32xf32>
    %795 = math.tanh %794 : vector<2x32xf32>
    %cst_273 = arith.constant 1.000000e+00 : f32
    %796 = vector.broadcast %cst_273 : f32 to vector<2x32xf32>
    %797 = arith.addf %795, %796 : vector<2x32xf32>
    %cst_274 = arith.constant 5.000000e-01 : f32
    %798 = vector.broadcast %cst_274 : f32 to vector<2x32xf32>
    %799 = arith.mulf %798, %797 : vector<2x32xf32>
    %800 = vector.extract_strided_slice %791 {offsets = [0, 32], sizes = [2, 32], strides = [1, 1]} : vector<2x128xf32> to vector<2x32xf32>
    %cst_275 = arith.constant 5.000000e-01 : f32
    %801 = vector.broadcast %cst_275 : f32 to vector<2x32xf32>
    %802 = arith.mulf %801, %800 : vector<2x32xf32>
    %803 = math.tanh %802 : vector<2x32xf32>
    %cst_276 = arith.constant 1.000000e+00 : f32
    %804 = vector.broadcast %cst_276 : f32 to vector<2x32xf32>
    %805 = arith.addf %803, %804 : vector<2x32xf32>
    %cst_277 = arith.constant 5.000000e-01 : f32
    %806 = vector.broadcast %cst_277 : f32 to vector<2x32xf32>
    %807 = arith.mulf %806, %805 : vector<2x32xf32>
    %808 = vector.extract_strided_slice %791 {offsets = [0, 64], sizes = [2, 32], strides = [1, 1]} : vector<2x128xf32> to vector<2x32xf32>
    %809 = math.tanh %808 : vector<2x32xf32>
    %810 = vector.extract_strided_slice %791 {offsets = [0, 96], sizes = [2, 32], strides = [1, 1]} : vector<2x128xf32> to vector<2x32xf32>
    %cst_278 = arith.constant 5.000000e-01 : f32
    %811 = vector.broadcast %cst_278 : f32 to vector<2x32xf32>
    %812 = arith.mulf %811, %810 : vector<2x32xf32>
    %813 = math.tanh %812 : vector<2x32xf32>
    %cst_279 = arith.constant 1.000000e+00 : f32
    %814 = vector.broadcast %cst_279 : f32 to vector<2x32xf32>
    %815 = arith.addf %813, %814 : vector<2x32xf32>
    %cst_280 = arith.constant 5.000000e-01 : f32
    %816 = vector.broadcast %cst_280 : f32 to vector<2x32xf32>
    %817 = arith.mulf %816, %815 : vector<2x32xf32>
    %818 = arith.mulf %807, %765 : vector<2x32xf32>
    %819 = arith.mulf %799, %809 : vector<2x32xf32>
    %820 = arith.addf %818, %819 : vector<2x32xf32>
    %821 = math.tanh %820 : vector<2x32xf32>
    %822 = arith.mulf %817, %821 : vector<2x32xf32>
    %823 = vector.extract_strided_slice %822 {offsets = [0, 0], sizes = [1, 32], strides = [1, 1]} : vector<2x32xf32> to vector<1x32xf32>
    %c0_281 = arith.constant 0 : index
    %824 = memref.load %arg1[%c0_281] : memref<2xi32, #tpu.memory_space<smem>>
    %c14_i32 = arith.constant 14 : i32
    %825 = arith.cmpi sgt, %824, %c14_i32 : i32
    %826 = arith.extui %825 : i1 to i32
    %827 = arith.sitofp %826 : i32 to f32
    %828 = vector.broadcast %827 : f32 to vector<1x32xf32>
    %829 = arith.mulf %823, %828 : vector<1x32xf32>
    %830 = vector.extract_strided_slice %822 {offsets = [1, 0], sizes = [1, 32], strides = [1, 1]} : vector<2x32xf32> to vector<1x32xf32>
    %c1_282 = arith.constant 1 : index
    %831 = memref.load %arg1[%c1_282] : memref<2xi32, #tpu.memory_space<smem>>
    %c14_i32_283 = arith.constant 14 : i32
    %832 = arith.cmpi sgt, %831, %c14_i32_283 : i32
    %833 = arith.extui %832 : i1 to i32
    %834 = arith.sitofp %833 : i32 to f32
    %835 = vector.broadcast %834 : f32 to vector<1x32xf32>
    %836 = arith.mulf %830, %835 : vector<1x32xf32>
    %837 = tpu.concatenate %829, %836 in 0 : vector<1x32xf32>, vector<1x32xf32> -> vector<2x32xf32>
    %c14_284 = arith.constant 14 : index
    %c0_285 = arith.constant 0 : index
    %c0_286 = arith.constant 0 : index
    %838 = vector.load %arg8[%c14_284, %c0_285, %c0_286] : memref<16x2x32xf32, #tpu.memory_space<vmem>>, vector<1x2x32xf32>
    %839 = vector.shape_cast %838 : vector<1x2x32xf32> to vector<2x32xf32>
    %840 = vector.shape_cast %837 : vector<2x32xf32> to vector<1x2x32xf32>
    tpu.vector_store %arg8[%c14_284, %c0_285, %c0_286], %840 {strides = array<i32>} : memref<16x2x32xf32, #tpu.memory_space<vmem>>, vector<1x2x32xf32>,
    %c15 = arith.constant 15 : index
    %c0_287 = arith.constant 0 : index
    %841 = vector.load %arg9[%c15, %c0_287] : memref<32x128xf32, #tpu.memory_space<vmem>>, vector<1x128xf32>
    %c31 = arith.constant 31 : index
    %c0_288 = arith.constant 0 : index
    %842 = vector.load %arg9[%c31, %c0_288] : memref<32x128xf32, #tpu.memory_space<vmem>>, vector<1x128xf32>
    %843 = tpu.concatenate %841, %842 in 0 : vector<1x128xf32>, vector<1x128xf32> -> vector<2x128xf32>
    %844 = arith.truncf %822 : vector<2x32xf32> to vector<2x32xbf16>
    %cst_289 = arith.constant dense<0.000000e+00> : vector<2x128xf32>
    %845 = tpu.matmul %844, %13, %cst_289 {dimension_numbers = #tpu.dot_dimension_numbers<[1], [0], [0], [1], [0, 0, 1, 1], [], []>} : vector<2x32xbf16>, vector<32x128xbf16>, vector<2x128xf32> -> vector<2x128xf32>
    %846 = arith.addf %843, %845 : vector<2x128xf32>
    %847 = vector.extract_strided_slice %846 {offsets = [0, 0], sizes = [2, 32], strides = [1, 1]} : vector<2x128xf32> to vector<2x32xf32>
    %cst_290 = arith.constant 5.000000e-01 : f32
    %848 = vector.broadcast %cst_290 : f32 to vector<2x32xf32>
    %849 = arith.mulf %848, %847 : vector<2x32xf32>
    %850 = math.tanh %849 : vector<2x32xf32>
    %cst_291 = arith.constant 1.000000e+00 : f32
    %851 = vector.broadcast %cst_291 : f32 to vector<2x32xf32>
    %852 = arith.addf %850, %851 : vector<2x32xf32>
    %cst_292 = arith.constant 5.000000e-01 : f32
    %853 = vector.broadcast %cst_292 : f32 to vector<2x32xf32>
    %854 = arith.mulf %853, %852 : vector<2x32xf32>
    %855 = vector.extract_strided_slice %846 {offsets = [0, 32], sizes = [2, 32], strides = [1, 1]} : vector<2x128xf32> to vector<2x32xf32>
    %cst_293 = arith.constant 5.000000e-01 : f32
    %856 = vector.broadcast %cst_293 : f32 to vector<2x32xf32>
    %857 = arith.mulf %856, %855 : vector<2x32xf32>
    %858 = math.tanh %857 : vector<2x32xf32>
    %cst_294 = arith.constant 1.000000e+00 : f32
    %859 = vector.broadcast %cst_294 : f32 to vector<2x32xf32>
    %860 = arith.addf %858, %859 : vector<2x32xf32>
    %cst_295 = arith.constant 5.000000e-01 : f32
    %861 = vector.broadcast %cst_295 : f32 to vector<2x32xf32>
    %862 = arith.mulf %861, %860 : vector<2x32xf32>
    %863 = vector.extract_strided_slice %846 {offsets = [0, 64], sizes = [2, 32], strides = [1, 1]} : vector<2x128xf32> to vector<2x32xf32>
    %864 = math.tanh %863 : vector<2x32xf32>
    %865 = vector.extract_strided_slice %846 {offsets = [0, 96], sizes = [2, 32], strides = [1, 1]} : vector<2x128xf32> to vector<2x32xf32>
    %cst_296 = arith.constant 5.000000e-01 : f32
    %866 = vector.broadcast %cst_296 : f32 to vector<2x32xf32>
    %867 = arith.mulf %866, %865 : vector<2x32xf32>
    %868 = math.tanh %867 : vector<2x32xf32>
    %cst_297 = arith.constant 1.000000e+00 : f32
    %869 = vector.broadcast %cst_297 : f32 to vector<2x32xf32>
    %870 = arith.addf %868, %869 : vector<2x32xf32>
    %cst_298 = arith.constant 5.000000e-01 : f32
    %871 = vector.broadcast %cst_298 : f32 to vector<2x32xf32>
    %872 = arith.mulf %871, %870 : vector<2x32xf32>
    %873 = arith.mulf %862, %820 : vector<2x32xf32>
    %874 = arith.mulf %854, %864 : vector<2x32xf32>
    %875 = arith.addf %873, %874 : vector<2x32xf32>
    %876 = math.tanh %875 : vector<2x32xf32>
    %877 = arith.mulf %872, %876 : vector<2x32xf32>
    %878 = vector.extract_strided_slice %877 {offsets = [0, 0], sizes = [1, 32], strides = [1, 1]} : vector<2x32xf32> to vector<1x32xf32>
    %c0_299 = arith.constant 0 : index
    %879 = memref.load %arg1[%c0_299] : memref<2xi32, #tpu.memory_space<smem>>
    %c15_i32 = arith.constant 15 : i32
    %880 = arith.cmpi sgt, %879, %c15_i32 : i32
    %881 = arith.extui %880 : i1 to i32
    %882 = arith.sitofp %881 : i32 to f32
    %883 = vector.broadcast %882 : f32 to vector<1x32xf32>
    %884 = arith.mulf %878, %883 : vector<1x32xf32>
    %885 = vector.extract_strided_slice %877 {offsets = [1, 0], sizes = [1, 32], strides = [1, 1]} : vector<2x32xf32> to vector<1x32xf32>
    %c1_300 = arith.constant 1 : index
    %886 = memref.load %arg1[%c1_300] : memref<2xi32, #tpu.memory_space<smem>>
    %c15_i32_301 = arith.constant 15 : i32
    %887 = arith.cmpi sgt, %886, %c15_i32_301 : i32
    %888 = arith.extui %887 : i1 to i32
    %889 = arith.sitofp %888 : i32 to f32
    %890 = vector.broadcast %889 : f32 to vector<1x32xf32>
    %891 = arith.mulf %885, %890 : vector<1x32xf32>
    %892 = tpu.concatenate %884, %891 in 0 : vector<1x32xf32>, vector<1x32xf32> -> vector<2x32xf32>
    %c15_302 = arith.constant 15 : index
    %c0_303 = arith.constant 0 : index
    %c0_304 = arith.constant 0 : index
    %893 = vector.load %arg8[%c15_302, %c0_303, %c0_304] : memref<16x2x32xf32, #tpu.memory_space<vmem>>, vector<1x2x32xf32>
    %894 = vector.shape_cast %893 : vector<1x2x32xf32> to vector<2x32xf32>
    %895 = vector.shape_cast %892 : vector<2x32xf32> to vector<1x2x32xf32>
    tpu.vector_store %arg8[%c15_302, %c0_303, %c0_304], %895 {strides = array<i32>} : memref<16x2x32xf32, #tpu.memory_space<vmem>>, vector<1x2x32xf32>,
    return
  }
  func.func @transform_0(%arg0: i32, %arg1: memref<2xi32, #tpu.memory_space<smem>>) -> (i32, i32) {
    %c0_i32 = arith.constant 0 : i32
    %c0_i32_0 = arith.constant 0 : i32
    %c0_i32_1 = arith.constant 0 : i32
    return %c0_i32, %c0_i32_0 : i32, i32
  }
  func.func @transform_1(%arg0: i32, %arg1: memref<2xi32, #tpu.memory_space<smem>>) -> (i32, i32) {
    %c0_i32 = arith.constant 0 : i32
    %c0_i32_0 = arith.constant 0 : i32
    %c0_i32_1 = arith.constant 0 : i32
    return %c0_i32, %c0_i32_0 : i32, i32
  }
  func.func @transform_2(%arg0: i32, %arg1: memref<2xi32, #tpu.memory_space<smem>>) -> (i32, i32) {
    %c0_i32 = arith.constant 0 : i32
    %c0_i32_0 = arith.constant 0 : i32
    %c0_i32_1 = arith.constant 0 : i32
    return %c0_i32, %c0_i32_0 : i32, i32
  }
  func.func @transform_3(%arg0: i32, %arg1: memref<2xi32, #tpu.memory_space<smem>>) -> (i32, i32) {
    %c0_i32 = arith.constant 0 : i32
    %c0_i32_0 = arith.constant 0 : i32
    %c0_i32_1 = arith.constant 0 : i32
    return %c0_i32, %c0_i32_0 : i32, i32
  }
  func.func @transform_4(%arg0: i32, %arg1: memref<2xi32, #tpu.memory_space<smem>>) -> (i32, i32) {
    %c0_i32 = arith.constant 0 : i32
    %c0_i32_0 = arith.constant 0 : i32
    %c0_i32_1 = arith.constant 0 : i32
    return %c0_i32, %c0_i32_0 : i32, i32
  }
  func.func @transform_5(%arg0: i32, %arg1: memref<2xi32, #tpu.memory_space<smem>>) -> (i32, i32) {
    %c0_i32 = arith.constant 0 : i32
    %c0_i32_0 = arith.constant 0 : i32
    %c0_i32_1 = arith.constant 0 : i32
    return %c0_i32, %c0_i32_0 : i32, i32
  }
  func.func @transform_6(%arg0: i32, %arg1: memref<2xi32, #tpu.memory_space<smem>>) -> (i32, i32, i32) {
    %c0_i32 = arith.constant 0 : i32
    %c0_i32_0 = arith.constant 0 : i32
    %c0_i32_1 = arith.constant 0 : i32
    %c0_i32_2 = arith.constant 0 : i32
    return %c0_i32, %c0_i32_0, %c0_i32_1 : i32, i32, i32
  }
}

module attributes {stable_mosaic.version = 11 : i64} {
  func.func @_gemm_bias_kernel(%arg0: i32, %arg1: memref<1024x25xbf16, #tpu.memory_space<vmem>>, %arg2: memref<25x32xbf16, #tpu.memory_space<vmem>>, %arg3: memref<1x32xf32, #tpu.memory_space<vmem>>, %arg4: memref<1024x32xbf16, #tpu.memory_space<vmem>>) attributes {dimension_semantics = [#tpu.dimension_semantics<parallel>], iteration_bounds = array<i64: 1>, scalar_prefetch = 0 : i64, scratch_operands = 0 : i64, tpu.core_type = #tpu.core_type<tc>, window_params = [{transform_indices = @transform_0, window_bounds = array<i64: 1024, 25>}, {pipeline_mode = #tpu.pipeline_mode<synchronous>, transform_indices = @transform_1, window_bounds = array<i64: 25, 32>}, {pipeline_mode = #tpu.pipeline_mode<synchronous>, transform_indices = @transform_2, window_bounds = array<i64: 1, 32>}, {transform_indices = @transform_3, window_bounds = array<i64: 1024, 32>}]} {
    %c0 = arith.constant 0 : index
    %c0_0 = arith.constant 0 : index
    %0 = vector.load %arg1[%c0, %c0_0] : memref<1024x25xbf16, #tpu.memory_space<vmem>>, vector<1024x25xbf16>
    %c0_1 = arith.constant 0 : index
    %c0_2 = arith.constant 0 : index
    %1 = vector.load %arg2[%c0_1, %c0_2] : memref<25x32xbf16, #tpu.memory_space<vmem>>, vector<25x32xbf16>
    %cst = arith.constant dense<0.000000e+00> : vector<1024x32xf32>
    %2 = tpu.matmul %0, %1, %cst {dimension_numbers = #tpu.dot_dimension_numbers<[1], [0], [0], [1], [0, 0, 1, 1], [], []>} : vector<1024x25xbf16>, vector<25x32xbf16>, vector<1024x32xf32> -> vector<1024x32xf32>
    %c0_3 = arith.constant 0 : index
    %c0_4 = arith.constant 0 : index
    %3 = vector.load %arg3[%c0_3, %c0_4] : memref<1x32xf32, #tpu.memory_space<vmem>>, vector<1x32xf32>
    %4 = vector.broadcast %3 : vector<1x32xf32> to vector<1024x32xf32>
    %5 = arith.addf %2, %4 : vector<1024x32xf32>
    %6 = arith.truncf %5 : vector<1024x32xf32> to vector<1024x32xbf16>
    %c0_5 = arith.constant 0 : index
    %c0_6 = arith.constant 0 : index
    %7 = vector.load %arg4[%c0_5, %c0_6] : memref<1024x32xbf16, #tpu.memory_space<vmem>>, vector<1024x32xbf16>
    tpu.vector_store %arg4[%c0_5, %c0_6], %6 {strides = array<i32>} : memref<1024x32xbf16, #tpu.memory_space<vmem>>, vector<1024x32xbf16>,
    return
  }
  func.func @transform_0(%arg0: i32) -> (i32, i32) {
    %c0_i32 = arith.constant 0 : i32
    %c0_i32_0 = arith.constant 0 : i32
    return %arg0, %c0_i32 : i32, i32
  }
  func.func @transform_1(%arg0: i32) -> (i32, i32) {
    %c0_i32 = arith.constant 0 : i32
    %c0_i32_0 = arith.constant 0 : i32
    %c0_i32_1 = arith.constant 0 : i32
    return %c0_i32, %c0_i32_0 : i32, i32
  }
  func.func @transform_2(%arg0: i32) -> (i32, i32) {
    %c0_i32 = arith.constant 0 : i32
    %c0_i32_0 = arith.constant 0 : i32
    %c0_i32_1 = arith.constant 0 : i32
    return %c0_i32, %c0_i32_0 : i32, i32
  }
  func.func @transform_3(%arg0: i32) -> (i32, i32) {
    %c0_i32 = arith.constant 0 : i32
    %c0_i32_0 = arith.constant 0 : i32
    return %arg0, %c0_i32 : i32, i32
  }
}

module attributes {stable_mosaic.version = 11 : i64} {
  func.func @_gemm_bias_kernel(%arg0: i32, %arg1: memref<128x800xbf16, #tpu.memory_space<vmem>>, %arg2: memref<800x128xbf16, #tpu.memory_space<vmem>>, %arg3: memref<1x128xf32, #tpu.memory_space<vmem>>, %arg4: memref<128x128xbf16, #tpu.memory_space<vmem>>) attributes {dimension_semantics = [#tpu.dimension_semantics<parallel>], iteration_bounds = array<i64: 2>, scalar_prefetch = 0 : i64, scratch_operands = 0 : i64, tpu.core_type = #tpu.core_type<tc>, window_params = [{transform_indices = @transform_0, window_bounds = array<i64: 128, 800>}, {pipeline_mode = #tpu.pipeline_mode<synchronous>, transform_indices = @transform_1, window_bounds = array<i64: 800, 128>}, {pipeline_mode = #tpu.pipeline_mode<synchronous>, transform_indices = @transform_2, window_bounds = array<i64: 1, 128>}, {transform_indices = @transform_3, window_bounds = array<i64: 128, 128>}]} {
    %c0 = arith.constant 0 : index
    %c0_0 = arith.constant 0 : index
    %0 = vector.load %arg1[%c0, %c0_0] : memref<128x800xbf16, #tpu.memory_space<vmem>>, vector<128x800xbf16>
    %c0_1 = arith.constant 0 : index
    %c0_2 = arith.constant 0 : index
    %1 = vector.load %arg2[%c0_1, %c0_2] : memref<800x128xbf16, #tpu.memory_space<vmem>>, vector<800x128xbf16>
    %cst = arith.constant dense<0.000000e+00> : vector<128x128xf32>
    %2 = tpu.matmul %0, %1, %cst {dimension_numbers = #tpu.dot_dimension_numbers<[1], [0], [0], [1], [0, 0, 1, 1], [], []>} : vector<128x800xbf16>, vector<800x128xbf16>, vector<128x128xf32> -> vector<128x128xf32>
    %c0_3 = arith.constant 0 : index
    %c0_4 = arith.constant 0 : index
    %3 = vector.load %arg3[%c0_3, %c0_4] : memref<1x128xf32, #tpu.memory_space<vmem>>, vector<1x128xf32>
    %4 = vector.broadcast %3 : vector<1x128xf32> to vector<128x128xf32>
    %5 = arith.addf %2, %4 : vector<128x128xf32>
    %6 = arith.truncf %5 : vector<128x128xf32> to vector<128x128xbf16>
    %c0_5 = arith.constant 0 : index
    %c0_6 = arith.constant 0 : index
    %7 = vector.load %arg4[%c0_5, %c0_6] : memref<128x128xbf16, #tpu.memory_space<vmem>>, vector<128x128xbf16>
    tpu.vector_store %arg4[%c0_5, %c0_6], %6 {strides = array<i32>} : memref<128x128xbf16, #tpu.memory_space<vmem>>, vector<128x128xbf16>,
    return
  }
  func.func @transform_0(%arg0: i32) -> (i32, i32) {
    %c0_i32 = arith.constant 0 : i32
    %c0_i32_0 = arith.constant 0 : i32
    return %arg0, %c0_i32 : i32, i32
  }
  func.func @transform_1(%arg0: i32) -> (i32, i32) {
    %c0_i32 = arith.constant 0 : i32
    %c0_i32_0 = arith.constant 0 : i32
    %c0_i32_1 = arith.constant 0 : i32
    return %c0_i32, %c0_i32_0 : i32, i32
  }
  func.func @transform_2(%arg0: i32) -> (i32, i32) {
    %c0_i32 = arith.constant 0 : i32
    %c0_i32_0 = arith.constant 0 : i32
    %c0_i32_1 = arith.constant 0 : i32
    return %c0_i32, %c0_i32_0 : i32, i32
  }
  func.func @transform_3(%arg0: i32) -> (i32, i32) {
    %c0_i32 = arith.constant 0 : i32
    %c0_i32_0 = arith.constant 0 : i32
    return %arg0, %c0_i32 : i32, i32
  }
}

module attributes {stable_mosaic.version = 11 : i64} {
  func.func @kernel(%arg0: i32, %arg1: memref<4x3200xbf16, #tpu.memory_space<vmem>>, %arg2: memref<3200x256xbf16, #tpu.memory_space<vmem>>, %arg3: memref<1x256xf32, #tpu.memory_space<vmem>>, %arg4: memref<256x512xbf16, #tpu.memory_space<vmem>>, %arg5: memref<1x512xf32, #tpu.memory_space<vmem>>, %arg6: memref<512x256xbf16, #tpu.memory_space<vmem>>, %arg7: memref<1x256xf32, #tpu.memory_space<vmem>>, %arg8: memref<1x256xf32, #tpu.memory_space<vmem>>, %arg9: memref<1x1xf32, #tpu.memory_space<vmem>>, %arg10: memref<2x1xf32, #tpu.memory_space<vmem>>) attributes {dimension_semantics = [#tpu.dimension_semantics<arbitrary>], iteration_bounds = array<i64: 1>, scalar_prefetch = 0 : i64, scratch_operands = 0 : i64, tpu.core_type = #tpu.core_type<tc>, window_params = [{pipeline_mode = #tpu.pipeline_mode<synchronous>, transform_indices = @transform_0, window_bounds = array<i64: 4, 3200>}, {pipeline_mode = #tpu.pipeline_mode<synchronous>, transform_indices = @transform_1, window_bounds = array<i64: 3200, 256>}, {pipeline_mode = #tpu.pipeline_mode<synchronous>, transform_indices = @transform_2, window_bounds = array<i64: 1, 256>}, {pipeline_mode = #tpu.pipeline_mode<synchronous>, transform_indices = @transform_3, window_bounds = array<i64: 256, 512>}, {pipeline_mode = #tpu.pipeline_mode<synchronous>, transform_indices = @transform_4, window_bounds = array<i64: 1, 512>}, {pipeline_mode = #tpu.pipeline_mode<synchronous>, transform_indices = @transform_5, window_bounds = array<i64: 512, 256>}, {pipeline_mode = #tpu.pipeline_mode<synchronous>, transform_indices = @transform_6, window_bounds = array<i64: 1, 256>}, {pipeline_mode = #tpu.pipeline_mode<synchronous>, transform_indices = @transform_7, window_bounds = array<i64: 1, 256>}, {pipeline_mode = #tpu.pipeline_mode<synchronous>, transform_indices = @transform_8, window_bounds = array<i64: 1, 1>}, {pipeline_mode = #tpu.pipeline_mode<synchronous>, transform_indices = @transform_9, window_bounds = array<i64: 2, 1>}]} {
    %c0 = arith.constant 0 : index
    %c0_0 = arith.constant 0 : index
    %0 = vector.load %arg1[%c0, %c0_0] : memref<4x3200xbf16, #tpu.memory_space<vmem>>, vector<4x3200xbf16>
    %c0_1 = arith.constant 0 : index
    %c0_2 = arith.constant 0 : index
    %1 = vector.load %arg2[%c0_1, %c0_2] : memref<3200x256xbf16, #tpu.memory_space<vmem>>, vector<3200x256xbf16>
    %cst = arith.constant dense<0.000000e+00> : vector<4x256xf32>
    %2 = tpu.matmul %0, %1, %cst {dimension_numbers = #tpu.dot_dimension_numbers<[1], [0], [0], [1], [0, 0, 1, 1], [], []>} : vector<4x3200xbf16>, vector<3200x256xbf16>, vector<4x256xf32> -> vector<4x256xf32>
    %c0_3 = arith.constant 0 : index
    %c0_4 = arith.constant 0 : index
    %3 = vector.load %arg3[%c0_3, %c0_4] : memref<1x256xf32, #tpu.memory_space<vmem>>, vector<1x256xf32>
    %4 = vector.broadcast %3 : vector<1x256xf32> to vector<4x256xf32>
    %5 = arith.addf %2, %4 : vector<4x256xf32>
    %6 = arith.truncf %5 : vector<4x256xf32> to vector<4x256xbf16>
    %c0_5 = arith.constant 0 : index
    %c0_6 = arith.constant 0 : index
    %7 = vector.load %arg4[%c0_5, %c0_6] : memref<256x512xbf16, #tpu.memory_space<vmem>>, vector<256x512xbf16>
    %cst_7 = arith.constant dense<0.000000e+00> : vector<4x512xf32>
    %8 = tpu.matmul %6, %7, %cst_7 {dimension_numbers = #tpu.dot_dimension_numbers<[1], [0], [0], [1], [0, 0, 1, 1], [], []>} : vector<4x256xbf16>, vector<256x512xbf16>, vector<4x512xf32> -> vector<4x512xf32>
    %c0_8 = arith.constant 0 : index
    %c0_9 = arith.constant 0 : index
    %9 = vector.load %arg5[%c0_8, %c0_9] : memref<1x512xf32, #tpu.memory_space<vmem>>, vector<1x512xf32>
    %10 = vector.broadcast %9 : vector<1x512xf32> to vector<4x512xf32>
    %11 = arith.addf %8, %10 : vector<4x512xf32>
    %12 = arith.truncf %11 : vector<4x512xf32> to vector<4x512xbf16>
    %c0_10 = arith.constant 0 : index
    %c0_11 = arith.constant 0 : index
    %13 = vector.load %arg6[%c0_10, %c0_11] : memref<512x256xbf16, #tpu.memory_space<vmem>>, vector<512x256xbf16>
    %cst_12 = arith.constant dense<0.000000e+00> : vector<4x256xf32>
    %14 = tpu.matmul %12, %13, %cst_12 {dimension_numbers = #tpu.dot_dimension_numbers<[1], [0], [0], [1], [0, 0, 1, 1], [], []>} : vector<4x512xbf16>, vector<512x256xbf16>, vector<4x256xf32> -> vector<4x256xf32>
    %c0_13 = arith.constant 0 : index
    %c0_14 = arith.constant 0 : index
    %15 = vector.load %arg7[%c0_13, %c0_14] : memref<1x256xf32, #tpu.memory_space<vmem>>, vector<1x256xf32>
    %16 = vector.broadcast %15 : vector<1x256xf32> to vector<4x256xf32>
    %17 = arith.addf %14, %16 : vector<4x256xf32>
    %c0_15 = arith.constant 0 : index
    %c0_16 = arith.constant 0 : index
    %18 = vector.load %arg8[%c0_15, %c0_16] : memref<1x256xf32, #tpu.memory_space<vmem>>, vector<1x256xf32>
    %19 = vector.broadcast %18 : vector<1x256xf32> to vector<4x256xf32>
    %20 = arith.mulf %17, %19 : vector<4x256xf32>
    %cst_17 = arith.constant dense<0.000000e+00> : vector<4xf32>
    %21 = vector.multi_reduction <add>, %20, %cst_17 [1] : vector<4x256xf32> to vector<4xf32>
    %22 = vector.shape_cast %21 : vector<4xf32> to vector<4x1xf32>
    %c0_18 = arith.constant 0 : index
    %c0_19 = arith.constant 0 : index
    %23 = vector.load %arg9[%c0_18, %c0_19] : memref<1x1xf32, #tpu.memory_space<vmem>>, vector<1x1xf32>
    %24 = vector.broadcast %23 : vector<1x1xf32> to vector<4x1xf32>
    %25 = arith.addf %22, %24 : vector<4x1xf32>
    %26 = vector.extract_strided_slice %25 {offsets = [0, 0], sizes = [1, 1], strides = [1, 1]} : vector<4x1xf32> to vector<1x1xf32>
    %27 = vector.extract_strided_slice %25 {offsets = [1, 0], sizes = [1, 1], strides = [1, 1]} : vector<4x1xf32> to vector<1x1xf32>
    %28 = arith.maximumf %26, %27 : vector<1x1xf32>
    %29 = vector.extract_strided_slice %25 {offsets = [2, 0], sizes = [1, 1], strides = [1, 1]} : vector<4x1xf32> to vector<1x1xf32>
    %30 = vector.extract_strided_slice %25 {offsets = [3, 0], sizes = [1, 1], strides = [1, 1]} : vector<4x1xf32> to vector<1x1xf32>
    %31 = arith.maximumf %29, %30 : vector<1x1xf32>
    %32 = tpu.concatenate %28, %31 in 0 : vector<1x1xf32>, vector<1x1xf32> -> vector<2x1xf32>
    %c0_20 = arith.constant 0 : index
    %c0_21 = arith.constant 0 : index
    %33 = vector.load %arg10[%c0_20, %c0_21] : memref<2x1xf32, #tpu.memory_space<vmem>>, vector<2x1xf32>
    tpu.vector_store %arg10[%c0_20, %c0_21], %32 {strides = array<i32>} : memref<2x1xf32, #tpu.memory_space<vmem>>, vector<2x1xf32>,
    return
  }
  func.func @transform_0(%arg0: i32) -> (i32, i32) {
    %c0_i32 = arith.constant 0 : i32
    %c0_i32_0 = arith.constant 0 : i32
    %c0_i32_1 = arith.constant 0 : i32
    return %c0_i32, %c0_i32_0 : i32, i32
  }
  func.func @transform_1(%arg0: i32) -> (i32, i32) {
    %c0_i32 = arith.constant 0 : i32
    %c0_i32_0 = arith.constant 0 : i32
    %c0_i32_1 = arith.constant 0 : i32
    return %c0_i32, %c0_i32_0 : i32, i32
  }
  func.func @transform_2(%arg0: i32) -> (i32, i32) {
    %c0_i32 = arith.constant 0 : i32
    %c0_i32_0 = arith.constant 0 : i32
    %c0_i32_1 = arith.constant 0 : i32
    return %c0_i32, %c0_i32_0 : i32, i32
  }
  func.func @transform_3(%arg0: i32) -> (i32, i32) {
    %c0_i32 = arith.constant 0 : i32
    %c0_i32_0 = arith.constant 0 : i32
    %c0_i32_1 = arith.constant 0 : i32
    return %c0_i32, %c0_i32_0 : i32, i32
  }
  func.func @transform_4(%arg0: i32) -> (i32, i32) {
    %c0_i32 = arith.constant 0 : i32
    %c0_i32_0 = arith.constant 0 : i32
    %c0_i32_1 = arith.constant 0 : i32
    return %c0_i32, %c0_i32_0 : i32, i32
  }
  func.func @transform_5(%arg0: i32) -> (i32, i32) {
    %c0_i32 = arith.constant 0 : i32
    %c0_i32_0 = arith.constant 0 : i32
    %c0_i32_1 = arith.constant 0 : i32
    return %c0_i32, %c0_i32_0 : i32, i32
  }
  func.func @transform_6(%arg0: i32) -> (i32, i32) {
    %c0_i32 = arith.constant 0 : i32
    %c0_i32_0 = arith.constant 0 : i32
    %c0_i32_1 = arith.constant 0 : i32
    return %c0_i32, %c0_i32_0 : i32, i32
  }
  func.func @transform_7(%arg0: i32) -> (i32, i32) {
    %c0_i32 = arith.constant 0 : i32
    %c0_i32_0 = arith.constant 0 : i32
    %c0_i32_1 = arith.constant 0 : i32
    return %c0_i32, %c0_i32_0 : i32, i32
  }
  func.func @transform_8(%arg0: i32) -> (i32, i32) {
    %c0_i32 = arith.constant 0 : i32
    %c0_i32_0 = arith.constant 0 : i32
    %c0_i32_1 = arith.constant 0 : i32
    return %c0_i32, %c0_i32_0 : i32, i32
  }
  func.func @transform_9(%arg0: i32) -> (i32, i32) {
    %c0_i32 = arith.constant 0 : i32
    %c0_i32_0 = arith.constant 0 : i32
    %c0_i32_1 = arith.constant 0 : i32
    return %c0_i32, %c0_i32_0 : i32, i32
  }
}

</mosaic_0001>

<llo_original>
// kernel: kws_net_forward.4
$region0: #{kws_net_forward.4}
  #allocation0 [shape = 'u32[]', space=smem, size = 0x4, offset = 0x4, fixed_abs, tag = 'smem constant byte address 0x4 - core index']
  #allocation1 [shape = 'u32[72,128]{1,0:T(1,128)}', space=vmem, size = 0x9000, scoped, tag = 'internal scratch']
  #allocation2 [shape = 'f32[32,128]{1,0:T(8,128)}', space=vmem, size = 0x4000, scoped, tag = 'scratch operand']
  #allocation3 [shape = 's32[1]{0}', space=sflag, size = 0x4, scoped, tag = 'scoped memory for kws_net_forward.4']
  #allocation4 [shape = 'u8[512]{0}', space=smem, size = 0x200, scoped, tag = 'prefetched SMEM operand 0']
  %s0 = inlined_call_operand.hbm [shape: s32[2], index: 0, kind: input, shape index: {}]
  %s1 = inlined_call_operand.vmem [shape: bf16[32,256], index: 1, kind: input, shape index: {}]
  %s2 = inlined_call_operand.hbm [shape: bf16[256,256], index: 2, kind: input, shape index: {}]
  %s3 = inlined_call_operand.hbm [shape: f32[1,256], index: 3, kind: input, shape index: {}]
  %s4 = inlined_call_operand.hbm [shape: bf16[256,128], index: 4, kind: input, shape index: {}]
  %s5 = inlined_call_operand.hbm [shape: f32[1,128], index: 5, kind: input, shape index: {}]
  %s6 = inlined_call_operand.hbm [shape: bf16[32,128], index: 6, kind: input, shape index: {}]
  %s7 = inlined_call_operand.vmem [shape: f32[16,2,32], index: 7, kind: output, shape index: {}]
  %s8 = sld [smem:[#allocation0]]
  $region54: #{kws_net_forward.4} parent=0
    _
  %s10 = ssub.s32 1, %s8
  %s11 = scalar_select 0, %s10, %s8
  %s13 = sshll.u32 %s0, 4
  %s14 = int_to_ptr.hbm [resolvable:$true] %s13
  %16 = dma.hbm_to_smem %s14, 16, [#allocation4], [#allocation3]
  %18 = dma.done [#allocation3], 16
  %19 = sfence
  $region1: #{kws_net_forward.4} parent=0
    #allocation5 [shape = 'u8[131072]{0}', space=vmem, size = 0x20000, scoped, tag = 'input window, operand 2, single buffered']
    #allocation6 [shape = 's32[1]{0}', space=sflag, size = 0x4, scoped, tag = 'scoped memory for kws_net_forward.4']
    #allocation7 [shape = 'u8[1024]{0}', space=vmem, size = 0x400, scoped, tag = 'input window, operand 3, single buffered']
    #allocation8 [shape = 's32[1]{0}', space=sflag, size = 0x4, scoped, tag = 'scoped memory for kws_net_forward.4']
    #allocation9 [shape = 'u8[65536]{0}', space=vmem, size = 0x10000, scoped, tag = 'input window, operand 4, single buffered']
    #allocation10 [shape = 'u8[512]{0}', space=vmem, size = 0x400, scoped, tag = 'input window, operand 5, single buffered']
    #allocation11 [shape = 's32[1]{0}', space=sflag, size = 0x4, scoped, tag = 'scoped memory for kws_net_forward.4']
    #allocation12 [shape = 'u8[8192]{0}', space=vmem, size = 0x2000, scoped, tag = 'input window, operand 6, single buffered']
    %20 = vsyncpa [#allocation6], 0
    %21 = vsyncpa [#allocation8], 0
    %22 = vsyncpa [#allocation11], 0
    // Predicated region
    $region2: #{kws_net_forward.4} parent=1 // pred_check
      _
    $region3: #{kws_net_forward.4} parent=1 // pred_check_branch
      %24 = sbr.rel (0) target = $region5
    $region4: #{kws_net_forward.4} parent=1 // pred_region
      _
    $region5: #{kws_net_forward.4} parent=1 // pred_fallthru
      _
    // Predicated region
    $region6: #{kws_net_forward.4} parent=1 // pred_check
      _
    $region7: #{kws_net_forward.4} parent=1 // pred_check_branch
      %26 = sbr.rel (0) target = $region9
    $region8: #{kws_net_forward.4} parent=1 // pred_region
      %28 = vsyncadd [#allocation6], 0
      %s29 = sshll.u32 %s2, 4
      %s30 = int_to_ptr.hbm [resolvable:$true] %s29
      %s31 = sshll.u32 [#allocation5], 4
      %s32 = int_to_ptr.vmem [resolvable:$true] %s31
      %37 = dma.hbm_to_vmem [thread:$0]  %s30, 4096, %s32, [#allocation6], 128, 128, 8
    $region9: #{kws_net_forward.4} parent=1 // pred_fallthru
      _
    // Predicated region
    $region10: #{kws_net_forward.4} parent=1 // pred_check
      _
    $region11: #{kws_net_forward.4} parent=1 // pred_check_branch
      %39 = sbr.rel (0) target = $region13
    $region12: #{kws_net_forward.4} parent=1 // pred_region
      %41 = vsyncadd [#allocation8], 0
      %s43 = sshll.u32 %s3, 4
      %s44 = int_to_ptr.hbm [resolvable:$true] %s43
      %s45 = sshll.u32 [#allocation7], 4
      %s46 = int_to_ptr.vmem [resolvable:$true] %s45
      %48 = dma.hbm_to_vmem [thread:$0]  %s44, 32, %s46, [#allocation8]
    $region13: #{kws_net_forward.4} parent=1 // pred_fallthru
      _
    // Predicated region
    $region14: #{kws_net_forward.4} parent=1 // pred_check
      _
    $region15: #{kws_net_forward.4} parent=1 // pred_check_branch
      %50 = sbr.rel (0) target = $region17
    $region16: #{kws_net_forward.4} parent=1 // pred_region
      %52 = vsyncadd [#allocation8], 0
      %s53 = sshll.u32 %s4, 4
      %s54 = int_to_ptr.hbm [resolvable:$true] %s53
      %s55 = sshll.u32 [#allocation9], 4
      %s56 = int_to_ptr.vmem [resolvable:$true] %s55
      %61 = dma.hbm_to_vmem [thread:$0]  %s54, 2048, %s56, [#allocation8], 64, 64, 4
    $region17: #{kws_net_forward.4} parent=1 // pred_fallthru
      _
    // Predicated region
    $region18: #{kws_net_forward.4} parent=1 // pred_check
      _
    $region19: #{kws_net_forward.4} parent=1 // pred_check_branch
      %63 = sbr.rel (0) target = $region21
    $region20: #{kws_net_forward.4} parent=1 // pred_region
      %65 = vsyncadd [#allocation11], 0
      %s67 = sshll.u32 %s5, 4
      %s68 = int_to_ptr.hbm [resolvable:$true] %s67
      %s69 = sshll.u32 [#allocation10], 4
      %s70 = int_to_ptr.vmem [resolvable:$true] %s69
      %72 = dma.hbm_to_vmem [thread:$0]  %s68, 16, %s70, [#allocation11]
    $region21: #{kws_net_forward.4} parent=1 // pred_fallthru
      _
    // Predicated region
    $region22: #{kws_net_forward.4} parent=1 // pred_check
      _
    $region23: #{kws_net_forward.4} parent=1 // pred_check_branch
      %74 = sbr.rel (0) target = $region25
    $region24: #{kws_net_forward.4} parent=1 // pred_region
      %76 = vsyncadd [#allocation11], 0
      %s77 = sshll.u32 %s6, 4
      %s78 = int_to_ptr.hbm [resolvable:$true] %s77
      %s79 = sshll.u32 [#allocation12], 4
      %s80 = int_to_ptr.vmem [resolvable:$true] %s79
      %85 = dma.hbm_to_vmem [thread:$0]  %s78, 256, %s80, [#allocation11], 64, 64, 4
    $region25: #{kws_net_forward.4} parent=1 // pred_fallthru
      _
    // Predicated region
    $region26: #{kws_net_forward.4} parent=1 // pred_check
      _
    $region27: #{kws_net_forward.4} parent=1 // pred_check_branch
      %87 = sbr.rel (0) target = $region29
    $region28: #{kws_net_forward.4} parent=1 // pred_region
      %89 = dma.done [#allocation6], 4096
    $region29: #{kws_net_forward.4} parent=1 // pred_fallthru
      _
    // Predicated region
    $region30: #{kws_net_forward.4} parent=1 // pred_check
      _
    $region31: #{kws_net_forward.4} parent=1 // pred_check_branch
      %91 = sbr.rel (0) target = $region33
    $region32: #{kws_net_forward.4} parent=1 // pred_region
      %93 = dma.done [#allocation8], 32
    $region33: #{kws_net_forward.4} parent=1 // pred_fallthru
      _
    // Predicated region
    $region34: #{kws_net_forward.4} parent=1 // pred_check
      _
    $region35: #{kws_net_forward.4} parent=1 // pred_check_branch
      %95 = sbr.rel (0) target = $region37
    $region36: #{kws_net_forward.4} parent=1 // pred_region
      %97 = dma.done [#allocation8], 2048
    $region37: #{kws_net_forward.4} parent=1 // pred_fallthru
      _
    // Predicated region
    $region38: #{kws_net_forward.4} parent=1 // pred_check
      _
    $region39: #{kws_net_forward.4} parent=1 // pred_check_branch
      %99 = sbr.rel (0) target = $region41
    $region40: #{kws_net_forward.4} parent=1 // pred_region
      %101 = dma.done [#allocation11], 16
    $region41: #{kws_net_forward.4} parent=1 // pred_fallthru
      _
    // Predicated region
    $region42: #{kws_net_forward.4} parent=1 // pred_check
      _
    $region43: #{kws_net_forward.4} parent=1 // pred_check_branch
      %103 = sbr.rel (0) target = $region45
    $region44: #{kws_net_forward.4} parent=1 // pred_region
      %105 = dma.done [#allocation11], 256
    $region45: #{kws_net_forward.4} parent=1 // pred_fallthru
      _
    %v107 = vld [vmem:[%s1] sm:$0xff]
    %v108 = vld [vmem:[%s1 + $0x8] sm:$0xff]
    %v109 = vld [vmem:[%s1 + $0x10] sm:$0xff]
    %v110 = vld [vmem:[%s1 + $0x18] sm:$0xff]
    %v111 = vld [vmem:[#allocation5] sm:$0xff]
    %v112 = vld [vmem:[#allocation5 + $0x8] sm:$0xff]
    %v113 = vld [vmem:[#allocation5 + $0x10] sm:$0xff]
    %v114 = vld [vmem:[#allocation5 + $0x18] sm:$0xff]
    %v115 = vld [vmem:[#allocation5 + $0x20] sm:$0xff]
    %v116 = vld [vmem:[#allocation5 + $0x28] sm:$0xff]
    %v117 = vld [vmem:[#allocation5 + $0x30] sm:$0xff]
    %v118 = vld [vmem:[#allocation5 + $0x38] sm:$0xff]
    %v119 = vld [vmem:[#allocation5 + $0x40] sm:$0xff]
    %v120 = vld [vmem:[#allocation5 + $0x48] sm:$0xff]
    %v121 = vld [vmem:[#allocation5 + $0x50] sm:$0xff]
    %v122 = vld [vmem:[#allocation5 + $0x58] sm:$0xff]
    %v123 = vld [vmem:[#allocation5 + $0x60] sm:$0xff]
    %v124 = vld [vmem:[#allocation5 + $0x68] sm:$0xff]
    %v125 = vld [vmem:[#allocation5 + $0x70] sm:$0xff]
    %v126 = vld [vmem:[#allocation5 + $0x78] sm:$0xff]
    %v127 = vld [vmem:[#allocation5 + $0x80] sm:$0xff]
    %v128 = vld [vmem:[#allocation5 + $0x88] sm:$0xff]
    %v129 = vld [vmem:[#allocation5 + $0x90] sm:$0xff]
    %v130 = vld [vmem:[#allocation5 + $0x98] sm:$0xff]
    %v131 = vld [vmem:[#allocation5 + $0xa0] sm:$0xff]
    %v132 = vld [vmem:[#allocation5 + $0xa8] sm:$0xff]
    %v133 = vld [vmem:[#allocation5 + $0xb0] sm:$0xff]
    %v134 = vld [vmem:[#allocation5 + $0xb8] sm:$0xff]
    %v135 = vld [vmem:[#allocation5 + $0xc0] sm:$0xff]
    %v136 = vld [vmem:[#allocation5 + $0xc8] sm:$0xff]
    %v137 = vld [vmem:[#allocation5 + $0xd0] sm:$0xff]
    %v138 = vld [vmem:[#allocation5 + $0xd8] sm:$0xff]
    %v139 = vld [vmem:[#allocation5 + $0xe0] sm:$0xff]
    %v140 = vld [vmem:[#allocation5 + $0xe8] sm:$0xff]
    %v141 = vld [vmem:[#allocation5 + $0xf0] sm:$0xff]
    %v142 = vld [vmem:[#allocation5 + $0xf8] sm:$0xff]
    %v143 = vld [vmem:[#allocation7] sm:$0x3]
    %v145 = vperm.slane %v143, 0
    %v146 = vperm.slane %v143, 1
    %v153 = vunpack.c.l.b16 %v107
    %v154 = vunpack.c.h.b16 %v107
    %v155 = vunpack.c.l.b16 %v108
    %v156 = vunpack.c.h.b16 %v108
    %v157 = vunpack.c.l.b16 %v109
    %v158 = vunpack.c.h.b16 %v109
    %v159 = vunpack.c.l.b16 %v110
    %v160 = vunpack.c.h.b16 %v110
    %v161 = vpack.c.b16 %v155, %v153
    %v162 = vpack.c.b16 %v156, %v154
    %v163 = vpack.c.b16 %v159, %v157
    %v164 = vpack.c.b16 %v160, %v158
    %v201 = vunpack.c.l.b16 %v111
    %v202 = vunpack.c.h.b16 %v111
    %v203 = vunpack.c.l.b16 %v112
    %v204 = vunpack.c.h.b16 %v112
    %v205 = vunpack.c.l.b16 %v113
    %v206 = vunpack.c.h.b16 %v113
    %v207 = vunpack.c.l.b16 %v114
    %v208 = vunpack.c.h.b16 %v114
    %v209 = vunpack.c.l.b16 %v115
    %v210 = vunpack.c.h.b16 %v115
    %v211 = vunpack.c.l.b16 %v116
    %v212 = vunpack.c.h.b16 %v116
    %v213 = vunpack.c.l.b16 %v117
    %v214 = vunpack.c.h.b16 %v117
    %v215 = vunpack.c.l.b16 %v118
    %v216 = vunpack.c.h.b16 %v118
    %v217 = vunpack.c.l.b16 %v119
    %v218 = vunpack.c.h.b16 %v119
    %v219 = vunpack.c.l.b16 %v120
    %v220 = vunpack.c.h.b16 %v120
    %v221 = vunpack.c.l.b16 %v121
    %v222 = vunpack.c.h.b16 %v121
    %v223 = vunpack.c.l.b16 %v122
    %v224 = vunpack.c.h.b16 %v122
    %v225 = vunpack.c.l.b16 %v123
    %v226 = vunpack.c.h.b16 %v123
    %v227 = vunpack.c.l.b16 %v124
    %v228 = vunpack.c.h.b16 %v124
    %v229 = vunpack.c.l.b16 %v125
    %v230 = vunpack.c.h.b16 %v125
    %v231 = vunpack.c.l.b16 %v126
    %v232 = vunpack.c.h.b16 %v126
    %v233 = vunpack.c.l.b16 %v127
    %v234 = vunpack.c.h.b16 %v127
    %v235 = vunpack.c.l.b16 %v128
    %v236 = vunpack.c.h.b16 %v128
    %v237 = vunpack.c.l.b16 %v129
    %v238 = vunpack.c.h.b16 %v129
    %v239 = vunpack.c.l.b16 %v130
    %v240 = vunpack.c.h.b16 %v130
    %v241 = vunpack.c.l.b16 %v131
    %v242 = vunpack.c.h.b16 %v131
    %v243 = vunpack.c.l.b16 %v132
    %v244 = vunpack.c.h.b16 %v132
    %v245 = vunpack.c.l.b16 %v133
    %v246 = vunpack.c.h.b16 %v133
    %v247 = vunpack.c.l.b16 %v134
    %v248 = vunpack.c.h.b16 %v134
    %v249 = vunpack.c.l.b16 %v135
    %v250 = vunpack.c.h.b16 %v135
    %v251 = vunpack.c.l.b16 %v136
    %v252 = vunpack.c.h.b16 %v136
    %v253 = vunpack.c.l.b16 %v137
    %v254 = vunpack.c.h.b16 %v137
    %v255 = vunpack.c.l.b16 %v138
    %v256 = vunpack.c.h.b16 %v138
    %v257 = vunpack.c.l.b16 %v139
    %v258 = vunpack.c.h.b16 %v139
    %v259 = vunpack.c.l.b16 %v140
    %v260 = vunpack.c.h.b16 %v140
    %v261 = vunpack.c.l.b16 %v141
    %v262 = vunpack.c.h.b16 %v141
    %v263 = vunpack.c.l.b16 %v142
    %v264 = vunpack.c.h.b16 %v142
    %v265 = vpack.c.b16 %v203, %v201
    %v266 = vpack.c.b16 %v204, %v202
    %v267 = vpack.c.b16 %v207, %v205
    %v268 = vpack.c.b16 %v208, %v206
    %v269 = vpack.c.b16 %v211, %v209
    %v270 = vpack.c.b16 %v212, %v210
    %v271 = vpack.c.b16 %v215, %v213
    %v272 = vpack.c.b16 %v216, %v214
    %v273 = vpack.c.b16 %v219, %v217
    %v274 = vpack.c.b16 %v220, %v218
    %v275 = vpack.c.b16 %v223, %v221
    %v276 = vpack.c.b16 %v224, %v222
    %v277 = vpack.c.b16 %v227, %v225
    %v278 = vpack.c.b16 %v228, %v226
    %v279 = vpack.c.b16 %v231, %v229
    %v280 = vpack.c.b16 %v232, %v230
    %v281 = vpack.c.b16 %v235, %v233
    %v282 = vpack.c.b16 %v236, %v234
    %v283 = vpack.c.b16 %v239, %v237
    %v284 = vpack.c.b16 %v240, %v238
    %v285 = vpack.c.b16 %v243, %v241
    %v286 = vpack.c.b16 %v244, %v242
    %v287 = vpack.c.b16 %v247, %v245
    %v288 = vpack.c.b16 %v248, %v246
    %v289 = vpack.c.b16 %v251, %v249
    %v290 = vpack.c.b16 %v252, %v250
    %v291 = vpack.c.b16 %v255, %v253
    %v292 = vpack.c.b16 %v256, %v254
    %v293 = vpack.c.b16 %v259, %v257
    %v294 = vpack.c.b16 %v260, %v258
    %v295 = vpack.c.b16 %v263, %v261
    %v296 = vpack.c.b16 %v264, %v262
    %329 = vmatpush.bf16.msra.mxu0 %v279
    %330 = vmatpush.bf16.msra.mxu0 %v277
    %331 = vmatpush.bf16.msra.mxu0 %v275
    %332 = vmatpush.bf16.msra.mxu0 %v273
    %333 = vmatpush.bf16.msra.mxu0 %v271
    %334 = vmatpush.bf16.msra.mxu0 %v269
    %335 = vmatpush.bf16.msra.mxu0 %v267
    %336 = vmatpush.bf16.msra.mxu0 %v265
    %337 = vmatmul.bf16.gmra.mxu0 %v161
    %v338 = vpop.f32.mrf.mxu0
    %v339 = vadd.f32 %v145, %v338
    %v340 = vpop.f32.mrf.mxu0
    %v341 = vadd.f32 %v145, %v340
    %342 = vmatmul.bf16.gmra.mxu0 %v163
    %v343 = vpop.f32.mrf.mxu0
    %v344 = vadd.f32 %v145, %v343
    %v345 = vpop.f32.mrf.mxu0
    %v346 = vadd.f32 %v145, %v345
    %347 = vdwg.mxu0
    %348 = vmatpush.bf16.msra.mxu0 %v295
    %349 = vmatpush.bf16.msra.mxu0 %v293
    %350 = vmatpush.bf16.msra.mxu0 %v291
    %351 = vmatpush.bf16.msra.mxu0 %v289
    %352 = vmatpush.bf16.msra.mxu0 %v287
    %353 = vmatpush.bf16.msra.mxu0 %v285
    %354 = vmatpush.bf16.msra.mxu0 %v283
    %355 = vmatpush.bf16.msra.mxu0 %v281
    %356 = vmatmul.bf16.gmra.mxu0 %v162
    %v357 = vpop.f32.mrf.mxu0
    %v358 = vadd.f32 %v339, %v357
    %v359 = vpop.f32.mrf.mxu0
    %v360 = vadd.f32 %v341, %v359
    %361 = vmatmul.bf16.gmra.mxu0 %v164
    %v362 = vpop.f32.mrf.mxu0
    %v363 = vadd.f32 %v344, %v362
    %v364 = vpop.f32.mrf.mxu0
    %v365 = vadd.f32 %v346, %v364
    %366 = vdwg.mxu0
    %367 = vmatpush.bf16.msra.mxu0 %v280
    %368 = vmatpush.bf16.msra.mxu0 %v278
    %369 = vmatpush.bf16.msra.mxu0 %v276
    %370 = vmatpush.bf16.msra.mxu0 %v274
    %371 = vmatpush.bf16.msra.mxu0 %v272
    %372 = vmatpush.bf16.msra.mxu0 %v270
    %373 = vmatpush.bf16.msra.mxu0 %v268
    %374 = vmatpush.bf16.msra.mxu0 %v266
    %375 = vmatmul.bf16.gmra.mxu0 %v161
    %v376 = vpop.f32.mrf.mxu0
    %v377 = vadd.f32 %v146, %v376
    %v378 = vpop.f32.mrf.mxu0
    %v379 = vadd.f32 %v146, %v378
    %380 = vmatmul.bf16.gmra.mxu0 %v163
    %v381 = vpop.f32.mrf.mxu0
    %v382 = vadd.f32 %v146, %v381
    %v383 = vpop.f32.mrf.mxu0
    %v384 = vadd.f32 %v146, %v383
    %385 = vdwg.mxu0
    %386 = vmatpush.bf16.msra.mxu0 %v296
    %387 = vmatpush.bf16.msra.mxu0 %v294
    %388 = vmatpush.bf16.msra.mxu0 %v292
    %389 = vmatpush.bf16.msra.mxu0 %v290
    %390 = vmatpush.bf16.msra.mxu0 %v288
    %391 = vmatpush.bf16.msra.mxu0 %v286
    %392 = vmatpush.bf16.msra.mxu0 %v284
    %393 = vmatpush.bf16.msra.mxu0 %v282
    %394 = vmatmul.bf16.gmra.mxu0 %v162
    %v395 = vpop.f32.mrf.mxu0
    %v396 = vadd.f32 %v377, %v395
    %v397 = vpop.f32.mrf.mxu0
    %v398 = vadd.f32 %v379, %v397
    %399 = vmatmul.bf16.gmra.mxu0 %v164
    %v400 = vpop.f32.mrf.mxu0
    %v401 = vadd.f32 %v382, %v400
    %v402 = vpop.f32.mrf.mxu0
    %v403 = vadd.f32 %v384, %v402
    %404 = vdwg.mxu0
    %v405 = vpack.c.bf16 %v360, %v358
    %v406 = vpack.c.bf16 %v398, %v396
    %v407 = vpack.c.bf16 %v365, %v363
    %v408 = vpack.c.bf16 %v403, %v401
    %v409 = vld [vmem:[#allocation9] sm:$0xf]
    %v410 = vld [vmem:[#allocation9 + $0x4] sm:$0xf]
    %v411 = vld [vmem:[#allocation9 + $0x8] sm:$0xf]
    %v412 = vld [vmem:[#allocation9 + $0xc] sm:$0xf]
    %v413 = vld [vmem:[#allocation9 + $0x10] sm:$0xf]
    %v414 = vld [vmem:[#allocation9 + $0x14] sm:$0xf]
    %v415 = vld [vmem:[#allocation9 + $0x18] sm:$0xf]
    %v416 = vld [vmem:[#allocation9 + $0x1c] sm:$0xf]
    %v417 = vld [vmem:[#allocation9 + $0x20] sm:$0xf]
    %v418 = vld [vmem:[#allocation9 + $0x24] sm:$0xf]
    %v419 = vld [vmem:[#allocation9 + $0x28] sm:$0xf]
    %v420 = vld [vmem:[#allocation9 + $0x2c] sm:$0xf]
    %v421 = vld [vmem:[#allocation9 + $0x30] sm:$0xf]
    %v422 = vld [vmem:[#allocation9 + $0x34] sm:$0xf]
    %v423 = vld [vmem:[#allocation9 + $0x38] sm:$0xf]
    %v424 = vld [vmem:[#allocation9 + $0x3c] sm:$0xf]
    %v425 = vld [vmem:[#allocation9 + $0x40] sm:$0xf]
    %v426 = vld [vmem:[#allocation9 + $0x44] sm:$0xf]
    %v427 = vld [vmem:[#allocation9 + $0x48] sm:$0xf]
    %v428 = vld [vmem:[#allocation9 + $0x4c] sm:$0xf]
    %v429 = vld [vmem:[#allocation9 + $0x50] sm:$0xf]
    %v430 = vld [vmem:[#allocation9 + $0x54] sm:$0xf]
    %v431 = vld [vmem:[#allocation9 + $0x58] sm:$0xf]
    %v432 = vld [vmem:[#allocation9 + $0x5c] sm:$0xf]
    %v433 = vld [vmem:[#allocation9 + $0x60] sm:$0xf]
    %v434 = vld [vmem:[#allocation9 + $0x64] sm:$0xf]
    %v435 = vld [vmem:[#allocation9 + $0x68] sm:$0xf]
    %v436 = vld [vmem:[#allocation9 + $0x6c] sm:$0xf]
    %v437 = vld [vmem:[#allocation9 + $0x70] sm:$0xf]
    %v438 = vld [vmem:[#allocation9 + $0x74] sm:$0xf]
    %v439 = vld [vmem:[#allocation9 + $0x78] sm:$0xf]
    %v440 = vld [vmem:[#allocation9 + $0x7c] sm:$0xf]
    %v441 = vld [vmem:[#allocation10] sm:$0x1]
    %v443 = vperm.slane %v441, 0
    %v477 = vunpack.c.l.b16 %v409
    %v478 = vunpack.c.l.b16 %v410
    %v479 = vunpack.c.l.b16 %v411
    %v480 = vunpack.c.l.b16 %v412
    %v481 = vunpack.c.l.b16 %v413
    %v482 = vunpack.c.l.b16 %v414
    %v483 = vunpack.c.l.b16 %v415
    %v484 = vunpack.c.l.b16 %v416
    %v485 = vunpack.c.l.b16 %v417
    %v486 = vunpack.c.l.b16 %v418
    %v487 = vunpack.c.l.b16 %v419
    %v488 = vunpack.c.l.b16 %v420
    %v489 = vunpack.c.l.b16 %v421
    %v490 = vunpack.c.l.b16 %v422
    %v491 = vunpack.c.l.b16 %v423
    %v492 = vunpack.c.l.b16 %v424
    %v493 = vunpack.c.l.b16 %v425
    %v494 = vunpack.c.l.b16 %v426
    %v495 = vunpack.c.l.b16 %v427
    %v496 = vunpack.c.l.b16 %v428
    %v497 = vunpack.c.l.b16 %v429
    %v498 = vunpack.c.l.b16 %v430
    %v499 = vunpack.c.l.b16 %v431
    %v500 = vunpack.c.l.b16 %v432
    %v501 = vunpack.c.l.b16 %v433
    %v502 = vunpack.c.l.b16 %v434
    %v503 = vunpack.c.l.b16 %v435
    %v504 = vunpack.c.l.b16 %v436
    %v505 = vunpack.c.l.b16 %v437
    %v506 = vunpack.c.l.b16 %v438
    %v507 = vunpack.c.l.b16 %v439
    %v508 = vunpack.c.l.b16 %v440
    %v509 = vpack.c.b16 %v478, %v477
    %v510 = vpack.c.b16 %v480, %v479
    %v511 = vpack.c.b16 %v482, %v481
    %v512 = vpack.c.b16 %v484, %v483
    %v513 = vpack.c.b16 %v486, %v485
    %v514 = vpack.c.b16 %v488, %v487
    %v515 = vpack.c.b16 %v490, %v489
    %v516 = vpack.c.b16 %v492, %v491
    %v517 = vpack.c.b16 %v494, %v493
    %v518 = vpack.c.b16 %v496, %v495
    %v519 = vpack.c.b16 %v498, %v497
    %v520 = vpack.c.b16 %v500, %v499
    %v521 = vpack.c.b16 %v502, %v501
    %v522 = vpack.c.b16 %v504, %v503
    %v523 = vpack.c.b16 %v506, %v505
    %v524 = vpack.c.b16 %v508, %v507
    %541 = vmatpush.bf16.msra.mxu0 %v516
    %542 = vmatpush.bf16.msra.mxu0 %v515
    %543 = vmatpush.bf16.msra.mxu0 %v514
    %544 = vmatpush.bf16.msra.mxu0 %v513
    %545 = vmatpush.bf16.msra.mxu0 %v512
    %546 = vmatpush.bf16.msra.mxu0 %v511
    %547 = vmatpush.bf16.msra.mxu0 %v510
    %548 = vmatpush.bf16.msra.mxu0 %v509
    %549 = vmatmul.bf16.gmra.mxu0 %v405
    %v550 = vpop.f32.mrf.mxu0
    %v551 = vadd.f32 %v443, %v550
    %v552 = vpop.f32.mrf.mxu0
    %v553 = vadd.f32 %v443, %v552
    %554 = vmatmul.bf16.gmra.mxu0 %v407
    %v555 = vpop.f32.mrf.mxu0
    %v556 = vadd.f32 %v443, %v555
    %v557 = vpop.f32.mrf.mxu0
    %v558 = vadd.f32 %v443, %v557
    %559 = vdwg.mxu0
    %560 = vmatpush.bf16.msra.mxu0 %v524
    %561 = vmatpush.bf16.msra.mxu0 %v523
    %562 = vmatpush.bf16.msra.mxu0 %v522
    %563 = vmatpush.bf16.msra.mxu0 %v521
    %564 = vmatpush.bf16.msra.mxu0 %v520
    %565 = vmatpush.bf16.msra.mxu0 %v519
    %566 = vmatpush.bf16.msra.mxu0 %v518
    %567 = vmatpush.bf16.msra.mxu0 %v517
    %568 = vmatmul.bf16.gmra.mxu0 %v406
    %v569 = vpop.f32.mrf.mxu0
    %v570 = vadd.f32 %v551, %v569
    %v571 = vpop.f32.mrf.mxu0
    %v572 = vadd.f32 %v553, %v571
    %573 = vmatmul.bf16.gmra.mxu0 %v408
    %v574 = vpop.f32.mrf.mxu0
    %v575 = vadd.f32 %v556, %v574
    %v576 = vpop.f32.mrf.mxu0
    %v577 = vadd.f32 %v558, %v576
    %578 = vdwg.mxu0
    %579 = vst [vmem:[#allocation2] sm:$0xff] %v570
    %580 = vst [vmem:[#allocation2 + $0x8] sm:$0xff] %v572
    %581 = vst [vmem:[#allocation2 + $0x10] sm:$0xff] %v575
    %582 = vst [vmem:[#allocation2 + $0x18] sm:$0xff] %v577
    %v583 = vld [vmem:[#allocation12] sm:$0xf]
    %v584 = vld [vmem:[#allocation12 + $0x4] sm:$0xf]
    %v585 = vld [vmem:[#allocation12 + $0x8] sm:$0xf]
    %v586 = vld [vmem:[#allocation12 + $0xc] sm:$0xf]
    %v587 = vld [vmem:[#allocation2] sm:$0x1]
    %v588 = vld [vmem:[#allocation2 + $0x10] sm:$0x1]
    %v590 = vrot.slane %v588, 7
    %vm592 = vcmask 1040384
    %v593 = vsel %vm592, %v587, %v590
    %v598 = vunpack.c.l.b16 %v583
    %v599 = vunpack.c.l.b16 %v584
    %v600 = vunpack.c.l.b16 %v585
    %v601 = vunpack.c.l.b16 %v586
    %v602 = vpack.c.b16 %v599, %v598
    %v603 = vpack.c.b16 %v601, %v600
    %vm606 = vcmask 261120
    %v608 = vsel %vm606, 0, 0
    %610 = vmatpush.bf16.msra.mxu0 0
    %611 = vmatpush.bf16.msra.mxu0 0
    %612 = vmatpush.bf16.msra.mxu0 0
    %613 = vmatpush.bf16.msra.mxu0 0
    %614 = vmatpush.bf16.msra.mxu0 0
    %615 = vmatpush.bf16.msra.mxu0 0
    %616 = vmatpush.bf16.msra.mxu0 %v603
    %617 = vmatpush.bf16.msra.mxu0 %v602
    %618 = vmatmul.bf16.gmra.mxu0 %v608
    %v619 = vpop.f32.mrf.mxu0
    %v620 = vadd.f32 0.0, %v619
    %v621 = vpop.f32.mrf.mxu0
    %622 = vdwg.mxu0
    %v623 = vadd.f32 %v593, %v620
    %v624 = vmul.f32 %v623, 0.5
    %v625 = vtanh.pop %v624
    %v626 = vadd.f32 %v625, 1.0
    %v627 = vmul.f32 %v626, 0.5
    %v628 = vtanh.pop %v623
    %v629 = vmul.f32 %v627, 0.0
    %631 = vrot.lane.b32.xlu0 %v628, 64
    %v632 = vpop.permute.xlu0 %631
    %v634 = vmul.f32 %v627, %v632
    %636 = vrot.lane.b32.xlu0 %v634, 32
    %v637 = vpop.permute.xlu0 %636
    %v639 = vadd.f32 %v629, %v637
    %v640 = vtanh.pop %v639
    %642 = vrot.lane.b32.xlu0 %v640, 64
    %v643 = vpop.permute.xlu0 %642
    %v645 = vmul.f32 %v627, %v643
    %s646 = sld [smem:[#allocation4]]
    %p647 = scmp.gt.s32.totalorder %s646, 0
    %s648 = scalar_select %p647, 1, 0
    %s649 = scvt.s32.f32 %s648
    %v650 = vstv %s649
    %v651 = vmul.f32 %v645, %v650
    %s652 = sld [smem:[#allocation4 + $0x1]]
    %p653 = scmp.gt.s32.totalorder %s652, 0
    %s654 = scalar_select %p653, 1, 0
    %s655 = scvt.s32.f32 %s654
    %v656 = vstv %s655
    %v657 = vmul.f32 %v645, %v656
    %v658 = vsel %vm592, %v651, %v657
    %660 = vrot.lane.b32.xlu0 %v658, 32
    %v661 = vpop.permute.xlu0 %660
    %vm663 = vcmask 254976
    %664 = vst.msk [vmem:[%s7] sm:$0x3] %vm663, %v661
    %v665 = vld [vmem:[#allocation2 + $0x1] sm:$0x1]
    %v666 = vld [vmem:[#allocation2 + $0x11] sm:$0x1]
    %v668 = vrot.slane %v666, 7
    %v670 = vsel %vm592, %v665, %v668
    %v671 = vpack.c.bf16 %v645, %v645
    %673 = vrot.lane.b32.xlu0 %v671, 32
    %v674 = vpop.permute.xlu0 %673
    %v676 = vsel %vm606, %v674, 0
    %678 = vmatpush.bf16.msra.mxu0 0
    %679 = vmatpush.bf16.msra.mxu0 0
    %680 = vmatpush.bf16.msra.mxu0 0
    %681 = vmatpush.bf16.msra.mxu0 0
    %682 = vmatpush.bf16.msra.mxu0 0
    %683 = vmatpush.bf16.msra.mxu0 0
    %684 = vmatpush.bf16.msra.mxu0 %v603
    %685 = vmatpush.bf16.msra.mxu0 %v602
    %686 = vmatmul.bf16.gmra.mxu0 %v676
    %v687 = vpop.f32.mrf.mxu0
    %v688 = vadd.f32 0.0, %v687
    %v689 = vpop.f32.mrf.mxu0
    %690 = vdwg.mxu0
    %v691 = vadd.f32 %v670, %v688
    %v692 = vmul.f32 %v691, 0.5
    %v693 = vtanh.pop %v692
    %v694 = vadd.f32 %v693, 1.0
    %v695 = vmul.f32 %v694, 0.5
    %v696 = vtanh.pop %v691
    %v697 = vmul.f32 %v695, %v639
    %699 = vrot.lane.b32.xlu0 %v696, 64
    %v700 = vpop.permute.xlu0 %699
    %v702 = vmul.f32 %v695, %v700
    %704 = vrot.lane.b32.xlu0 %v702, 32
    %v705 = vpop.permute.xlu0 %704
    %v707 = vadd.f32 %v697, %v705
    %v708 = vtanh.pop %v707
    %710 = vrot.lane.b32.xlu0 %v708, 64
    %v711 = vpop.permute.xlu0 %710
    %v713 = vmul.f32 %v695, %v711
    %s714 = sld [smem:[#allocation4]]
    %p715 = scmp.gt.s32.totalorder %s714, 1
    %s716 = scalar_select %p715, 1, 0
    %s717 = scvt.s32.f32 %s716
    %v718 = vstv %s717
    %v719 = vmul.f32 %v713, %v718
    %s720 = sld [smem:[#allocation4 + $0x1]]
    %p721 = scmp.gt.s32.totalorder %s720, 1
    %s722 = scalar_select %p721, 1, 0
    %s723 = scvt.s32.f32 %s722
    %v724 = vstv %s723
    %v725 = vmul.f32 %v713, %v724
    %v726 = vsel %vm592, %v719, %v725
    %728 = vrot.lane.b32.xlu0 %v726, 32
    %v729 = vpop.permute.xlu0 %728
    %s731 = scalar_lea.vmem %s7, 2
    %732 = vst.msk [vmem:[%s731] sm:$0x3] %vm663, %v729
    %v733 = vld [vmem:[#allocation2 + $0x2] sm:$0x1]
    %v734 = vld [vmem:[#allocation2 + $0x12] sm:$0x1]
    %v736 = vrot.slane %v734, 7
    %v738 = vsel %vm592, %v733, %v736
    %v739 = vpack.c.bf16 %v713, %v713
    %741 = vrot.lane.b32.xlu0 %v739, 32
    %v742 = vpop.permute.xlu0 %741
    %v744 = vsel %vm606, %v742, 0
    %746 = vmatpush.bf16.msra.mxu0 0
    %747 = vmatpush.bf16.msra.mxu0 0
    %748 = vmatpush.bf16.msra.mxu0 0
    %749 = vmatpush.bf16.msra.mxu0 0
    %750 = vmatpush.bf16.msra.mxu0 0
    %751 = vmatpush.bf16.msra.mxu0 0
    %752 = vmatpush.bf16.msra.mxu0 %v603
    %753 = vmatpush.bf16.msra.mxu0 %v602
    %754 = vmatmul.bf16.gmra.mxu0 %v744
    %v755 = vpop.f32.mrf.mxu0
    %v756 = vadd.f32 0.0, %v755
    %v757 = vpop.f32.mrf.mxu0
    %758 = vdwg.mxu0
    %v759 = vadd.f32 %v738, %v756
    %v760 = vmul.f32 %v759, 0.5
    %v761 = vtanh.pop %v760
    %v762 = vadd.f32 %v761, 1.0
    %v763 = vmul.f32 %v762, 0.5
    %v764 = vtanh.pop %v759
    %v765 = vmul.f32 %v763, %v707
    %767 = vrot.lane.b32.xlu0 %v764, 64
    %v768 = vpop.permute.xlu0 %767
    %v770 = vmul.f32 %v763, %v768
    %772 = vrot.lane.b32.xlu0 %v770, 32
    %v773 = vpop.permute.xlu0 %772
    %v775 = vadd.f32 %v765, %v773
    %v776 = vtanh.pop %v775
    %778 = vrot.lane.b32.xlu0 %v776, 64
    %v779 = vpop.permute.xlu0 %778
    %v781 = vmul.f32 %v763, %v779
    %s782 = sld [smem:[#allocation4]]
    %p783 = scmp.gt.s32.totalorder %s782, 2
    %s784 = scalar_select %p783, 1, 0
    %s785 = scvt.s32.f32 %s784
    %v786 = vstv %s785
    %v787 = vmul.f32 %v781, %v786
    %s788 = sld [smem:[#allocation4 + $0x1]]
    %p789 = scmp.gt.s32.totalorder %s788, 2
    %s790 = scalar_select %p789, 1, 0
    %s791 = scvt.s32.f32 %s790
    %v792 = vstv %s791
    %v793 = vmul.f32 %v781, %v792
    %v794 = vsel %vm592, %v787, %v793
    %796 = vrot.lane.b32.xlu0 %v794, 32
    %v797 = vpop.permute.xlu0 %796
    %s799 = scalar_lea.vmem %s7, 4
    %800 = vst.msk [vmem:[%s799] sm:$0x3] %vm663, %v797
    %v801 = vld [vmem:[#allocation2 + $0x3] sm:$0x1]
    %v802 = vld [vmem:[#allocation2 + $0x13] sm:$0x1]
    %v804 = vrot.slane %v802, 7
    %v806 = vsel %vm592, %v801, %v804
    %v807 = vpack.c.bf16 %v781, %v781
    %809 = vrot.lane.b32.xlu0 %v807, 32
    %v810 = vpop.permute.xlu0 %809
    %v812 = vsel %vm606, %v810, 0
    %814 = vmatpush.bf16.msra.mxu0 0
    %815 = vmatpush.bf16.msra.mxu0 0
    %816 = vmatpush.bf16.msra.mxu0 0
    %817 = vmatpush.bf16.msra.mxu0 0
    %818 = vmatpush.bf16.msra.mxu0 0
    %819 = vmatpush.bf16.msra.mxu0 0
    %820 = vmatpush.bf16.msra.mxu0 %v603
    %821 = vmatpush.bf16.msra.mxu0 %v602
    %822 = vmatmul.bf16.gmra.mxu0 %v812
    %v823 = vpop.f32.mrf.mxu0
    %v824 = vadd.f32 0.0, %v823
    %v825 = vpop.f32.mrf.mxu0
    %826 = vdwg.mxu0
    %v827 = vadd.f32 %v806, %v824
    %v828 = vmul.f32 %v827, 0.5
    %v829 = vtanh.pop %v828
    %v830 = vadd.f32 %v829, 1.0
    %v831 = vmul.f32 %v830, 0.5
    %v832 = vtanh.pop %v827
    %v833 = vmul.f32 %v831, %v775
    %835 = vrot.lane.b32.xlu0 %v832, 64
    %v836 = vpop.permute.xlu0 %835
    %v838 = vmul.f32 %v831, %v836
    %840 = vrot.lane.b32.xlu0 %v838, 32
    %v841 = vpop.permute.xlu0 %840
    %v843 = vadd.f32 %v833, %v841
    %v844 = vtanh.pop %v843
    %846 = vrot.lane.b32.xlu0 %v844, 64
    %v847 = vpop.permute.xlu0 %846
    %v849 = vmul.f32 %v831, %v847
    %s850 = sld [smem:[#allocation4]]
    %p851 = scmp.gt.s32.totalorder %s850, 3
    %s852 = scalar_select %p851, 1, 0
    %s853 = scvt.s32.f32 %s852
    %v854 = vstv %s853
    %v855 = vmul.f32 %v849, %v854
    %s856 = sld [smem:[#allocation4 + $0x1]]
    %p857 = scmp.gt.s32.totalorder %s856, 3
    %s858 = scalar_select %p857, 1, 0
    %s859 = scvt.s32.f32 %s858
    %v860 = vstv %s859
    %v861 = vmul.f32 %v849, %v860
    %v862 = vsel %vm592, %v855, %v861
    %864 = vrot.lane.b32.xlu0 %v862, 32
    %v865 = vpop.permute.xlu0 %864
    %s867 = scalar_lea.vmem %s7, 6
    %868 = vst.msk [vmem:[%s867] sm:$0x3] %vm663, %v865
    %v869 = vld [vmem:[#allocation2 + $0x4] sm:$0x1]
    %v870 = vld [vmem:[#allocation2 + $0x14] sm:$0x1]
    %v872 = vrot.slane %v870, 7
    %v874 = vsel %vm592, %v869, %v872
    %v875 = vpack.c.bf16 %v849, %v849
    %877 = vrot.lane.b32.xlu0 %v875, 32
    %v878 = vpop.permute.xlu0 %877
    %v880 = vsel %vm606, %v878, 0
    %882 = vmatpush.bf16.msra.mxu0 0
    %883 = vmatpush.bf16.msra.mxu0 0
    %884 = vmatpush.bf16.msra.mxu0 0
    %885 = vmatpush.bf16.msra.mxu0 0
    %886 = vmatpush.bf16.msra.mxu0 0
    %887 = vmatpush.bf16.msra.mxu0 0
    %888 = vmatpush.bf16.msra.mxu0 %v603
    %889 = vmatpush.bf16.msra.mxu0 %v602
    %890 = vmatmul.bf16.gmra.mxu0 %v880
    %v891 = vpop.f32.mrf.mxu0
    %v892 = vadd.f32 0.0, %v891
    %v893 = vpop.f32.mrf.mxu0
    %894 = vdwg.mxu0
    %v895 = vadd.f32 %v874, %v892
    %v896 = vmul.f32 %v895, 0.5
    %v897 = vtanh.pop %v896
    %v898 = vadd.f32 %v897, 1.0
    %v899 = vmul.f32 %v898, 0.5
    %v900 = vtanh.pop %v895
    %v901 = vmul.f32 %v899, %v843
    %903 = vrot.lane.b32.xlu0 %v900, 64
    %v904 = vpop.permute.xlu0 %903
    %v906 = vmul.f32 %v899, %v904
    %908 = vrot.lane.b32.xlu0 %v906, 32
    %v909 = vpop.permute.xlu0 %908
    %v911 = vadd.f32 %v901, %v909
    %v912 = vtanh.pop %v911
    %914 = vrot.lane.b32.xlu0 %v912, 64
    %v915 = vpop.permute.xlu0 %914
    %v917 = vmul.f32 %v899, %v915
    %s918 = sld [smem:[#allocation4]]
    %p919 = scmp.gt.s32.totalorder %s918, 4
    %s920 = scalar_select %p919, 1, 0
    %s921 = scvt.s32.f32 %s920
    %v922 = vstv %s921
    %v923 = vmul.f32 %v917, %v922
    %s924 = sld [smem:[#allocation4 + $0x1]]
    %p925 = scmp.gt.s32.totalorder %s924, 4
    %s926 = scalar_select %p925, 1, 0
    %s927 = scvt.s32.f32 %s926
    %v928 = vstv %s927
    %v929 = vmul.f32 %v917, %v928
    %v930 = vsel %vm592, %v923, %v929
    %932 = vrot.lane.b32.xlu0 %v930, 32
    %v933 = vpop.permute.xlu0 %932
    %s935 = scalar_lea.vmem %s7, 8
    %936 = vst.msk [vmem:[%s935] sm:$0x3] %vm663, %v933
    %v937 = vld [vmem:[#allocation2 + $0x5] sm:$0x1]
    %v938 = vld [vmem:[#allocation2 + $0x15] sm:$0x1]
    %v940 = vrot.slane %v938, 7
    %v942 = vsel %vm592, %v937, %v940
    %v943 = vpack.c.bf16 %v917, %v917
    %945 = vrot.lane.b32.xlu0 %v943, 32
    %v946 = vpop.permute.xlu0 %945
    %v948 = vsel %vm606, %v946, 0
    %950 = vmatpush.bf16.msra.mxu0 0
    %951 = vmatpush.bf16.msra.mxu0 0
    %952 = vmatpush.bf16.msra.mxu0 0
    %953 = vmatpush.bf16.msra.mxu0 0
    %954 = vmatpush.bf16.msra.mxu0 0
    %955 = vmatpush.bf16.msra.mxu0 0
    %956 = vmatpush.bf16.msra.mxu0 %v603
    %957 = vmatpush.bf16.msra.mxu0 %v602
    %958 = vmatmul.bf16.gmra.mxu0 %v948
    %v959 = vpop.f32.mrf.mxu0
    %v960 = vadd.f32 0.0, %v959
    %v961 = vpop.f32.mrf.mxu0
    %962 = vdwg.mxu0
    %v963 = vadd.f32 %v942, %v960
    %v964 = vmul.f32 %v963, 0.5
    %v965 = vtanh.pop %v964
    %v966 = vadd.f32 %v965, 1.0
    %v967 = vmul.f32 %v966, 0.5
    %v968 = vtanh.pop %v963
    %v969 = vmul.f32 %v967, %v911
    %971 = vrot.lane.b32.xlu0 %v968, 64
    %v972 = vpop.permute.xlu0 %971
    %v974 = vmul.f32 %v967, %v972
    %976 = vrot.lane.b32.xlu0 %v974, 32
    %v977 = vpop.permute.xlu0 %976
    %v979 = vadd.f32 %v969, %v977
    %v980 = vtanh.pop %v979
    %982 = vrot.lane.b32.xlu0 %v980, 64
    %v983 = vpop.permute.xlu0 %982
    %v985 = vmul.f32 %v967, %v983
    %s986 = sld [smem:[#allocation4]]
    %p987 = scmp.gt.s32.totalorder %s986, 5
    %s988 = scalar_select %p987, 1, 0
    %s989 = scvt.s32.f32 %s988
    %v990 = vstv %s989
    %v991 = vmul.f32 %v985, %v990
    %s992 = sld [smem:[#allocation4 + $0x1]]
    %p993 = scmp.gt.s32.totalorder %s992, 5
    %s994 = scalar_select %p993, 1, 0
    %s995 = scvt.s32.f32 %s994
    %v996 = vstv %s995
    %v997 = vmul.f32 %v985, %v996
    %v998 = vsel %vm592, %v991, %v997
    %1000 = vrot.lane.b32.xlu0 %v998, 32
    %v1001 = vpop.permute.xlu0 %1000
    %s1003 = scalar_lea.vmem %s7, 10
    %1004 = vst.msk [vmem:[%s1003] sm:$0x3] %vm663, %v1001
    %v1005 = vld [vmem:[#allocation2 + $0x6] sm:$0x1]
    %v1006 = vld [vmem:[#allocation2 + $0x16] sm:$0x1]
    %v1008 = vrot.slane %v1006, 7
    %v1010 = vsel %vm592, %v1005, %v1008
    %v1011 = vpack.c.bf16 %v985, %v985
    %1013 = vrot.lane.b32.xlu0 %v1011, 32
    %v1014 = vpop.permute.xlu0 %1013
    %v1016 = vsel %vm606, %v1014, 0
    %1018 = vmatpush.bf16.msra.mxu0 0
    %1019 = vmatpush.bf16.msra.mxu0 0
    %1020 = vmatpush.bf16.msra.mxu0 0
    %1021 = vmatpush.bf16.msra.mxu0 0
    %1022 = vmatpush.bf16.msra.mxu0 0
    %1023 = vmatpush.bf16.msra.mxu0 0
    %1024 = vmatpush.bf16.msra.mxu0 %v603
    %1025 = vmatpush.bf16.msra.mxu0 %v602
    %1026 = vmatmul.bf16.gmra.mxu0 %v1016
    %v1027 = vpop.f32.mrf.mxu0
    %v1028 = vadd.f32 0.0, %v1027
    %v1029 = vpop.f32.mrf.mxu0
    %1030 = vdwg.mxu0
    %v1031 = vadd.f32 %v1010, %v1028
    %v1032 = vmul.f32 %v1031, 0.5
    %v1033 = vtanh.pop %v1032
    %v1034 = vadd.f32 %v1033, 1.0
    %v1035 = vmul.f32 %v1034, 0.5
    %v1036 = vtanh.pop %v1031
    %v1037 = vmul.f32 %v1035, %v979
    %1039 = vrot.lane.b32.xlu0 %v1036, 64
    %v1040 = vpop.permute.xlu0 %1039
    %v1042 = vmul.f32 %v1035, %v1040
    %1044 = vrot.lane.b32.xlu0 %v1042, 32
    %v1045 = vpop.permute.xlu0 %1044
    %v1047 = vadd.f32 %v1037, %v1045
    %v1048 = vtanh.pop %v1047
    %1050 = vrot.lane.b32.xlu0 %v1048, 64
    %v1051 = vpop.permute.xlu0 %1050
    %v1053 = vmul.f32 %v1035, %v1051
    %s1054 = sld [smem:[#allocation4]]
    %p1055 = scmp.gt.s32.totalorder %s1054, 6
    %s1056 = scalar_select %p1055, 1, 0
    %s1057 = scvt.s32.f32 %s1056
    %v1058 = vstv %s1057
    %v1059 = vmul.f32 %v1053, %v1058
    %s1060 = sld [smem:[#allocation4 + $0x1]]
    %p1061 = scmp.gt.s32.totalorder %s1060, 6
    %s1062 = scalar_select %p1061, 1, 0
    %s1063 = scvt.s32.f32 %s1062
    %v1064 = vstv %s1063
    %v1065 = vmul.f32 %v1053, %v1064
    %v1066 = vsel %vm592, %v1059, %v1065
    %1068 = vrot.lane.b32.xlu0 %v1066, 32
    %v1069 = vpop.permute.xlu0 %1068
    %s1071 = scalar_lea.vmem %s7, 12
    %1072 = vst.msk [vmem:[%s1071] sm:$0x3] %vm663, %v1069
    %v1073 = vld [vmem:[#allocation2 + $0x7] sm:$0x1]
    %v1074 = vld [vmem:[#allocation2 + $0x17] sm:$0x1]
    %v1076 = vrot.slane %v1074, 7
    %v1078 = vsel %vm592, %v1073, %v1076
    %v1079 = vpack.c.bf16 %v1053, %v1053
    %1081 = vrot.lane.b32.xlu0 %v1079, 32
    %v1082 = vpop.permute.xlu0 %1081
    %v1084 = vsel %vm606, %v1082, 0
    %1086 = vmatpush.bf16.msra.mxu0 0
    %1087 = vmatpush.bf16.msra.mxu0 0
    %1088 = vmatpush.bf16.msra.mxu0 0
    %1089 = vmatpush.bf16.msra.mxu0 0
    %1090 = vmatpush.bf16.msra.mxu0 0
    %1091 = vmatpush.bf16.msra.mxu0 0
    %1092 = vmatpush.bf16.msra.mxu0 %v603
    %1093 = vmatpush.bf16.msra.mxu0 %v602
    %1094 = vmatmul.bf16.gmra.mxu0 %v1084
    %v1095 = vpop.f32.mrf.mxu0
    %v1096 = vadd.f32 0.0, %v1095
    %v1097 = vpop.f32.mrf.mxu0
    %1098 = vdwg.mxu0
    %v1099 = vadd.f32 %v1078, %v1096
    %v1100 = vmul.f32 %v1099, 0.5
    %v1101 = vtanh.pop %v1100
    %v1102 = vadd.f32 %v1101, 1.0
    %v1103 = vmul.f32 %v1102, 0.5
    %v1104 = vtanh.pop %v1099
    %v1105 = vmul.f32 %v1103, %v1047
    %1107 = vrot.lane.b32.xlu0 %v1104, 64
    %v1108 = vpop.permute.xlu0 %1107
    %v1110 = vmul.f32 %v1103, %v1108
    %1112 = vrot.lane.b32.xlu0 %v1110, 32
    %v1113 = vpop.permute.xlu0 %1112
    %v1115 = vadd.f32 %v1105, %v1113
    %v1116 = vtanh.pop %v1115
    %1118 = vrot.lane.b32.xlu0 %v1116, 64
    %v1119 = vpop.permute.xlu0 %1118
    %v1121 = vmul.f32 %v1103, %v1119
    %s1122 = sld [smem:[#allocation4]]
    %p1123 = scmp.gt.s32.totalorder %s1122, 7
    %s1124 = scalar_select %p1123, 1, 0
    %s1125 = scvt.s32.f32 %s1124
    %v1126 = vstv %s1125
    %v1127 = vmul.f32 %v1121, %v1126
    %s1128 = sld [smem:[#allocation4 + $0x1]]
    %p1129 = scmp.gt.s32.totalorder %s1128, 7
    %s1130 = scalar_select %p1129, 1, 0
    %s1131 = scvt.s32.f32 %s1130
    %v1132 = vstv %s1131
    %v1133 = vmul.f32 %v1121, %v1132
    %v1134 = vsel %vm592, %v1127, %v1133
    %1136 = vrot.lane.b32.xlu0 %v1134, 32
    %v1137 = vpop.permute.xlu0 %1136
    %s1139 = scalar_lea.vmem %s7, 14
    %1140 = vst.msk [vmem:[%s1139] sm:$0x3] %vm663, %v1137
    %v1141 = vld [vmem:[#allocation2 + $0x8] sm:$0x1]
    %v1142 = vld [vmem:[#allocation2 + $0x18] sm:$0x1]
    %v1144 = vrot.slane %v1142, 7
    %v1146 = vsel %vm592, %v1141, %v1144
    %v1147 = vpack.c.bf16 %v1121, %v1121
    %1149 = vrot.lane.b32.xlu0 %v1147, 32
    %v1150 = vpop.permute.xlu0 %1149
    %v1152 = vsel %vm606, %v1150, 0
    %1154 = vmatpush.bf16.msra.mxu0 0
    %1155 = vmatpush.bf16.msra.mxu0 0
    %1156 = vmatpush.bf16.msra.mxu0 0
    %1157 = vmatpush.bf16.msra.mxu0 0
    %1158 = vmatpush.bf16.msra.mxu0 0
    %1159 = vmatpush.bf16.msra.mxu0 0
    %1160 = vmatpush.bf16.msra.mxu0 %v603
    %1161 = vmatpush.bf16.msra.mxu0 %v602
    %1162 = vmatmul.bf16.gmra.mxu0 %v1152
    %v1163 = vpop.f32.mrf.mxu0
    %v1164 = vadd.f32 0.0, %v1163
    %v1165 = vpop.f32.mrf.mxu0
    %1166 = vdwg.mxu0
    %v1167 = vadd.f32 %v1146, %v1164
    %v1168 = vmul.f32 %v1167, 0.5
    %v1169 = vtanh.pop %v1168
    %v1170 = vadd.f32 %v1169, 1.0
    %v1171 = vmul.f32 %v1170, 0.5
    %v1172 = vtanh.pop %v1167
    %v1173 = vmul.f32 %v1171, %v1115
    %1175 = vrot.lane.b32.xlu0 %v1172, 64
    %v1176 = vpop.permute.xlu0 %1175
    %v1178 = vmul.f32 %v1171, %v1176
    %1180 = vrot.lane.b32.xlu0 %v1178, 32
    %v1181 = vpop.permute.xlu0 %1180
    %v1183 = vadd.f32 %v1173, %v1181
    %v1184 = vtanh.pop %v1183
    %1186 = vrot.lane.b32.xlu0 %v1184, 64
    %v1187 = vpop.permute.xlu0 %1186
    %v1189 = vmul.f32 %v1171, %v1187
    %s1190 = sld [smem:[#allocation4]]
    %p1191 = scmp.gt.s32.totalorder %s1190, 8
    %s1192 = scalar_select %p1191, 1, 0
    %s1193 = scvt.s32.f32 %s1192
    %v1194 = vstv %s1193
    %v1195 = vmul.f32 %v1189, %v1194
    %s1196 = sld [smem:[#allocation4 + $0x1]]
    %p1197 = scmp.gt.s32.totalorder %s1196, 8
    %s1198 = scalar_select %p1197, 1, 0
    %s1199 = scvt.s32.f32 %s1198
    %v1200 = vstv %s1199
    %v1201 = vmul.f32 %v1189, %v1200
    %v1202 = vsel %vm592, %v1195, %v1201
    %1204 = vrot.lane.b32.xlu0 %v1202, 32
    %v1205 = vpop.permute.xlu0 %1204
    %s1207 = scalar_lea.vmem %s7, 16
    %1208 = vst.msk [vmem:[%s1207] sm:$0x3] %vm663, %v1205
    %v1209 = vld [vmem:[#allocation2 + $0x9] sm:$0x1]
    %v1210 = vld [vmem:[#allocation2 + $0x19] sm:$0x1]
    %v1212 = vrot.slane %v1210, 7
    %v1214 = vsel %vm592, %v1209, %v1212
    %v1215 = vpack.c.bf16 %v1189, %v1189
    %1217 = vrot.lane.b32.xlu0 %v1215, 32
    %v1218 = vpop.permute.xlu0 %1217
    %v1220 = vsel %vm606, %v1218, 0
    %1222 = vmatpush.bf16.msra.mxu0 0
    %1223 = vmatpush.bf16.msra.mxu0 0
    %1224 = vmatpush.bf16.msra.mxu0 0
    %1225 = vmatpush.bf16.msra.mxu0 0
    %1226 = vmatpush.bf16.msra.mxu0 0
    %1227 = vmatpush.bf16.msra.mxu0 0
    %1228 = vmatpush.bf16.msra.mxu0 %v603
    %1229 = vmatpush.bf16.msra.mxu0 %v602
    %1230 = vmatmul.bf16.gmra.mxu0 %v1220
    %v1231 = vpop.f32.mrf.mxu0
    %v1232 = vadd.f32 0.0, %v1231
    %v1233 = vpop.f32.mrf.mxu0
    %1234 = vdwg.mxu0
    %v1235 = vadd.f32 %v1214, %v1232
    %v1236 = vmul.f32 %v1235, 0.5
    %v1237 = vtanh.pop %v1236
    %v1238 = vadd.f32 %v1237, 1.0
    %v1239 = vmul.f32 %v1238, 0.5
    %v1240 = vtanh.pop %v1235
    %v1241 = vmul.f32 %v1239, %v1183
    %1243 = vrot.lane.b32.xlu0 %v1240, 64
    %v1244 = vpop.permute.xlu0 %1243
    %v1246 = vmul.f32 %v1239, %v1244
    %1248 = vrot.lane.b32.xlu0 %v1246, 32
    %v1249 = vpop.permute.xlu0 %1248
    %v1251 = vadd.f32 %v1241, %v1249
    %v1252 = vtanh.pop %v1251
    %1254 = vrot.lane.b32.xlu0 %v1252, 64
    %v1255 = vpop.permute.xlu0 %1254
    %v1257 = vmul.f32 %v1239, %v1255
    %s1258 = sld [smem:[#allocation4]]
    %p1259 = scmp.gt.s32.totalorder %s1258, 9
    %s1260 = scalar_select %p1259, 1, 0
    %s1261 = scvt.s32.f32 %s1260
    %v1262 = vstv %s1261
    %v1263 = vmul.f32 %v1257, %v1262
    %s1264 = sld [smem:[#allocation4 + $0x1]]
    %p1265 = scmp.gt.s32.totalorder %s1264, 9
    %s1266 = scalar_select %p1265, 1, 0
    %s1267 = scvt.s32.f32 %s1266
    %v1268 = vstv %s1267
    %v1269 = vmul.f32 %v1257, %v1268
    %v1270 = vsel %vm592, %v1263, %v1269
    %1272 = vrot.lane.b32.xlu0 %v1270, 32
    %v1273 = vpop.permute.xlu0 %1272
    %s1275 = scalar_lea.vmem %s7, 18
    %1276 = vst.msk [vmem:[%s1275] sm:$0x3] %vm663, %v1273
    %v1277 = vld [vmem:[#allocation2 + $0xa] sm:$0x1]
    %v1278 = vld [vmem:[#allocation2 + $0x1a] sm:$0x1]
    %v1280 = vrot.slane %v1278, 7
    %v1282 = vsel %vm592, %v1277, %v1280
    %v1283 = vpack.c.bf16 %v1257, %v1257
    %1285 = vrot.lane.b32.xlu0 %v1283, 32
    %v1286 = vpop.permute.xlu0 %1285
    %v1288 = vsel %vm606, %v1286, 0
    %1290 = vmatpush.bf16.msra.mxu0 0
    %1291 = vmatpush.bf16.msra.mxu0 0
    %1292 = vmatpush.bf16.msra.mxu0 0
    %1293 = vmatpush.bf16.msra.mxu0 0
    %1294 = vmatpush.bf16.msra.mxu0 0
    %1295 = vmatpush.bf16.msra.mxu0 0
    %1296 = vmatpush.bf16.msra.mxu0 %v603
    %1297 = vmatpush.bf16.msra.mxu0 %v602
    %1298 = vmatmul.bf16.gmra.mxu0 %v1288
    %v1299 = vpop.f32.mrf.mxu0
    %v1300 = vadd.f32 0.0, %v1299
    %v1301 = vpop.f32.mrf.mxu0
    %1302 = vdwg.mxu0
    %v1303 = vadd.f32 %v1282, %v1300
    %v1304 = vmul.f32 %v1303, 0.5
    %v1305 = vtanh.pop %v1304
    %v1306 = vadd.f32 %v1305, 1.0
    %v1307 = vmul.f32 %v1306, 0.5
    %v1308 = vtanh.pop %v1303
    %v1309 = vmul.f32 %v1307, %v1251
    %1311 = vrot.lane.b32.xlu0 %v1308, 64
    %v1312 = vpop.permute.xlu0 %1311
    %v1314 = vmul.f32 %v1307, %v1312
    %1316 = vrot.lane.b32.xlu0 %v1314, 32
    %v1317 = vpop.permute.xlu0 %1316
    %v1319 = vadd.f32 %v1309, %v1317
    %v1320 = vtanh.pop %v1319
    %1322 = vrot.lane.b32.xlu0 %v1320, 64
    %v1323 = vpop.permute.xlu0 %1322
    %v1325 = vmul.f32 %v1307, %v1323
    %s1326 = sld [smem:[#allocation4]]
    %p1327 = scmp.gt.s32.totalorder %s1326, 10
    %s1328 = scalar_select %p1327, 1, 0
    %s1329 = scvt.s32.f32 %s1328
    %v1330 = vstv %s1329
    %v1331 = vmul.f32 %v1325, %v1330
    %s1332 = sld [smem:[#allocation4 + $0x1]]
    %p1333 = scmp.gt.s32.totalorder %s1332, 10
    %s1334 = scalar_select %p1333, 1, 0
    %s1335 = scvt.s32.f32 %s1334
    %v1336 = vstv %s1335
    %v1337 = vmul.f32 %v1325, %v1336
    %v1338 = vsel %vm592, %v1331, %v1337
    %1340 = vrot.lane.b32.xlu0 %v1338, 32
    %v1341 = vpop.permute.xlu0 %1340
    %s1343 = scalar_lea.vmem %s7, 20
    %1344 = vst.msk [vmem:[%s1343] sm:$0x3] %vm663, %v1341
    %v1345 = vld [vmem:[#allocation2 + $0xb] sm:$0x1]
    %v1346 = vld [vmem:[#allocation2 + $0x1b] sm:$0x1]
    %v1348 = vrot.slane %v1346, 7
    %v1350 = vsel %vm592, %v1345, %v1348
    %v1351 = vpack.c.bf16 %v1325, %v1325
    %1353 = vrot.lane.b32.xlu0 %v1351, 32
    %v1354 = vpop.permute.xlu0 %1353
    %v1356 = vsel %vm606, %v1354, 0
    %1358 = vmatpush.bf16.msra.mxu0 0
    %1359 = vmatpush.bf16.msra.mxu0 0
    %1360 = vmatpush.bf16.msra.mxu0 0
    %1361 = vmatpush.bf16.msra.mxu0 0
    %1362 = vmatpush.bf16.msra.mxu0 0
    %1363 = vmatpush.bf16.msra.mxu0 0
    %1364 = vmatpush.bf16.msra.mxu0 %v603
    %1365 = vmatpush.bf16.msra.mxu0 %v602
    %1366 = vmatmul.bf16.gmra.mxu0 %v1356
    %v1367 = vpop.f32.mrf.mxu0
    %v1368 = vadd.f32 0.0, %v1367
    %v1369 = vpop.f32.mrf.mxu0
    %1370 = vdwg.mxu0
    %v1371 = vadd.f32 %v1350, %v1368
    %v1372 = vmul.f32 %v1371, 0.5
    %v1373 = vtanh.pop %v1372
    %v1374 = vadd.f32 %v1373, 1.0
    %v1375 = vmul.f32 %v1374, 0.5
    %v1376 = vtanh.pop %v1371
    %v1377 = vmul.f32 %v1375, %v1319
    %1379 = vrot.lane.b32.xlu0 %v1376, 64
    %v1380 = vpop.permute.xlu0 %1379
    %v1382 = vmul.f32 %v1375, %v1380
    %1384 = vrot.lane.b32.xlu0 %v1382, 32
    %v1385 = vpop.permute.xlu0 %1384
    %v1387 = vadd.f32 %v1377, %v1385
    %v1388 = vtanh.pop %v1387
    %1390 = vrot.lane.b32.xlu0 %v1388, 64
    %v1391 = vpop.permute.xlu0 %1390
    %v1393 = vmul.f32 %v1375, %v1391
    %s1394 = sld [smem:[#allocation4]]
    %p1395 = scmp.gt.s32.totalorder %s1394, 11
    %s1396 = scalar_select %p1395, 1, 0
    %s1397 = scvt.s32.f32 %s1396
    %v1398 = vstv %s1397
    %v1399 = vmul.f32 %v1393, %v1398
    %s1400 = sld [smem:[#allocation4 + $0x1]]
    %p1401 = scmp.gt.s32.totalorder %s1400, 11
    %s1402 = scalar_select %p1401, 1, 0
    %s1403 = scvt.s32.f32 %s1402
    %v1404 = vstv %s1403
    %v1405 = vmul.f32 %v1393, %v1404
    %v1406 = vsel %vm592, %v1399, %v1405
    %1408 = vrot.lane.b32.xlu0 %v1406, 32
    %v1409 = vpop.permute.xlu0 %1408
    %s1411 = scalar_lea.vmem %s7, 22
    %1412 = vst.msk [vmem:[%s1411] sm:$0x3] %vm663, %v1409
    %v1413 = vld [vmem:[#allocation2 + $0xc] sm:$0x1]
    %v1414 = vld [vmem:[#allocation2 + $0x1c] sm:$0x1]
    %v1416 = vrot.slane %v1414, 7
    %v1418 = vsel %vm592, %v1413, %v1416
    %v1419 = vpack.c.bf16 %v1393, %v1393
    %1421 = vrot.lane.b32.xlu0 %v1419, 32
    %v1422 = vpop.permute.xlu0 %1421
    %v1424 = vsel %vm606, %v1422, 0
    %1426 = vmatpush.bf16.msra.mxu0 0
    %1427 = vmatpush.bf16.msra.mxu0 0
    %1428 = vmatpush.bf16.msra.mxu0 0
    %1429 = vmatpush.bf16.msra.mxu0 0
    %1430 = vmatpush.bf16.msra.mxu0 0
    %1431 = vmatpush.bf16.msra.mxu0 0
    %1432 = vmatpush.bf16.msra.mxu0 %v603
    %1433 = vmatpush.bf16.msra.mxu0 %v602
    %1434 = vmatmul.bf16.gmra.mxu0 %v1424
    %v1435 = vpop.f32.mrf.mxu0
    %v1436 = vadd.f32 0.0, %v1435
    %v1437 = vpop.f32.mrf.mxu0
    %1438 = vdwg.mxu0
    %v1439 = vadd.f32 %v1418, %v1436
    %v1440 = vmul.f32 %v1439, 0.5
    %v1441 = vtanh.pop %v1440
    %v1442 = vadd.f32 %v1441, 1.0
    %v1443 = vmul.f32 %v1442, 0.5
    %v1444 = vtanh.pop %v1439
    %v1445 = vmul.f32 %v1443, %v1387
    %1447 = vrot.lane.b32.xlu0 %v1444, 64
    %v1448 = vpop.permute.xlu0 %1447
    %v1450 = vmul.f32 %v1443, %v1448
    %1452 = vrot.lane.b32.xlu0 %v1450, 32
    %v1453 = vpop.permute.xlu0 %1452
    %v1455 = vadd.f32 %v1445, %v1453
    %v1456 = vtanh.pop %v1455
    %1458 = vrot.lane.b32.xlu0 %v1456, 64
    %v1459 = vpop.permute.xlu0 %1458
    %v1461 = vmul.f32 %v1443, %v1459
    %s1462 = sld [smem:[#allocation4]]
    %p1463 = scmp.gt.s32.totalorder %s1462, 12
    %s1464 = scalar_select %p1463, 1, 0
    %s1465 = scvt.s32.f32 %s1464
    %v1466 = vstv %s1465
    %v1467 = vmul.f32 %v1461, %v1466
    %s1468 = sld [smem:[#allocation4 + $0x1]]
    %p1469 = scmp.gt.s32.totalorder %s1468, 12
    %s1470 = scalar_select %p1469, 1, 0
    %s1471 = scvt.s32.f32 %s1470
    %v1472 = vstv %s1471
    %v1473 = vmul.f32 %v1461, %v1472
    %v1474 = vsel %vm592, %v1467, %v1473
    %1476 = vrot.lane.b32.xlu0 %v1474, 32
    %v1477 = vpop.permute.xlu0 %1476
    %s1479 = scalar_lea.vmem %s7, 24
    %1480 = vst.msk [vmem:[%s1479] sm:$0x3] %vm663, %v1477
    %v1481 = vld [vmem:[#allocation2 + $0xd] sm:$0x1]
    %v1482 = vld [vmem:[#allocation2 + $0x1d] sm:$0x1]
    %v1484 = vrot.slane %v1482, 7
    %v1486 = vsel %vm592, %v1481, %v1484
    %v1487 = vpack.c.bf16 %v1461, %v1461
    %1489 = vrot.lane.b32.xlu0 %v1487, 32
    %v1490 = vpop.permute.xlu0 %1489
    %v1492 = vsel %vm606, %v1490, 0
    %1494 = vmatpush.bf16.msra.mxu0 0
    %1495 = vmatpush.bf16.msra.mxu0 0
    %1496 = vmatpush.bf16.msra.mxu0 0
    %1497 = vmatpush.bf16.msra.mxu0 0
    %1498 = vmatpush.bf16.msra.mxu0 0
    %1499 = vmatpush.bf16.msra.mxu0 0
    %1500 = vmatpush.bf16.msra.mxu0 %v603
    %1501 = vmatpush.bf16.msra.mxu0 %v602
    %1502 = vmatmul.bf16.gmra.mxu0 %v1492
    %v1503 = vpop.f32.mrf.mxu0
    %v1504 = vadd.f32 0.0, %v1503
    %v1505 = vpop.f32.mrf.mxu0
    %1506 = vdwg.mxu0
    %v1507 = vadd.f32 %v1486, %v1504
    %v1508 = vmul.f32 %v1507, 0.5
    %v1509 = vtanh.pop %v1508
    %v1510 = vadd.f32 %v1509, 1.0
    %v1511 = vmul.f32 %v1510, 0.5
    %v1512 = vtanh.pop %v1507
    %v1513 = vmul.f32 %v1511, %v1455
    %1515 = vrot.lane.b32.xlu0 %v1512, 64
    %v1516 = vpop.permute.xlu0 %1515
    %v1518 = vmul.f32 %v1511, %v1516
    %1520 = vrot.lane.b32.xlu0 %v1518, 32
    %v1521 = vpop.permute.xlu0 %1520
    %v1523 = vadd.f32 %v1513, %v1521
    %v1524 = vtanh.pop %v1523
    %1526 = vrot.lane.b32.xlu0 %v1524, 64
    %v1527 = vpop.permute.xlu0 %1526
    %v1529 = vmul.f32 %v1511, %v1527
    %s1530 = sld [smem:[#allocation4]]
    %p1531 = scmp.gt.s32.totalorder %s1530, 13
    %s1532 = scalar_select %p1531, 1, 0
    %s1533 = scvt.s32.f32 %s1532
    %v1534 = vstv %s1533
    %v1535 = vmul.f32 %v1529, %v1534
    %s1536 = sld [smem:[#allocation4 + $0x1]]
    %p1537 = scmp.gt.s32.totalorder %s1536, 13
    %s1538 = scalar_select %p1537, 1, 0
    %s1539 = scvt.s32.f32 %s1538
    %v1540 = vstv %s1539
    %v1541 = vmul.f32 %v1529, %v1540
    %v1542 = vsel %vm592, %v1535, %v1541
    %1544 = vrot.lane.b32.xlu0 %v1542, 32
    %v1545 = vpop.permute.xlu0 %1544
    %s1547 = scalar_lea.vmem %s7, 26
    %1548 = vst.msk [vmem:[%s1547] sm:$0x3] %vm663, %v1545
    %v1549 = vld [vmem:[#allocation2 + $0xe] sm:$0x1]
    %v1550 = vld [vmem:[#allocation2 + $0x1e] sm:$0x1]
    %v1552 = vrot.slane %v1550, 7
    %v1554 = vsel %vm592, %v1549, %v1552
    %v1555 = vpack.c.bf16 %v1529, %v1529
    %1557 = vrot.lane.b32.xlu0 %v1555, 32
    %v1558 = vpop.permute.xlu0 %1557
    %v1560 = vsel %vm606, %v1558, 0
    %1562 = vmatpush.bf16.msra.mxu0 0
    %1563 = vmatpush.bf16.msra.mxu0 0
    %1564 = vmatpush.bf16.msra.mxu0 0
    %1565 = vmatpush.bf16.msra.mxu0 0
    %1566 = vmatpush.bf16.msra.mxu0 0
    %1567 = vmatpush.bf16.msra.mxu0 0
    %1568 = vmatpush.bf16.msra.mxu0 %v603
    %1569 = vmatpush.bf16.msra.mxu0 %v602
    %1570 = vmatmul.bf16.gmra.mxu0 %v1560
    %v1571 = vpop.f32.mrf.mxu0
    %v1572 = vadd.f32 0.0, %v1571
    %v1573 = vpop.f32.mrf.mxu0
    %1574 = vdwg.mxu0
    %v1575 = vadd.f32 %v1554, %v1572
    %v1576 = vmul.f32 %v1575, 0.5
    %v1577 = vtanh.pop %v1576
    %v1578 = vadd.f32 %v1577, 1.0
    %v1579 = vmul.f32 %v1578, 0.5
    %v1580 = vtanh.pop %v1575
    %v1581 = vmul.f32 %v1579, %v1523
    %1583 = vrot.lane.b32.xlu0 %v1580, 64
    %v1584 = vpop.permute.xlu0 %1583
    %v1586 = vmul.f32 %v1579, %v1584
    %1588 = vrot.lane.b32.xlu0 %v1586, 32
    %v1589 = vpop.permute.xlu0 %1588
    %v1591 = vadd.f32 %v1581, %v1589
    %v1592 = vtanh.pop %v1591
    %1594 = vrot.lane.b32.xlu0 %v1592, 64
    %v1595 = vpop.permute.xlu0 %1594
    %v1597 = vmul.f32 %v1579, %v1595
    %s1598 = sld [smem:[#allocation4]]
    %p1599 = scmp.gt.s32.totalorder %s1598, 14
    %s1600 = scalar_select %p1599, 1, 0
    %s1601 = scvt.s32.f32 %s1600
    %v1602 = vstv %s1601
    %v1603 = vmul.f32 %v1597, %v1602
    %s1604 = sld [smem:[#allocation4 + $0x1]]
    %p1605 = scmp.gt.s32.totalorder %s1604, 14
    %s1606 = scalar_select %p1605, 1, 0
    %s1607 = scvt.s32.f32 %s1606
    %v1608 = vstv %s1607
    %v1609 = vmul.f32 %v1597, %v1608
    %v1610 = vsel %vm592, %v1603, %v1609
    %1612 = vrot.lane.b32.xlu0 %v1610, 32
    %v1613 = vpop.permute.xlu0 %1612
    %s1615 = scalar_lea.vmem %s7, 28
    %1616 = vst.msk [vmem:[%s1615] sm:$0x3] %vm663, %v1613
    %v1617 = vld [vmem:[#allocation2 + $0xf] sm:$0x1]
    %v1618 = vld [vmem:[#allocation2 + $0x1f] sm:$0x1]
    %v1620 = vrot.slane %v1618, 7
    %v1622 = vsel %vm592, %v1617, %v1620
    %v1623 = vpack.c.bf16 %v1597, %v1597
    %1625 = vrot.lane.b32.xlu0 %v1623, 32
    %v1626 = vpop.permute.xlu0 %1625
    %v1628 = vsel %vm606, %v1626, 0
    %1630 = vmatpush.bf16.msra.mxu0 0
    %1631 = vmatpush.bf16.msra.mxu0 0
    %1632 = vmatpush.bf16.msra.mxu0 0
    %1633 = vmatpush.bf16.msra.mxu0 0
    %1634 = vmatpush.bf16.msra.mxu0 0
    %1635 = vmatpush.bf16.msra.mxu0 0
    %1636 = vmatpush.bf16.msra.mxu0 %v603
    %1637 = vmatpush.bf16.msra.mxu0 %v602
    %1638 = vmatmul.bf16.gmra.mxu0 %v1628
    %v1639 = vpop.f32.mrf.mxu0
    %v1640 = vadd.f32 0.0, %v1639
    %v1641 = vpop.f32.mrf.mxu0
    %1642 = vdwg.mxu0
    %v1643 = vadd.f32 %v1622, %v1640
    %v1644 = vmul.f32 %v1643, 0.5
    %v1645 = vtanh.pop %v1644
    %v1646 = vadd.f32 %v1645, 1.0
    %v1647 = vmul.f32 %v1646, 0.5
    %v1648 = vtanh.pop %v1643
    %v1649 = vmul.f32 %v1647, %v1591
    %1651 = vrot.lane.b32.xlu0 %v1648, 64
    %v1652 = vpop.permute.xlu0 %1651
    %v1654 = vmul.f32 %v1647, %v1652
    %1656 = vrot.lane.b32.xlu0 %v1654, 32
    %v1657 = vpop.permute.xlu0 %1656
    %v1659 = vadd.f32 %v1649, %v1657
    %v1660 = vtanh.pop %v1659
    %1662 = vrot.lane.b32.xlu0 %v1660, 64
    %v1663 = vpop.permute.xlu0 %1662
    %v1665 = vmul.f32 %v1647, %v1663
    %s1666 = sld [smem:[#allocation4]]
    %p1667 = scmp.gt.s32.totalorder %s1666, 15
    %s1668 = scalar_select %p1667, 1, 0
    %s1669 = scvt.s32.f32 %s1668
    %v1670 = vstv %s1669
    %v1671 = vmul.f32 %v1665, %v1670
    %s1672 = sld [smem:[#allocation4 + $0x1]]
    %p1673 = scmp.gt.s32.totalorder %s1672, 15
    %s1674 = scalar_select %p1673, 1, 0
    %s1675 = scvt.s32.f32 %s1674
    %v1676 = vstv %s1675
    %v1677 = vmul.f32 %v1665, %v1676
    %v1678 = vsel %vm592, %v1671, %v1677
    %1680 = vrot.lane.b32.xlu0 %v1678, 32
    %v1681 = vpop.permute.xlu0 %1680
    %s1683 = scalar_lea.vmem %s7, 30
    %1684 = vst.msk [vmem:[%s1683] sm:$0x3] %vm663, %v1681
    // Predicated region
    $region46: #{kws_net_forward.4} parent=1 // pred_check
      _
    $region47: #{kws_net_forward.4} parent=1 // pred_check_branch
      %1686 = sbr.rel (0) target = $region49
    $region48: #{kws_net_forward.4} parent=1 // pred_region
      _
    $region49: #{kws_net_forward.4} parent=1 // pred_fallthru
      _
    // Predicated region
    $region50: #{kws_net_forward.4} parent=1 // pred_check
      _
    $region51: #{kws_net_forward.4} parent=1 // pred_check_branch
      %1688 = sbr.rel (0) target = $region53
    $region52: #{kws_net_forward.4} parent=1 // pred_region
      _
    $region53: #{kws_net_forward.4} parent=1 // pred_fallthru
      _
    %1689 = vsyncpa [#allocation6], 1
    %1690 = vsyncpa [#allocation8], 1
    %1691 = vsyncpa [#allocation11], 1

// kernel: kws_net_forward.5
$region0: #{kws_net_forward.5}
  #allocation0 [shape = 'u32[]', space=smem, size = 0x4, offset = 0x4, fixed_abs, tag = 'smem constant byte address 0x4 - core index']
  #allocation1 [shape = 'u32[72,128]{1,0:T(1,128)}', space=vmem, size = 0x9000, scoped, tag = 'internal scratch']
  %s0 = inlined_call_operand.vmem [shape: bf16[1024,25], index: 0, kind: input, shape index: {}]
  %s1 = inlined_call_operand.vmem [shape: bf16[25,32], index: 1, kind: input, shape index: {}]
  %s2 = inlined_call_operand.vmem [shape: f32[1,32], index: 2, kind: input, shape index: {}]
  %s3 = inlined_call_operand.vmem [shape: bf16[1024,32], index: 3, kind: output, shape index: {}]
  %s4 = sld [smem:[#allocation0]]
  $region22: #{kws_net_forward.5} parent=0
    _
  %s6 = ssub.s32 1, %s4
  %s7 = scalar_select 0, %s6, %s4
  // Predicated region
  $region2: #{kws_net_forward.5} parent=0 // pred_check
    _
  $region3: #{kws_net_forward.5} parent=0 // pred_check_branch
    %9 = sbr.rel (0) target = $region5
  $region4: #{kws_net_forward.5} parent=0 // pred_region
    _
  $region5: #{kws_net_forward.5} parent=0 // pred_fallthru
    _
  // Predicated region
  $region6: #{kws_net_forward.5} parent=0 // pred_check
    _
  $region7: #{kws_net_forward.5} parent=0 // pred_check_branch
    %11 = sbr.rel (0) target = $region9
  $region8: #{kws_net_forward.5} parent=0 // pred_region
    _
  $region9: #{kws_net_forward.5} parent=0 // pred_fallthru
    _
  // Predicated region
  $region10: #{kws_net_forward.5} parent=0 // pred_check
    _
  $region11: #{kws_net_forward.5} parent=0 // pred_check_branch
    %13 = sbr.rel (0) target = $region13
  $region12: #{kws_net_forward.5} parent=0 // pred_region
    _
  $region13: #{kws_net_forward.5} parent=0 // pred_fallthru
    _
  %v15 = vld [vmem:[%s0] sm:$0xf]
  %v16 = vld [vmem:[%s0 + $0x4] sm:$0xf]
  %v17 = vld [vmem:[%s0 + $0x8] sm:$0xf]
  %v18 = vld [vmem:[%s0 + $0xc] sm:$0xf]
  %v19 = vld [vmem:[%s0 + $0x10] sm:$0xf]
  %v20 = vld [vmem:[%s0 + $0x14] sm:$0xf]
  %v21 = vld [vmem:[%s0 + $0x18] sm:$0xf]
  %v22 = vld [vmem:[%s0 + $0x1c] sm:$0xf]
  %v23 = vld [vmem:[%s0 + $0x20] sm:$0xf]
  %v24 = vld [vmem:[%s0 + $0x24] sm:$0xf]
  %v25 = vld [vmem:[%s0 + $0x28] sm:$0xf]
  %v26 = vld [vmem:[%s0 + $0x2c] sm:$0xf]
  %v27 = vld [vmem:[%s0 + $0x30] sm:$0xf]
  %v28 = vld [vmem:[%s0 + $0x34] sm:$0xf]
  %v29 = vld [vmem:[%s0 + $0x38] sm:$0xf]
  %v30 = vld [vmem:[%s0 + $0x3c] sm:$0xf]
  %v31 = vld [vmem:[%s0 + $0x40] sm:$0xf]
  %v32 = vld [vmem:[%s0 + $0x44] sm:$0xf]
  %v33 = vld [vmem:[%s0 + $0x48] sm:$0xf]
  %v34 = vld [vmem:[%s0 + $0x4c] sm:$0xf]
  %v35 = vld [vmem:[%s0 + $0x50] sm:$0xf]
  %v36 = vld [vmem:[%s0 + $0x54] sm:$0xf]
  %v37 = vld [vmem:[%s0 + $0x58] sm:$0xf]
  %v38 = vld [vmem:[%s0 + $0x5c] sm:$0xf]
  %v39 = vld [vmem:[%s0 + $0x60] sm:$0xf]
  %v40 = vld [vmem:[%s0 + $0x64] sm:$0xf]
  %v41 = vld [vmem:[%s0 + $0x68] sm:$0xf]
  %v42 = vld [vmem:[%s0 + $0x6c] sm:$0xf]
  %v43 = vld [vmem:[%s0 + $0x70] sm:$0xf]
  %v44 = vld [vmem:[%s0 + $0x74] sm:$0xf]
  %v45 = vld [vmem:[%s0 + $0x78] sm:$0xf]
  %v46 = vld [vmem:[%s0 + $0x7c] sm:$0xf]
  %v47 = vld [vmem:[%s0 + $0x80] sm:$0xf]
  %v48 = vld [vmem:[%s0 + $0x84] sm:$0xf]
  %v49 = vld [vmem:[%s0 + $0x88] sm:$0xf]
  %v50 = vld [vmem:[%s0 + $0x8c] sm:$0xf]
  %v51 = vld [vmem:[%s0 + $0x90] sm:$0xf]
  %v52 = vld [vmem:[%s0 + $0x94] sm:$0xf]
  %v53 = vld [vmem:[%s0 + $0x98] sm:$0xf]
  %v54 = vld [vmem:[%s0 + $0x9c] sm:$0xf]
  %v55 = vld [vmem:[%s0 + $0xa0] sm:$0xf]
  %v56 = vld [vmem:[%s0 + $0xa4] sm:$0xf]
  %v57 = vld [vmem:[%s0 + $0xa8] sm:$0xf]
  %v58 = vld [vmem:[%s0 + $0xac] sm:$0xf]
  %v59 = vld [vmem:[%s0 + $0xb0] sm:$0xf]
  %v60 = vld [vmem:[%s0 + $0xb4] sm:$0xf]
  %v61 = vld [vmem:[%s0 + $0xb8] sm:$0xf]
  %v62 = vld [vmem:[%s0 + $0xbc] sm:$0xf]
  %v63 = vld [vmem:[%s0 + $0xc0] sm:$0xf]
  %v64 = vld [vmem:[%s0 + $0xc4] sm:$0xf]
  %v65 = vld [vmem:[%s0 + $0xc8] sm:$0xf]
  %v66 = vld [vmem:[%s0 + $0xcc] sm:$0xf]
  %v67 = vld [vmem:[%s0 + $0xd0] sm:$0xf]
  %v68 = vld [vmem:[%s0 + $0xd4] sm:$0xf]
  %v69 = vld [vmem:[%s0 + $0xd8] sm:$0xf]
  %v70 = vld [vmem:[%s0 + $0xdc] sm:$0xf]
  %v71 = vld [vmem:[%s0 + $0xe0] sm:$0xf]
  %v72 = vld [vmem:[%s0 + $0xe4] sm:$0xf]
  %v73 = vld [vmem:[%s0 + $0xe8] sm:$0xf]
  %v74 = vld [vmem:[%s0 + $0xec] sm:$0xf]
  %v75 = vld [vmem:[%s0 + $0xf0] sm:$0xf]
  %v76 = vld [vmem:[%s0 + $0xf4] sm:$0xf]
  %v77 = vld [vmem:[%s0 + $0xf8] sm:$0xf]
  %v78 = vld [vmem:[%s0 + $0xfc] sm:$0xf]
  %v79 = vld [vmem:[%s0 + $0x100] sm:$0xf]
  %v80 = vld [vmem:[%s0 + $0x104] sm:$0xf]
  %v81 = vld [vmem:[%s0 + $0x108] sm:$0xf]
  %v82 = vld [vmem:[%s0 + $0x10c] sm:$0xf]
  %v83 = vld [vmem:[%s0 + $0x110] sm:$0xf]
  %v84 = vld [vmem:[%s0 + $0x114] sm:$0xf]
  %v85 = vld [vmem:[%s0 + $0x118] sm:$0xf]
  %v86 = vld [vmem:[%s0 + $0x11c] sm:$0xf]
  %v87 = vld [vmem:[%s0 + $0x120] sm:$0xf]
  %v88 = vld [vmem:[%s0 + $0x124] sm:$0xf]
  %v89 = vld [vmem:[%s0 + $0x128] sm:$0xf]
  %v90 = vld [vmem:[%s0 + $0x12c] sm:$0xf]
  %v91 = vld [vmem:[%s0 + $0x130] sm:$0xf]
  %v92 = vld [vmem:[%s0 + $0x134] sm:$0xf]
  %v93 = vld [vmem:[%s0 + $0x138] sm:$0xf]
  %v94 = vld [vmem:[%s0 + $0x13c] sm:$0xf]
  %v95 = vld [vmem:[%s0 + $0x140] sm:$0xf]
  %v96 = vld [vmem:[%s0 + $0x144] sm:$0xf]
  %v97 = vld [vmem:[%s0 + $0x148] sm:$0xf]
  %v98 = vld [vmem:[%s0 + $0x14c] sm:$0xf]
  %v99 = vld [vmem:[%s0 + $0x150] sm:$0xf]
  %v100 = vld [vmem:[%s0 + $0x154] sm:$0xf]
  %v101 = vld [vmem:[%s0 + $0x158] sm:$0xf]
  %v102 = vld [vmem:[%s0 + $0x15c] sm:$0xf]
  %v103 = vld [vmem:[%s0 + $0x160] sm:$0xf]
  %v104 = vld [vmem:[%s0 + $0x164] sm:$0xf]
  %v105 = vld [vmem:[%s0 + $0x168] sm:$0xf]
  %v106 = vld [vmem:[%s0 + $0x16c] sm:$0xf]
  %v107 = vld [vmem:[%s0 + $0x170] sm:$0xf]
  %v108 = vld [vmem:[%s0 + $0x174] sm:$0xf]
  %v109 = vld [vmem:[%s0 + $0x178] sm:$0xf]
  %v110 = vld [vmem:[%s0 + $0x17c] sm:$0xf]
  %v111 = vld [vmem:[%s0 + $0x180] sm:$0xf]
  %v112 = vld [vmem:[%s0 + $0x184] sm:$0xf]
  %v113 = vld [vmem:[%s0 + $0x188] sm:$0xf]
  %v114 = vld [vmem:[%s0 + $0x18c] sm:$0xf]
  %v115 = vld [vmem:[%s0 + $0x190] sm:$0xf]
  %v116 = vld [vmem:[%s0 + $0x194] sm:$0xf]
  %v117 = vld [vmem:[%s0 + $0x198] sm:$0xf]
  %v118 = vld [vmem:[%s0 + $0x19c] sm:$0xf]
  %v119 = vld [vmem:[%s0 + $0x1a0] sm:$0xf]
  %v120 = vld [vmem:[%s0 + $0x1a4] sm:$0xf]
  %v121 = vld [vmem:[%s0 + $0x1a8] sm:$0xf]
  %v122 = vld [vmem:[%s0 + $0x1ac] sm:$0xf]
  %v123 = vld [vmem:[%s0 + $0x1b0] sm:$0xf]
  %v124 = vld [vmem:[%s0 + $0x1b4] sm:$0xf]
  %v125 = vld [vmem:[%s0 + $0x1b8] sm:$0xf]
  %v126 = vld [vmem:[%s0 + $0x1bc] sm:$0xf]
  %v127 = vld [vmem:[%s0 + $0x1c0] sm:$0xf]
  %v128 = vld [vmem:[%s0 + $0x1c4] sm:$0xf]
  %v129 = vld [vmem:[%s0 + $0x1c8] sm:$0xf]
  %v130 = vld [vmem:[%s0 + $0x1cc] sm:$0xf]
  %v131 = vld [vmem:[%s0 + $0x1d0] sm:$0xf]
  %v132 = vld [vmem:[%s0 + $0x1d4] sm:$0xf]
  %v133 = vld [vmem:[%s0 + $0x1d8] sm:$0xf]
  %v134 = vld [vmem:[%s0 + $0x1dc] sm:$0xf]
  %v135 = vld [vmem:[%s0 + $0x1e0] sm:$0xf]
  %v136 = vld [vmem:[%s0 + $0x1e4] sm:$0xf]
  %v137 = vld [vmem:[%s0 + $0x1e8] sm:$0xf]
  %v138 = vld [vmem:[%s0 + $0x1ec] sm:$0xf]
  %v139 = vld [vmem:[%s0 + $0x1f0] sm:$0xf]
  %v140 = vld [vmem:[%s0 + $0x1f4] sm:$0xf]
  %v141 = vld [vmem:[%s0 + $0x1f8] sm:$0xf]
  %v142 = vld [vmem:[%s0 + $0x1fc] sm:$0xf]
  %v143 = vld [vmem:[%s1] sm:$0xf]
  %v144 = vld [vmem:[%s1 + $0x4] sm:$0xf]
  %v145 = vld [vmem:[%s1 + $0x8] sm:$0xf]
  %v146 = vld [vmem:[%s1 + $0xc] sm:$0x1]
  %v147 = vld [vmem:[%s2] sm:$0x1]
  %v149 = vperm.slane %v147, 0
  %v279 = vunpack.c.l.b16 %v15
  %v280 = vunpack.c.l.b16 %v16
  %v281 = vunpack.c.l.b16 %v17
  %v282 = vunpack.c.l.b16 %v18
  %v283 = vunpack.c.l.b16 %v19
  %v284 = vunpack.c.l.b16 %v20
  %v285 = vunpack.c.l.b16 %v21
  %v286 = vunpack.c.l.b16 %v22
  %v287 = vunpack.c.l.b16 %v23
  %v288 = vunpack.c.l.b16 %v24
  %v289 = vunpack.c.l.b16 %v25
  %v290 = vunpack.c.l.b16 %v26
  %v291 = vunpack.c.l.b16 %v27
  %v292 = vunpack.c.l.b16 %v28
  %v293 = vunpack.c.l.b16 %v29
  %v294 = vunpack.c.l.b16 %v30
  %v295 = vunpack.c.l.b16 %v31
  %v296 = vunpack.c.l.b16 %v32
  %v297 = vunpack.c.l.b16 %v33
  %v298 = vunpack.c.l.b16 %v34
  %v299 = vunpack.c.l.b16 %v35
  %v300 = vunpack.c.l.b16 %v36
  %v301 = vunpack.c.l.b16 %v37
  %v302 = vunpack.c.l.b16 %v38
  %v303 = vunpack.c.l.b16 %v39
  %v304 = vunpack.c.l.b16 %v40
  %v305 = vunpack.c.l.b16 %v41
  %v306 = vunpack.c.l.b16 %v42
  %v307 = vunpack.c.l.b16 %v43
  %v308 = vunpack.c.l.b16 %v44
  %v309 = vunpack.c.l.b16 %v45
  %v310 = vunpack.c.l.b16 %v46
  %v311 = vunpack.c.l.b16 %v47
  %v312 = vunpack.c.l.b16 %v48
  %v313 = vunpack.c.l.b16 %v49
  %v314 = vunpack.c.l.b16 %v50
  %v315 = vunpack.c.l.b16 %v51
  %v316 = vunpack.c.l.b16 %v52
  %v317 = vunpack.c.l.b16 %v53
  %v318 = vunpack.c.l.b16 %v54
  %v319 = vunpack.c.l.b16 %v55
  %v320 = vunpack.c.l.b16 %v56
  %v321 = vunpack.c.l.b16 %v57
  %v322 = vunpack.c.l.b16 %v58
  %v323 = vunpack.c.l.b16 %v59
  %v324 = vunpack.c.l.b16 %v60
  %v325 = vunpack.c.l.b16 %v61
  %v326 = vunpack.c.l.b16 %v62
  %v327 = vunpack.c.l.b16 %v63
  %v328 = vunpack.c.l.b16 %v64
  %v329 = vunpack.c.l.b16 %v65
  %v330 = vunpack.c.l.b16 %v66
  %v331 = vunpack.c.l.b16 %v67
  %v332 = vunpack.c.l.b16 %v68
  %v333 = vunpack.c.l.b16 %v69
  %v334 = vunpack.c.l.b16 %v70
  %v335 = vunpack.c.l.b16 %v71
  %v336 = vunpack.c.l.b16 %v72
  %v337 = vunpack.c.l.b16 %v73
  %v338 = vunpack.c.l.b16 %v74
  %v339 = vunpack.c.l.b16 %v75
  %v340 = vunpack.c.l.b16 %v76
  %v341 = vunpack.c.l.b16 %v77
  %v342 = vunpack.c.l.b16 %v78
  %v343 = vunpack.c.l.b16 %v79
  %v344 = vunpack.c.l.b16 %v80
  %v345 = vunpack.c.l.b16 %v81
  %v346 = vunpack.c.l.b16 %v82
  %v347 = vunpack.c.l.b16 %v83
  %v348 = vunpack.c.l.b16 %v84
  %v349 = vunpack.c.l.b16 %v85
  %v350 = vunpack.c.l.b16 %v86
  %v351 = vunpack.c.l.b16 %v87
  %v352 = vunpack.c.l.b16 %v88
  %v353 = vunpack.c.l.b16 %v89
  %v354 = vunpack.c.l.b16 %v90
  %v355 = vunpack.c.l.b16 %v91
  %v356 = vunpack.c.l.b16 %v92
  %v357 = vunpack.c.l.b16 %v93
  %v358 = vunpack.c.l.b16 %v94
  %v359 = vunpack.c.l.b16 %v95
  %v360 = vunpack.c.l.b16 %v96
  %v361 = vunpack.c.l.b16 %v97
  %v362 = vunpack.c.l.b16 %v98
  %v363 = vunpack.c.l.b16 %v99
  %v364 = vunpack.c.l.b16 %v100
  %v365 = vunpack.c.l.b16 %v101
  %v366 = vunpack.c.l.b16 %v102
  %v367 = vunpack.c.l.b16 %v103
  %v368 = vunpack.c.l.b16 %v104
  %v369 = vunpack.c.l.b16 %v105
  %v370 = vunpack.c.l.b16 %v106
  %v371 = vunpack.c.l.b16 %v107
  %v372 = vunpack.c.l.b16 %v108
  %v373 = vunpack.c.l.b16 %v109
  %v374 = vunpack.c.l.b16 %v110
  %v375 = vunpack.c.l.b16 %v111
  %v376 = vunpack.c.l.b16 %v112
  %v377 = vunpack.c.l.b16 %v113
  %v378 = vunpack.c.l.b16 %v114
  %v379 = vunpack.c.l.b16 %v115
  %v380 = vunpack.c.l.b16 %v116
  %v381 = vunpack.c.l.b16 %v117
  %v382 = vunpack.c.l.b16 %v118
  %v383 = vunpack.c.l.b16 %v119
  %v384 = vunpack.c.l.b16 %v120
  %v385 = vunpack.c.l.b16 %v121
  %v386 = vunpack.c.l.b16 %v122
  %v387 = vunpack.c.l.b16 %v123
  %v388 = vunpack.c.l.b16 %v124
  %v389 = vunpack.c.l.b16 %v125
  %v390 = vunpack.c.l.b16 %v126
  %v391 = vunpack.c.l.b16 %v127
  %v392 = vunpack.c.l.b16 %v128
  %v393 = vunpack.c.l.b16 %v129
  %v394 = vunpack.c.l.b16 %v130
  %v395 = vunpack.c.l.b16 %v131
  %v396 = vunpack.c.l.b16 %v132
  %v397 = vunpack.c.l.b16 %v133
  %v398 = vunpack.c.l.b16 %v134
  %v399 = vunpack.c.l.b16 %v135
  %v400 = vunpack.c.l.b16 %v136
  %v401 = vunpack.c.l.b16 %v137
  %v402 = vunpack.c.l.b16 %v138
  %v403 = vunpack.c.l.b16 %v139
  %v404 = vunpack.c.l.b16 %v140
  %v405 = vunpack.c.l.b16 %v141
  %v406 = vunpack.c.l.b16 %v142
  %v407 = vpack.c.b16 %v280, %v279
  %v408 = vpack.c.b16 %v282, %v281
  %v409 = vpack.c.b16 %v284, %v283
  %v410 = vpack.c.b16 %v286, %v285
  %v411 = vpack.c.b16 %v288, %v287
  %v412 = vpack.c.b16 %v290, %v289
  %v413 = vpack.c.b16 %v292, %v291
  %v414 = vpack.c.b16 %v294, %v293
  %v415 = vpack.c.b16 %v296, %v295
  %v416 = vpack.c.b16 %v298, %v297
  %v417 = vpack.c.b16 %v300, %v299
  %v418 = vpack.c.b16 %v302, %v301
  %v419 = vpack.c.b16 %v304, %v303
  %v420 = vpack.c.b16 %v306, %v305
  %v421 = vpack.c.b16 %v308, %v307
  %v422 = vpack.c.b16 %v310, %v309
  %v423 = vpack.c.b16 %v312, %v311
  %v424 = vpack.c.b16 %v314, %v313
  %v425 = vpack.c.b16 %v316, %v315
  %v426 = vpack.c.b16 %v318, %v317
  %v427 = vpack.c.b16 %v320, %v319
  %v428 = vpack.c.b16 %v322, %v321
  %v429 = vpack.c.b16 %v324, %v323
  %v430 = vpack.c.b16 %v326, %v325
  %v431 = vpack.c.b16 %v328, %v327
  %v432 = vpack.c.b16 %v330, %v329
  %v433 = vpack.c.b16 %v332, %v331
  %v434 = vpack.c.b16 %v334, %v333
  %v435 = vpack.c.b16 %v336, %v335
  %v436 = vpack.c.b16 %v338, %v337
  %v437 = vpack.c.b16 %v340, %v339
  %v438 = vpack.c.b16 %v342, %v341
  %v439 = vpack.c.b16 %v344, %v343
  %v440 = vpack.c.b16 %v346, %v345
  %v441 = vpack.c.b16 %v348, %v347
  %v442 = vpack.c.b16 %v350, %v349
  %v443 = vpack.c.b16 %v352, %v351
  %v444 = vpack.c.b16 %v354, %v353
  %v445 = vpack.c.b16 %v356, %v355
  %v446 = vpack.c.b16 %v358, %v357
  %v447 = vpack.c.b16 %v360, %v359
  %v448 = vpack.c.b16 %v362, %v361
  %v449 = vpack.c.b16 %v364, %v363
  %v450 = vpack.c.b16 %v366, %v365
  %v451 = vpack.c.b16 %v368, %v367
  %v452 = vpack.c.b16 %v370, %v369
  %v453 = vpack.c.b16 %v372, %v371
  %v454 = vpack.c.b16 %v374, %v373
  %v455 = vpack.c.b16 %v376, %v375
  %v456 = vpack.c.b16 %v378, %v377
  %v457 = vpack.c.b16 %v380, %v379
  %v458 = vpack.c.b16 %v382, %v381
  %v459 = vpack.c.b16 %v384, %v383
  %v460 = vpack.c.b16 %v386, %v385
  %v461 = vpack.c.b16 %v388, %v387
  %v462 = vpack.c.b16 %v390, %v389
  %v463 = vpack.c.b16 %v392, %v391
  %v464 = vpack.c.b16 %v394, %v393
  %v465 = vpack.c.b16 %v396, %v395
  %v466 = vpack.c.b16 %v398, %v397
  %v467 = vpack.c.b16 %v400, %v399
  %v468 = vpack.c.b16 %v402, %v401
  %v469 = vpack.c.b16 %v404, %v403
  %v470 = vpack.c.b16 %v406, %v405
  %v475 = vunpack.c.l.b16 %v143
  %v476 = vunpack.c.l.b16 %v144
  %v477 = vunpack.c.l.b16 %v145
  %v478 = vunpack.c.l.b16 %v146
  %v479 = vpack.c.b16 %v476, %v475
  %v480 = vpack.c.b16 %v478, %v477
  %vm482 = vcmask 203776
  %v484 = vsel %vm482, %v407, 0
  %v487 = vsel %vm482, %v408, 0
  %v490 = vsel %vm482, %v409, 0
  %v493 = vsel %vm482, %v410, 0
  %v496 = vsel %vm482, %v411, 0
  %v499 = vsel %vm482, %v412, 0
  %v502 = vsel %vm482, %v413, 0
  %v505 = vsel %vm482, %v414, 0
  %v508 = vsel %vm482, %v415, 0
  %v511 = vsel %vm482, %v416, 0
  %v514 = vsel %vm482, %v417, 0
  %v517 = vsel %vm482, %v418, 0
  %v520 = vsel %vm482, %v419, 0
  %v523 = vsel %vm482, %v420, 0
  %v526 = vsel %vm482, %v421, 0
  %v529 = vsel %vm482, %v422, 0
  %v532 = vsel %vm482, %v423, 0
  %v535 = vsel %vm482, %v424, 0
  %v538 = vsel %vm482, %v425, 0
  %v541 = vsel %vm482, %v426, 0
  %v544 = vsel %vm482, %v427, 0
  %v547 = vsel %vm482, %v428, 0
  %v550 = vsel %vm482, %v429, 0
  %v553 = vsel %vm482, %v430, 0
  %v556 = vsel %vm482, %v431, 0
  %v559 = vsel %vm482, %v432, 0
  %v562 = vsel %vm482, %v433, 0
  %v565 = vsel %vm482, %v434, 0
  %v568 = vsel %vm482, %v435, 0
  %v571 = vsel %vm482, %v436, 0
  %v574 = vsel %vm482, %v437, 0
  %v577 = vsel %vm482, %v438, 0
  %v580 = vsel %vm482, %v439, 0
  %v583 = vsel %vm482, %v440, 0
  %v586 = vsel %vm482, %v441, 0
  %v589 = vsel %vm482, %v442, 0
  %v592 = vsel %vm482, %v443, 0
  %v595 = vsel %vm482, %v444, 0
  %v598 = vsel %vm482, %v445, 0
  %v601 = vsel %vm482, %v446, 0
  %v604 = vsel %vm482, %v447, 0
  %v607 = vsel %vm482, %v448, 0
  %v610 = vsel %vm482, %v449, 0
  %v613 = vsel %vm482, %v450, 0
  %v616 = vsel %vm482, %v451, 0
  %v619 = vsel %vm482, %v452, 0
  %v622 = vsel %vm482, %v453, 0
  %v625 = vsel %vm482, %v454, 0
  %v628 = vsel %vm482, %v455, 0
  %v631 = vsel %vm482, %v456, 0
  %v634 = vsel %vm482, %v457, 0
  %v637 = vsel %vm482, %v458, 0
  %v640 = vsel %vm482, %v459, 0
  %v643 = vsel %vm482, %v460, 0
  %v646 = vsel %vm482, %v461, 0
  %v649 = vsel %vm482, %v462, 0
  %v652 = vsel %vm482, %v463, 0
  %v655 = vsel %vm482, %v464, 0
  %v658 = vsel %vm482, %v465, 0
  %v661 = vsel %vm482, %v466, 0
  %v664 = vsel %vm482, %v467, 0
  %v667 = vsel %vm482, %v468, 0
  %v670 = vsel %vm482, %v469, 0
  %v673 = vsel %vm482, %v470, 0
  %vm675 = vcmask 1043456
  %vm676 = vcmask 1044480
  %v677 = vsel %vm675, 4294967295, 65535
  %v678 = vsel %vm676, %v677, 0
  %v680 = vand.u32 %v480, %v678
  %682 = vmatpush.bf16.msra.mxu0 0
  %683 = vmatpush.bf16.msra.mxu0 0
  %684 = vmatpush.bf16.msra.mxu0 0
  %685 = vmatpush.bf16.msra.mxu0 0
  %686 = vmatpush.bf16.msra.mxu0 0
  %687 = vmatpush.bf16.msra.mxu0 0
  %688 = vmatpush.bf16.msra.mxu0 %v680
  %689 = vmatpush.bf16.msra.mxu0 %v479
  %690 = vmatmul.bf16.gmra.mxu0 %v484
  %v691 = vpop.f32.mrf.mxu0
  %v692 = vadd.f32 %v149, %v691
  %v693 = vpop.f32.mrf.mxu0
  %v694 = vadd.f32 %v149, %v693
  %695 = vmatmul.bf16.gmra.mxu0 %v487
  %v696 = vpop.f32.mrf.mxu0
  %v697 = vadd.f32 %v149, %v696
  %v698 = vpop.f32.mrf.mxu0
  %v699 = vadd.f32 %v149, %v698
  %700 = vmatmul.bf16.gmra.mxu0 %v490
  %v701 = vpop.f32.mrf.mxu0
  %v702 = vadd.f32 %v149, %v701
  %v703 = vpop.f32.mrf.mxu0
  %v704 = vadd.f32 %v149, %v703
  %705 = vmatmul.bf16.gmra.mxu0 %v493
  %v706 = vpop.f32.mrf.mxu0
  %v707 = vadd.f32 %v149, %v706
  %v708 = vpop.f32.mrf.mxu0
  %v709 = vadd.f32 %v149, %v708
  %710 = vmatmul.bf16.gmra.mxu0 %v496
  %v711 = vpop.f32.mrf.mxu0
  %v712 = vadd.f32 %v149, %v711
  %v713 = vpop.f32.mrf.mxu0
  %v714 = vadd.f32 %v149, %v713
  %715 = vmatmul.bf16.gmra.mxu0 %v499
  %v716 = vpop.f32.mrf.mxu0
  %v717 = vadd.f32 %v149, %v716
  %v718 = vpop.f32.mrf.mxu0
  %v719 = vadd.f32 %v149, %v718
  %720 = vmatmul.bf16.gmra.mxu0 %v502
  %v721 = vpop.f32.mrf.mxu0
  %v722 = vadd.f32 %v149, %v721
  %v723 = vpop.f32.mrf.mxu0
  %v724 = vadd.f32 %v149, %v723
  %725 = vmatmul.bf16.gmra.mxu0 %v505
  %v726 = vpop.f32.mrf.mxu0
  %v727 = vadd.f32 %v149, %v726
  %v728 = vpop.f32.mrf.mxu0
  %v729 = vadd.f32 %v149, %v728
  %730 = vmatmul.bf16.gmra.mxu0 %v508
  %v731 = vpop.f32.mrf.mxu0
  %v732 = vadd.f32 %v149, %v731
  %v733 = vpop.f32.mrf.mxu0
  %v734 = vadd.f32 %v149, %v733
  %735 = vmatmul.bf16.gmra.mxu0 %v511
  %v736 = vpop.f32.mrf.mxu0
  %v737 = vadd.f32 %v149, %v736
  %v738 = vpop.f32.mrf.mxu0
  %v739 = vadd.f32 %v149, %v738
  %740 = vmatmul.bf16.gmra.mxu0 %v514
  %v741 = vpop.f32.mrf.mxu0
  %v742 = vadd.f32 %v149, %v741
  %v743 = vpop.f32.mrf.mxu0
  %v744 = vadd.f32 %v149, %v743
  %745 = vmatmul.bf16.gmra.mxu0 %v517
  %v746 = vpop.f32.mrf.mxu0
  %v747 = vadd.f32 %v149, %v746
  %v748 = vpop.f32.mrf.mxu0
  %v749 = vadd.f32 %v149, %v748
  %750 = vmatmul.bf16.gmra.mxu0 %v520
  %v751 = vpop.f32.mrf.mxu0
  %v752 = vadd.f32 %v149, %v751
  %v753 = vpop.f32.mrf.mxu0
  %v754 = vadd.f32 %v149, %v753
  %755 = vmatmul.bf16.gmra.mxu0 %v523
  %v756 = vpop.f32.mrf.mxu0
  %v757 = vadd.f32 %v149, %v756
  %v758 = vpop.f32.mrf.mxu0
  %v759 = vadd.f32 %v149, %v758
  %760 = vmatmul.bf16.gmra.mxu0 %v526
  %v761 = vpop.f32.mrf.mxu0
  %v762 = vadd.f32 %v149, %v761
  %v763 = vpop.f32.mrf.mxu0
  %v764 = vadd.f32 %v149, %v763
  %765 = vmatmul.bf16.gmra.mxu0 %v529
  %v766 = vpop.f32.mrf.mxu0
  %v767 = vadd.f32 %v149, %v766
  %v768 = vpop.f32.mrf.mxu0
  %v769 = vadd.f32 %v149, %v768
  %770 = vmatmul.bf16.gmra.mxu0 %v532
  %v771 = vpop.f32.mrf.mxu0
  %v772 = vadd.f32 %v149, %v771
  %v773 = vpop.f32.mrf.mxu0
  %v774 = vadd.f32 %v149, %v773
  %775 = vmatmul.bf16.gmra.mxu0 %v535
  %v776 = vpop.f32.mrf.mxu0
  %v777 = vadd.f32 %v149, %v776
  %v778 = vpop.f32.mrf.mxu0
  %v779 = vadd.f32 %v149, %v778
  %780 = vmatmul.bf16.gmra.mxu0 %v538
  %v781 = vpop.f32.mrf.mxu0
  %v782 = vadd.f32 %v149, %v781
  %v783 = vpop.f32.mrf.mxu0
  %v784 = vadd.f32 %v149, %v783
  %785 = vmatmul.bf16.gmra.mxu0 %v541
  %v786 = vpop.f32.mrf.mxu0
  %v787 = vadd.f32 %v149, %v786
  %v788 = vpop.f32.mrf.mxu0
  %v789 = vadd.f32 %v149, %v788
  %790 = vmatmul.bf16.gmra.mxu0 %v544
  %v791 = vpop.f32.mrf.mxu0
  %v792 = vadd.f32 %v149, %v791
  %v793 = vpop.f32.mrf.mxu0
  %v794 = vadd.f32 %v149, %v793
  %795 = vmatmul.bf16.gmra.mxu0 %v547
  %v796 = vpop.f32.mrf.mxu0
  %v797 = vadd.f32 %v149, %v796
  %v798 = vpop.f32.mrf.mxu0
  %v799 = vadd.f32 %v149, %v798
  %800 = vmatmul.bf16.gmra.mxu0 %v550
  %v801 = vpop.f32.mrf.mxu0
  %v802 = vadd.f32 %v149, %v801
  %v803 = vpop.f32.mrf.mxu0
  %v804 = vadd.f32 %v149, %v803
  %805 = vmatmul.bf16.gmra.mxu0 %v553
  %v806 = vpop.f32.mrf.mxu0
  %v807 = vadd.f32 %v149, %v806
  %v808 = vpop.f32.mrf.mxu0
  %v809 = vadd.f32 %v149, %v808
  %810 = vmatmul.bf16.gmra.mxu0 %v556
  %v811 = vpop.f32.mrf.mxu0
  %v812 = vadd.f32 %v149, %v811
  %v813 = vpop.f32.mrf.mxu0
  %v814 = vadd.f32 %v149, %v813
  %815 = vmatmul.bf16.gmra.mxu0 %v559
  %v816 = vpop.f32.mrf.mxu0
  %v817 = vadd.f32 %v149, %v816
  %v818 = vpop.f32.mrf.mxu0
  %v819 = vadd.f32 %v149, %v818
  %820 = vmatmul.bf16.gmra.mxu0 %v562
  %v821 = vpop.f32.mrf.mxu0
  %v822 = vadd.f32 %v149, %v821
  %v823 = vpop.f32.mrf.mxu0
  %v824 = vadd.f32 %v149, %v823
  %825 = vmatmul.bf16.gmra.mxu0 %v565
  %v826 = vpop.f32.mrf.mxu0
  %v827 = vadd.f32 %v149, %v826
  %v828 = vpop.f32.mrf.mxu0
  %v829 = vadd.f32 %v149, %v828
  %830 = vmatmul.bf16.gmra.mxu0 %v568
  %v831 = vpop.f32.mrf.mxu0
  %v832 = vadd.f32 %v149, %v831
  %v833 = vpop.f32.mrf.mxu0
  %v834 = vadd.f32 %v149, %v833
  %835 = vmatmul.bf16.gmra.mxu0 %v571
  %v836 = vpop.f32.mrf.mxu0
  %v837 = vadd.f32 %v149, %v836
  %v838 = vpop.f32.mrf.mxu0
  %v839 = vadd.f32 %v149, %v838
  %840 = vmatmul.bf16.gmra.mxu0 %v574
  %v841 = vpop.f32.mrf.mxu0
  %v842 = vadd.f32 %v149, %v841
  %v843 = vpop.f32.mrf.mxu0
  %v844 = vadd.f32 %v149, %v843
  %845 = vmatmul.bf16.gmra.mxu0 %v577
  %v846 = vpop.f32.mrf.mxu0
  %v847 = vadd.f32 %v149, %v846
  %v848 = vpop.f32.mrf.mxu0
  %v849 = vadd.f32 %v149, %v848
  %850 = vmatmul.bf16.gmra.mxu0 %v580
  %v851 = vpop.f32.mrf.mxu0
  %v852 = vadd.f32 %v149, %v851
  %v853 = vpop.f32.mrf.mxu0
  %v854 = vadd.f32 %v149, %v853
  %855 = vmatmul.bf16.gmra.mxu0 %v583
  %v856 = vpop.f32.mrf.mxu0
  %v857 = vadd.f32 %v149, %v856
  %v858 = vpop.f32.mrf.mxu0
  %v859 = vadd.f32 %v149, %v858
  %860 = vmatmul.bf16.gmra.mxu0 %v586
  %v861 = vpop.f32.mrf.mxu0
  %v862 = vadd.f32 %v149, %v861
  %v863 = vpop.f32.mrf.mxu0
  %v864 = vadd.f32 %v149, %v863
  %865 = vmatmul.bf16.gmra.mxu0 %v589
  %v866 = vpop.f32.mrf.mxu0
  %v867 = vadd.f32 %v149, %v866
  %v868 = vpop.f32.mrf.mxu0
  %v869 = vadd.f32 %v149, %v868
  %870 = vmatmul.bf16.gmra.mxu0 %v592
  %v871 = vpop.f32.mrf.mxu0
  %v872 = vadd.f32 %v149, %v871
  %v873 = vpop.f32.mrf.mxu0
  %v874 = vadd.f32 %v149, %v873
  %875 = vmatmul.bf16.gmra.mxu0 %v595
  %v876 = vpop.f32.mrf.mxu0
  %v877 = vadd.f32 %v149, %v876
  %v878 = vpop.f32.mrf.mxu0
  %v879 = vadd.f32 %v149, %v878
  %880 = vmatmul.bf16.gmra.mxu0 %v598
  %v881 = vpop.f32.mrf.mxu0
  %v882 = vadd.f32 %v149, %v881
  %v883 = vpop.f32.mrf.mxu0
  %v884 = vadd.f32 %v149, %v883
  %885 = vmatmul.bf16.gmra.mxu0 %v601
  %v886 = vpop.f32.mrf.mxu0
  %v887 = vadd.f32 %v149, %v886
  %v888 = vpop.f32.mrf.mxu0
  %v889 = vadd.f32 %v149, %v888
  %890 = vmatmul.bf16.gmra.mxu0 %v604
  %v891 = vpop.f32.mrf.mxu0
  %v892 = vadd.f32 %v149, %v891
  %v893 = vpop.f32.mrf.mxu0
  %v894 = vadd.f32 %v149, %v893
  %895 = vmatmul.bf16.gmra.mxu0 %v607
  %v896 = vpop.f32.mrf.mxu0
  %v897 = vadd.f32 %v149, %v896
  %v898 = vpop.f32.mrf.mxu0
  %v899 = vadd.f32 %v149, %v898
  %900 = vmatmul.bf16.gmra.mxu0 %v610
  %v901 = vpop.f32.mrf.mxu0
  %v902 = vadd.f32 %v149, %v901
  %v903 = vpop.f32.mrf.mxu0
  %v904 = vadd.f32 %v149, %v903
  %905 = vmatmul.bf16.gmra.mxu0 %v613
  %v906 = vpop.f32.mrf.mxu0
  %v907 = vadd.f32 %v149, %v906
  %v908 = vpop.f32.mrf.mxu0
  %v909 = vadd.f32 %v149, %v908
  %910 = vmatmul.bf16.gmra.mxu0 %v616
  %v911 = vpop.f32.mrf.mxu0
  %v912 = vadd.f32 %v149, %v911
  %v913 = vpop.f32.mrf.mxu0
  %v914 = vadd.f32 %v149, %v913
  %915 = vmatmul.bf16.gmra.mxu0 %v619
  %v916 = vpop.f32.mrf.mxu0
  %v917 = vadd.f32 %v149, %v916
  %v918 = vpop.f32.mrf.mxu0
  %v919 = vadd.f32 %v149, %v918
  %920 = vmatmul.bf16.gmra.mxu0 %v622
  %v921 = vpop.f32.mrf.mxu0
  %v922 = vadd.f32 %v149, %v921
  %v923 = vpop.f32.mrf.mxu0
  %v924 = vadd.f32 %v149, %v923
  %925 = vmatmul.bf16.gmra.mxu0 %v625
  %v926 = vpop.f32.mrf.mxu0
  %v927 = vadd.f32 %v149, %v926
  %v928 = vpop.f32.mrf.mxu0
  %v929 = vadd.f32 %v149, %v928
  %930 = vmatmul.bf16.gmra.mxu0 %v628
  %v931 = vpop.f32.mrf.mxu0
  %v932 = vadd.f32 %v149, %v931
  %v933 = vpop.f32.mrf.mxu0
  %v934 = vadd.f32 %v149, %v933
  %935 = vmatmul.bf16.gmra.mxu0 %v631
  %v936 = vpop.f32.mrf.mxu0
  %v937 = vadd.f32 %v149, %v936
  %v938 = vpop.f32.mrf.mxu0
  %v939 = vadd.f32 %v149, %v938
  %940 = vmatmul.bf16.gmra.mxu0 %v634
  %v941 = vpop.f32.mrf.mxu0
  %v942 = vadd.f32 %v149, %v941
  %v943 = vpop.f32.mrf.mxu0
  %v944 = vadd.f32 %v149, %v943
  %945 = vmatmul.bf16.gmra.mxu0 %v637
  %v946 = vpop.f32.mrf.mxu0
  %v947 = vadd.f32 %v149, %v946
  %v948 = vpop.f32.mrf.mxu0
  %v949 = vadd.f32 %v149, %v948
  %950 = vmatmul.bf16.gmra.mxu0 %v640
  %v951 = vpop.f32.mrf.mxu0
  %v952 = vadd.f32 %v149, %v951
  %v953 = vpop.f32.mrf.mxu0
  %v954 = vadd.f32 %v149, %v953
  %955 = vmatmul.bf16.gmra.mxu0 %v643
  %v956 = vpop.f32.mrf.mxu0
  %v957 = vadd.f32 %v149, %v956
  %v958 = vpop.f32.mrf.mxu0
  %v959 = vadd.f32 %v149, %v958
  %960 = vmatmul.bf16.gmra.mxu0 %v646
  %v961 = vpop.f32.mrf.mxu0
  %v962 = vadd.f32 %v149, %v961
  %v963 = vpop.f32.mrf.mxu0
  %v964 = vadd.f32 %v149, %v963
  %965 = vmatmul.bf16.gmra.mxu0 %v649
  %v966 = vpop.f32.mrf.mxu0
  %v967 = vadd.f32 %v149, %v966
  %v968 = vpop.f32.mrf.mxu0
  %v969 = vadd.f32 %v149, %v968
  %970 = vmatmul.bf16.gmra.mxu0 %v652
  %v971 = vpop.f32.mrf.mxu0
  %v972 = vadd.f32 %v149, %v971
  %v973 = vpop.f32.mrf.mxu0
  %v974 = vadd.f32 %v149, %v973
  %975 = vmatmul.bf16.gmra.mxu0 %v655
  %v976 = vpop.f32.mrf.mxu0
  %v977 = vadd.f32 %v149, %v976
  %v978 = vpop.f32.mrf.mxu0
  %v979 = vadd.f32 %v149, %v978
  %980 = vmatmul.bf16.gmra.mxu0 %v658
  %v981 = vpop.f32.mrf.mxu0
  %v982 = vadd.f32 %v149, %v981
  %v983 = vpop.f32.mrf.mxu0
  %v984 = vadd.f32 %v149, %v983
  %985 = vmatmul.bf16.gmra.mxu0 %v661
  %v986 = vpop.f32.mrf.mxu0
  %v987 = vadd.f32 %v149, %v986
  %v988 = vpop.f32.mrf.mxu0
  %v989 = vadd.f32 %v149, %v988
  %990 = vmatmul.bf16.gmra.mxu0 %v664
  %v991 = vpop.f32.mrf.mxu0
  %v992 = vadd.f32 %v149, %v991
  %v993 = vpop.f32.mrf.mxu0
  %v994 = vadd.f32 %v149, %v993
  %995 = vmatmul.bf16.gmra.mxu0 %v667
  %v996 = vpop.f32.mrf.mxu0
  %v997 = vadd.f32 %v149, %v996
  %v998 = vpop.f32.mrf.mxu0
  %v999 = vadd.f32 %v149, %v998
  %1000 = vmatmul.bf16.gmra.mxu0 %v670
  %v1001 = vpop.f32.mrf.mxu0
  %v1002 = vadd.f32 %v149, %v1001
  %v1003 = vpop.f32.mrf.mxu0
  %v1004 = vadd.f32 %v149, %v1003
  %1005 = vmatmul.bf16.gmra.mxu0 %v673
  %v1006 = vpop.f32.mrf.mxu0
  %v1007 = vadd.f32 %v149, %v1006
  %v1008 = vpop.f32.mrf.mxu0
  %v1009 = vadd.f32 %v149, %v1008
  %1010 = vdwg.mxu0
  %v1011 = vpack.c.bf16 %v692, %v692
  %v1012 = vpack.c.bf16 %v694, %v694
  %v1013 = vpack.c.bf16 %v697, %v697
  %v1014 = vpack.c.bf16 %v699, %v699
  %v1015 = vpack.c.bf16 %v702, %v702
  %v1016 = vpack.c.bf16 %v704, %v704
  %v1017 = vpack.c.bf16 %v707, %v707
  %v1018 = vpack.c.bf16 %v709, %v709
  %v1019 = vpack.c.bf16 %v712, %v712
  %v1020 = vpack.c.bf16 %v714, %v714
  %v1021 = vpack.c.bf16 %v717, %v717
  %v1022 = vpack.c.bf16 %v719, %v719
  %v1023 = vpack.c.bf16 %v722, %v722
  %v1024 = vpack.c.bf16 %v724, %v724
  %v1025 = vpack.c.bf16 %v727, %v727
  %v1026 = vpack.c.bf16 %v729, %v729
  %v1027 = vpack.c.bf16 %v732, %v732
  %v1028 = vpack.c.bf16 %v734, %v734
  %v1029 = vpack.c.bf16 %v737, %v737
  %v1030 = vpack.c.bf16 %v739, %v739
  %v1031 = vpack.c.bf16 %v742, %v742
  %v1032 = vpack.c.bf16 %v744, %v744
  %v1033 = vpack.c.bf16 %v747, %v747
  %v1034 = vpack.c.bf16 %v749, %v749
  %v1035 = vpack.c.bf16 %v752, %v752
  %v1036 = vpack.c.bf16 %v754, %v754
  %v1037 = vpack.c.bf16 %v757, %v757
  %v1038 = vpack.c.bf16 %v759, %v759
  %v1039 = vpack.c.bf16 %v762, %v762
  %v1040 = vpack.c.bf16 %v764, %v764
  %v1041 = vpack.c.bf16 %v767, %v767
  %v1042 = vpack.c.bf16 %v769, %v769
  %v1043 = vpack.c.bf16 %v772, %v772
  %v1044 = vpack.c.bf16 %v774, %v774
  %v1045 = vpack.c.bf16 %v777, %v777
  %v1046 = vpack.c.bf16 %v779, %v779
  %v1047 = vpack.c.bf16 %v782, %v782
  %v1048 = vpack.c.bf16 %v784, %v784
  %v1049 = vpack.c.bf16 %v787, %v787
  %v1050 = vpack.c.bf16 %v789, %v789
  %v1051 = vpack.c.bf16 %v792, %v792
  %v1052 = vpack.c.bf16 %v794, %v794
  %v1053 = vpack.c.bf16 %v797, %v797
  %v1054 = vpack.c.bf16 %v799, %v799
  %v1055 = vpack.c.bf16 %v802, %v802
  %v1056 = vpack.c.bf16 %v804, %v804
  %v1057 = vpack.c.bf16 %v807, %v807
  %v1058 = vpack.c.bf16 %v809, %v809
  %v1059 = vpack.c.bf16 %v812, %v812
  %v1060 = vpack.c.bf16 %v814, %v814
  %v1061 = vpack.c.bf16 %v817, %v817
  %v1062 = vpack.c.bf16 %v819, %v819
  %v1063 = vpack.c.bf16 %v822, %v822
  %v1064 = vpack.c.bf16 %v824, %v824
  %v1065 = vpack.c.bf16 %v827, %v827
  %v1066 = vpack.c.bf16 %v829, %v829
  %v1067 = vpack.c.bf16 %v832, %v832
  %v1068 = vpack.c.bf16 %v834, %v834
  %v1069 = vpack.c.bf16 %v837, %v837
  %v1070 = vpack.c.bf16 %v839, %v839
  %v1071 = vpack.c.bf16 %v842, %v842
  %v1072 = vpack.c.bf16 %v844, %v844
  %v1073 = vpack.c.bf16 %v847, %v847
  %v1074 = vpack.c.bf16 %v849, %v849
  %v1075 = vpack.c.bf16 %v852, %v852
  %v1076 = vpack.c.bf16 %v854, %v854
  %v1077 = vpack.c.bf16 %v857, %v857
  %v1078 = vpack.c.bf16 %v859, %v859
  %v1079 = vpack.c.bf16 %v862, %v862
  %v1080 = vpack.c.bf16 %v864, %v864
  %v1081 = vpack.c.bf16 %v867, %v867
  %v1082 = vpack.c.bf16 %v869, %v869
  %v1083 = vpack.c.bf16 %v872, %v872
  %v1084 = vpack.c.bf16 %v874, %v874
  %v1085 = vpack.c.bf16 %v877, %v877
  %v1086 = vpack.c.bf16 %v879, %v879
  %v1087 = vpack.c.bf16 %v882, %v882
  %v1088 = vpack.c.bf16 %v884, %v884
  %v1089 = vpack.c.bf16 %v887, %v887
  %v1090 = vpack.c.bf16 %v889, %v889
  %v1091 = vpack.c.bf16 %v892, %v892
  %v1092 = vpack.c.bf16 %v894, %v894
  %v1093 = vpack.c.bf16 %v897, %v897
  %v1094 = vpack.c.bf16 %v899, %v899
  %v1095 = vpack.c.bf16 %v902, %v902
  %v1096 = vpack.c.bf16 %v904, %v904
  %v1097 = vpack.c.bf16 %v907, %v907
  %v1098 = vpack.c.bf16 %v909, %v909
  %v1099 = vpack.c.bf16 %v912, %v912
  %v1100 = vpack.c.bf16 %v914, %v914
  %v1101 = vpack.c.bf16 %v917, %v917
  %v1102 = vpack.c.bf16 %v919, %v919
  %v1103 = vpack.c.bf16 %v922, %v922
  %v1104 = vpack.c.bf16 %v924, %v924
  %v1105 = vpack.c.bf16 %v927, %v927
  %v1106 = vpack.c.bf16 %v929, %v929
  %v1107 = vpack.c.bf16 %v932, %v932
  %v1108 = vpack.c.bf16 %v934, %v934
  %v1109 = vpack.c.bf16 %v937, %v937
  %v1110 = vpack.c.bf16 %v939, %v939
  %v1111 = vpack.c.bf16 %v942, %v942
  %v1112 = vpack.c.bf16 %v944, %v944
  %v1113 = vpack.c.bf16 %v947, %v947
  %v1114 = vpack.c.bf16 %v949, %v949
  %v1115 = vpack.c.bf16 %v952, %v952
  %v1116 = vpack.c.bf16 %v954, %v954
  %v1117 = vpack.c.bf16 %v957, %v957
  %v1118 = vpack.c.bf16 %v959, %v959
  %v1119 = vpack.c.bf16 %v962, %v962
  %v1120 = vpack.c.bf16 %v964, %v964
  %v1121 = vpack.c.bf16 %v967, %v967
  %v1122 = vpack.c.bf16 %v969, %v969
  %v1123 = vpack.c.bf16 %v972, %v972
  %v1124 = vpack.c.bf16 %v974, %v974
  %v1125 = vpack.c.bf16 %v977, %v977
  %v1126 = vpack.c.bf16 %v979, %v979
  %v1127 = vpack.c.bf16 %v982, %v982
  %v1128 = vpack.c.bf16 %v984, %v984
  %v1129 = vpack.c.bf16 %v987, %v987
  %v1130 = vpack.c.bf16 %v989, %v989
  %v1131 = vpack.c.bf16 %v992, %v992
  %v1132 = vpack.c.bf16 %v994, %v994
  %v1133 = vpack.c.bf16 %v997, %v997
  %v1134 = vpack.c.bf16 %v999, %v999
  %v1135 = vpack.c.bf16 %v1002, %v1002
  %v1136 = vpack.c.bf16 %v1004, %v1004
  %v1137 = vpack.c.bf16 %v1007, %v1007
  %v1138 = vpack.c.bf16 %v1009, %v1009
  %vm1139 = vcmask 257024
  %1140 = vst.msk [vmem:[%s3] sm:$0xf] %vm1139, %v1011
  %1141 = vst.msk [vmem:[%s3 + $0x4] sm:$0xf] %vm1139, %v1012
  %1142 = vst.msk [vmem:[%s3 + $0x8] sm:$0xf] %vm1139, %v1013
  %1143 = vst.msk [vmem:[%s3 + $0xc] sm:$0xf] %vm1139, %v1014
  %1144 = vst.msk [vmem:[%s3 + $0x10] sm:$0xf] %vm1139, %v1015
  %1145 = vst.msk [vmem:[%s3 + $0x14] sm:$0xf] %vm1139, %v1016
  %1146 = vst.msk [vmem:[%s3 + $0x18] sm:$0xf] %vm1139, %v1017
  %1147 = vst.msk [vmem:[%s3 + $0x1c] sm:$0xf] %vm1139, %v1018
  %1148 = vst.msk [vmem:[%s3 + $0x20] sm:$0xf] %vm1139, %v1019
  %1149 = vst.msk [vmem:[%s3 + $0x24] sm:$0xf] %vm1139, %v1020
  %1150 = vst.msk [vmem:[%s3 + $0x28] sm:$0xf] %vm1139, %v1021
  %1151 = vst.msk [vmem:[%s3 + $0x2c] sm:$0xf] %vm1139, %v1022
  %1152 = vst.msk [vmem:[%s3 + $0x30] sm:$0xf] %vm1139, %v1023
  %1153 = vst.msk [vmem:[%s3 + $0x34] sm:$0xf] %vm1139, %v1024
  %1154 = vst.msk [vmem:[%s3 + $0x38] sm:$0xf] %vm1139, %v1025
  %1155 = vst.msk [vmem:[%s3 + $0x3c] sm:$0xf] %vm1139, %v1026
  %1156 = vst.msk [vmem:[%s3 + $0x40] sm:$0xf] %vm1139, %v1027
  %1157 = vst.msk [vmem:[%s3 + $0x44] sm:$0xf] %vm1139, %v1028
  %1158 = vst.msk [vmem:[%s3 + $0x48] sm:$0xf] %vm1139, %v1029
  %1159 = vst.msk [vmem:[%s3 + $0x4c] sm:$0xf] %vm1139, %v1030
  %1160 = vst.msk [vmem:[%s3 + $0x50] sm:$0xf] %vm1139, %v1031
  %1161 = vst.msk [vmem:[%s3 + $0x54] sm:$0xf] %vm1139, %v1032
  %1162 = vst.msk [vmem:[%s3 + $0x58] sm:$0xf] %vm1139, %v1033
  %1163 = vst.msk [vmem:[%s3 + $0x5c] sm:$0xf] %vm1139, %v1034
  %1164 = vst.msk [vmem:[%s3 + $0x60] sm:$0xf] %vm1139, %v1035
  %1165 = vst.msk [vmem:[%s3 + $0x64] sm:$0xf] %vm1139, %v1036
  %1166 = vst.msk [vmem:[%s3 + $0x68] sm:$0xf] %vm1139, %v1037
  %1167 = vst.msk [vmem:[%s3 + $0x6c] sm:$0xf] %vm1139, %v1038
  %1168 = vst.msk [vmem:[%s3 + $0x70] sm:$0xf] %vm1139, %v1039
  %1169 = vst.msk [vmem:[%s3 + $0x74] sm:$0xf] %vm1139, %v1040
  %1170 = vst.msk [vmem:[%s3 + $0x78] sm:$0xf] %vm1139, %v1041
  %1171 = vst.msk [vmem:[%s3 + $0x7c] sm:$0xf] %vm1139, %v1042
  %1172 = vst.msk [vmem:[%s3 + $0x80] sm:$0xf] %vm1139, %v1043
  %1173 = vst.msk [vmem:[%s3 + $0x84] sm:$0xf] %vm1139, %v1044
  %1174 = vst.msk [vmem:[%s3 + $0x88] sm:$0xf] %vm1139, %v1045
  %1175 = vst.msk [vmem:[%s3 + $0x8c] sm:$0xf] %vm1139, %v1046
  %1176 = vst.msk [vmem:[%s3 + $0x90] sm:$0xf] %vm1139, %v1047
  %1177 = vst.msk [vmem:[%s3 + $0x94] sm:$0xf] %vm1139, %v1048
  %1178 = vst.msk [vmem:[%s3 + $0x98] sm:$0xf] %vm1139, %v1049
  %1179 = vst.msk [vmem:[%s3 + $0x9c] sm:$0xf] %vm1139, %v1050
  %1180 = vst.msk [vmem:[%s3 + $0xa0] sm:$0xf] %vm1139, %v1051
  %1181 = vst.msk [vmem:[%s3 + $0xa4] sm:$0xf] %vm1139, %v1052
  %1182 = vst.msk [vmem:[%s3 + $0xa8] sm:$0xf] %vm1139, %v1053
  %1183 = vst.msk [vmem:[%s3 + $0xac] sm:$0xf] %vm1139, %v1054
  %1184 = vst.msk [vmem:[%s3 + $0xb0] sm:$0xf] %vm1139, %v1055
  %1185 = vst.msk [vmem:[%s3 + $0xb4] sm:$0xf] %vm1139, %v1056
  %1186 = vst.msk [vmem:[%s3 + $0xb8] sm:$0xf] %vm1139, %v1057
  %1187 = vst.msk [vmem:[%s3 + $0xbc] sm:$0xf] %vm1139, %v1058
  %1188 = vst.msk [vmem:[%s3 + $0xc0] sm:$0xf] %vm1139, %v1059
  %1189 = vst.msk [vmem:[%s3 + $0xc4] sm:$0xf] %vm1139, %v1060
  %1190 = vst.msk [vmem:[%s3 + $0xc8] sm:$0xf] %vm1139, %v1061
  %1191 = vst.msk [vmem:[%s3 + $0xcc] sm:$0xf] %vm1139, %v1062
  %1192 = vst.msk [vmem:[%s3 + $0xd0] sm:$0xf] %vm1139, %v1063
  %1193 = vst.msk [vmem:[%s3 + $0xd4] sm:$0xf] %vm1139, %v1064
  %1194 = vst.msk [vmem:[%s3 + $0xd8] sm:$0xf] %vm1139, %v1065
  %1195 = vst.msk [vmem:[%s3 + $0xdc] sm:$0xf] %vm1139, %v1066
  %1196 = vst.msk [vmem:[%s3 + $0xe0] sm:$0xf] %vm1139, %v1067
  %1197 = vst.msk [vmem:[%s3 + $0xe4] sm:$0xf] %vm1139, %v1068
  %1198 = vst.msk [vmem:[%s3 + $0xe8] sm:$0xf] %vm1139, %v1069
  %1199 = vst.msk [vmem:[%s3 + $0xec] sm:$0xf] %vm1139, %v1070
  %1200 = vst.msk [vmem:[%s3 + $0xf0] sm:$0xf] %vm1139, %v1071
  %1201 = vst.msk [vmem:[%s3 + $0xf4] sm:$0xf] %vm1139, %v1072
  %1202 = vst.msk [vmem:[%s3 + $0xf8] sm:$0xf] %vm1139, %v1073
  %1203 = vst.msk [vmem:[%s3 + $0xfc] sm:$0xf] %vm1139, %v1074
  %1204 = vst.msk [vmem:[%s3 + $0x100] sm:$0xf] %vm1139, %v1075
  %1205 = vst.msk [vmem:[%s3 + $0x104] sm:$0xf] %vm1139, %v1076
  %1206 = vst.msk [vmem:[%s3 + $0x108] sm:$0xf] %vm1139, %v1077
  %1207 = vst.msk [vmem:[%s3 + $0x10c] sm:$0xf] %vm1139, %v1078
  %1208 = vst.msk [vmem:[%s3 + $0x110] sm:$0xf] %vm1139, %v1079
  %1209 = vst.msk [vmem:[%s3 + $0x114] sm:$0xf] %vm1139, %v1080
  %1210 = vst.msk [vmem:[%s3 + $0x118] sm:$0xf] %vm1139, %v1081
  %1211 = vst.msk [vmem:[%s3 + $0x11c] sm:$0xf] %vm1139, %v1082
  %1212 = vst.msk [vmem:[%s3 + $0x120] sm:$0xf] %vm1139, %v1083
  %1213 = vst.msk [vmem:[%s3 + $0x124] sm:$0xf] %vm1139, %v1084
  %1214 = vst.msk [vmem:[%s3 + $0x128] sm:$0xf] %vm1139, %v1085
  %1215 = vst.msk [vmem:[%s3 + $0x12c] sm:$0xf] %vm1139, %v1086
  %1216 = vst.msk [vmem:[%s3 + $0x130] sm:$0xf] %vm1139, %v1087
  %1217 = vst.msk [vmem:[%s3 + $0x134] sm:$0xf] %vm1139, %v1088
  %1218 = vst.msk [vmem:[%s3 + $0x138] sm:$0xf] %vm1139, %v1089
  %1219 = vst.msk [vmem:[%s3 + $0x13c] sm:$0xf] %vm1139, %v1090
  %1220 = vst.msk [vmem:[%s3 + $0x140] sm:$0xf] %vm1139, %v1091
  %1221 = vst.msk [vmem:[%s3 + $0x144] sm:$0xf] %vm1139, %v1092
  %1222 = vst.msk [vmem:[%s3 + $0x148] sm:$0xf] %vm1139, %v1093
  %1223 = vst.msk [vmem:[%s3 + $0x14c] sm:$0xf] %vm1139, %v1094
  %1224 = vst.msk [vmem:[%s3 + $0x150] sm:$0xf] %vm1139, %v1095
  %1225 = vst.msk [vmem:[%s3 + $0x154] sm:$0xf] %vm1139, %v1096
  %1226 = vst.msk [vmem:[%s3 + $0x158] sm:$0xf] %vm1139, %v1097
  %1227 = vst.msk [vmem:[%s3 + $0x15c] sm:$0xf] %vm1139, %v1098
  %1228 = vst.msk [vmem:[%s3 + $0x160] sm:$0xf] %vm1139, %v1099
  %1229 = vst.msk [vmem:[%s3 + $0x164] sm:$0xf] %vm1139, %v1100
  %1230 = vst.msk [vmem:[%s3 + $0x168] sm:$0xf] %vm1139, %v1101
  %1231 = vst.msk [vmem:[%s3 + $0x16c] sm:$0xf] %vm1139, %v1102
  %1232 = vst.msk [vmem:[%s3 + $0x170] sm:$0xf] %vm1139, %v1103
  %1233 = vst.msk [vmem:[%s3 + $0x174] sm:$0xf] %vm1139, %v1104
  %1234 = vst.msk [vmem:[%s3 + $0x178] sm:$0xf] %vm1139, %v1105
  %1235 = vst.msk [vmem:[%s3 + $0x17c] sm:$0xf] %vm1139, %v1106
  %1236 = vst.msk [vmem:[%s3 + $0x180] sm:$0xf] %vm1139, %v1107
  %1237 = vst.msk [vmem:[%s3 + $0x184] sm:$0xf] %vm1139, %v1108
  %1238 = vst.msk [vmem:[%s3 + $0x188] sm:$0xf] %vm1139, %v1109
  %1239 = vst.msk [vmem:[%s3 + $0x18c] sm:$0xf] %vm1139, %v1110
  %1240 = vst.msk [vmem:[%s3 + $0x190] sm:$0xf] %vm1139, %v1111
  %1241 = vst.msk [vmem:[%s3 + $0x194] sm:$0xf] %vm1139, %v1112
  %1242 = vst.msk [vmem:[%s3 + $0x198] sm:$0xf] %vm1139, %v1113
  %1243 = vst.msk [vmem:[%s3 + $0x19c] sm:$0xf] %vm1139, %v1114
  %1244 = vst.msk [vmem:[%s3 + $0x1a0] sm:$0xf] %vm1139, %v1115
  %1245 = vst.msk [vmem:[%s3 + $0x1a4] sm:$0xf] %vm1139, %v1116
  %1246 = vst.msk [vmem:[%s3 + $0x1a8] sm:$0xf] %vm1139, %v1117
  %1247 = vst.msk [vmem:[%s3 + $0x1ac] sm:$0xf] %vm1139, %v1118
  %1248 = vst.msk [vmem:[%s3 + $0x1b0] sm:$0xf] %vm1139, %v1119
  %1249 = vst.msk [vmem:[%s3 + $0x1b4] sm:$0xf] %vm1139, %v1120
  %1250 = vst.msk [vmem:[%s3 + $0x1b8] sm:$0xf] %vm1139, %v1121
  %1251 = vst.msk [vmem:[%s3 + $0x1bc] sm:$0xf] %vm1139, %v1122
  %1252 = vst.msk [vmem:[%s3 + $0x1c0] sm:$0xf] %vm1139, %v1123
  %1253 = vst.msk [vmem:[%s3 + $0x1c4] sm:$0xf] %vm1139, %v1124
  %1254 = vst.msk [vmem:[%s3 + $0x1c8] sm:$0xf] %vm1139, %v1125
  %1255 = vst.msk [vmem:[%s3 + $0x1cc] sm:$0xf] %vm1139, %v1126
  %1256 = vst.msk [vmem:[%s3 + $0x1d0] sm:$0xf] %vm1139, %v1127
  %1257 = vst.msk [vmem:[%s3 + $0x1d4] sm:$0xf] %vm1139, %v1128
  %1258 = vst.msk [vmem:[%s3 + $0x1d8] sm:$0xf] %vm1139, %v1129
  %1259 = vst.msk [vmem:[%s3 + $0x1dc] sm:$0xf] %vm1139, %v1130
  %1260 = vst.msk [vmem:[%s3 + $0x1e0] sm:$0xf] %vm1139, %v1131
  %1261 = vst.msk [vmem:[%s3 + $0x1e4] sm:$0xf] %vm1139, %v1132
  %1262 = vst.msk [vmem:[%s3 + $0x1e8] sm:$0xf] %vm1139, %v1133
  %1263 = vst.msk [vmem:[%s3 + $0x1ec] sm:$0xf] %vm1139, %v1134
  %1264 = vst.msk [vmem:[%s3 + $0x1f0] sm:$0xf] %vm1139, %v1135
  %1265 = vst.msk [vmem:[%s3 + $0x1f4] sm:$0xf] %vm1139, %v1136
  %1266 = vst.msk [vmem:[%s3 + $0x1f8] sm:$0xf] %vm1139, %v1137
  %1267 = vst.msk [vmem:[%s3 + $0x1fc] sm:$0xf] %vm1139, %v1138
  // Predicated region
  $region14: #{kws_net_forward.5} parent=0 // pred_check
    _
  $region15: #{kws_net_forward.5} parent=0 // pred_check_branch
    %1269 = sbr.rel (0) target = $region17
  $region16: #{kws_net_forward.5} parent=0 // pred_region
    _
  $region17: #{kws_net_forward.5} parent=0 // pred_fallthru
    _
  // Predicated region
  $region18: #{kws_net_forward.5} parent=0 // pred_check
    _
  $region19: #{kws_net_forward.5} parent=0 // pred_check_branch
    %1271 = sbr.rel (0) target = $region21
  $region20: #{kws_net_forward.5} parent=0 // pred_region
    _
  $region21: #{kws_net_forward.5} parent=0 // pred_fallthru
    _

// kernel: kws_net_forward.6
$region0: #{kws_net_forward.6}
  #allocation0 [shape = 'u32[]', space=smem, size = 0x4, offset = 0x4, fixed_abs, tag = 'smem constant byte address 0x4 - core index']
  #allocation1 [shape = 'u32[72,128]{1,0:T(1,128)}', space=vmem, size = 0x9000, scoped, tag = 'internal scratch']
  %s0 = inlined_call_operand.vmem [shape: bf16[256,800], index: 0, kind: input, shape index: {}]
  %s1 = inlined_call_operand.vmem [shape: bf16[800,128], index: 1, kind: input, shape index: {}]
  %s2 = inlined_call_operand.vmem [shape: f32[1,128], index: 2, kind: input, shape index: {}]
  %s3 = inlined_call_operand.vmem [shape: bf16[256,128], index: 3, kind: output, shape index: {}]
  %s4 = sld [smem:[#allocation0]]
  $region45: #{kws_net_forward.6} parent=0
    _
  %s6 = ssub.s32 1, %s4
  %s7 = scalar_select 0, %s6, %s4
  loop: start=0, step=1, limit=4
  $region2: #{kws_net_forward.6} parent=0 // loop_pre_header
    _
  $region3: #{kws_net_forward.6} parent=0 // loop_header
    %s9 = sphi 0, %s13
    %p10 = scmp.ge.s32.totalorder %s9, 4
    %s19 = sphi 0, %s21
    %s22 = sphi 0, %s19
    %s23 = sphi 0, %s22
    %s39 = sphi 0, %s23
    %s43 = sphi 0, %s43
    %s45 = sphi 0, %s43
    %s46 = sphi 0, %s45
    %s60 = sphi 0, %s46
    %s64 = sphi 0, %s64
    %s66 = sphi 0, %s64
    %s67 = sphi 0, %s66
    %s81 = sphi 0, %s67
    %s87 = sphi 0, %s89
    %s90 = sphi 0, %s87
    %s91 = sphi 0, %s90
    %s107 = sphi 0, %s91
  $region4: #{kws_net_forward.6} parent=0 // loop_header_branch
    %12 = sbr.rel (%p10) target = $region8
  $region5: #{kws_net_forward.6} parent=0 // loop_body
    %s14 = ssub.s32 %s9, 1
    %s15 = ssub.s32 %s9, 2
    %s16 = sadd.s32 %s9, 1
    %s17 = ssub.s32 %s9, %s16
    %p18 = scmp.eq.s32.totalorder %s17, 0
    %s20 = sadd.s32 %s19, 1
    %s21 = scalar_select %p18, %s19, %s20
    %p24 = pneg %p18
    %p25 = scmp.eq.s32.totalorder %s9, 1
    %p26 = por %p24, %p25
    %p27 = scmp.ne.s32.totalorder %s19, %s22
    %p28 = scmp.eq.s32.totalorder %s9, 0
    %p29 = por %p27, %p28
    %p30 = scmp.ne.s32.totalorder %s19, %s22
    %p31 = scmp.eq.s32.totalorder %s14, 1
    %p32 = por %p30, %p31
    %p33 = scmp.ne.s32.totalorder %s22, %s23
    %p34 = scmp.eq.s32.totalorder %s14, 0
    %p35 = por %p33, %p34
    %p36 = scmp.ne.s32.totalorder %s22, %s23
    %p37 = scmp.eq.s32.totalorder %s15, 1
    %p38 = por %p36, %p37
    %p40 = scmp.ne.s32.totalorder %s23, %s39
    %p41 = scmp.eq.s32.totalorder %s15, 0
    %p42 = por %p40, %p41
    %s44 = sadd.s32 %s43, 1
    %p47 = scmp.eq.s32.totalorder %s9, 1
    %p48 = scmp.ne.s32.totalorder %s43, %s45
    %p49 = scmp.eq.s32.totalorder %s9, 0
    %p50 = por %p48, %p49
    %p51 = scmp.ne.s32.totalorder %s43, %s45
    %p52 = scmp.eq.s32.totalorder %s14, 1
    %p53 = por %p51, %p52
    %p54 = scmp.ne.s32.totalorder %s45, %s46
    %p55 = scmp.eq.s32.totalorder %s14, 0
    %p56 = por %p54, %p55
    %p57 = scmp.ne.s32.totalorder %s45, %s46
    %p58 = scmp.eq.s32.totalorder %s15, 1
    %p59 = por %p57, %p58
    %p61 = scmp.ne.s32.totalorder %s46, %s60
    %p62 = scmp.eq.s32.totalorder %s15, 0
    %p63 = por %p61, %p62
    %s65 = sadd.s32 %s64, 1
    %p68 = scmp.eq.s32.totalorder %s9, 1
    %p69 = scmp.ne.s32.totalorder %s64, %s66
    %p70 = scmp.eq.s32.totalorder %s9, 0
    %p71 = por %p69, %p70
    %p72 = scmp.ne.s32.totalorder %s64, %s66
    %p73 = scmp.eq.s32.totalorder %s14, 1
    %p74 = por %p72, %p73
    %p75 = scmp.ne.s32.totalorder %s66, %s67
    %p76 = scmp.eq.s32.totalorder %s14, 0
    %p77 = por %p75, %p76
    %p78 = scmp.ne.s32.totalorder %s66, %s67
    %p79 = scmp.eq.s32.totalorder %s15, 1
    %p80 = por %p78, %p79
    %p82 = scmp.ne.s32.totalorder %s67, %s81
    %p83 = scmp.eq.s32.totalorder %s15, 0
    %p84 = por %p82, %p83
    %s85 = ssub.s32 %s9, %s16
    %p86 = scmp.eq.s32.totalorder %s85, 0
    %s88 = sadd.s32 %s87, 1
    %s89 = scalar_select %p86, %s87, %s88
    %p92 = pneg %p86
    %p93 = scmp.eq.s32.totalorder %s9, 1
    %p94 = por %p92, %p93
    %p95 = scmp.ne.s32.totalorder %s87, %s90
    %p96 = scmp.eq.s32.totalorder %s9, 0
    %p97 = por %p95, %p96
    %p98 = scmp.ne.s32.totalorder %s87, %s90
    %p99 = scmp.eq.s32.totalorder %s14, 1
    %p100 = por %p98, %p99
    %p101 = scmp.ne.s32.totalorder %s90, %s91
    %p102 = scmp.eq.s32.totalorder %s14, 0
    %p103 = por %p101, %p102
    %p104 = scmp.ne.s32.totalorder %s90, %s91
    %p105 = scmp.eq.s32.totalorder %s15, 1
    %p106 = por %p104, %p105
    %p108 = scmp.ne.s32.totalorder %s91, %s107
    %p109 = scmp.eq.s32.totalorder %s15, 0
    %p110 = por %p108, %p109
    %p111 = scmp.le.s32.totalorder 1, %s9
    %p112 = scmp.lt.s32.totalorder %s9, 3
    %p113 = pnand %p111, %p112
    %p114 = pneg %p113
    // Predicated region
    $region9: #{kws_net_forward.6} parent=5 // pred_check
      _
    $region10: #{kws_net_forward.6} parent=5 // pred_check_branch
      %116 = sbr.rel (%p113) target = $region12
    $region11: #{kws_net_forward.6} parent=5 // pred_region
      %s117 = ssub.s32 %s9, 1
      // Predicated region
      $region13: #{kws_net_forward.6} parent=11 // pred_check
        %p118 = pneg %p56
      $region14: #{kws_net_forward.6} parent=11 // pred_check_branch
        %120 = sbr.rel (%p118) target = $region16
      $region15: #{kws_net_forward.6} parent=11 // pred_region
        _
      $region16: #{kws_net_forward.6} parent=11 // pred_fallthru
        _
      // Predicated region
      $region17: #{kws_net_forward.6} parent=11 // pred_check
        %p121 = pneg %p77
      $region18: #{kws_net_forward.6} parent=11 // pred_check_branch
        %123 = sbr.rel (%p121) target = $region20
      $region19: #{kws_net_forward.6} parent=11 // pred_region
        _
      $region20: #{kws_net_forward.6} parent=11 // pred_fallthru
        _
    $region12: #{kws_net_forward.6} parent=5 // pred_fallthru
      _
    %p124 = scmp.lt.s32.totalorder %s9, 2
    // Predicated region
    $region21: #{kws_net_forward.6} parent=5 // pred_check
      %p125 = pneg %p124
    $region22: #{kws_net_forward.6} parent=5 // pred_check_branch
      %127 = sbr.rel (%p125) target = $region24
    $region23: #{kws_net_forward.6} parent=5 // pred_region
      // Predicated region
      $region25: #{kws_net_forward.6} parent=23 // pred_check
        %p128 = pneg %p29
      $region26: #{kws_net_forward.6} parent=23 // pred_check_branch
        %130 = sbr.rel (%p128) target = $region28
      $region27: #{kws_net_forward.6} parent=23 // pred_region
        %s131 = smul.u32 16, %s9
        %p132 = scmp.lt.s32.totalorder %s131, 31
        %s133 = scalar_select %p132, %s131, 31
        %s134 = smul.addr %s133, 7
        %s135 = smul.addr %s134, 4
        %s136 = scalar_lea.vmem %s0, %s135
        %s137 = smul.u32 16, %s9
      $region28: #{kws_net_forward.6} parent=23 // pred_fallthru
        _
    $region24: #{kws_net_forward.6} parent=5 // pred_fallthru
      _
    %p138 = scmp.le.s32.totalorder 1, %s9
    %p139 = scmp.lt.s32.totalorder %s9, 3
    %p140 = pnand %p138, %p139
    %p141 = pneg %p140
    // Predicated region
    $region29: #{kws_net_forward.6} parent=5 // pred_check
      _
    $region30: #{kws_net_forward.6} parent=5 // pred_check_branch
      %143 = sbr.rel (%p140) target = $region32
    $region31: #{kws_net_forward.6} parent=5 // pred_region
      %s144 = ssub.s32 %s9, 1
      %s145 = smul.u32 16, %s14
      %p146 = scmp.lt.s32.totalorder %s145, 31
      %s147 = scalar_select %p146, %s145, 31
      %s148 = smul.addr %s147, 7
      %s149 = smul.addr %s148, 4
      %s150 = scalar_lea.vmem %s0, %s149
      %p151 = pneg %p35
      %p152 = pneg %p32
      %p153 = pneg %p56
      %p154 = pneg %p53
      %p155 = pneg %p77
      %p156 = pneg %p74
      %p157 = pneg %p103
      %p158 = pneg %p100
      %s159 = smul.u32 16, %s14
      %p160 = scmp.lt.s32.totalorder %s159, 31
      %s161 = scalar_select %p160, %s159, 31
      %s162 = smul.addr %s161, 4
      %s163 = scalar_lea.vmem %s3, %s162
      %s164 = smul.u32 16, %s14
      %p165 = scmp.lt.s32.totalorder %s164, 31
      %s166 = scalar_select %p165, %s164, 31
      %s167 = smul.addr %s166, 7
      %s168 = smul.addr %s167, 4
      %s169 = scalar_lea.vmem %s0, %s168
      %s170 = smul.u32 16, %s14
      %s171 = smul.u32 16, %s14
      %p172 = scmp.lt.s32.totalorder %s171, 31
      %s173 = scalar_select %p172, %s171, 31
      %s174 = smul.addr %s173, 4
      %s175 = scalar_lea.vmem %s3, %s174
      %s176 = smul.u32 16, %s14
      %v178 = vld [vmem:[%s169] sm:$0xff]
      %v179 = vld [vmem:[%s169 + $0x8] sm:$0xff]
      %v180 = vld [vmem:[%s169 + $0x10] sm:$0xff]
      %v181 = vld [vmem:[%s169 + $0x18] sm:$0xf]
      %v182 = vld [vmem:[%s169 + $0x1c] sm:$0xff]
      %v183 = vld [vmem:[%s169 + $0x24] sm:$0xff]
      %v184 = vld [vmem:[%s169 + $0x2c] sm:$0xff]
      %v185 = vld [vmem:[%s169 + $0x34] sm:$0xf]
      %v186 = vld [vmem:[%s169 + $0x38] sm:$0xff]
      %v187 = vld [vmem:[%s169 + $0x40] sm:$0xff]
      %v188 = vld [vmem:[%s169 + $0x48] sm:$0xff]
      %v189 = vld [vmem:[%s169 + $0x50] sm:$0xf]
      %v190 = vld [vmem:[%s169 + $0x54] sm:$0xff]
      %v191 = vld [vmem:[%s169 + $0x5c] sm:$0xff]
      %v192 = vld [vmem:[%s169 + $0x64] sm:$0xff]
      %v193 = vld [vmem:[%s169 + $0x6c] sm:$0xf]
      %v194 = vld [vmem:[%s169 + $0x70] sm:$0xff]
      %v195 = vld [vmem:[%s169 + $0x78] sm:$0xff]
      %v196 = vld [vmem:[%s169 + $0x80] sm:$0xff]
      %v197 = vld [vmem:[%s169 + $0x88] sm:$0xf]
      %v198 = vld [vmem:[%s169 + $0x8c] sm:$0xff]
      %v199 = vld [vmem:[%s169 + $0x94] sm:$0xff]
      %v200 = vld [vmem:[%s169 + $0x9c] sm:$0xff]
      %v201 = vld [vmem:[%s169 + $0xa4] sm:$0xf]
      %v202 = vld [vmem:[%s169 + $0xa8] sm:$0xff]
      %v203 = vld [vmem:[%s169 + $0xb0] sm:$0xff]
      %v204 = vld [vmem:[%s169 + $0xb8] sm:$0xff]
      %v205 = vld [vmem:[%s169 + $0xc0] sm:$0xf]
      %v206 = vld [vmem:[%s169 + $0xc4] sm:$0xff]
      %v207 = vld [vmem:[%s169 + $0xcc] sm:$0xff]
      %v208 = vld [vmem:[%s169 + $0xd4] sm:$0xff]
      %v209 = vld [vmem:[%s169 + $0xdc] sm:$0xf]
      %v210 = vld [vmem:[%s169 + $0xe0] sm:$0xff]
      %v211 = vld [vmem:[%s169 + $0xe8] sm:$0xff]
      %v212 = vld [vmem:[%s169 + $0xf0] sm:$0xff]
      %v213 = vld [vmem:[%s169 + $0xf8] sm:$0xf]
      %v214 = vld [vmem:[%s169 + $0xfc] sm:$0xff]
      %v215 = vld [vmem:[%s169 + $0x104] sm:$0xff]
      %v216 = vld [vmem:[%s169 + $0x10c] sm:$0xff]
      %v217 = vld [vmem:[%s169 + $0x114] sm:$0xf]
      %v218 = vld [vmem:[%s169 + $0x118] sm:$0xff]
      %v219 = vld [vmem:[%s169 + $0x120] sm:$0xff]
      %v220 = vld [vmem:[%s169 + $0x128] sm:$0xff]
      %v221 = vld [vmem:[%s169 + $0x130] sm:$0xf]
      %v222 = vld [vmem:[%s169 + $0x134] sm:$0xff]
      %v223 = vld [vmem:[%s169 + $0x13c] sm:$0xff]
      %v224 = vld [vmem:[%s169 + $0x144] sm:$0xff]
      %v225 = vld [vmem:[%s169 + $0x14c] sm:$0xf]
      %v226 = vld [vmem:[%s169 + $0x150] sm:$0xff]
      %v227 = vld [vmem:[%s169 + $0x158] sm:$0xff]
      %v228 = vld [vmem:[%s169 + $0x160] sm:$0xff]
      %v229 = vld [vmem:[%s169 + $0x168] sm:$0xf]
      %v230 = vld [vmem:[%s169 + $0x16c] sm:$0xff]
      %v231 = vld [vmem:[%s169 + $0x174] sm:$0xff]
      %v232 = vld [vmem:[%s169 + $0x17c] sm:$0xff]
      %v233 = vld [vmem:[%s169 + $0x184] sm:$0xf]
      %v234 = vld [vmem:[%s169 + $0x188] sm:$0xff]
      %v235 = vld [vmem:[%s169 + $0x190] sm:$0xff]
      %v236 = vld [vmem:[%s169 + $0x198] sm:$0xff]
      %v237 = vld [vmem:[%s169 + $0x1a0] sm:$0xf]
      %v238 = vld [vmem:[%s169 + $0x1a4] sm:$0xff]
      %v239 = vld [vmem:[%s169 + $0x1ac] sm:$0xff]
      %v240 = vld [vmem:[%s169 + $0x1b4] sm:$0xff]
      %v241 = vld [vmem:[%s169 + $0x1bc] sm:$0xf]
      %v242 = vld [vmem:[%s1] sm:$0xf]
      %v243 = vld [vmem:[%s1 + $0x4] sm:$0xf]
      %v244 = vld [vmem:[%s1 + $0x8] sm:$0xf]
      %v245 = vld [vmem:[%s1 + $0xc] sm:$0xf]
      %v246 = vld [vmem:[%s1 + $0x10] sm:$0xf]
      %v247 = vld [vmem:[%s1 + $0x14] sm:$0xf]
      %v248 = vld [vmem:[%s1 + $0x18] sm:$0xf]
      %v249 = vld [vmem:[%s1 + $0x1c] sm:$0xf]
      %v250 = vld [vmem:[%s1 + $0x20] sm:$0xf]
      %v251 = vld [vmem:[%s1 + $0x24] sm:$0xf]
      %v252 = vld [vmem:[%s1 + $0x28] sm:$0xf]
      %v253 = vld [vmem:[%s1 + $0x2c] sm:$0xf]
      %v254 = vld [vmem:[%s1 + $0x30] sm:$0xf]
      %v255 = vld [vmem:[%s1 + $0x34] sm:$0xf]
      %v256 = vld [vmem:[%s1 + $0x38] sm:$0xf]
      %v257 = vld [vmem:[%s1 + $0x3c] sm:$0xf]
      %v258 = vld [vmem:[%s1 + $0x40] sm:$0xf]
      %v259 = vld [vmem:[%s1 + $0x44] sm:$0xf]
      %v260 = vld [vmem:[%s1 + $0x48] sm:$0xf]
      %v261 = vld [vmem:[%s1 + $0x4c] sm:$0xf]
      %v262 = vld [vmem:[%s1 + $0x50] sm:$0xf]
      %v263 = vld [vmem:[%s1 + $0x54] sm:$0xf]
      %v264 = vld [vmem:[%s1 + $0x58] sm:$0xf]
      %v265 = vld [vmem:[%s1 + $0x5c] sm:$0xf]
      %v266 = vld [vmem:[%s1 + $0x60] sm:$0xf]
      %v267 = vld [vmem:[%s1 + $0x64] sm:$0xf]
      %v268 = vld [vmem:[%s1 + $0x68] sm:$0xf]
      %v269 = vld [vmem:[%s1 + $0x6c] sm:$0xf]
      %v270 = vld [vmem:[%s1 + $0x70] sm:$0xf]
      %v271 = vld [vmem:[%s1 + $0x74] sm:$0xf]
      %v272 = vld [vmem:[%s1 + $0x78] sm:$0xf]
      %v273 = vld [vmem:[%s1 + $0x7c] sm:$0xf]
      %v274 = vld [vmem:[%s1 + $0x80] sm:$0xf]
      %v275 = vld [vmem:[%s1 + $0x84] sm:$0xf]
      %v276 = vld [vmem:[%s1 + $0x88] sm:$0xf]
      %v277 = vld [vmem:[%s1 + $0x8c] sm:$0xf]
      %v278 = vld [vmem:[%s1 + $0x90] sm:$0xf]
      %v279 = vld [vmem:[%s1 + $0x94] sm:$0xf]
      %v280 = vld [vmem:[%s1 + $0x98] sm:$0xf]
      %v281 = vld [vmem:[%s1 + $0x9c] sm:$0xf]
      %v282 = vld [vmem:[%s1 + $0xa0] sm:$0xf]
      %v283 = vld [vmem:[%s1 + $0xa4] sm:$0xf]
      %v284 = vld [vmem:[%s1 + $0xa8] sm:$0xf]
      %v285 = vld [vmem:[%s1 + $0xac] sm:$0xf]
      %v286 = vld [vmem:[%s1 + $0xb0] sm:$0xf]
      %v287 = vld [vmem:[%s1 + $0xb4] sm:$0xf]
      %v288 = vld [vmem:[%s1 + $0xb8] sm:$0xf]
      %v289 = vld [vmem:[%s1 + $0xbc] sm:$0xf]
      %v290 = vld [vmem:[%s1 + $0xc0] sm:$0xf]
      %v291 = vld [vmem:[%s1 + $0xc4] sm:$0xf]
      %v292 = vld [vmem:[%s1 + $0xc8] sm:$0xf]
      %v293 = vld [vmem:[%s1 + $0xcc] sm:$0xf]
      %v294 = vld [vmem:[%s1 + $0xd0] sm:$0xf]
      %v295 = vld [vmem:[%s1 + $0xd4] sm:$0xf]
      %v296 = vld [vmem:[%s1 + $0xd8] sm:$0xf]
      %v297 = vld [vmem:[%s1 + $0xdc] sm:$0xf]
      %v298 = vld [vmem:[%s1 + $0xe0] sm:$0xf]
      %v299 = vld [vmem:[%s1 + $0xe4] sm:$0xf]
      %v300 = vld [vmem:[%s1 + $0xe8] sm:$0xf]
      %v301 = vld [vmem:[%s1 + $0xec] sm:$0xf]
      %v302 = vld [vmem:[%s1 + $0xf0] sm:$0xf]
      %v303 = vld [vmem:[%s1 + $0xf4] sm:$0xf]
      %v304 = vld [vmem:[%s1 + $0xf8] sm:$0xf]
      %v305 = vld [vmem:[%s1 + $0xfc] sm:$0xf]
      %v306 = vld [vmem:[%s1 + $0x100] sm:$0xf]
      %v307 = vld [vmem:[%s1 + $0x104] sm:$0xf]
      %v308 = vld [vmem:[%s1 + $0x108] sm:$0xf]
      %v309 = vld [vmem:[%s1 + $0x10c] sm:$0xf]
      %v310 = vld [vmem:[%s1 + $0x110] sm:$0xf]
      %v311 = vld [vmem:[%s1 + $0x114] sm:$0xf]
      %v312 = vld [vmem:[%s1 + $0x118] sm:$0xf]
      %v313 = vld [vmem:[%s1 + $0x11c] sm:$0xf]
      %v314 = vld [vmem:[%s1 + $0x120] sm:$0xf]
      %v315 = vld [vmem:[%s1 + $0x124] sm:$0xf]
      %v316 = vld [vmem:[%s1 + $0x128] sm:$0xf]
      %v317 = vld [vmem:[%s1 + $0x12c] sm:$0xf]
      %v318 = vld [vmem:[%s1 + $0x130] sm:$0xf]
      %v319 = vld [vmem:[%s1 + $0x134] sm:$0xf]
      %v320 = vld [vmem:[%s1 + $0x138] sm:$0xf]
      %v321 = vld [vmem:[%s1 + $0x13c] sm:$0xf]
      %v322 = vld [vmem:[%s1 + $0x140] sm:$0xf]
      %v323 = vld [vmem:[%s1 + $0x144] sm:$0xf]
      %v324 = vld [vmem:[%s1 + $0x148] sm:$0xf]
      %v325 = vld [vmem:[%s1 + $0x14c] sm:$0xf]
      %v326 = vld [vmem:[%s1 + $0x150] sm:$0xf]
      %v327 = vld [vmem:[%s1 + $0x154] sm:$0xf]
      %v328 = vld [vmem:[%s1 + $0x158] sm:$0xf]
      %v329 = vld [vmem:[%s1 + $0x15c] sm:$0xf]
      %v330 = vld [vmem:[%s1 + $0x160] sm:$0xf]
      %v331 = vld [vmem:[%s1 + $0x164] sm:$0xf]
      %v332 = vld [vmem:[%s1 + $0x168] sm:$0xf]
      %v333 = vld [vmem:[%s1 + $0x16c] sm:$0xf]
      %v334 = vld [vmem:[%s1 + $0x170] sm:$0xf]
      %v335 = vld [vmem:[%s1 + $0x174] sm:$0xf]
      %v336 = vld [vmem:[%s1 + $0x178] sm:$0xf]
      %v337 = vld [vmem:[%s1 + $0x17c] sm:$0xf]
      %v338 = vld [vmem:[%s1 + $0x180] sm:$0xf]
      %v339 = vld [vmem:[%s1 + $0x184] sm:$0xf]
      %v340 = vld [vmem:[%s1 + $0x188] sm:$0xf]
      %v341 = vld [vmem:[%s1 + $0x18c] sm:$0xf]
      %v342 = vld [vmem:[%s2] sm:$0x1]
      %v344 = vperm.slane %v342, 0
      %v410 = vunpack.c.l.b16 %v178
      %v411 = vunpack.c.h.b16 %v178
      %v412 = vunpack.c.l.b16 %v179
      %v413 = vunpack.c.h.b16 %v179
      %v414 = vunpack.c.l.b16 %v180
      %v415 = vunpack.c.h.b16 %v180
      %v416 = vunpack.c.l.b16 %v181
      %v417 = vunpack.c.l.b16 %v182
      %v418 = vunpack.c.h.b16 %v182
      %v419 = vunpack.c.l.b16 %v183
      %v420 = vunpack.c.h.b16 %v183
      %v421 = vunpack.c.l.b16 %v184
      %v422 = vunpack.c.h.b16 %v184
      %v423 = vunpack.c.l.b16 %v185
      %v424 = vunpack.c.l.b16 %v186
      %v425 = vunpack.c.h.b16 %v186
      %v426 = vunpack.c.l.b16 %v187
      %v427 = vunpack.c.h.b16 %v187
      %v428 = vunpack.c.l.b16 %v188
      %v429 = vunpack.c.h.b16 %v188
      %v430 = vunpack.c.l.b16 %v189
      %v431 = vunpack.c.l.b16 %v190
      %v432 = vunpack.c.h.b16 %v190
      %v433 = vunpack.c.l.b16 %v191
      %v434 = vunpack.c.h.b16 %v191
      %v435 = vunpack.c.l.b16 %v192
      %v436 = vunpack.c.h.b16 %v192
      %v437 = vunpack.c.l.b16 %v193
      %v438 = vunpack.c.l.b16 %v194
      %v439 = vunpack.c.h.b16 %v194
      %v440 = vunpack.c.l.b16 %v195
      %v441 = vunpack.c.h.b16 %v195
      %v442 = vunpack.c.l.b16 %v196
      %v443 = vunpack.c.h.b16 %v196
      %v444 = vunpack.c.l.b16 %v197
      %v445 = vunpack.c.l.b16 %v198
      %v446 = vunpack.c.h.b16 %v198
      %v447 = vunpack.c.l.b16 %v199
      %v448 = vunpack.c.h.b16 %v199
      %v449 = vunpack.c.l.b16 %v200
      %v450 = vunpack.c.h.b16 %v200
      %v451 = vunpack.c.l.b16 %v201
      %v452 = vunpack.c.l.b16 %v202
      %v453 = vunpack.c.h.b16 %v202
      %v454 = vunpack.c.l.b16 %v203
      %v455 = vunpack.c.h.b16 %v203
      %v456 = vunpack.c.l.b16 %v204
      %v457 = vunpack.c.h.b16 %v204
      %v458 = vunpack.c.l.b16 %v205
      %v459 = vunpack.c.l.b16 %v206
      %v460 = vunpack.c.h.b16 %v206
      %v461 = vunpack.c.l.b16 %v207
      %v462 = vunpack.c.h.b16 %v207
      %v463 = vunpack.c.l.b16 %v208
      %v464 = vunpack.c.h.b16 %v208
      %v465 = vunpack.c.l.b16 %v209
      %v466 = vunpack.c.l.b16 %v210
      %v467 = vunpack.c.h.b16 %v210
      %v468 = vunpack.c.l.b16 %v211
      %v469 = vunpack.c.h.b16 %v211
      %v470 = vunpack.c.l.b16 %v212
      %v471 = vunpack.c.h.b16 %v212
      %v472 = vunpack.c.l.b16 %v213
      %v473 = vunpack.c.l.b16 %v214
      %v474 = vunpack.c.h.b16 %v214
      %v475 = vunpack.c.l.b16 %v215
      %v476 = vunpack.c.h.b16 %v215
      %v477 = vunpack.c.l.b16 %v216
      %v478 = vunpack.c.h.b16 %v216
      %v479 = vunpack.c.l.b16 %v217
      %v480 = vunpack.c.l.b16 %v218
      %v481 = vunpack.c.h.b16 %v218
      %v482 = vunpack.c.l.b16 %v219
      %v483 = vunpack.c.h.b16 %v219
      %v484 = vunpack.c.l.b16 %v220
      %v485 = vunpack.c.h.b16 %v220
      %v486 = vunpack.c.l.b16 %v221
      %v487 = vunpack.c.l.b16 %v222
      %v488 = vunpack.c.h.b16 %v222
      %v489 = vunpack.c.l.b16 %v223
      %v490 = vunpack.c.h.b16 %v223
      %v491 = vunpack.c.l.b16 %v224
      %v492 = vunpack.c.h.b16 %v224
      %v493 = vunpack.c.l.b16 %v225
      %v494 = vunpack.c.l.b16 %v226
      %v495 = vunpack.c.h.b16 %v226
      %v496 = vunpack.c.l.b16 %v227
      %v497 = vunpack.c.h.b16 %v227
      %v498 = vunpack.c.l.b16 %v228
      %v499 = vunpack.c.h.b16 %v228
      %v500 = vunpack.c.l.b16 %v229
      %v501 = vunpack.c.l.b16 %v230
      %v502 = vunpack.c.h.b16 %v230
      %v503 = vunpack.c.l.b16 %v231
      %v504 = vunpack.c.h.b16 %v231
      %v505 = vunpack.c.l.b16 %v232
      %v506 = vunpack.c.h.b16 %v232
      %v507 = vunpack.c.l.b16 %v233
      %v508 = vunpack.c.l.b16 %v234
      %v509 = vunpack.c.h.b16 %v234
      %v510 = vunpack.c.l.b16 %v235
      %v511 = vunpack.c.h.b16 %v235
      %v512 = vunpack.c.l.b16 %v236
      %v513 = vunpack.c.h.b16 %v236
      %v514 = vunpack.c.l.b16 %v237
      %v515 = vunpack.c.l.b16 %v238
      %v516 = vunpack.c.h.b16 %v238
      %v517 = vunpack.c.l.b16 %v239
      %v518 = vunpack.c.h.b16 %v239
      %v519 = vunpack.c.l.b16 %v240
      %v520 = vunpack.c.h.b16 %v240
      %v521 = vunpack.c.l.b16 %v241
      %v522 = vpack.c.b16 %v417, %v410
      %v523 = vpack.c.b16 %v418, %v411
      %v524 = vpack.c.b16 %v419, %v412
      %v525 = vpack.c.b16 %v420, %v413
      %v526 = vpack.c.b16 %v421, %v414
      %v527 = vpack.c.b16 %v422, %v415
      %v528 = vpack.c.b16 %v423, %v416
      %v529 = vpack.c.b16 %v431, %v424
      %v530 = vpack.c.b16 %v432, %v425
      %v531 = vpack.c.b16 %v433, %v426
      %v532 = vpack.c.b16 %v434, %v427
      %v533 = vpack.c.b16 %v435, %v428
      %v534 = vpack.c.b16 %v436, %v429
      %v535 = vpack.c.b16 %v437, %v430
      %v536 = vpack.c.b16 %v445, %v438
      %v537 = vpack.c.b16 %v446, %v439
      %v538 = vpack.c.b16 %v447, %v440
      %v539 = vpack.c.b16 %v448, %v441
      %v540 = vpack.c.b16 %v449, %v442
      %v541 = vpack.c.b16 %v450, %v443
      %v542 = vpack.c.b16 %v451, %v444
      %v543 = vpack.c.b16 %v459, %v452
      %v544 = vpack.c.b16 %v460, %v453
      %v545 = vpack.c.b16 %v461, %v454
      %v546 = vpack.c.b16 %v462, %v455
      %v547 = vpack.c.b16 %v463, %v456
      %v548 = vpack.c.b16 %v464, %v457
      %v549 = vpack.c.b16 %v465, %v458
      %v550 = vpack.c.b16 %v473, %v466
      %v551 = vpack.c.b16 %v474, %v467
      %v552 = vpack.c.b16 %v475, %v468
      %v553 = vpack.c.b16 %v476, %v469
      %v554 = vpack.c.b16 %v477, %v470
      %v555 = vpack.c.b16 %v478, %v471
      %v556 = vpack.c.b16 %v479, %v472
      %v557 = vpack.c.b16 %v487, %v480
      %v558 = vpack.c.b16 %v488, %v481
      %v559 = vpack.c.b16 %v489, %v482
      %v560 = vpack.c.b16 %v490, %v483
      %v561 = vpack.c.b16 %v491, %v484
      %v562 = vpack.c.b16 %v492, %v485
      %v563 = vpack.c.b16 %v493, %v486
      %v564 = vpack.c.b16 %v501, %v494
      %v565 = vpack.c.b16 %v502, %v495
      %v566 = vpack.c.b16 %v503, %v496
      %v567 = vpack.c.b16 %v504, %v497
      %v568 = vpack.c.b16 %v505, %v498
      %v569 = vpack.c.b16 %v506, %v499
      %v570 = vpack.c.b16 %v507, %v500
      %v571 = vpack.c.b16 %v515, %v508
      %v572 = vpack.c.b16 %v516, %v509
      %v573 = vpack.c.b16 %v517, %v510
      %v574 = vpack.c.b16 %v518, %v511
      %v575 = vpack.c.b16 %v519, %v512
      %v576 = vpack.c.b16 %v520, %v513
      %v577 = vpack.c.b16 %v521, %v514
      %v726 = vunpack.c.l.b16 %v242
      %v727 = vunpack.c.l.b16 %v243
      %v728 = vunpack.c.l.b16 %v244
      %v729 = vunpack.c.l.b16 %v245
      %v730 = vunpack.c.l.b16 %v246
      %v731 = vunpack.c.l.b16 %v247
      %v732 = vunpack.c.l.b16 %v248
      %v733 = vunpack.c.l.b16 %v249
      %v734 = vunpack.c.l.b16 %v250
      %v735 = vunpack.c.l.b16 %v251
      %v736 = vunpack.c.l.b16 %v252
      %v737 = vunpack.c.l.b16 %v253
      %v738 = vunpack.c.l.b16 %v254
      %v739 = vunpack.c.l.b16 %v255
      %v740 = vunpack.c.l.b16 %v256
      %v741 = vunpack.c.l.b16 %v257
      %v742 = vunpack.c.l.b16 %v258
      %v743 = vunpack.c.l.b16 %v259
      %v744 = vunpack.c.l.b16 %v260
      %v745 = vunpack.c.l.b16 %v261
      %v746 = vunpack.c.l.b16 %v262
      %v747 = vunpack.c.l.b16 %v263
      %v748 = vunpack.c.l.b16 %v264
      %v749 = vunpack.c.l.b16 %v265
      %v750 = vunpack.c.l.b16 %v266
      %v751 = vunpack.c.l.b16 %v267
      %v752 = vunpack.c.l.b16 %v268
      %v753 = vunpack.c.l.b16 %v269
      %v754 = vunpack.c.l.b16 %v270
      %v755 = vunpack.c.l.b16 %v271
      %v756 = vunpack.c.l.b16 %v272
      %v757 = vunpack.c.l.b16 %v273
      %v758 = vunpack.c.l.b16 %v274
      %v759 = vunpack.c.l.b16 %v275
      %v760 = vunpack.c.l.b16 %v276
      %v761 = vunpack.c.l.b16 %v277
      %v762 = vunpack.c.l.b16 %v278
      %v763 = vunpack.c.l.b16 %v279
      %v764 = vunpack.c.l.b16 %v280
      %v765 = vunpack.c.l.b16 %v281
      %v766 = vunpack.c.l.b16 %v282
      %v767 = vunpack.c.l.b16 %v283
      %v768 = vunpack.c.l.b16 %v284
      %v769 = vunpack.c.l.b16 %v285
      %v770 = vunpack.c.l.b16 %v286
      %v771 = vunpack.c.l.b16 %v287
      %v772 = vunpack.c.l.b16 %v288
      %v773 = vunpack.c.l.b16 %v289
      %v774 = vunpack.c.l.b16 %v290
      %v775 = vunpack.c.l.b16 %v291
      %v776 = vunpack.c.l.b16 %v292
      %v777 = vunpack.c.l.b16 %v293
      %v778 = vunpack.c.l.b16 %v294
      %v779 = vunpack.c.l.b16 %v295
      %v780 = vunpack.c.l.b16 %v296
      %v781 = vunpack.c.l.b16 %v297
      %v782 = vunpack.c.l.b16 %v298
      %v783 = vunpack.c.l.b16 %v299
      %v784 = vunpack.c.l.b16 %v300
      %v785 = vunpack.c.l.b16 %v301
      %v786 = vunpack.c.l.b16 %v302
      %v787 = vunpack.c.l.b16 %v303
      %v788 = vunpack.c.l.b16 %v304
      %v789 = vunpack.c.l.b16 %v305
      %v790 = vunpack.c.l.b16 %v306
      %v791 = vunpack.c.l.b16 %v307
      %v792 = vunpack.c.l.b16 %v308
      %v793 = vunpack.c.l.b16 %v309
      %v794 = vunpack.c.l.b16 %v310
      %v795 = vunpack.c.l.b16 %v311
      %v796 = vunpack.c.l.b16 %v312
      %v797 = vunpack.c.l.b16 %v313
      %v798 = vunpack.c.l.b16 %v314
      %v799 = vunpack.c.l.b16 %v315
      %v800 = vunpack.c.l.b16 %v316
      %v801 = vunpack.c.l.b16 %v317
      %v802 = vunpack.c.l.b16 %v318
      %v803 = vunpack.c.l.b16 %v319
      %v804 = vunpack.c.l.b16 %v320
      %v805 = vunpack.c.l.b16 %v321
      %v806 = vunpack.c.l.b16 %v322
      %v807 = vunpack.c.l.b16 %v323
      %v808 = vunpack.c.l.b16 %v324
      %v809 = vunpack.c.l.b16 %v325
      %v810 = vunpack.c.l.b16 %v326
      %v811 = vunpack.c.l.b16 %v327
      %v812 = vunpack.c.l.b16 %v328
      %v813 = vunpack.c.l.b16 %v329
      %v814 = vunpack.c.l.b16 %v330
      %v815 = vunpack.c.l.b16 %v331
      %v816 = vunpack.c.l.b16 %v332
      %v817 = vunpack.c.l.b16 %v333
      %v818 = vunpack.c.l.b16 %v334
      %v819 = vunpack.c.l.b16 %v335
      %v820 = vunpack.c.l.b16 %v336
      %v821 = vunpack.c.l.b16 %v337
      %v822 = vunpack.c.l.b16 %v338
      %v823 = vunpack.c.l.b16 %v339
      %v824 = vunpack.c.l.b16 %v340
      %v825 = vunpack.c.l.b16 %v341
      %v826 = vpack.c.b16 %v727, %v726
      %v827 = vpack.c.b16 %v729, %v728
      %v828 = vpack.c.b16 %v731, %v730
      %v829 = vpack.c.b16 %v733, %v732
      %v830 = vpack.c.b16 %v735, %v734
      %v831 = vpack.c.b16 %v737, %v736
      %v832 = vpack.c.b16 %v739, %v738
      %v833 = vpack.c.b16 %v741, %v740
      %v834 = vpack.c.b16 %v743, %v742
      %v835 = vpack.c.b16 %v745, %v744
      %v836 = vpack.c.b16 %v747, %v746
      %v837 = vpack.c.b16 %v749, %v748
      %v838 = vpack.c.b16 %v751, %v750
      %v839 = vpack.c.b16 %v753, %v752
      %v840 = vpack.c.b16 %v755, %v754
      %v841 = vpack.c.b16 %v757, %v756
      %v842 = vpack.c.b16 %v759, %v758
      %v843 = vpack.c.b16 %v761, %v760
      %v844 = vpack.c.b16 %v763, %v762
      %v845 = vpack.c.b16 %v765, %v764
      %v846 = vpack.c.b16 %v767, %v766
      %v847 = vpack.c.b16 %v769, %v768
      %v848 = vpack.c.b16 %v771, %v770
      %v849 = vpack.c.b16 %v773, %v772
      %v850 = vpack.c.b16 %v775, %v774
      %v851 = vpack.c.b16 %v777, %v776
      %v852 = vpack.c.b16 %v779, %v778
      %v853 = vpack.c.b16 %v781, %v780
      %v854 = vpack.c.b16 %v783, %v782
      %v855 = vpack.c.b16 %v785, %v784
      %v856 = vpack.c.b16 %v787, %v786
      %v857 = vpack.c.b16 %v789, %v788
      %v858 = vpack.c.b16 %v791, %v790
      %v859 = vpack.c.b16 %v793, %v792
      %v860 = vpack.c.b16 %v795, %v794
      %v861 = vpack.c.b16 %v797, %v796
      %v862 = vpack.c.b16 %v799, %v798
      %v863 = vpack.c.b16 %v801, %v800
      %v864 = vpack.c.b16 %v803, %v802
      %v865 = vpack.c.b16 %v805, %v804
      %v866 = vpack.c.b16 %v807, %v806
      %v867 = vpack.c.b16 %v809, %v808
      %v868 = vpack.c.b16 %v811, %v810
      %v869 = vpack.c.b16 %v813, %v812
      %v870 = vpack.c.b16 %v815, %v814
      %v871 = vpack.c.b16 %v817, %v816
      %v872 = vpack.c.b16 %v819, %v818
      %v873 = vpack.c.b16 %v821, %v820
      %v874 = vpack.c.b16 %v823, %v822
      %v875 = vpack.c.b16 %v825, %v824
      %vm926 = vcmask 261120
      %v928 = vsel %vm926, %v528, 0
      %v931 = vsel %vm926, %v535, 0
      %v934 = vsel %vm926, %v542, 0
      %v937 = vsel %vm926, %v549, 0
      %v940 = vsel %vm926, %v556, 0
      %v943 = vsel %vm926, %v563, 0
      %v946 = vsel %vm926, %v570, 0
      %v949 = vsel %vm926, %v577, 0
      %951 = vmatpush.bf16.msra.mxu0 %v833
      %952 = vmatpush.bf16.msra.mxu0 %v832
      %953 = vmatpush.bf16.msra.mxu0 %v831
      %954 = vmatpush.bf16.msra.mxu0 %v830
      %955 = vmatpush.bf16.msra.mxu0 %v829
      %956 = vmatpush.bf16.msra.mxu0 %v828
      %957 = vmatpush.bf16.msra.mxu0 %v827
      %958 = vmatpush.bf16.msra.mxu0 %v826
      %959 = vmatmul.bf16.gmra.mxu0 %v522
      %v960 = vpop.f32.mrf.mxu0
      %v961 = vadd.f32 %v344, %v960
      %v962 = vpop.f32.mrf.mxu0
      %v963 = vadd.f32 %v344, %v962
      %964 = vmatmul.bf16.gmra.mxu0 %v529
      %v965 = vpop.f32.mrf.mxu0
      %v966 = vadd.f32 %v344, %v965
      %v967 = vpop.f32.mrf.mxu0
      %v968 = vadd.f32 %v344, %v967
      %969 = vmatmul.bf16.gmra.mxu0 %v536
      %v970 = vpop.f32.mrf.mxu0
      %v971 = vadd.f32 %v344, %v970
      %v972 = vpop.f32.mrf.mxu0
      %v973 = vadd.f32 %v344, %v972
      %974 = vmatmul.bf16.gmra.mxu0 %v543
      %v975 = vpop.f32.mrf.mxu0
      %v976 = vadd.f32 %v344, %v975
      %v977 = vpop.f32.mrf.mxu0
      %v978 = vadd.f32 %v344, %v977
      %979 = vmatmul.bf16.gmra.mxu0 %v550
      %v980 = vpop.f32.mrf.mxu0
      %v981 = vadd.f32 %v344, %v980
      %v982 = vpop.f32.mrf.mxu0
      %v983 = vadd.f32 %v344, %v982
      %984 = vmatmul.bf16.gmra.mxu0 %v557
      %v985 = vpop.f32.mrf.mxu0
      %v986 = vadd.f32 %v344, %v985
      %v987 = vpop.f32.mrf.mxu0
      %v988 = vadd.f32 %v344, %v987
      %989 = vmatmul.bf16.gmra.mxu0 %v564
      %v990 = vpop.f32.mrf.mxu0
      %v991 = vadd.f32 %v344, %v990
      %v992 = vpop.f32.mrf.mxu0
      %v993 = vadd.f32 %v344, %v992
      %994 = vmatmul.bf16.gmra.mxu0 %v571
      %v995 = vpop.f32.mrf.mxu0
      %v996 = vadd.f32 %v344, %v995
      %v997 = vpop.f32.mrf.mxu0
      %v998 = vadd.f32 %v344, %v997
      %999 = vdwg.mxu0
      %1000 = vmatpush.bf16.msra.mxu0 %v841
      %1001 = vmatpush.bf16.msra.mxu0 %v840
      %1002 = vmatpush.bf16.msra.mxu0 %v839
      %1003 = vmatpush.bf16.msra.mxu0 %v838
      %1004 = vmatpush.bf16.msra.mxu0 %v837
      %1005 = vmatpush.bf16.msra.mxu0 %v836
      %1006 = vmatpush.bf16.msra.mxu0 %v835
      %1007 = vmatpush.bf16.msra.mxu0 %v834
      %1008 = vmatmul.bf16.gmra.mxu0 %v523
      %v1009 = vpop.f32.mrf.mxu0
      %v1010 = vadd.f32 %v961, %v1009
      %v1011 = vpop.f32.mrf.mxu0
      %v1012 = vadd.f32 %v963, %v1011
      %1013 = vmatmul.bf16.gmra.mxu0 %v530
      %v1014 = vpop.f32.mrf.mxu0
      %v1015 = vadd.f32 %v966, %v1014
      %v1016 = vpop.f32.mrf.mxu0
      %v1017 = vadd.f32 %v968, %v1016
      %1018 = vmatmul.bf16.gmra.mxu0 %v537
      %v1019 = vpop.f32.mrf.mxu0
      %v1020 = vadd.f32 %v971, %v1019
      %v1021 = vpop.f32.mrf.mxu0
      %v1022 = vadd.f32 %v973, %v1021
      %1023 = vmatmul.bf16.gmra.mxu0 %v544
      %v1024 = vpop.f32.mrf.mxu0
      %v1025 = vadd.f32 %v976, %v1024
      %v1026 = vpop.f32.mrf.mxu0
      %v1027 = vadd.f32 %v978, %v1026
      %1028 = vmatmul.bf16.gmra.mxu0 %v551
      %v1029 = vpop.f32.mrf.mxu0
      %v1030 = vadd.f32 %v981, %v1029
      %v1031 = vpop.f32.mrf.mxu0
      %v1032 = vadd.f32 %v983, %v1031
      %1033 = vmatmul.bf16.gmra.mxu0 %v558
      %v1034 = vpop.f32.mrf.mxu0
      %v1035 = vadd.f32 %v986, %v1034
      %v1036 = vpop.f32.mrf.mxu0
      %v1037 = vadd.f32 %v988, %v1036
      %1038 = vmatmul.bf16.gmra.mxu0 %v565
      %v1039 = vpop.f32.mrf.mxu0
      %v1040 = vadd.f32 %v991, %v1039
      %v1041 = vpop.f32.mrf.mxu0
      %v1042 = vadd.f32 %v993, %v1041
      %1043 = vmatmul.bf16.gmra.mxu0 %v572
      %v1044 = vpop.f32.mrf.mxu0
      %v1045 = vadd.f32 %v996, %v1044
      %v1046 = vpop.f32.mrf.mxu0
      %v1047 = vadd.f32 %v998, %v1046
      %1048 = vdwg.mxu0
      %1049 = vmatpush.bf16.msra.mxu0 %v849
      %1050 = vmatpush.bf16.msra.mxu0 %v848
      %1051 = vmatpush.bf16.msra.mxu0 %v847
      %1052 = vmatpush.bf16.msra.mxu0 %v846
      %1053 = vmatpush.bf16.msra.mxu0 %v845
      %1054 = vmatpush.bf16.msra.mxu0 %v844
      %1055 = vmatpush.bf16.msra.mxu0 %v843
      %1056 = vmatpush.bf16.msra.mxu0 %v842
      %1057 = vmatmul.bf16.gmra.mxu0 %v524
      %v1058 = vpop.f32.mrf.mxu0
      %v1059 = vadd.f32 %v1010, %v1058
      %v1060 = vpop.f32.mrf.mxu0
      %v1061 = vadd.f32 %v1012, %v1060
      %1062 = vmatmul.bf16.gmra.mxu0 %v531
      %v1063 = vpop.f32.mrf.mxu0
      %v1064 = vadd.f32 %v1015, %v1063
      %v1065 = vpop.f32.mrf.mxu0
      %v1066 = vadd.f32 %v1017, %v1065
      %1067 = vmatmul.bf16.gmra.mxu0 %v538
      %v1068 = vpop.f32.mrf.mxu0
      %v1069 = vadd.f32 %v1020, %v1068
      %v1070 = vpop.f32.mrf.mxu0
      %v1071 = vadd.f32 %v1022, %v1070
      %1072 = vmatmul.bf16.gmra.mxu0 %v545
      %v1073 = vpop.f32.mrf.mxu0
      %v1074 = vadd.f32 %v1025, %v1073
      %v1075 = vpop.f32.mrf.mxu0
      %v1076 = vadd.f32 %v1027, %v1075
      %1077 = vmatmul.bf16.gmra.mxu0 %v552
      %v1078 = vpop.f32.mrf.mxu0
      %v1079 = vadd.f32 %v1030, %v1078
      %v1080 = vpop.f32.mrf.mxu0
      %v1081 = vadd.f32 %v1032, %v1080
      %1082 = vmatmul.bf16.gmra.mxu0 %v559
      %v1083 = vpop.f32.mrf.mxu0
      %v1084 = vadd.f32 %v1035, %v1083
      %v1085 = vpop.f32.mrf.mxu0
      %v1086 = vadd.f32 %v1037, %v1085
      %1087 = vmatmul.bf16.gmra.mxu0 %v566
      %v1088 = vpop.f32.mrf.mxu0
      %v1089 = vadd.f32 %v1040, %v1088
      %v1090 = vpop.f32.mrf.mxu0
      %v1091 = vadd.f32 %v1042, %v1090
      %1092 = vmatmul.bf16.gmra.mxu0 %v573
      %v1093 = vpop.f32.mrf.mxu0
      %v1094 = vadd.f32 %v1045, %v1093
      %v1095 = vpop.f32.mrf.mxu0
      %v1096 = vadd.f32 %v1047, %v1095
      %1097 = vdwg.mxu0
      %1098 = vmatpush.bf16.msra.mxu0 %v857
      %1099 = vmatpush.bf16.msra.mxu0 %v856
      %1100 = vmatpush.bf16.msra.mxu0 %v855
      %1101 = vmatpush.bf16.msra.mxu0 %v854
      %1102 = vmatpush.bf16.msra.mxu0 %v853
      %1103 = vmatpush.bf16.msra.mxu0 %v852
      %1104 = vmatpush.bf16.msra.mxu0 %v851
      %1105 = vmatpush.bf16.msra.mxu0 %v850
      %1106 = vmatmul.bf16.gmra.mxu0 %v525
      %v1107 = vpop.f32.mrf.mxu0
      %v1108 = vadd.f32 %v1059, %v1107
      %v1109 = vpop.f32.mrf.mxu0
      %v1110 = vadd.f32 %v1061, %v1109
      %1111 = vmatmul.bf16.gmra.mxu0 %v532
      %v1112 = vpop.f32.mrf.mxu0
      %v1113 = vadd.f32 %v1064, %v1112
      %v1114 = vpop.f32.mrf.mxu0
      %v1115 = vadd.f32 %v1066, %v1114
      %1116 = vmatmul.bf16.gmra.mxu0 %v539
      %v1117 = vpop.f32.mrf.mxu0
      %v1118 = vadd.f32 %v1069, %v1117
      %v1119 = vpop.f32.mrf.mxu0
      %v1120 = vadd.f32 %v1071, %v1119
      %1121 = vmatmul.bf16.gmra.mxu0 %v546
      %v1122 = vpop.f32.mrf.mxu0
      %v1123 = vadd.f32 %v1074, %v1122
      %v1124 = vpop.f32.mrf.mxu0
      %v1125 = vadd.f32 %v1076, %v1124
      %1126 = vmatmul.bf16.gmra.mxu0 %v553
      %v1127 = vpop.f32.mrf.mxu0
      %v1128 = vadd.f32 %v1079, %v1127
      %v1129 = vpop.f32.mrf.mxu0
      %v1130 = vadd.f32 %v1081, %v1129
      %1131 = vmatmul.bf16.gmra.mxu0 %v560
      %v1132 = vpop.f32.mrf.mxu0
      %v1133 = vadd.f32 %v1084, %v1132
      %v1134 = vpop.f32.mrf.mxu0
      %v1135 = vadd.f32 %v1086, %v1134
      %1136 = vmatmul.bf16.gmra.mxu0 %v567
      %v1137 = vpop.f32.mrf.mxu0
      %v1138 = vadd.f32 %v1089, %v1137
      %v1139 = vpop.f32.mrf.mxu0
      %v1140 = vadd.f32 %v1091, %v1139
      %1141 = vmatmul.bf16.gmra.mxu0 %v574
      %v1142 = vpop.f32.mrf.mxu0
      %v1143 = vadd.f32 %v1094, %v1142
      %v1144 = vpop.f32.mrf.mxu0
      %v1145 = vadd.f32 %v1096, %v1144
      %1146 = vdwg.mxu0
      %1147 = vmatpush.bf16.msra.mxu0 %v865
      %1148 = vmatpush.bf16.msra.mxu0 %v864
      %1149 = vmatpush.bf16.msra.mxu0 %v863
      %1150 = vmatpush.bf16.msra.mxu0 %v862
      %1151 = vmatpush.bf16.msra.mxu0 %v861
      %1152 = vmatpush.bf16.msra.mxu0 %v860
      %1153 = vmatpush.bf16.msra.mxu0 %v859
      %1154 = vmatpush.bf16.msra.mxu0 %v858
      %1155 = vmatmul.bf16.gmra.mxu0 %v526
      %v1156 = vpop.f32.mrf.mxu0
      %v1157 = vadd.f32 %v1108, %v1156
      %v1158 = vpop.f32.mrf.mxu0
      %v1159 = vadd.f32 %v1110, %v1158
      %1160 = vmatmul.bf16.gmra.mxu0 %v533
      %v1161 = vpop.f32.mrf.mxu0
      %v1162 = vadd.f32 %v1113, %v1161
      %v1163 = vpop.f32.mrf.mxu0
      %v1164 = vadd.f32 %v1115, %v1163
      %1165 = vmatmul.bf16.gmra.mxu0 %v540
      %v1166 = vpop.f32.mrf.mxu0
      %v1167 = vadd.f32 %v1118, %v1166
      %v1168 = vpop.f32.mrf.mxu0
      %v1169 = vadd.f32 %v1120, %v1168
      %1170 = vmatmul.bf16.gmra.mxu0 %v547
      %v1171 = vpop.f32.mrf.mxu0
      %v1172 = vadd.f32 %v1123, %v1171
      %v1173 = vpop.f32.mrf.mxu0
      %v1174 = vadd.f32 %v1125, %v1173
      %1175 = vmatmul.bf16.gmra.mxu0 %v554
      %v1176 = vpop.f32.mrf.mxu0
      %v1177 = vadd.f32 %v1128, %v1176
      %v1178 = vpop.f32.mrf.mxu0
      %v1179 = vadd.f32 %v1130, %v1178
      %1180 = vmatmul.bf16.gmra.mxu0 %v561
      %v1181 = vpop.f32.mrf.mxu0
      %v1182 = vadd.f32 %v1133, %v1181
      %v1183 = vpop.f32.mrf.mxu0
      %v1184 = vadd.f32 %v1135, %v1183
      %1185 = vmatmul.bf16.gmra.mxu0 %v568
      %v1186 = vpop.f32.mrf.mxu0
      %v1187 = vadd.f32 %v1138, %v1186
      %v1188 = vpop.f32.mrf.mxu0
      %v1189 = vadd.f32 %v1140, %v1188
      %1190 = vmatmul.bf16.gmra.mxu0 %v575
      %v1191 = vpop.f32.mrf.mxu0
      %v1192 = vadd.f32 %v1143, %v1191
      %v1193 = vpop.f32.mrf.mxu0
      %v1194 = vadd.f32 %v1145, %v1193
      %1195 = vdwg.mxu0
      %1196 = vmatpush.bf16.msra.mxu0 %v873
      %1197 = vmatpush.bf16.msra.mxu0 %v872
      %1198 = vmatpush.bf16.msra.mxu0 %v871
      %1199 = vmatpush.bf16.msra.mxu0 %v870
      %1200 = vmatpush.bf16.msra.mxu0 %v869
      %1201 = vmatpush.bf16.msra.mxu0 %v868
      %1202 = vmatpush.bf16.msra.mxu0 %v867
      %1203 = vmatpush.bf16.msra.mxu0 %v866
      %1204 = vmatmul.bf16.gmra.mxu0 %v527
      %v1205 = vpop.f32.mrf.mxu0
      %v1206 = vadd.f32 %v1157, %v1205
      %v1207 = vpop.f32.mrf.mxu0
      %v1208 = vadd.f32 %v1159, %v1207
      %1209 = vmatmul.bf16.gmra.mxu0 %v534
      %v1210 = vpop.f32.mrf.mxu0
      %v1211 = vadd.f32 %v1162, %v1210
      %v1212 = vpop.f32.mrf.mxu0
      %v1213 = vadd.f32 %v1164, %v1212
      %1214 = vmatmul.bf16.gmra.mxu0 %v541
      %v1215 = vpop.f32.mrf.mxu0
      %v1216 = vadd.f32 %v1167, %v1215
      %v1217 = vpop.f32.mrf.mxu0
      %v1218 = vadd.f32 %v1169, %v1217
      %1219 = vmatmul.bf16.gmra.mxu0 %v548
      %v1220 = vpop.f32.mrf.mxu0
      %v1221 = vadd.f32 %v1172, %v1220
      %v1222 = vpop.f32.mrf.mxu0
      %v1223 = vadd.f32 %v1174, %v1222
      %1224 = vmatmul.bf16.gmra.mxu0 %v555
      %v1225 = vpop.f32.mrf.mxu0
      %v1226 = vadd.f32 %v1177, %v1225
      %v1227 = vpop.f32.mrf.mxu0
      %v1228 = vadd.f32 %v1179, %v1227
      %1229 = vmatmul.bf16.gmra.mxu0 %v562
      %v1230 = vpop.f32.mrf.mxu0
      %v1231 = vadd.f32 %v1182, %v1230
      %v1232 = vpop.f32.mrf.mxu0
      %v1233 = vadd.f32 %v1184, %v1232
      %1234 = vmatmul.bf16.gmra.mxu0 %v569
      %v1235 = vpop.f32.mrf.mxu0
      %v1236 = vadd.f32 %v1187, %v1235
      %v1237 = vpop.f32.mrf.mxu0
      %v1238 = vadd.f32 %v1189, %v1237
      %1239 = vmatmul.bf16.gmra.mxu0 %v576
      %v1240 = vpop.f32.mrf.mxu0
      %v1241 = vadd.f32 %v1192, %v1240
      %v1242 = vpop.f32.mrf.mxu0
      %v1243 = vadd.f32 %v1194, %v1242
      %1244 = vdwg.mxu0
      %1245 = vmatpush.bf16.msra.mxu0 0
      %1246 = vmatpush.bf16.msra.mxu0 0
      %1247 = vmatpush.bf16.msra.mxu0 0
      %1248 = vmatpush.bf16.msra.mxu0 0
      %1249 = vmatpush.bf16.msra.mxu0 0
      %1250 = vmatpush.bf16.msra.mxu0 0
      %1251 = vmatpush.bf16.msra.mxu0 %v875
      %1252 = vmatpush.bf16.msra.mxu0 %v874
      %1253 = vmatmul.bf16.gmra.mxu0 %v928
      %v1254 = vpop.f32.mrf.mxu0
      %v1255 = vadd.f32 %v1206, %v1254
      %v1256 = vpop.f32.mrf.mxu0
      %v1257 = vadd.f32 %v1208, %v1256
      %1258 = vmatmul.bf16.gmra.mxu0 %v931
      %v1259 = vpop.f32.mrf.mxu0
      %v1260 = vadd.f32 %v1211, %v1259
      %v1261 = vpop.f32.mrf.mxu0
      %v1262 = vadd.f32 %v1213, %v1261
      %1263 = vmatmul.bf16.gmra.mxu0 %v934
      %v1264 = vpop.f32.mrf.mxu0
      %v1265 = vadd.f32 %v1216, %v1264
      %v1266 = vpop.f32.mrf.mxu0
      %v1267 = vadd.f32 %v1218, %v1266
      %1268 = vmatmul.bf16.gmra.mxu0 %v937
      %v1269 = vpop.f32.mrf.mxu0
      %v1270 = vadd.f32 %v1221, %v1269
      %v1271 = vpop.f32.mrf.mxu0
      %v1272 = vadd.f32 %v1223, %v1271
      %1273 = vmatmul.bf16.gmra.mxu0 %v940
      %v1274 = vpop.f32.mrf.mxu0
      %v1275 = vadd.f32 %v1226, %v1274
      %v1276 = vpop.f32.mrf.mxu0
      %v1277 = vadd.f32 %v1228, %v1276
      %1278 = vmatmul.bf16.gmra.mxu0 %v943
      %v1279 = vpop.f32.mrf.mxu0
      %v1280 = vadd.f32 %v1231, %v1279
      %v1281 = vpop.f32.mrf.mxu0
      %v1282 = vadd.f32 %v1233, %v1281
      %1283 = vmatmul.bf16.gmra.mxu0 %v946
      %v1284 = vpop.f32.mrf.mxu0
      %v1285 = vadd.f32 %v1236, %v1284
      %v1286 = vpop.f32.mrf.mxu0
      %v1287 = vadd.f32 %v1238, %v1286
      %1288 = vmatmul.bf16.gmra.mxu0 %v949
      %v1289 = vpop.f32.mrf.mxu0
      %v1290 = vadd.f32 %v1241, %v1289
      %v1291 = vpop.f32.mrf.mxu0
      %v1292 = vadd.f32 %v1243, %v1291
      %1293 = vdwg.mxu0
      %v1294 = vpack.c.bf16 %v1255, %v1255
      %v1295 = vpack.c.bf16 %v1257, %v1257
      %v1296 = vpack.c.bf16 %v1260, %v1260
      %v1297 = vpack.c.bf16 %v1262, %v1262
      %v1298 = vpack.c.bf16 %v1265, %v1265
      %v1299 = vpack.c.bf16 %v1267, %v1267
      %v1300 = vpack.c.bf16 %v1270, %v1270
      %v1301 = vpack.c.bf16 %v1272, %v1272
      %v1302 = vpack.c.bf16 %v1275, %v1275
      %v1303 = vpack.c.bf16 %v1277, %v1277
      %v1304 = vpack.c.bf16 %v1280, %v1280
      %v1305 = vpack.c.bf16 %v1282, %v1282
      %v1306 = vpack.c.bf16 %v1285, %v1285
      %v1307 = vpack.c.bf16 %v1287, %v1287
      %v1308 = vpack.c.bf16 %v1290, %v1290
      %v1309 = vpack.c.bf16 %v1292, %v1292
      %1310 = vst [vmem:[%s175] sm:$0xf] %v1294
      %1311 = vst [vmem:[%s175 + $0x4] sm:$0xf] %v1295
      %1312 = vst [vmem:[%s175 + $0x8] sm:$0xf] %v1296
      %1313 = vst [vmem:[%s175 + $0xc] sm:$0xf] %v1297
      %1314 = vst [vmem:[%s175 + $0x10] sm:$0xf] %v1298
      %1315 = vst [vmem:[%s175 + $0x14] sm:$0xf] %v1299
      %1316 = vst [vmem:[%s175 + $0x18] sm:$0xf] %v1300
      %1317 = vst [vmem:[%s175 + $0x1c] sm:$0xf] %v1301
      %1318 = vst [vmem:[%s175 + $0x20] sm:$0xf] %v1302
      %1319 = vst [vmem:[%s175 + $0x24] sm:$0xf] %v1303
      %1320 = vst [vmem:[%s175 + $0x28] sm:$0xf] %v1304
      %1321 = vst [vmem:[%s175 + $0x2c] sm:$0xf] %v1305
      %1322 = vst [vmem:[%s175 + $0x30] sm:$0xf] %v1306
      %1323 = vst [vmem:[%s175 + $0x34] sm:$0xf] %v1307
      %1324 = vst [vmem:[%s175 + $0x38] sm:$0xf] %v1308
      %1325 = vst [vmem:[%s175 + $0x3c] sm:$0xf] %v1309
      %s1326 = smul.u32 16, %s14
      %p1327 = scmp.lt.s32.totalorder %s1326, 31
      %s1328 = scalar_select %p1327, %s1326, 31
      %s1329 = smul.addr %s1328, 4
      %s1330 = scalar_lea.vmem %s3, %s1329
      // Predicated region
      $region33: #{kws_net_forward.6} parent=31 // pred_check
        %p1331 = pneg %p100
      $region34: #{kws_net_forward.6} parent=31 // pred_check_branch
        %1333 = sbr.rel (%p1331) target = $region36
      $region35: #{kws_net_forward.6} parent=31 // pred_region
        %s1334 = smul.u32 16, %s14
      $region36: #{kws_net_forward.6} parent=31 // pred_fallthru
        _
    $region32: #{kws_net_forward.6} parent=5 // pred_fallthru
      _
    %p1335 = scmp.le.s32.totalorder 2, %s9
    // Predicated region
    $region37: #{kws_net_forward.6} parent=5 // pred_check
      %p1336 = pneg %p1335
    $region38: #{kws_net_forward.6} parent=5 // pred_check_branch
      %1338 = sbr.rel (%p1336) target = $region40
    $region39: #{kws_net_forward.6} parent=5 // pred_region
      %s1339 = ssub.s32 %s9, 2
      // Predicated region
      $region41: #{kws_net_forward.6} parent=39 // pred_check
        %p1340 = pneg %p106
      $region42: #{kws_net_forward.6} parent=39 // pred_check_branch
        %1342 = sbr.rel (%p1340) target = $region44
      $region43: #{kws_net_forward.6} parent=39 // pred_region
        %s1343 = smul.u32 16, %s15
        %p1344 = scmp.lt.s32.totalorder %s1343, 31
        %s1345 = scalar_select %p1344, %s1343, 31
        %s1346 = smul.addr %s1345, 4
        %s1347 = scalar_lea.vmem %s3, %s1346
      $region44: #{kws_net_forward.6} parent=39 // pred_fallthru
        _
    $region40: #{kws_net_forward.6} parent=5 // pred_fallthru
      _
  $region6: #{kws_net_forward.6} parent=0 // loop_footer
    %s13 = sadd.s32 1, %s9
  $region7: #{kws_net_forward.6} parent=0 // loop_footer_branch
    %8 = sbr.rel target = $region3
  $region8: #{kws_net_forward.6} parent=0 // loop_exit
    _

// kernel: kws_net_forward.7
$region0: #{kws_net_forward.7}
  #allocation0 [shape = 'u32[]', space=smem, size = 0x4, offset = 0x4, fixed_abs, tag = 'smem constant byte address 0x4 - core index']
  #allocation1 [shape = 'u32[72,128]{1,0:T(1,128)}', space=vmem, size = 0x9000, scoped, tag = 'internal scratch']
  #allocation2 [shape = 'f32[1,1]{1,0:T(1,128)S(1)}', space=vmem, size = 0x200, scoped, tag = 'scoped memory for kws_net_forward.7']
  %s0 = inlined_call_operand.vmem [shape: bf16[4,3200], index: 0, kind: input, shape index: {}]
  %s1 = inlined_call_operand.vmem [shape: bf16[3200,256], index: 1, kind: input, shape index: {}]
  %s2 = inlined_call_operand.vmem [shape: f32[1,256], index: 2, kind: input, shape index: {}]
  %s3 = inlined_call_operand.vmem [shape: bf16[256,512], index: 3, kind: input, shape index: {}]
  %s4 = inlined_call_operand.vmem [shape: f32[1,512], index: 4, kind: input, shape index: {}]
  %s5 = inlined_call_operand.vmem [shape: bf16[512,256], index: 5, kind: input, shape index: {}]
  %s6 = inlined_call_operand.vmem [shape: f32[1,256], index: 6, kind: input, shape index: {}]
  %s7 = inlined_call_operand.vmem [shape: f32[1,256], index: 7, kind: input, shape index: {}]
  %s8 = inlined_call_operand.<no memory space> [shape: f32[1,1], index: 8, kind: input, shape index: {}]
  %s9 = inlined_call_operand.vmem [shape: f32[2,1], index: 9, kind: output, shape index: {}]
  %s10 = sld [smem:[#allocation0]]
  $region46: #{kws_net_forward.7} parent=0
    _
  %s12 = ssub.s32 1, %s10
  %s13 = scalar_select 0, %s12, %s10
  %v14 = vstv %s8
  %15 = vst [vmem:[#allocation2] sm:$0x1] %v14
  // Predicated region
  $region2: #{kws_net_forward.7} parent=0 // pred_check
    _
  $region3: #{kws_net_forward.7} parent=0 // pred_check_branch
    %17 = sbr.rel (0) target = $region5
  $region4: #{kws_net_forward.7} parent=0 // pred_region
    _
  $region5: #{kws_net_forward.7} parent=0 // pred_fallthru
    _
  // Predicated region
  $region6: #{kws_net_forward.7} parent=0 // pred_check
    _
  $region7: #{kws_net_forward.7} parent=0 // pred_check_branch
    %19 = sbr.rel (0) target = $region9
  $region8: #{kws_net_forward.7} parent=0 // pred_region
    _
  $region9: #{kws_net_forward.7} parent=0 // pred_fallthru
    _
  // Predicated region
  $region10: #{kws_net_forward.7} parent=0 // pred_check
    _
  $region11: #{kws_net_forward.7} parent=0 // pred_check_branch
    %21 = sbr.rel (0) target = $region13
  $region12: #{kws_net_forward.7} parent=0 // pred_region
    _
  $region13: #{kws_net_forward.7} parent=0 // pred_fallthru
    _
  // Predicated region
  $region14: #{kws_net_forward.7} parent=0 // pred_check
    _
  $region15: #{kws_net_forward.7} parent=0 // pred_check_branch
    %23 = sbr.rel (0) target = $region17
  $region16: #{kws_net_forward.7} parent=0 // pred_region
    _
  $region17: #{kws_net_forward.7} parent=0 // pred_fallthru
    _
  // Predicated region
  $region18: #{kws_net_forward.7} parent=0 // pred_check
    _
  $region19: #{kws_net_forward.7} parent=0 // pred_check_branch
    %25 = sbr.rel (0) target = $region21
  $region20: #{kws_net_forward.7} parent=0 // pred_region
    _
  $region21: #{kws_net_forward.7} parent=0 // pred_fallthru
    _
  // Predicated region
  $region22: #{kws_net_forward.7} parent=0 // pred_check
    _
  $region23: #{kws_net_forward.7} parent=0 // pred_check_branch
    %27 = sbr.rel (0) target = $region25
  $region24: #{kws_net_forward.7} parent=0 // pred_region
    _
  $region25: #{kws_net_forward.7} parent=0 // pred_fallthru
    _
  // Predicated region
  $region26: #{kws_net_forward.7} parent=0 // pred_check
    _
  $region27: #{kws_net_forward.7} parent=0 // pred_check_branch
    %29 = sbr.rel (0) target = $region29
  $region28: #{kws_net_forward.7} parent=0 // pred_region
    _
  $region29: #{kws_net_forward.7} parent=0 // pred_fallthru
    _
  // Predicated region
  $region30: #{kws_net_forward.7} parent=0 // pred_check
    _
  $region31: #{kws_net_forward.7} parent=0 // pred_check_branch
    %31 = sbr.rel (0) target = $region33
  $region32: #{kws_net_forward.7} parent=0 // pred_region
    _
  $region33: #{kws_net_forward.7} parent=0 // pred_fallthru
    _
  // Predicated region
  $region34: #{kws_net_forward.7} parent=0 // pred_check
    _
  $region35: #{kws_net_forward.7} parent=0 // pred_check_branch
    %33 = sbr.rel (0) target = $region37
  $region36: #{kws_net_forward.7} parent=0 // pred_region
    _
  $region37: #{kws_net_forward.7} parent=0 // pred_fallthru
    _
  %v34 = vld [vmem:[%s0] sm:$0xff]
  %v35 = vld [vmem:[%s0 + $0x8] sm:$0xff]
  %v36 = vld [vmem:[%s0 + $0x10] sm:$0xff]
  %v37 = vld [vmem:[%s0 + $0x18] sm:$0xff]
  %v38 = vld [vmem:[%s0 + $0x20] sm:$0xff]
  %v39 = vld [vmem:[%s0 + $0x28] sm:$0xff]
  %v40 = vld [vmem:[%s0 + $0x30] sm:$0x3]
  %v41 = vld [vmem:[%s1] sm:$0xff]
  %v42 = vld [vmem:[%s1 + $0x8] sm:$0xff]
  %v43 = vld [vmem:[%s1 + $0x10] sm:$0xff]
  %v44 = vld [vmem:[%s1 + $0x18] sm:$0xff]
  %v45 = vld [vmem:[%s1 + $0x20] sm:$0xff]
  %v46 = vld [vmem:[%s1 + $0x28] sm:$0xff]
  %v47 = vld [vmem:[%s1 + $0x30] sm:$0xff]
  %v48 = vld [vmem:[%s1 + $0x38] sm:$0xff]
  %v49 = vld [vmem:[%s1 + $0x40] sm:$0xff]
  %v50 = vld [vmem:[%s1 + $0x48] sm:$0xff]
  %v51 = vld [vmem:[%s1 + $0x50] sm:$0xff]
  %v52 = vld [vmem:[%s1 + $0x58] sm:$0xff]
  %v53 = vld [vmem:[%s1 + $0x60] sm:$0xff]
  %v54 = vld [vmem:[%s1 + $0x68] sm:$0xff]
  %v55 = vld [vmem:[%s1 + $0x70] sm:$0xff]
  %v56 = vld [vmem:[%s1 + $0x78] sm:$0xff]
  %v57 = vld [vmem:[%s1 + $0x80] sm:$0xff]
  %v58 = vld [vmem:[%s1 + $0x88] sm:$0xff]
  %v59 = vld [vmem:[%s1 + $0x90] sm:$0xff]
  %v60 = vld [vmem:[%s1 + $0x98] sm:$0xff]
  %v61 = vld [vmem:[%s1 + $0xa0] sm:$0xff]
  %v62 = vld [vmem:[%s1 + $0xa8] sm:$0xff]
  %v63 = vld [vmem:[%s1 + $0xb0] sm:$0xff]
  %v64 = vld [vmem:[%s1 + $0xb8] sm:$0xff]
  %v65 = vld [vmem:[%s1 + $0xc0] sm:$0xff]
  %v66 = vld [vmem:[%s1 + $0xc8] sm:$0xff]
  %v67 = vld [vmem:[%s1 + $0xd0] sm:$0xff]
  %v68 = vld [vmem:[%s1 + $0xd8] sm:$0xff]
  %v69 = vld [vmem:[%s1 + $0xe0] sm:$0xff]
  %v70 = vld [vmem:[%s1 + $0xe8] sm:$0xff]
  %v71 = vld [vmem:[%s1 + $0xf0] sm:$0xff]
  %v72 = vld [vmem:[%s1 + $0xf8] sm:$0xff]
  %v73 = vld [vmem:[%s1 + $0x100] sm:$0xff]
  %v74 = vld [vmem:[%s1 + $0x108] sm:$0xff]
  %v75 = vld [vmem:[%s1 + $0x110] sm:$0xff]
  %v76 = vld [vmem:[%s1 + $0x118] sm:$0xff]
  %v77 = vld [vmem:[%s1 + $0x120] sm:$0xff]
  %v78 = vld [vmem:[%s1 + $0x128] sm:$0xff]
  %v79 = vld [vmem:[%s1 + $0x130] sm:$0xff]
  %v80 = vld [vmem:[%s1 + $0x138] sm:$0xff]
  %v81 = vld [vmem:[%s1 + $0x140] sm:$0xff]
  %v82 = vld [vmem:[%s1 + $0x148] sm:$0xff]
  %v83 = vld [vmem:[%s1 + $0x150] sm:$0xff]
  %v84 = vld [vmem:[%s1 + $0x158] sm:$0xff]
  %v85 = vld [vmem:[%s1 + $0x160] sm:$0xff]
  %v86 = vld [vmem:[%s1 + $0x168] sm:$0xff]
  %v87 = vld [vmem:[%s1 + $0x170] sm:$0xff]
  %v88 = vld [vmem:[%s1 + $0x178] sm:$0xff]
  %v89 = vld [vmem:[%s1 + $0x180] sm:$0xff]
  %v90 = vld [vmem:[%s1 + $0x188] sm:$0xff]
  %v91 = vld [vmem:[%s1 + $0x190] sm:$0xff]
  %v92 = vld [vmem:[%s1 + $0x198] sm:$0xff]
  %v93 = vld [vmem:[%s1 + $0x1a0] sm:$0xff]
  %v94 = vld [vmem:[%s1 + $0x1a8] sm:$0xff]
  %v95 = vld [vmem:[%s1 + $0x1b0] sm:$0xff]
  %v96 = vld [vmem:[%s1 + $0x1b8] sm:$0xff]
  %v97 = vld [vmem:[%s1 + $0x1c0] sm:$0xff]
  %v98 = vld [vmem:[%s1 + $0x1c8] sm:$0xff]
  %v99 = vld [vmem:[%s1 + $0x1d0] sm:$0xff]
  %v100 = vld [vmem:[%s1 + $0x1d8] sm:$0xff]
  %v101 = vld [vmem:[%s1 + $0x1e0] sm:$0xff]
  %v102 = vld [vmem:[%s1 + $0x1e8] sm:$0xff]
  %v103 = vld [vmem:[%s1 + $0x1f0] sm:$0xff]
  %v104 = vld [vmem:[%s1 + $0x1f8] sm:$0xff]
  %v105 = vld [vmem:[%s1 + $0x200] sm:$0xff]
  %v106 = vld [vmem:[%s1 + $0x208] sm:$0xff]
  %v107 = vld [vmem:[%s1 + $0x210] sm:$0xff]
  %v108 = vld [vmem:[%s1 + $0x218] sm:$0xff]
  %v109 = vld [vmem:[%s1 + $0x220] sm:$0xff]
  %v110 = vld [vmem:[%s1 + $0x228] sm:$0xff]
  %v111 = vld [vmem:[%s1 + $0x230] sm:$0xff]
  %v112 = vld [vmem:[%s1 + $0x238] sm:$0xff]
  %v113 = vld [vmem:[%s1 + $0x240] sm:$0xff]
  %v114 = vld [vmem:[%s1 + $0x248] sm:$0xff]
  %v115 = vld [vmem:[%s1 + $0x250] sm:$0xff]
  %v116 = vld [vmem:[%s1 + $0x258] sm:$0xff]
  %v117 = vld [vmem:[%s1 + $0x260] sm:$0xff]
  %v118 = vld [vmem:[%s1 + $0x268] sm:$0xff]
  %v119 = vld [vmem:[%s1 + $0x270] sm:$0xff]
  %v120 = vld [vmem:[%s1 + $0x278] sm:$0xff]
  %v121 = vld [vmem:[%s1 + $0x280] sm:$0xff]
  %v122 = vld [vmem:[%s1 + $0x288] sm:$0xff]
  %v123 = vld [vmem:[%s1 + $0x290] sm:$0xff]
  %v124 = vld [vmem:[%s1 + $0x298] sm:$0xff]
  %v125 = vld [vmem:[%s1 + $0x2a0] sm:$0xff]
  %v126 = vld [vmem:[%s1 + $0x2a8] sm:$0xff]
  %v127 = vld [vmem:[%s1 + $0x2b0] sm:$0xff]
  %v128 = vld [vmem:[%s1 + $0x2b8] sm:$0xff]
  %v129 = vld [vmem:[%s1 + $0x2c0] sm:$0xff]
  %v130 = vld [vmem:[%s1 + $0x2c8] sm:$0xff]
  %v131 = vld [vmem:[%s1 + $0x2d0] sm:$0xff]
  %v132 = vld [vmem:[%s1 + $0x2d8] sm:$0xff]
  %v133 = vld [vmem:[%s1 + $0x2e0] sm:$0xff]
  %v134 = vld [vmem:[%s1 + $0x2e8] sm:$0xff]
  %v135 = vld [vmem:[%s1 + $0x2f0] sm:$0xff]
  %v136 = vld [vmem:[%s1 + $0x2f8] sm:$0xff]
  %v137 = vld [vmem:[%s1 + $0x300] sm:$0xff]
  %v138 = vld [vmem:[%s1 + $0x308] sm:$0xff]
  %v139 = vld [vmem:[%s1 + $0x310] sm:$0xff]
  %v140 = vld [vmem:[%s1 + $0x318] sm:$0xff]
  %v141 = vld [vmem:[%s1 + $0x320] sm:$0xff]
  %v142 = vld [vmem:[%s1 + $0x328] sm:$0xff]
  %v143 = vld [vmem:[%s1 + $0x330] sm:$0xff]
  %v144 = vld [vmem:[%s1 + $0x338] sm:$0xff]
  %v145 = vld [vmem:[%s1 + $0x340] sm:$0xff]
  %v146 = vld [vmem:[%s1 + $0x348] sm:$0xff]
  %v147 = vld [vmem:[%s1 + $0x350] sm:$0xff]
  %v148 = vld [vmem:[%s1 + $0x358] sm:$0xff]
  %v149 = vld [vmem:[%s1 + $0x360] sm:$0xff]
  %v150 = vld [vmem:[%s1 + $0x368] sm:$0xff]
  %v151 = vld [vmem:[%s1 + $0x370] sm:$0xff]
  %v152 = vld [vmem:[%s1 + $0x378] sm:$0xff]
  %v153 = vld [vmem:[%s1 + $0x380] sm:$0xff]
  %v154 = vld [vmem:[%s1 + $0x388] sm:$0xff]
  %v155 = vld [vmem:[%s1 + $0x390] sm:$0xff]
  %v156 = vld [vmem:[%s1 + $0x398] sm:$0xff]
  %v157 = vld [vmem:[%s1 + $0x3a0] sm:$0xff]
  %v158 = vld [vmem:[%s1 + $0x3a8] sm:$0xff]
  %v159 = vld [vmem:[%s1 + $0x3b0] sm:$0xff]
  %v160 = vld [vmem:[%s1 + $0x3b8] sm:$0xff]
  %v161 = vld [vmem:[%s1 + $0x3c0] sm:$0xff]
  %v162 = vld [vmem:[%s1 + $0x3c8] sm:$0xff]
  %v163 = vld [vmem:[%s1 + $0x3d0] sm:$0xff]
  %v164 = vld [vmem:[%s1 + $0x3d8] sm:$0xff]
  %v165 = vld [vmem:[%s1 + $0x3e0] sm:$0xff]
  %v166 = vld [vmem:[%s1 + $0x3e8] sm:$0xff]
  %v167 = vld [vmem:[%s1 + $0x3f0] sm:$0xff]
  %v168 = vld [vmem:[%s1 + $0x3f8] sm:$0xff]
  %v169 = vld [vmem:[%s1 + $0x400] sm:$0xff]
  %v170 = vld [vmem:[%s1 + $0x408] sm:$0xff]
  %v171 = vld [vmem:[%s1 + $0x410] sm:$0xff]
  %v172 = vld [vmem:[%s1 + $0x418] sm:$0xff]
  %v173 = vld [vmem:[%s1 + $0x420] sm:$0xff]
  %v174 = vld [vmem:[%s1 + $0x428] sm:$0xff]
  %v175 = vld [vmem:[%s1 + $0x430] sm:$0xff]
  %v176 = vld [vmem:[%s1 + $0x438] sm:$0xff]
  %v177 = vld [vmem:[%s1 + $0x440] sm:$0xff]
  %v178 = vld [vmem:[%s1 + $0x448] sm:$0xff]
  %v179 = vld [vmem:[%s1 + $0x450] sm:$0xff]
  %v180 = vld [vmem:[%s1 + $0x458] sm:$0xff]
  %v181 = vld [vmem:[%s1 + $0x460] sm:$0xff]
  %v182 = vld [vmem:[%s1 + $0x468] sm:$0xff]
  %v183 = vld [vmem:[%s1 + $0x470] sm:$0xff]
  %v184 = vld [vmem:[%s1 + $0x478] sm:$0xff]
  %v185 = vld [vmem:[%s1 + $0x480] sm:$0xff]
  %v186 = vld [vmem:[%s1 + $0x488] sm:$0xff]
  %v187 = vld [vmem:[%s1 + $0x490] sm:$0xff]
  %v188 = vld [vmem:[%s1 + $0x498] sm:$0xff]
  %v189 = vld [vmem:[%s1 + $0x4a0] sm:$0xff]
  %v190 = vld [vmem:[%s1 + $0x4a8] sm:$0xff]
  %v191 = vld [vmem:[%s1 + $0x4b0] sm:$0xff]
  %v192 = vld [vmem:[%s1 + $0x4b8] sm:$0xff]
  %v193 = vld [vmem:[%s1 + $0x4c0] sm:$0xff]
  %v194 = vld [vmem:[%s1 + $0x4c8] sm:$0xff]
  %v195 = vld [vmem:[%s1 + $0x4d0] sm:$0xff]
  %v196 = vld [vmem:[%s1 + $0x4d8] sm:$0xff]
  %v197 = vld [vmem:[%s1 + $0x4e0] sm:$0xff]
  %v198 = vld [vmem:[%s1 + $0x4e8] sm:$0xff]
  %v199 = vld [vmem:[%s1 + $0x4f0] sm:$0xff]
  %v200 = vld [vmem:[%s1 + $0x4f8] sm:$0xff]
  %v201 = vld [vmem:[%s1 + $0x500] sm:$0xff]
  %v202 = vld [vmem:[%s1 + $0x508] sm:$0xff]
  %v203 = vld [vmem:[%s1 + $0x510] sm:$0xff]
  %v204 = vld [vmem:[%s1 + $0x518] sm:$0xff]
  %v205 = vld [vmem:[%s1 + $0x520] sm:$0xff]
  %v206 = vld [vmem:[%s1 + $0x528] sm:$0xff]
  %v207 = vld [vmem:[%s1 + $0x530] sm:$0xff]
  %v208 = vld [vmem:[%s1 + $0x538] sm:$0xff]
  %v209 = vld [vmem:[%s1 + $0x540] sm:$0xff]
  %v210 = vld [vmem:[%s1 + $0x548] sm:$0xff]
  %v211 = vld [vmem:[%s1 + $0x550] sm:$0xff]
  %v212 = vld [vmem:[%s1 + $0x558] sm:$0xff]
  %v213 = vld [vmem:[%s1 + $0x560] sm:$0xff]
  %v214 = vld [vmem:[%s1 + $0x568] sm:$0xff]
  %v215 = vld [vmem:[%s1 + $0x570] sm:$0xff]
  %v216 = vld [vmem:[%s1 + $0x578] sm:$0xff]
  %v217 = vld [vmem:[%s1 + $0x580] sm:$0xff]
  %v218 = vld [vmem:[%s1 + $0x588] sm:$0xff]
  %v219 = vld [vmem:[%s1 + $0x590] sm:$0xff]
  %v220 = vld [vmem:[%s1 + $0x598] sm:$0xff]
  %v221 = vld [vmem:[%s1 + $0x5a0] sm:$0xff]
  %v222 = vld [vmem:[%s1 + $0x5a8] sm:$0xff]
  %v223 = vld [vmem:[%s1 + $0x5b0] sm:$0xff]
  %v224 = vld [vmem:[%s1 + $0x5b8] sm:$0xff]
  %v225 = vld [vmem:[%s1 + $0x5c0] sm:$0xff]
  %v226 = vld [vmem:[%s1 + $0x5c8] sm:$0xff]
  %v227 = vld [vmem:[%s1 + $0x5d0] sm:$0xff]
  %v228 = vld [vmem:[%s1 + $0x5d8] sm:$0xff]
  %v229 = vld [vmem:[%s1 + $0x5e0] sm:$0xff]
  %v230 = vld [vmem:[%s1 + $0x5e8] sm:$0xff]
  %v231 = vld [vmem:[%s1 + $0x5f0] sm:$0xff]
  %v232 = vld [vmem:[%s1 + $0x5f8] sm:$0xff]
  %v233 = vld [vmem:[%s1 + $0x600] sm:$0xff]
  %v234 = vld [vmem:[%s1 + $0x608] sm:$0xff]
  %v235 = vld [vmem:[%s1 + $0x610] sm:$0xff]
  %v236 = vld [vmem:[%s1 + $0x618] sm:$0xff]
  %v237 = vld [vmem:[%s1 + $0x620] sm:$0xff]
  %v238 = vld [vmem:[%s1 + $0x628] sm:$0xff]
  %v239 = vld [vmem:[%s1 + $0x630] sm:$0xff]
  %v240 = vld [vmem:[%s1 + $0x638] sm:$0xff]
  %v241 = vld [vmem:[%s1 + $0x640] sm:$0xff]
  %v242 = vld [vmem:[%s1 + $0x648] sm:$0xff]
  %v243 = vld [vmem:[%s1 + $0x650] sm:$0xff]
  %v244 = vld [vmem:[%s1 + $0x658] sm:$0xff]
  %v245 = vld [vmem:[%s1 + $0x660] sm:$0xff]
  %v246 = vld [vmem:[%s1 + $0x668] sm:$0xff]
  %v247 = vld [vmem:[%s1 + $0x670] sm:$0xff]
  %v248 = vld [vmem:[%s1 + $0x678] sm:$0xff]
  %v249 = vld [vmem:[%s1 + $0x680] sm:$0xff]
  %v250 = vld [vmem:[%s1 + $0x688] sm:$0xff]
  %v251 = vld [vmem:[%s1 + $0x690] sm:$0xff]
  %v252 = vld [vmem:[%s1 + $0x698] sm:$0xff]
  %v253 = vld [vmem:[%s1 + $0x6a0] sm:$0xff]
  %v254 = vld [vmem:[%s1 + $0x6a8] sm:$0xff]
  %v255 = vld [vmem:[%s1 + $0x6b0] sm:$0xff]
  %v256 = vld [vmem:[%s1 + $0x6b8] sm:$0xff]
  %v257 = vld [vmem:[%s1 + $0x6c0] sm:$0xff]
  %v258 = vld [vmem:[%s1 + $0x6c8] sm:$0xff]
  %v259 = vld [vmem:[%s1 + $0x6d0] sm:$0xff]
  %v260 = vld [vmem:[%s1 + $0x6d8] sm:$0xff]
  %v261 = vld [vmem:[%s1 + $0x6e0] sm:$0xff]
  %v262 = vld [vmem:[%s1 + $0x6e8] sm:$0xff]
  %v263 = vld [vmem:[%s1 + $0x6f0] sm:$0xff]
  %v264 = vld [vmem:[%s1 + $0x6f8] sm:$0xff]
  %v265 = vld [vmem:[%s1 + $0x700] sm:$0xff]
  %v266 = vld [vmem:[%s1 + $0x708] sm:$0xff]
  %v267 = vld [vmem:[%s1 + $0x710] sm:$0xff]
  %v268 = vld [vmem:[%s1 + $0x718] sm:$0xff]
  %v269 = vld [vmem:[%s1 + $0x720] sm:$0xff]
  %v270 = vld [vmem:[%s1 + $0x728] sm:$0xff]
  %v271 = vld [vmem:[%s1 + $0x730] sm:$0xff]
  %v272 = vld [vmem:[%s1 + $0x738] sm:$0xff]
  %v273 = vld [vmem:[%s1 + $0x740] sm:$0xff]
  %v274 = vld [vmem:[%s1 + $0x748] sm:$0xff]
  %v275 = vld [vmem:[%s1 + $0x750] sm:$0xff]
  %v276 = vld [vmem:[%s1 + $0x758] sm:$0xff]
  %v277 = vld [vmem:[%s1 + $0x760] sm:$0xff]
  %v278 = vld [vmem:[%s1 + $0x768] sm:$0xff]
  %v279 = vld [vmem:[%s1 + $0x770] sm:$0xff]
  %v280 = vld [vmem:[%s1 + $0x778] sm:$0xff]
  %v281 = vld [vmem:[%s1 + $0x780] sm:$0xff]
  %v282 = vld [vmem:[%s1 + $0x788] sm:$0xff]
  %v283 = vld [vmem:[%s1 + $0x790] sm:$0xff]
  %v284 = vld [vmem:[%s1 + $0x798] sm:$0xff]
  %v285 = vld [vmem:[%s1 + $0x7a0] sm:$0xff]
  %v286 = vld [vmem:[%s1 + $0x7a8] sm:$0xff]
  %v287 = vld [vmem:[%s1 + $0x7b0] sm:$0xff]
  %v288 = vld [vmem:[%s1 + $0x7b8] sm:$0xff]
  %v289 = vld [vmem:[%s1 + $0x7c0] sm:$0xff]
  %v290 = vld [vmem:[%s1 + $0x7c8] sm:$0xff]
  %v291 = vld [vmem:[%s1 + $0x7d0] sm:$0xff]
  %v292 = vld [vmem:[%s1 + $0x7d8] sm:$0xff]
  %v293 = vld [vmem:[%s1 + $0x7e0] sm:$0xff]
  %v294 = vld [vmem:[%s1 + $0x7e8] sm:$0xff]
  %v295 = vld [vmem:[%s1 + $0x7f0] sm:$0xff]
  %v296 = vld [vmem:[%s1 + $0x7f8] sm:$0xff]
  %v297 = vld [vmem:[%s1 + $0x800] sm:$0xff]
  %v298 = vld [vmem:[%s1 + $0x808] sm:$0xff]
  %v299 = vld [vmem:[%s1 + $0x810] sm:$0xff]
  %v300 = vld [vmem:[%s1 + $0x818] sm:$0xff]
  %v301 = vld [vmem:[%s1 + $0x820] sm:$0xff]
  %v302 = vld [vmem:[%s1 + $0x828] sm:$0xff]
  %v303 = vld [vmem:[%s1 + $0x830] sm:$0xff]
  %v304 = vld [vmem:[%s1 + $0x838] sm:$0xff]
  %v305 = vld [vmem:[%s1 + $0x840] sm:$0xff]
  %v306 = vld [vmem:[%s1 + $0x848] sm:$0xff]
  %v307 = vld [vmem:[%s1 + $0x850] sm:$0xff]
  %v308 = vld [vmem:[%s1 + $0x858] sm:$0xff]
  %v309 = vld [vmem:[%s1 + $0x860] sm:$0xff]
  %v310 = vld [vmem:[%s1 + $0x868] sm:$0xff]
  %v311 = vld [vmem:[%s1 + $0x870] sm:$0xff]
  %v312 = vld [vmem:[%s1 + $0x878] sm:$0xff]
  %v313 = vld [vmem:[%s1 + $0x880] sm:$0xff]
  %v314 = vld [vmem:[%s1 + $0x888] sm:$0xff]
  %v315 = vld [vmem:[%s1 + $0x890] sm:$0xff]
  %v316 = vld [vmem:[%s1 + $0x898] sm:$0xff]
  %v317 = vld [vmem:[%s1 + $0x8a0] sm:$0xff]
  %v318 = vld [vmem:[%s1 + $0x8a8] sm:$0xff]
  %v319 = vld [vmem:[%s1 + $0x8b0] sm:$0xff]
  %v320 = vld [vmem:[%s1 + $0x8b8] sm:$0xff]
  %v321 = vld [vmem:[%s1 + $0x8c0] sm:$0xff]
  %v322 = vld [vmem:[%s1 + $0x8c8] sm:$0xff]
  %v323 = vld [vmem:[%s1 + $0x8d0] sm:$0xff]
  %v324 = vld [vmem:[%s1 + $0x8d8] sm:$0xff]
  %v325 = vld [vmem:[%s1 + $0x8e0] sm:$0xff]
  %v326 = vld [vmem:[%s1 + $0x8e8] sm:$0xff]
  %v327 = vld [vmem:[%s1 + $0x8f0] sm:$0xff]
  %v328 = vld [vmem:[%s1 + $0x8f8] sm:$0xff]
  %v329 = vld [vmem:[%s1 + $0x900] sm:$0xff]
  %v330 = vld [vmem:[%s1 + $0x908] sm:$0xff]
  %v331 = vld [vmem:[%s1 + $0x910] sm:$0xff]
  %v332 = vld [vmem:[%s1 + $0x918] sm:$0xff]
  %v333 = vld [vmem:[%s1 + $0x920] sm:$0xff]
  %v334 = vld [vmem:[%s1 + $0x928] sm:$0xff]
  %v335 = vld [vmem:[%s1 + $0x930] sm:$0xff]
  %v336 = vld [vmem:[%s1 + $0x938] sm:$0xff]
  %v337 = vld [vmem:[%s1 + $0x940] sm:$0xff]
  %v338 = vld [vmem:[%s1 + $0x948] sm:$0xff]
  %v339 = vld [vmem:[%s1 + $0x950] sm:$0xff]
  %v340 = vld [vmem:[%s1 + $0x958] sm:$0xff]
  %v341 = vld [vmem:[%s1 + $0x960] sm:$0xff]
  %v342 = vld [vmem:[%s1 + $0x968] sm:$0xff]
  %v343 = vld [vmem:[%s1 + $0x970] sm:$0xff]
  %v344 = vld [vmem:[%s1 + $0x978] sm:$0xff]
  %v345 = vld [vmem:[%s1 + $0x980] sm:$0xff]
  %v346 = vld [vmem:[%s1 + $0x988] sm:$0xff]
  %v347 = vld [vmem:[%s1 + $0x990] sm:$0xff]
  %v348 = vld [vmem:[%s1 + $0x998] sm:$0xff]
  %v349 = vld [vmem:[%s1 + $0x9a0] sm:$0xff]
  %v350 = vld [vmem:[%s1 + $0x9a8] sm:$0xff]
  %v351 = vld [vmem:[%s1 + $0x9b0] sm:$0xff]
  %v352 = vld [vmem:[%s1 + $0x9b8] sm:$0xff]
  %v353 = vld [vmem:[%s1 + $0x9c0] sm:$0xff]
  %v354 = vld [vmem:[%s1 + $0x9c8] sm:$0xff]
  %v355 = vld [vmem:[%s1 + $0x9d0] sm:$0xff]
  %v356 = vld [vmem:[%s1 + $0x9d8] sm:$0xff]
  %v357 = vld [vmem:[%s1 + $0x9e0] sm:$0xff]
  %v358 = vld [vmem:[%s1 + $0x9e8] sm:$0xff]
  %v359 = vld [vmem:[%s1 + $0x9f0] sm:$0xff]
  %v360 = vld [vmem:[%s1 + $0x9f8] sm:$0xff]
  %v361 = vld [vmem:[%s1 + $0xa00] sm:$0xff]
  %v362 = vld [vmem:[%s1 + $0xa08] sm:$0xff]
  %v363 = vld [vmem:[%s1 + $0xa10] sm:$0xff]
  %v364 = vld [vmem:[%s1 + $0xa18] sm:$0xff]
  %v365 = vld [vmem:[%s1 + $0xa20] sm:$0xff]
  %v366 = vld [vmem:[%s1 + $0xa28] sm:$0xff]
  %v367 = vld [vmem:[%s1 + $0xa30] sm:$0xff]
  %v368 = vld [vmem:[%s1 + $0xa38] sm:$0xff]
  %v369 = vld [vmem:[%s1 + $0xa40] sm:$0xff]
  %v370 = vld [vmem:[%s1 + $0xa48] sm:$0xff]
  %v371 = vld [vmem:[%s1 + $0xa50] sm:$0xff]
  %v372 = vld [vmem:[%s1 + $0xa58] sm:$0xff]
  %v373 = vld [vmem:[%s1 + $0xa60] sm:$0xff]
  %v374 = vld [vmem:[%s1 + $0xa68] sm:$0xff]
  %v375 = vld [vmem:[%s1 + $0xa70] sm:$0xff]
  %v376 = vld [vmem:[%s1 + $0xa78] sm:$0xff]
  %v377 = vld [vmem:[%s1 + $0xa80] sm:$0xff]
  %v378 = vld [vmem:[%s1 + $0xa88] sm:$0xff]
  %v379 = vld [vmem:[%s1 + $0xa90] sm:$0xff]
  %v380 = vld [vmem:[%s1 + $0xa98] sm:$0xff]
  %v381 = vld [vmem:[%s1 + $0xaa0] sm:$0xff]
  %v382 = vld [vmem:[%s1 + $0xaa8] sm:$0xff]
  %v383 = vld [vmem:[%s1 + $0xab0] sm:$0xff]
  %v384 = vld [vmem:[%s1 + $0xab8] sm:$0xff]
  %v385 = vld [vmem:[%s1 + $0xac0] sm:$0xff]
  %v386 = vld [vmem:[%s1 + $0xac8] sm:$0xff]
  %v387 = vld [vmem:[%s1 + $0xad0] sm:$0xff]
  %v388 = vld [vmem:[%s1 + $0xad8] sm:$0xff]
  %v389 = vld [vmem:[%s1 + $0xae0] sm:$0xff]
  %v390 = vld [vmem:[%s1 + $0xae8] sm:$0xff]
  %v391 = vld [vmem:[%s1 + $0xaf0] sm:$0xff]
  %v392 = vld [vmem:[%s1 + $0xaf8] sm:$0xff]
  %v393 = vld [vmem:[%s1 + $0xb00] sm:$0xff]
  %v394 = vld [vmem:[%s1 + $0xb08] sm:$0xff]
  %v395 = vld [vmem:[%s1 + $0xb10] sm:$0xff]
  %v396 = vld [vmem:[%s1 + $0xb18] sm:$0xff]
  %v397 = vld [vmem:[%s1 + $0xb20] sm:$0xff]
  %v398 = vld [vmem:[%s1 + $0xb28] sm:$0xff]
  %v399 = vld [vmem:[%s1 + $0xb30] sm:$0xff]
  %v400 = vld [vmem:[%s1 + $0xb38] sm:$0xff]
  %v401 = vld [vmem:[%s1 + $0xb40] sm:$0xff]
  %v402 = vld [vmem:[%s1 + $0xb48] sm:$0xff]
  %v403 = vld [vmem:[%s1 + $0xb50] sm:$0xff]
  %v404 = vld [vmem:[%s1 + $0xb58] sm:$0xff]
  %v405 = vld [vmem:[%s1 + $0xb60] sm:$0xff]
  %v406 = vld [vmem:[%s1 + $0xb68] sm:$0xff]
  %v407 = vld [vmem:[%s1 + $0xb70] sm:$0xff]
  %v408 = vld [vmem:[%s1 + $0xb78] sm:$0xff]
  %v409 = vld [vmem:[%s1 + $0xb80] sm:$0xff]
  %v410 = vld [vmem:[%s1 + $0xb88] sm:$0xff]
  %v411 = vld [vmem:[%s1 + $0xb90] sm:$0xff]
  %v412 = vld [vmem:[%s1 + $0xb98] sm:$0xff]
  %v413 = vld [vmem:[%s1 + $0xba0] sm:$0xff]
  %v414 = vld [vmem:[%s1 + $0xba8] sm:$0xff]
  %v415 = vld [vmem:[%s1 + $0xbb0] sm:$0xff]
  %v416 = vld [vmem:[%s1 + $0xbb8] sm:$0xff]
  %v417 = vld [vmem:[%s1 + $0xbc0] sm:$0xff]
  %v418 = vld [vmem:[%s1 + $0xbc8] sm:$0xff]
  %v419 = vld [vmem:[%s1 + $0xbd0] sm:$0xff]
  %v420 = vld [vmem:[%s1 + $0xbd8] sm:$0xff]
  %v421 = vld [vmem:[%s1 + $0xbe0] sm:$0xff]
  %v422 = vld [vmem:[%s1 + $0xbe8] sm:$0xff]
  %v423 = vld [vmem:[%s1 + $0xbf0] sm:$0xff]
  %v424 = vld [vmem:[%s1 + $0xbf8] sm:$0xff]
  %v425 = vld [vmem:[%s1 + $0xc00] sm:$0xff]
  %v426 = vld [vmem:[%s1 + $0xc08] sm:$0xff]
  %v427 = vld [vmem:[%s1 + $0xc10] sm:$0xff]
  %v428 = vld [vmem:[%s1 + $0xc18] sm:$0xff]
  %v429 = vld [vmem:[%s1 + $0xc20] sm:$0xff]
  %v430 = vld [vmem:[%s1 + $0xc28] sm:$0xff]
  %v431 = vld [vmem:[%s1 + $0xc30] sm:$0xff]
  %v432 = vld [vmem:[%s1 + $0xc38] sm:$0xff]
  %v433 = vld [vmem:[%s1 + $0xc40] sm:$0xff]
  %v434 = vld [vmem:[%s1 + $0xc48] sm:$0xff]
  %v435 = vld [vmem:[%s1 + $0xc50] sm:$0xff]
  %v436 = vld [vmem:[%s1 + $0xc58] sm:$0xff]
  %v437 = vld [vmem:[%s1 + $0xc60] sm:$0xff]
  %v438 = vld [vmem:[%s1 + $0xc68] sm:$0xff]
  %v439 = vld [vmem:[%s1 + $0xc70] sm:$0xff]
  %v440 = vld [vmem:[%s1 + $0xc78] sm:$0xff]
  %v441 = vld [vmem:[%s2] sm:$0x3]
  %v443 = vperm.slane %v441, 0
  %v444 = vperm.slane %v441, 1
  %448 = vst [vmem:[#allocation1] ss:$4 sm:$0xff] %v34
  %s450 = scalar_lea.vmem [#allocation1], 32
  %451 = vst [vmem:[%s450] ss:$4 sm:$0xff] %v35
  %v452 = vld.sshfl [vmem:[#allocation1] sm:$0xff pattern:$0x73625140]
  %v453 = vld.sshfl [vmem:[#allocation1 + $0x8] sm:$0xff pattern:$0x73625140]
  %v454 = vld.sshfl [vmem:[#allocation1 + $0x10] sm:$0xff pattern:$0x73625140]
  %v455 = vld.sshfl [vmem:[#allocation1 + $0x18] sm:$0xff pattern:$0x73625140]
  %v456 = vld.sshfl [vmem:[#allocation1 + $0x20] sm:$0xff pattern:$0x73625140]
  %v457 = vld.sshfl [vmem:[#allocation1 + $0x28] sm:$0xff pattern:$0x73625140]
  %v458 = vld.sshfl [vmem:[#allocation1 + $0x30] sm:$0xff pattern:$0x73625140]
  %v459 = vld.sshfl [vmem:[#allocation1 + $0x38] sm:$0xff pattern:$0x73625140]
  %461 = vst [vmem:[#allocation1] ss:$4 sm:$0xff] %v36
  %463 = vst [vmem:[%s450] ss:$4 sm:$0xff] %v37
  %v464 = vld.sshfl [vmem:[#allocation1] sm:$0xff pattern:$0x73625140]
  %v465 = vld.sshfl [vmem:[#allocation1 + $0x8] sm:$0xff pattern:$0x73625140]
  %v466 = vld.sshfl [vmem:[#allocation1 + $0x10] sm:$0xff pattern:$0x73625140]
  %v467 = vld.sshfl [vmem:[#allocation1 + $0x18] sm:$0xff pattern:$0x73625140]
  %v468 = vld.sshfl [vmem:[#allocation1 + $0x20] sm:$0xff pattern:$0x73625140]
  %v469 = vld.sshfl [vmem:[#allocation1 + $0x28] sm:$0xff pattern:$0x73625140]
  %v470 = vld.sshfl [vmem:[#allocation1 + $0x30] sm:$0xff pattern:$0x73625140]
  %v471 = vld.sshfl [vmem:[#allocation1 + $0x38] sm:$0xff pattern:$0x73625140]
  %473 = vst [vmem:[#allocation1] ss:$4 sm:$0xff] %v38
  %475 = vst [vmem:[%s450] ss:$4 sm:$0xff] %v39
  %v476 = vld.sshfl [vmem:[#allocation1] sm:$0xff pattern:$0x73625140]
  %v477 = vld.sshfl [vmem:[#allocation1 + $0x8] sm:$0xff pattern:$0x73625140]
  %v478 = vld.sshfl [vmem:[#allocation1 + $0x10] sm:$0xff pattern:$0x73625140]
  %v479 = vld.sshfl [vmem:[#allocation1 + $0x18] sm:$0xff pattern:$0x73625140]
  %v480 = vld.sshfl [vmem:[#allocation1 + $0x20] sm:$0xff pattern:$0x73625140]
  %v481 = vld.sshfl [vmem:[#allocation1 + $0x28] sm:$0xff pattern:$0x73625140]
  %v482 = vld.sshfl [vmem:[#allocation1 + $0x30] sm:$0xff pattern:$0x73625140]
  %v483 = vld.sshfl [vmem:[#allocation1 + $0x38] sm:$0xff pattern:$0x73625140]
  %485 = vst [vmem:[#allocation1] ss:$4 sm:$0xff] %v40
  %v486 = vld.sshfl [vmem:[#allocation1] sm:$0xff pattern:$0x73625140]
  %v912 = vunpack.c.l.b16 %v41
  %v913 = vunpack.c.h.b16 %v41
  %v914 = vunpack.c.l.b16 %v42
  %v915 = vunpack.c.h.b16 %v42
  %v916 = vunpack.c.l.b16 %v43
  %v917 = vunpack.c.h.b16 %v43
  %v918 = vunpack.c.l.b16 %v44
  %v919 = vunpack.c.h.b16 %v44
  %v920 = vunpack.c.l.b16 %v45
  %v921 = vunpack.c.h.b16 %v45
  %v922 = vunpack.c.l.b16 %v46
  %v923 = vunpack.c.h.b16 %v46
  %v924 = vunpack.c.l.b16 %v47
  %v925 = vunpack.c.h.b16 %v47
  %v926 = vunpack.c.l.b16 %v48
  %v927 = vunpack.c.h.b16 %v48
  %v928 = vunpack.c.l.b16 %v49
  %v929 = vunpack.c.h.b16 %v49
  %v930 = vunpack.c.l.b16 %v50
  %v931 = vunpack.c.h.b16 %v50
  %v932 = vunpack.c.l.b16 %v51
  %v933 = vunpack.c.h.b16 %v51
  %v934 = vunpack.c.l.b16 %v52
  %v935 = vunpack.c.h.b16 %v52
  %v936 = vunpack.c.l.b16 %v53
  %v937 = vunpack.c.h.b16 %v53
  %v938 = vunpack.c.l.b16 %v54
  %v939 = vunpack.c.h.b16 %v54
  %v940 = vunpack.c.l.b16 %v55
  %v941 = vunpack.c.h.b16 %v55
  %v942 = vunpack.c.l.b16 %v56
  %v943 = vunpack.c.h.b16 %v56
  %v944 = vunpack.c.l.b16 %v57
  %v945 = vunpack.c.h.b16 %v57
  %v946 = vunpack.c.l.b16 %v58
  %v947 = vunpack.c.h.b16 %v58
  %v948 = vunpack.c.l.b16 %v59
  %v949 = vunpack.c.h.b16 %v59
  %v950 = vunpack.c.l.b16 %v60
  %v951 = vunpack.c.h.b16 %v60
  %v952 = vunpack.c.l.b16 %v61
  %v953 = vunpack.c.h.b16 %v61
  %v954 = vunpack.c.l.b16 %v62
  %v955 = vunpack.c.h.b16 %v62
  %v956 = vunpack.c.l.b16 %v63
  %v957 = vunpack.c.h.b16 %v63
  %v958 = vunpack.c.l.b16 %v64
  %v959 = vunpack.c.h.b16 %v64
  %v960 = vunpack.c.l.b16 %v65
  %v961 = vunpack.c.h.b16 %v65
  %v962 = vunpack.c.l.b16 %v66
  %v963 = vunpack.c.h.b16 %v66
  %v964 = vunpack.c.l.b16 %v67
  %v965 = vunpack.c.h.b16 %v67
  %v966 = vunpack.c.l.b16 %v68
  %v967 = vunpack.c.h.b16 %v68
  %v968 = vunpack.c.l.b16 %v69
  %v969 = vunpack.c.h.b16 %v69
  %v970 = vunpack.c.l.b16 %v70
  %v971 = vunpack.c.h.b16 %v70
  %v972 = vunpack.c.l.b16 %v71
  %v973 = vunpack.c.h.b16 %v71
  %v974 = vunpack.c.l.b16 %v72
  %v975 = vunpack.c.h.b16 %v72
  %v976 = vunpack.c.l.b16 %v73
  %v977 = vunpack.c.h.b16 %v73
  %v978 = vunpack.c.l.b16 %v74
  %v979 = vunpack.c.h.b16 %v74
  %v980 = vunpack.c.l.b16 %v75
  %v981 = vunpack.c.h.b16 %v75
  %v982 = vunpack.c.l.b16 %v76
  %v983 = vunpack.c.h.b16 %v76
  %v984 = vunpack.c.l.b16 %v77
  %v985 = vunpack.c.h.b16 %v77
  %v986 = vunpack.c.l.b16 %v78
  %v987 = vunpack.c.h.b16 %v78
  %v988 = vunpack.c.l.b16 %v79
  %v989 = vunpack.c.h.b16 %v79
  %v990 = vunpack.c.l.b16 %v80
  %v991 = vunpack.c.h.b16 %v80
  %v992 = vunpack.c.l.b16 %v81
  %v993 = vunpack.c.h.b16 %v81
  %v994 = vunpack.c.l.b16 %v82
  %v995 = vunpack.c.h.b16 %v82
  %v996 = vunpack.c.l.b16 %v83
  %v997 = vunpack.c.h.b16 %v83
  %v998 = vunpack.c.l.b16 %v84
  %v999 = vunpack.c.h.b16 %v84
  %v1000 = vunpack.c.l.b16 %v85
  %v1001 = vunpack.c.h.b16 %v85
  %v1002 = vunpack.c.l.b16 %v86
  %v1003 = vunpack.c.h.b16 %v86
  %v1004 = vunpack.c.l.b16 %v87
  %v1005 = vunpack.c.h.b16 %v87
  %v1006 = vunpack.c.l.b16 %v88
  %v1007 = vunpack.c.h.b16 %v88
  %v1008 = vunpack.c.l.b16 %v89
  %v1009 = vunpack.c.h.b16 %v89
  %v1010 = vunpack.c.l.b16 %v90
  %v1011 = vunpack.c.h.b16 %v90
  %v1012 = vunpack.c.l.b16 %v91
  %v1013 = vunpack.c.h.b16 %v91
  %v1014 = vunpack.c.l.b16 %v92
  %v1015 = vunpack.c.h.b16 %v92
  %v1016 = vunpack.c.l.b16 %v93
  %v1017 = vunpack.c.h.b16 %v93
  %v1018 = vunpack.c.l.b16 %v94
  %v1019 = vunpack.c.h.b16 %v94
  %v1020 = vunpack.c.l.b16 %v95
  %v1021 = vunpack.c.h.b16 %v95
  %v1022 = vunpack.c.l.b16 %v96
  %v1023 = vunpack.c.h.b16 %v96
  %v1024 = vunpack.c.l.b16 %v97
  %v1025 = vunpack.c.h.b16 %v97
  %v1026 = vunpack.c.l.b16 %v98
  %v1027 = vunpack.c.h.b16 %v98
  %v1028 = vunpack.c.l.b16 %v99
  %v1029 = vunpack.c.h.b16 %v99
  %v1030 = vunpack.c.l.b16 %v100
  %v1031 = vunpack.c.h.b16 %v100
  %v1032 = vunpack.c.l.b16 %v101
  %v1033 = vunpack.c.h.b16 %v101
  %v1034 = vunpack.c.l.b16 %v102
  %v1035 = vunpack.c.h.b16 %v102
  %v1036 = vunpack.c.l.b16 %v103
  %v1037 = vunpack.c.h.b16 %v103
  %v1038 = vunpack.c.l.b16 %v104
  %v1039 = vunpack.c.h.b16 %v104
  %v1040 = vunpack.c.l.b16 %v105
  %v1041 = vunpack.c.h.b16 %v105
  %v1042 = vunpack.c.l.b16 %v106
  %v1043 = vunpack.c.h.b16 %v106
  %v1044 = vunpack.c.l.b16 %v107
  %v1045 = vunpack.c.h.b16 %v107
  %v1046 = vunpack.c.l.b16 %v108
  %v1047 = vunpack.c.h.b16 %v108
  %v1048 = vunpack.c.l.b16 %v109
  %v1049 = vunpack.c.h.b16 %v109
  %v1050 = vunpack.c.l.b16 %v110
  %v1051 = vunpack.c.h.b16 %v110
  %v1052 = vunpack.c.l.b16 %v111
  %v1053 = vunpack.c.h.b16 %v111
  %v1054 = vunpack.c.l.b16 %v112
  %v1055 = vunpack.c.h.b16 %v112
  %v1056 = vunpack.c.l.b16 %v113
  %v1057 = vunpack.c.h.b16 %v113
  %v1058 = vunpack.c.l.b16 %v114
  %v1059 = vunpack.c.h.b16 %v114
  %v1060 = vunpack.c.l.b16 %v115
  %v1061 = vunpack.c.h.b16 %v115
  %v1062 = vunpack.c.l.b16 %v116
  %v1063 = vunpack.c.h.b16 %v116
  %v1064 = vunpack.c.l.b16 %v117
  %v1065 = vunpack.c.h.b16 %v117
  %v1066 = vunpack.c.l.b16 %v118
  %v1067 = vunpack.c.h.b16 %v118
  %v1068 = vunpack.c.l.b16 %v119
  %v1069 = vunpack.c.h.b16 %v119
  %v1070 = vunpack.c.l.b16 %v120
  %v1071 = vunpack.c.h.b16 %v120
  %v1072 = vunpack.c.l.b16 %v121
  %v1073 = vunpack.c.h.b16 %v121
  %v1074 = vunpack.c.l.b16 %v122
  %v1075 = vunpack.c.h.b16 %v122
  %v1076 = vunpack.c.l.b16 %v123
  %v1077 = vunpack.c.h.b16 %v123
  %v1078 = vunpack.c.l.b16 %v124
  %v1079 = vunpack.c.h.b16 %v124
  %v1080 = vunpack.c.l.b16 %v125
  %v1081 = vunpack.c.h.b16 %v125
  %v1082 = vunpack.c.l.b16 %v126
  %v1083 = vunpack.c.h.b16 %v126
  %v1084 = vunpack.c.l.b16 %v127
  %v1085 = vunpack.c.h.b16 %v127
  %v1086 = vunpack.c.l.b16 %v128
  %v1087 = vunpack.c.h.b16 %v128
  %v1088 = vunpack.c.l.b16 %v129
  %v1089 = vunpack.c.h.b16 %v129
  %v1090 = vunpack.c.l.b16 %v130
  %v1091 = vunpack.c.h.b16 %v130
  %v1092 = vunpack.c.l.b16 %v131
  %v1093 = vunpack.c.h.b16 %v131
  %v1094 = vunpack.c.l.b16 %v132
  %v1095 = vunpack.c.h.b16 %v132
  %v1096 = vunpack.c.l.b16 %v133
  %v1097 = vunpack.c.h.b16 %v133
  %v1098 = vunpack.c.l.b16 %v134
  %v1099 = vunpack.c.h.b16 %v134
  %v1100 = vunpack.c.l.b16 %v135
  %v1101 = vunpack.c.h.b16 %v135
  %v1102 = vunpack.c.l.b16 %v136
  %v1103 = vunpack.c.h.b16 %v136
  %v1104 = vunpack.c.l.b16 %v137
  %v1105 = vunpack.c.h.b16 %v137
  %v1106 = vunpack.c.l.b16 %v138
  %v1107 = vunpack.c.h.b16 %v138
  %v1108 = vunpack.c.l.b16 %v139
  %v1109 = vunpack.c.h.b16 %v139
  %v1110 = vunpack.c.l.b16 %v140
  %v1111 = vunpack.c.h.b16 %v140
  %v1112 = vunpack.c.l.b16 %v141
  %v1113 = vunpack.c.h.b16 %v141
  %v1114 = vunpack.c.l.b16 %v142
  %v1115 = vunpack.c.h.b16 %v142
  %v1116 = vunpack.c.l.b16 %v143
  %v1117 = vunpack.c.h.b16 %v143
  %v1118 = vunpack.c.l.b16 %v144
  %v1119 = vunpack.c.h.b16 %v144
  %v1120 = vunpack.c.l.b16 %v145
  %v1121 = vunpack.c.h.b16 %v145
  %v1122 = vunpack.c.l.b16 %v146
  %v1123 = vunpack.c.h.b16 %v146
  %v1124 = vunpack.c.l.b16 %v147
  %v1125 = vunpack.c.h.b16 %v147
  %v1126 = vunpack.c.l.b16 %v148
  %v1127 = vunpack.c.h.b16 %v148
  %v1128 = vunpack.c.l.b16 %v149
  %v1129 = vunpack.c.h.b16 %v149
  %v1130 = vunpack.c.l.b16 %v150
  %v1131 = vunpack.c.h.b16 %v150
  %v1132 = vunpack.c.l.b16 %v151
  %v1133 = vunpack.c.h.b16 %v151
  %v1134 = vunpack.c.l.b16 %v152
  %v1135 = vunpack.c.h.b16 %v152
  %v1136 = vunpack.c.l.b16 %v153
  %v1137 = vunpack.c.h.b16 %v153
  %v1138 = vunpack.c.l.b16 %v154
  %v1139 = vunpack.c.h.b16 %v154
  %v1140 = vunpack.c.l.b16 %v155
  %v1141 = vunpack.c.h.b16 %v155
  %v1142 = vunpack.c.l.b16 %v156
  %v1143 = vunpack.c.h.b16 %v156
  %v1144 = vunpack.c.l.b16 %v157
  %v1145 = vunpack.c.h.b16 %v157
  %v1146 = vunpack.c.l.b16 %v158
  %v1147 = vunpack.c.h.b16 %v158
  %v1148 = vunpack.c.l.b16 %v159
  %v1149 = vunpack.c.h.b16 %v159
  %v1150 = vunpack.c.l.b16 %v160
  %v1151 = vunpack.c.h.b16 %v160
  %v1152 = vunpack.c.l.b16 %v161
  %v1153 = vunpack.c.h.b16 %v161
  %v1154 = vunpack.c.l.b16 %v162
  %v1155 = vunpack.c.h.b16 %v162
  %v1156 = vunpack.c.l.b16 %v163
  %v1157 = vunpack.c.h.b16 %v163
  %v1158 = vunpack.c.l.b16 %v164
  %v1159 = vunpack.c.h.b16 %v164
  %v1160 = vunpack.c.l.b16 %v165
  %v1161 = vunpack.c.h.b16 %v165
  %v1162 = vunpack.c.l.b16 %v166
  %v1163 = vunpack.c.h.b16 %v166
  %v1164 = vunpack.c.l.b16 %v167
  %v1165 = vunpack.c.h.b16 %v167
  %v1166 = vunpack.c.l.b16 %v168
  %v1167 = vunpack.c.h.b16 %v168
  %v1168 = vunpack.c.l.b16 %v169
  %v1169 = vunpack.c.h.b16 %v169
  %v1170 = vunpack.c.l.b16 %v170
  %v1171 = vunpack.c.h.b16 %v170
  %v1172 = vunpack.c.l.b16 %v171
  %v1173 = vunpack.c.h.b16 %v171
  %v1174 = vunpack.c.l.b16 %v172
  %v1175 = vunpack.c.h.b16 %v172
  %v1176 = vunpack.c.l.b16 %v173
  %v1177 = vunpack.c.h.b16 %v173
  %v1178 = vunpack.c.l.b16 %v174
  %v1179 = vunpack.c.h.b16 %v174
  %v1180 = vunpack.c.l.b16 %v175
  %v1181 = vunpack.c.h.b16 %v175
  %v1182 = vunpack.c.l.b16 %v176
  %v1183 = vunpack.c.h.b16 %v176
  %v1184 = vunpack.c.l.b16 %v177
  %v1185 = vunpack.c.h.b16 %v177
  %v1186 = vunpack.c.l.b16 %v178
  %v1187 = vunpack.c.h.b16 %v178
  %v1188 = vunpack.c.l.b16 %v179
  %v1189 = vunpack.c.h.b16 %v179
  %v1190 = vunpack.c.l.b16 %v180
  %v1191 = vunpack.c.h.b16 %v180
  %v1192 = vunpack.c.l.b16 %v181
  %v1193 = vunpack.c.h.b16 %v181
  %v1194 = vunpack.c.l.b16 %v182
  %v1195 = vunpack.c.h.b16 %v182
  %v1196 = vunpack.c.l.b16 %v183
  %v1197 = vunpack.c.h.b16 %v183
  %v1198 = vunpack.c.l.b16 %v184
  %v1199 = vunpack.c.h.b16 %v184
  %v1200 = vunpack.c.l.b16 %v185
  %v1201 = vunpack.c.h.b16 %v185
  %v1202 = vunpack.c.l.b16 %v186
  %v1203 = vunpack.c.h.b16 %v186
  %v1204 = vunpack.c.l.b16 %v187
  %v1205 = vunpack.c.h.b16 %v187
  %v1206 = vunpack.c.l.b16 %v188
  %v1207 = vunpack.c.h.b16 %v188
  %v1208 = vunpack.c.l.b16 %v189
  %v1209 = vunpack.c.h.b16 %v189
  %v1210 = vunpack.c.l.b16 %v190
  %v1211 = vunpack.c.h.b16 %v190
  %v1212 = vunpack.c.l.b16 %v191
  %v1213 = vunpack.c.h.b16 %v191
  %v1214 = vunpack.c.l.b16 %v192
  %v1215 = vunpack.c.h.b16 %v192
  %v1216 = vunpack.c.l.b16 %v193
  %v1217 = vunpack.c.h.b16 %v193
  %v1218 = vunpack.c.l.b16 %v194
  %v1219 = vunpack.c.h.b16 %v194
  %v1220 = vunpack.c.l.b16 %v195
  %v1221 = vunpack.c.h.b16 %v195
  %v1222 = vunpack.c.l.b16 %v196
  %v1223 = vunpack.c.h.b16 %v196
  %v1224 = vunpack.c.l.b16 %v197
  %v1225 = vunpack.c.h.b16 %v197
  %v1226 = vunpack.c.l.b16 %v198
  %v1227 = vunpack.c.h.b16 %v198
  %v1228 = vunpack.c.l.b16 %v199
  %v1229 = vunpack.c.h.b16 %v199
  %v1230 = vunpack.c.l.b16 %v200
  %v1231 = vunpack.c.h.b16 %v200
  %v1232 = vunpack.c.l.b16 %v201
  %v1233 = vunpack.c.h.b16 %v201
  %v1234 = vunpack.c.l.b16 %v202
  %v1235 = vunpack.c.h.b16 %v202
  %v1236 = vunpack.c.l.b16 %v203
  %v1237 = vunpack.c.h.b16 %v203
  %v1238 = vunpack.c.l.b16 %v204
  %v1239 = vunpack.c.h.b16 %v204
  %v1240 = vunpack.c.l.b16 %v205
  %v1241 = vunpack.c.h.b16 %v205
  %v1242 = vunpack.c.l.b16 %v206
  %v1243 = vunpack.c.h.b16 %v206
  %v1244 = vunpack.c.l.b16 %v207
  %v1245 = vunpack.c.h.b16 %v207
  %v1246 = vunpack.c.l.b16 %v208
  %v1247 = vunpack.c.h.b16 %v208
  %v1248 = vunpack.c.l.b16 %v209
  %v1249 = vunpack.c.h.b16 %v209
  %v1250 = vunpack.c.l.b16 %v210
  %v1251 = vunpack.c.h.b16 %v210
  %v1252 = vunpack.c.l.b16 %v211
  %v1253 = vunpack.c.h.b16 %v211
  %v1254 = vunpack.c.l.b16 %v212
  %v1255 = vunpack.c.h.b16 %v212
  %v1256 = vunpack.c.l.b16 %v213
  %v1257 = vunpack.c.h.b16 %v213
  %v1258 = vunpack.c.l.b16 %v214
  %v1259 = vunpack.c.h.b16 %v214
  %v1260 = vunpack.c.l.b16 %v215
  %v1261 = vunpack.c.h.b16 %v215
  %v1262 = vunpack.c.l.b16 %v216
  %v1263 = vunpack.c.h.b16 %v216
  %v1264 = vunpack.c.l.b16 %v217
  %v1265 = vunpack.c.h.b16 %v217
  %v1266 = vunpack.c.l.b16 %v218
  %v1267 = vunpack.c.h.b16 %v218
  %v1268 = vunpack.c.l.b16 %v219
  %v1269 = vunpack.c.h.b16 %v219
  %v1270 = vunpack.c.l.b16 %v220
  %v1271 = vunpack.c.h.b16 %v220
  %v1272 = vunpack.c.l.b16 %v221
  %v1273 = vunpack.c.h.b16 %v221
  %v1274 = vunpack.c.l.b16 %v222
  %v1275 = vunpack.c.h.b16 %v222
  %v1276 = vunpack.c.l.b16 %v223
  %v1277 = vunpack.c.h.b16 %v223
  %v1278 = vunpack.c.l.b16 %v224
  %v1279 = vunpack.c.h.b16 %v224
  %v1280 = vunpack.c.l.b16 %v225
  %v1281 = vunpack.c.h.b16 %v225
  %v1282 = vunpack.c.l.b16 %v226
  %v1283 = vunpack.c.h.b16 %v226
  %v1284 = vunpack.c.l.b16 %v227
  %v1285 = vunpack.c.h.b16 %v227
  %v1286 = vunpack.c.l.b16 %v228
  %v1287 = vunpack.c.h.b16 %v228
  %v1288 = vunpack.c.l.b16 %v229
  %v1289 = vunpack.c.h.b16 %v229
  %v1290 = vunpack.c.l.b16 %v230
  %v1291 = vunpack.c.h.b16 %v230
  %v1292 = vunpack.c.l.b16 %v231
  %v1293 = vunpack.c.h.b16 %v231
  %v1294 = vunpack.c.l.b16 %v232
  %v1295 = vunpack.c.h.b16 %v232
  %v1296 = vunpack.c.l.b16 %v233
  %v1297 = vunpack.c.h.b16 %v233
  %v1298 = vunpack.c.l.b16 %v234
  %v1299 = vunpack.c.h.b16 %v234
  %v1300 = vunpack.c.l.b16 %v235
  %v1301 = vunpack.c.h.b16 %v235
  %v1302 = vunpack.c.l.b16 %v236
  %v1303 = vunpack.c.h.b16 %v236
  %v1304 = vunpack.c.l.b16 %v237
  %v1305 = vunpack.c.h.b16 %v237
  %v1306 = vunpack.c.l.b16 %v238
  %v1307 = vunpack.c.h.b16 %v238
  %v1308 = vunpack.c.l.b16 %v239
  %v1309 = vunpack.c.h.b16 %v239
  %v1310 = vunpack.c.l.b16 %v240
  %v1311 = vunpack.c.h.b16 %v240
  %v1312 = vunpack.c.l.b16 %v241
  %v1313 = vunpack.c.h.b16 %v241
  %v1314 = vunpack.c.l.b16 %v242
  %v1315 = vunpack.c.h.b16 %v242
  %v1316 = vunpack.c.l.b16 %v243
  %v1317 = vunpack.c.h.b16 %v243
  %v1318 = vunpack.c.l.b16 %v244
  %v1319 = vunpack.c.h.b16 %v244
  %v1320 = vunpack.c.l.b16 %v245
  %v1321 = vunpack.c.h.b16 %v245
  %v1322 = vunpack.c.l.b16 %v246
  %v1323 = vunpack.c.h.b16 %v246
  %v1324 = vunpack.c.l.b16 %v247
  %v1325 = vunpack.c.h.b16 %v247
  %v1326 = vunpack.c.l.b16 %v248
  %v1327 = vunpack.c.h.b16 %v248
  %v1328 = vunpack.c.l.b16 %v249
  %v1329 = vunpack.c.h.b16 %v249
  %v1330 = vunpack.c.l.b16 %v250
  %v1331 = vunpack.c.h.b16 %v250
  %v1332 = vunpack.c.l.b16 %v251
  %v1333 = vunpack.c.h.b16 %v251
  %v1334 = vunpack.c.l.b16 %v252
  %v1335 = vunpack.c.h.b16 %v252
  %v1336 = vunpack.c.l.b16 %v253
  %v1337 = vunpack.c.h.b16 %v253
  %v1338 = vunpack.c.l.b16 %v254
  %v1339 = vunpack.c.h.b16 %v254
  %v1340 = vunpack.c.l.b16 %v255
  %v1341 = vunpack.c.h.b16 %v255
  %v1342 = vunpack.c.l.b16 %v256
  %v1343 = vunpack.c.h.b16 %v256
  %v1344 = vunpack.c.l.b16 %v257
  %v1345 = vunpack.c.h.b16 %v257
  %v1346 = vunpack.c.l.b16 %v258
  %v1347 = vunpack.c.h.b16 %v258
  %v1348 = vunpack.c.l.b16 %v259
  %v1349 = vunpack.c.h.b16 %v259
  %v1350 = vunpack.c.l.b16 %v260
  %v1351 = vunpack.c.h.b16 %v260
  %v1352 = vunpack.c.l.b16 %v261
  %v1353 = vunpack.c.h.b16 %v261
  %v1354 = vunpack.c.l.b16 %v262
  %v1355 = vunpack.c.h.b16 %v262
  %v1356 = vunpack.c.l.b16 %v263
  %v1357 = vunpack.c.h.b16 %v263
  %v1358 = vunpack.c.l.b16 %v264
  %v1359 = vunpack.c.h.b16 %v264
  %v1360 = vunpack.c.l.b16 %v265
  %v1361 = vunpack.c.h.b16 %v265
  %v1362 = vunpack.c.l.b16 %v266
  %v1363 = vunpack.c.h.b16 %v266
  %v1364 = vunpack.c.l.b16 %v267
  %v1365 = vunpack.c.h.b16 %v267
  %v1366 = vunpack.c.l.b16 %v268
  %v1367 = vunpack.c.h.b16 %v268
  %v1368 = vunpack.c.l.b16 %v269
  %v1369 = vunpack.c.h.b16 %v269
  %v1370 = vunpack.c.l.b16 %v270
  %v1371 = vunpack.c.h.b16 %v270
  %v1372 = vunpack.c.l.b16 %v271
  %v1373 = vunpack.c.h.b16 %v271
  %v1374 = vunpack.c.l.b16 %v272
  %v1375 = vunpack.c.h.b16 %v272
  %v1376 = vunpack.c.l.b16 %v273
  %v1377 = vunpack.c.h.b16 %v273
  %v1378 = vunpack.c.l.b16 %v274
  %v1379 = vunpack.c.h.b16 %v274
  %v1380 = vunpack.c.l.b16 %v275
  %v1381 = vunpack.c.h.b16 %v275
  %v1382 = vunpack.c.l.b16 %v276
  %v1383 = vunpack.c.h.b16 %v276
  %v1384 = vunpack.c.l.b16 %v277
  %v1385 = vunpack.c.h.b16 %v277
  %v1386 = vunpack.c.l.b16 %v278
  %v1387 = vunpack.c.h.b16 %v278
  %v1388 = vunpack.c.l.b16 %v279
  %v1389 = vunpack.c.h.b16 %v279
  %v1390 = vunpack.c.l.b16 %v280
  %v1391 = vunpack.c.h.b16 %v280
  %v1392 = vunpack.c.l.b16 %v281
  %v1393 = vunpack.c.h.b16 %v281
  %v1394 = vunpack.c.l.b16 %v282
  %v1395 = vunpack.c.h.b16 %v282
  %v1396 = vunpack.c.l.b16 %v283
  %v1397 = vunpack.c.h.b16 %v283
  %v1398 = vunpack.c.l.b16 %v284
  %v1399 = vunpack.c.h.b16 %v284
  %v1400 = vunpack.c.l.b16 %v285
  %v1401 = vunpack.c.h.b16 %v285
  %v1402 = vunpack.c.l.b16 %v286
  %v1403 = vunpack.c.h.b16 %v286
  %v1404 = vunpack.c.l.b16 %v287
  %v1405 = vunpack.c.h.b16 %v287
  %v1406 = vunpack.c.l.b16 %v288
  %v1407 = vunpack.c.h.b16 %v288
  %v1408 = vunpack.c.l.b16 %v289
  %v1409 = vunpack.c.h.b16 %v289
  %v1410 = vunpack.c.l.b16 %v290
  %v1411 = vunpack.c.h.b16 %v290
  %v1412 = vunpack.c.l.b16 %v291
  %v1413 = vunpack.c.h.b16 %v291
  %v1414 = vunpack.c.l.b16 %v292
  %v1415 = vunpack.c.h.b16 %v292
  %v1416 = vunpack.c.l.b16 %v293
  %v1417 = vunpack.c.h.b16 %v293
  %v1418 = vunpack.c.l.b16 %v294
  %v1419 = vunpack.c.h.b16 %v294
  %v1420 = vunpack.c.l.b16 %v295
  %v1421 = vunpack.c.h.b16 %v295
  %v1422 = vunpack.c.l.b16 %v296
  %v1423 = vunpack.c.h.b16 %v296
  %v1424 = vunpack.c.l.b16 %v297
  %v1425 = vunpack.c.h.b16 %v297
  %v1426 = vunpack.c.l.b16 %v298
  %v1427 = vunpack.c.h.b16 %v298
  %v1428 = vunpack.c.l.b16 %v299
  %v1429 = vunpack.c.h.b16 %v299
  %v1430 = vunpack.c.l.b16 %v300
  %v1431 = vunpack.c.h.b16 %v300
  %v1432 = vunpack.c.l.b16 %v301
  %v1433 = vunpack.c.h.b16 %v301
  %v1434 = vunpack.c.l.b16 %v302
  %v1435 = vunpack.c.h.b16 %v302
  %v1436 = vunpack.c.l.b16 %v303
  %v1437 = vunpack.c.h.b16 %v303
  %v1438 = vunpack.c.l.b16 %v304
  %v1439 = vunpack.c.h.b16 %v304
  %v1440 = vunpack.c.l.b16 %v305
  %v1441 = vunpack.c.h.b16 %v305
  %v1442 = vunpack.c.l.b16 %v306
  %v1443 = vunpack.c.h.b16 %v306
  %v1444 = vunpack.c.l.b16 %v307
  %v1445 = vunpack.c.h.b16 %v307
  %v1446 = vunpack.c.l.b16 %v308
  %v1447 = vunpack.c.h.b16 %v308
  %v1448 = vunpack.c.l.b16 %v309
  %v1449 = vunpack.c.h.b16 %v309
  %v1450 = vunpack.c.l.b16 %v310
  %v1451 = vunpack.c.h.b16 %v310
  %v1452 = vunpack.c.l.b16 %v311
  %v1453 = vunpack.c.h.b16 %v311
  %v1454 = vunpack.c.l.b16 %v312
  %v1455 = vunpack.c.h.b16 %v312
  %v1456 = vunpack.c.l.b16 %v313
  %v1457 = vunpack.c.h.b16 %v313
  %v1458 = vunpack.c.l.b16 %v314
  %v1459 = vunpack.c.h.b16 %v314
  %v1460 = vunpack.c.l.b16 %v315
  %v1461 = vunpack.c.h.b16 %v315
  %v1462 = vunpack.c.l.b16 %v316
  %v1463 = vunpack.c.h.b16 %v316
  %v1464 = vunpack.c.l.b16 %v317
  %v1465 = vunpack.c.h.b16 %v317
  %v1466 = vunpack.c.l.b16 %v318
  %v1467 = vunpack.c.h.b16 %v318
  %v1468 = vunpack.c.l.b16 %v319
  %v1469 = vunpack.c.h.b16 %v319
  %v1470 = vunpack.c.l.b16 %v320
  %v1471 = vunpack.c.h.b16 %v320
  %v1472 = vunpack.c.l.b16 %v321
  %v1473 = vunpack.c.h.b16 %v321
  %v1474 = vunpack.c.l.b16 %v322
  %v1475 = vunpack.c.h.b16 %v322
  %v1476 = vunpack.c.l.b16 %v323
  %v1477 = vunpack.c.h.b16 %v323
  %v1478 = vunpack.c.l.b16 %v324
  %v1479 = vunpack.c.h.b16 %v324
  %v1480 = vunpack.c.l.b16 %v325
  %v1481 = vunpack.c.h.b16 %v325
  %v1482 = vunpack.c.l.b16 %v326
  %v1483 = vunpack.c.h.b16 %v326
  %v1484 = vunpack.c.l.b16 %v327
  %v1485 = vunpack.c.h.b16 %v327
  %v1486 = vunpack.c.l.b16 %v328
  %v1487 = vunpack.c.h.b16 %v328
  %v1488 = vunpack.c.l.b16 %v329
  %v1489 = vunpack.c.h.b16 %v329
  %v1490 = vunpack.c.l.b16 %v330
  %v1491 = vunpack.c.h.b16 %v330
  %v1492 = vunpack.c.l.b16 %v331
  %v1493 = vunpack.c.h.b16 %v331
  %v1494 = vunpack.c.l.b16 %v332
  %v1495 = vunpack.c.h.b16 %v332
  %v1496 = vunpack.c.l.b16 %v333
  %v1497 = vunpack.c.h.b16 %v333
  %v1498 = vunpack.c.l.b16 %v334
  %v1499 = vunpack.c.h.b16 %v334
  %v1500 = vunpack.c.l.b16 %v335
  %v1501 = vunpack.c.h.b16 %v335
  %v1502 = vunpack.c.l.b16 %v336
  %v1503 = vunpack.c.h.b16 %v336
  %v1504 = vunpack.c.l.b16 %v337
  %v1505 = vunpack.c.h.b16 %v337
  %v1506 = vunpack.c.l.b16 %v338
  %v1507 = vunpack.c.h.b16 %v338
  %v1508 = vunpack.c.l.b16 %v339
  %v1509 = vunpack.c.h.b16 %v339
  %v1510 = vunpack.c.l.b16 %v340
  %v1511 = vunpack.c.h.b16 %v340
  %v1512 = vunpack.c.l.b16 %v341
  %v1513 = vunpack.c.h.b16 %v341
  %v1514 = vunpack.c.l.b16 %v342
  %v1515 = vunpack.c.h.b16 %v342
  %v1516 = vunpack.c.l.b16 %v343
  %v1517 = vunpack.c.h.b16 %v343
  %v1518 = vunpack.c.l.b16 %v344
  %v1519 = vunpack.c.h.b16 %v344
  %v1520 = vunpack.c.l.b16 %v345
  %v1521 = vunpack.c.h.b16 %v345
  %v1522 = vunpack.c.l.b16 %v346
  %v1523 = vunpack.c.h.b16 %v346
  %v1524 = vunpack.c.l.b16 %v347
  %v1525 = vunpack.c.h.b16 %v347
  %v1526 = vunpack.c.l.b16 %v348
  %v1527 = vunpack.c.h.b16 %v348
  %v1528 = vunpack.c.l.b16 %v349
  %v1529 = vunpack.c.h.b16 %v349
  %v1530 = vunpack.c.l.b16 %v350
  %v1531 = vunpack.c.h.b16 %v350
  %v1532 = vunpack.c.l.b16 %v351
  %v1533 = vunpack.c.h.b16 %v351
  %v1534 = vunpack.c.l.b16 %v352
  %v1535 = vunpack.c.h.b16 %v352
  %v1536 = vunpack.c.l.b16 %v353
  %v1537 = vunpack.c.h.b16 %v353
  %v1538 = vunpack.c.l.b16 %v354
  %v1539 = vunpack.c.h.b16 %v354
  %v1540 = vunpack.c.l.b16 %v355
  %v1541 = vunpack.c.h.b16 %v355
  %v1542 = vunpack.c.l.b16 %v356
  %v1543 = vunpack.c.h.b16 %v356
  %v1544 = vunpack.c.l.b16 %v357
  %v1545 = vunpack.c.h.b16 %v357
  %v1546 = vunpack.c.l.b16 %v358
  %v1547 = vunpack.c.h.b16 %v358
  %v1548 = vunpack.c.l.b16 %v359
  %v1549 = vunpack.c.h.b16 %v359
  %v1550 = vunpack.c.l.b16 %v360
  %v1551 = vunpack.c.h.b16 %v360
  %v1552 = vunpack.c.l.b16 %v361
  %v1553 = vunpack.c.h.b16 %v361
  %v1554 = vunpack.c.l.b16 %v362
  %v1555 = vunpack.c.h.b16 %v362
  %v1556 = vunpack.c.l.b16 %v363
  %v1557 = vunpack.c.h.b16 %v363
  %v1558 = vunpack.c.l.b16 %v364
  %v1559 = vunpack.c.h.b16 %v364
  %v1560 = vunpack.c.l.b16 %v365
  %v1561 = vunpack.c.h.b16 %v365
  %v1562 = vunpack.c.l.b16 %v366
  %v1563 = vunpack.c.h.b16 %v366
  %v1564 = vunpack.c.l.b16 %v367
  %v1565 = vunpack.c.h.b16 %v367
  %v1566 = vunpack.c.l.b16 %v368
  %v1567 = vunpack.c.h.b16 %v368
  %v1568 = vunpack.c.l.b16 %v369
  %v1569 = vunpack.c.h.b16 %v369
  %v1570 = vunpack.c.l.b16 %v370
  %v1571 = vunpack.c.h.b16 %v370
  %v1572 = vunpack.c.l.b16 %v371
  %v1573 = vunpack.c.h.b16 %v371
  %v1574 = vunpack.c.l.b16 %v372
  %v1575 = vunpack.c.h.b16 %v372
  %v1576 = vunpack.c.l.b16 %v373
  %v1577 = vunpack.c.h.b16 %v373
  %v1578 = vunpack.c.l.b16 %v374
  %v1579 = vunpack.c.h.b16 %v374
  %v1580 = vunpack.c.l.b16 %v375
  %v1581 = vunpack.c.h.b16 %v375
  %v1582 = vunpack.c.l.b16 %v376
  %v1583 = vunpack.c.h.b16 %v376
  %v1584 = vunpack.c.l.b16 %v377
  %v1585 = vunpack.c.h.b16 %v377
  %v1586 = vunpack.c.l.b16 %v378
  %v1587 = vunpack.c.h.b16 %v378
  %v1588 = vunpack.c.l.b16 %v379
  %v1589 = vunpack.c.h.b16 %v379
  %v1590 = vunpack.c.l.b16 %v380
  %v1591 = vunpack.c.h.b16 %v380
  %v1592 = vunpack.c.l.b16 %v381
  %v1593 = vunpack.c.h.b16 %v381
  %v1594 = vunpack.c.l.b16 %v382
  %v1595 = vunpack.c.h.b16 %v382
  %v1596 = vunpack.c.l.b16 %v383
  %v1597 = vunpack.c.h.b16 %v383
  %v1598 = vunpack.c.l.b16 %v384
  %v1599 = vunpack.c.h.b16 %v384
  %v1600 = vunpack.c.l.b16 %v385
  %v1601 = vunpack.c.h.b16 %v385
  %v1602 = vunpack.c.l.b16 %v386
  %v1603 = vunpack.c.h.b16 %v386
  %v1604 = vunpack.c.l.b16 %v387
  %v1605 = vunpack.c.h.b16 %v387
  %v1606 = vunpack.c.l.b16 %v388
  %v1607 = vunpack.c.h.b16 %v388
  %v1608 = vunpack.c.l.b16 %v389
  %v1609 = vunpack.c.h.b16 %v389
  %v1610 = vunpack.c.l.b16 %v390
  %v1611 = vunpack.c.h.b16 %v390
  %v1612 = vunpack.c.l.b16 %v391
  %v1613 = vunpack.c.h.b16 %v391
  %v1614 = vunpack.c.l.b16 %v392
  %v1615 = vunpack.c.h.b16 %v392
  %v1616 = vunpack.c.l.b16 %v393
  %v1617 = vunpack.c.h.b16 %v393
  %v1618 = vunpack.c.l.b16 %v394
  %v1619 = vunpack.c.h.b16 %v394
  %v1620 = vunpack.c.l.b16 %v395
  %v1621 = vunpack.c.h.b16 %v395
  %v1622 = vunpack.c.l.b16 %v396
  %v1623 = vunpack.c.h.b16 %v396
  %v1624 = vunpack.c.l.b16 %v397
  %v1625 = vunpack.c.h.b16 %v397
  %v1626 = vunpack.c.l.b16 %v398
  %v1627 = vunpack.c.h.b16 %v398
  %v1628 = vunpack.c.l.b16 %v399
  %v1629 = vunpack.c.h.b16 %v399
  %v1630 = vunpack.c.l.b16 %v400
  %v1631 = vunpack.c.h.b16 %v400
  %v1632 = vunpack.c.l.b16 %v401
  %v1633 = vunpack.c.h.b16 %v401
  %v1634 = vunpack.c.l.b16 %v402
  %v1635 = vunpack.c.h.b16 %v402
  %v1636 = vunpack.c.l.b16 %v403
  %v1637 = vunpack.c.h.b16 %v403
  %v1638 = vunpack.c.l.b16 %v404
  %v1639 = vunpack.c.h.b16 %v404
  %v1640 = vunpack.c.l.b16 %v405
  %v1641 = vunpack.c.h.b16 %v405
  %v1642 = vunpack.c.l.b16 %v406
  %v1643 = vunpack.c.h.b16 %v406
  %v1644 = vunpack.c.l.b16 %v407
  %v1645 = vunpack.c.h.b16 %v407
  %v1646 = vunpack.c.l.b16 %v408
  %v1647 = vunpack.c.h.b16 %v408
  %v1648 = vunpack.c.l.b16 %v409
  %v1649 = vunpack.c.h.b16 %v409
  %v1650 = vunpack.c.l.b16 %v410
  %v1651 = vunpack.c.h.b16 %v410
  %v1652 = vunpack.c.l.b16 %v411
  %v1653 = vunpack.c.h.b16 %v411
  %v1654 = vunpack.c.l.b16 %v412
  %v1655 = vunpack.c.h.b16 %v412
  %v1656 = vunpack.c.l.b16 %v413
  %v1657 = vunpack.c.h.b16 %v413
  %v1658 = vunpack.c.l.b16 %v414
  %v1659 = vunpack.c.h.b16 %v414
  %v1660 = vunpack.c.l.b16 %v415
  %v1661 = vunpack.c.h.b16 %v415
  %v1662 = vunpack.c.l.b16 %v416
  %v1663 = vunpack.c.h.b16 %v416
  %v1664 = vunpack.c.l.b16 %v417
  %v1665 = vunpack.c.h.b16 %v417
  %v1666 = vunpack.c.l.b16 %v418
  %v1667 = vunpack.c.h.b16 %v418
  %v1668 = vunpack.c.l.b16 %v419
  %v1669 = vunpack.c.h.b16 %v419
  %v1670 = vunpack.c.l.b16 %v420
  %v1671 = vunpack.c.h.b16 %v420
  %v1672 = vunpack.c.l.b16 %v421
  %v1673 = vunpack.c.h.b16 %v421
  %v1674 = vunpack.c.l.b16 %v422
  %v1675 = vunpack.c.h.b16 %v422
  %v1676 = vunpack.c.l.b16 %v423
  %v1677 = vunpack.c.h.b16 %v423
  %v1678 = vunpack.c.l.b16 %v424
  %v1679 = vunpack.c.h.b16 %v424
  %v1680 = vunpack.c.l.b16 %v425
  %v1681 = vunpack.c.h.b16 %v425
  %v1682 = vunpack.c.l.b16 %v426
  %v1683 = vunpack.c.h.b16 %v426
  %v1684 = vunpack.c.l.b16 %v427
  %v1685 = vunpack.c.h.b16 %v427
  %v1686 = vunpack.c.l.b16 %v428
  %v1687 = vunpack.c.h.b16 %v428
  %v1688 = vunpack.c.l.b16 %v429
  %v1689 = vunpack.c.h.b16 %v429
  %v1690 = vunpack.c.l.b16 %v430
  %v1691 = vunpack.c.h.b16 %v430
  %v1692 = vunpack.c.l.b16 %v431
  %v1693 = vunpack.c.h.b16 %v431
  %v1694 = vunpack.c.l.b16 %v432
  %v1695 = vunpack.c.h.b16 %v432
  %v1696 = vunpack.c.l.b16 %v433
  %v1697 = vunpack.c.h.b16 %v433
  %v1698 = vunpack.c.l.b16 %v434
  %v1699 = vunpack.c.h.b16 %v434
  %v1700 = vunpack.c.l.b16 %v435
  %v1701 = vunpack.c.h.b16 %v435
  %v1702 = vunpack.c.l.b16 %v436
  %v1703 = vunpack.c.h.b16 %v436
  %v1704 = vunpack.c.l.b16 %v437
  %v1705 = vunpack.c.h.b16 %v437
  %v1706 = vunpack.c.l.b16 %v438
  %v1707 = vunpack.c.h.b16 %v438
  %v1708 = vunpack.c.l.b16 %v439
  %v1709 = vunpack.c.h.b16 %v439
  %v1710 = vunpack.c.l.b16 %v440
  %v1711 = vunpack.c.h.b16 %v440
  %v1712 = vpack.c.b16 %v914, %v912
  %v1713 = vpack.c.b16 %v915, %v913
  %v1714 = vpack.c.b16 %v918, %v916
  %v1715 = vpack.c.b16 %v919, %v917
  %v1716 = vpack.c.b16 %v922, %v920
  %v1717 = vpack.c.b16 %v923, %v921
  %v1718 = vpack.c.b16 %v926, %v924
  %v1719 = vpack.c.b16 %v927, %v925
  %v1720 = vpack.c.b16 %v930, %v928
  %v1721 = vpack.c.b16 %v931, %v929
  %v1722 = vpack.c.b16 %v934, %v932
  %v1723 = vpack.c.b16 %v935, %v933
  %v1724 = vpack.c.b16 %v938, %v936
  %v1725 = vpack.c.b16 %v939, %v937
  %v1726 = vpack.c.b16 %v942, %v940
  %v1727 = vpack.c.b16 %v943, %v941
  %v1728 = vpack.c.b16 %v946, %v944
  %v1729 = vpack.c.b16 %v947, %v945
  %v1730 = vpack.c.b16 %v950, %v948
  %v1731 = vpack.c.b16 %v951, %v949
  %v1732 = vpack.c.b16 %v954, %v952
  %v1733 = vpack.c.b16 %v955, %v953
  %v1734 = vpack.c.b16 %v958, %v956
  %v1735 = vpack.c.b16 %v959, %v957
  %v1736 = vpack.c.b16 %v962, %v960
  %v1737 = vpack.c.b16 %v963, %v961
  %v1738 = vpack.c.b16 %v966, %v964
  %v1739 = vpack.c.b16 %v967, %v965
  %v1740 = vpack.c.b16 %v970, %v968
  %v1741 = vpack.c.b16 %v971, %v969
  %v1742 = vpack.c.b16 %v974, %v972
  %v1743 = vpack.c.b16 %v975, %v973
  %v1744 = vpack.c.b16 %v978, %v976
  %v1745 = vpack.c.b16 %v979, %v977
  %v1746 = vpack.c.b16 %v982, %v980
  %v1747 = vpack.c.b16 %v983, %v981
  %v1748 = vpack.c.b16 %v986, %v984
  %v1749 = vpack.c.b16 %v987, %v985
  %v1750 = vpack.c.b16 %v990, %v988
  %v1751 = vpack.c.b16 %v991, %v989
  %v1752 = vpack.c.b16 %v994, %v992
  %v1753 = vpack.c.b16 %v995, %v993
  %v1754 = vpack.c.b16 %v998, %v996
  %v1755 = vpack.c.b16 %v999, %v997
  %v1756 = vpack.c.b16 %v1002, %v1000
  %v1757 = vpack.c.b16 %v1003, %v1001
  %v1758 = vpack.c.b16 %v1006, %v1004
  %v1759 = vpack.c.b16 %v1007, %v1005
  %v1760 = vpack.c.b16 %v1010, %v1008
  %v1761 = vpack.c.b16 %v1011, %v1009
  %v1762 = vpack.c.b16 %v1014, %v1012
  %v1763 = vpack.c.b16 %v1015, %v1013
  %v1764 = vpack.c.b16 %v1018, %v1016
  %v1765 = vpack.c.b16 %v1019, %v1017
  %v1766 = vpack.c.b16 %v1022, %v1020
  %v1767 = vpack.c.b16 %v1023, %v1021
  %v1768 = vpack.c.b16 %v1026, %v1024
  %v1769 = vpack.c.b16 %v1027, %v1025
  %v1770 = vpack.c.b16 %v1030, %v1028
  %v1771 = vpack.c.b16 %v1031, %v1029
  %v1772 = vpack.c.b16 %v1034, %v1032
  %v1773 = vpack.c.b16 %v1035, %v1033
  %v1774 = vpack.c.b16 %v1038, %v1036
  %v1775 = vpack.c.b16 %v1039, %v1037
  %v1776 = vpack.c.b16 %v1042, %v1040
  %v1777 = vpack.c.b16 %v1043, %v1041
  %v1778 = vpack.c.b16 %v1046, %v1044
  %v1779 = vpack.c.b16 %v1047, %v1045
  %v1780 = vpack.c.b16 %v1050, %v1048
  %v1781 = vpack.c.b16 %v1051, %v1049
  %v1782 = vpack.c.b16 %v1054, %v1052
  %v1783 = vpack.c.b16 %v1055, %v1053
  %v1784 = vpack.c.b16 %v1058, %v1056
  %v1785 = vpack.c.b16 %v1059, %v1057
  %v1786 = vpack.c.b16 %v1062, %v1060
  %v1787 = vpack.c.b16 %v1063, %v1061
  %v1788 = vpack.c.b16 %v1066, %v1064
  %v1789 = vpack.c.b16 %v1067, %v1065
  %v1790 = vpack.c.b16 %v1070, %v1068
  %v1791 = vpack.c.b16 %v1071, %v1069
  %v1792 = vpack.c.b16 %v1074, %v1072
  %v1793 = vpack.c.b16 %v1075, %v1073
  %v1794 = vpack.c.b16 %v1078, %v1076
  %v1795 = vpack.c.b16 %v1079, %v1077
  %v1796 = vpack.c.b16 %v1082, %v1080
  %v1797 = vpack.c.b16 %v1083, %v1081
  %v1798 = vpack.c.b16 %v1086, %v1084
  %v1799 = vpack.c.b16 %v1087, %v1085
  %v1800 = vpack.c.b16 %v1090, %v1088
  %v1801 = vpack.c.b16 %v1091, %v1089
  %v1802 = vpack.c.b16 %v1094, %v1092
  %v1803 = vpack.c.b16 %v1095, %v1093
  %v1804 = vpack.c.b16 %v1098, %v1096
  %v1805 = vpack.c.b16 %v1099, %v1097
  %v1806 = vpack.c.b16 %v1102, %v1100
  %v1807 = vpack.c.b16 %v1103, %v1101
  %v1808 = vpack.c.b16 %v1106, %v1104
  %v1809 = vpack.c.b16 %v1107, %v1105
  %v1810 = vpack.c.b16 %v1110, %v1108
  %v1811 = vpack.c.b16 %v1111, %v1109
  %v1812 = vpack.c.b16 %v1114, %v1112
  %v1813 = vpack.c.b16 %v1115, %v1113
  %v1814 = vpack.c.b16 %v1118, %v1116
  %v1815 = vpack.c.b16 %v1119, %v1117
  %v1816 = vpack.c.b16 %v1122, %v1120
  %v1817 = vpack.c.b16 %v1123, %v1121
  %v1818 = vpack.c.b16 %v1126, %v1124
  %v1819 = vpack.c.b16 %v1127, %v1125
  %v1820 = vpack.c.b16 %v1130, %v1128
  %v1821 = vpack.c.b16 %v1131, %v1129
  %v1822 = vpack.c.b16 %v1134, %v1132
  %v1823 = vpack.c.b16 %v1135, %v1133
  %v1824 = vpack.c.b16 %v1138, %v1136
  %v1825 = vpack.c.b16 %v1139, %v1137
  %v1826 = vpack.c.b16 %v1142, %v1140
  %v1827 = vpack.c.b16 %v1143, %v1141
  %v1828 = vpack.c.b16 %v1146, %v1144
  %v1829 = vpack.c.b16 %v1147, %v1145
  %v1830 = vpack.c.b16 %v1150, %v1148
  %v1831 = vpack.c.b16 %v1151, %v1149
  %v1832 = vpack.c.b16 %v1154, %v1152
  %v1833 = vpack.c.b16 %v1155, %v1153
  %v1834 = vpack.c.b16 %v1158, %v1156
  %v1835 = vpack.c.b16 %v1159, %v1157
  %v1836 = vpack.c.b16 %v1162, %v1160
  %v1837 = vpack.c.b16 %v1163, %v1161
  %v1838 = vpack.c.b16 %v1166, %v1164
  %v1839 = vpack.c.b16 %v1167, %v1165
  %v1840 = vpack.c.b16 %v1170, %v1168
  %v1841 = vpack.c.b16 %v1171, %v1169
  %v1842 = vpack.c.b16 %v1174, %v1172
  %v1843 = vpack.c.b16 %v1175, %v1173
  %v1844 = vpack.c.b16 %v1178, %v1176
  %v1845 = vpack.c.b16 %v1179, %v1177
  %v1846 = vpack.c.b16 %v1182, %v1180
  %v1847 = vpack.c.b16 %v1183, %v1181
  %v1848 = vpack.c.b16 %v1186, %v1184
  %v1849 = vpack.c.b16 %v1187, %v1185
  %v1850 = vpack.c.b16 %v1190, %v1188
  %v1851 = vpack.c.b16 %v1191, %v1189
  %v1852 = vpack.c.b16 %v1194, %v1192
  %v1853 = vpack.c.b16 %v1195, %v1193
  %v1854 = vpack.c.b16 %v1198, %v1196
  %v1855 = vpack.c.b16 %v1199, %v1197
  %v1856 = vpack.c.b16 %v1202, %v1200
  %v1857 = vpack.c.b16 %v1203, %v1201
  %v1858 = vpack.c.b16 %v1206, %v1204
  %v1859 = vpack.c.b16 %v1207, %v1205
  %v1860 = vpack.c.b16 %v1210, %v1208
  %v1861 = vpack.c.b16 %v1211, %v1209
  %v1862 = vpack.c.b16 %v1214, %v1212
  %v1863 = vpack.c.b16 %v1215, %v1213
  %v1864 = vpack.c.b16 %v1218, %v1216
  %v1865 = vpack.c.b16 %v1219, %v1217
  %v1866 = vpack.c.b16 %v1222, %v1220
  %v1867 = vpack.c.b16 %v1223, %v1221
  %v1868 = vpack.c.b16 %v1226, %v1224
  %v1869 = vpack.c.b16 %v1227, %v1225
  %v1870 = vpack.c.b16 %v1230, %v1228
  %v1871 = vpack.c.b16 %v1231, %v1229
  %v1872 = vpack.c.b16 %v1234, %v1232
  %v1873 = vpack.c.b16 %v1235, %v1233
  %v1874 = vpack.c.b16 %v1238, %v1236
  %v1875 = vpack.c.b16 %v1239, %v1237
  %v1876 = vpack.c.b16 %v1242, %v1240
  %v1877 = vpack.c.b16 %v1243, %v1241
  %v1878 = vpack.c.b16 %v1246, %v1244
  %v1879 = vpack.c.b16 %v1247, %v1245
  %v1880 = vpack.c.b16 %v1250, %v1248
  %v1881 = vpack.c.b16 %v1251, %v1249
  %v1882 = vpack.c.b16 %v1254, %v1252
  %v1883 = vpack.c.b16 %v1255, %v1253
  %v1884 = vpack.c.b16 %v1258, %v1256
  %v1885 = vpack.c.b16 %v1259, %v1257
  %v1886 = vpack.c.b16 %v1262, %v1260
  %v1887 = vpack.c.b16 %v1263, %v1261
  %v1888 = vpack.c.b16 %v1266, %v1264
  %v1889 = vpack.c.b16 %v1267, %v1265
  %v1890 = vpack.c.b16 %v1270, %v1268
  %v1891 = vpack.c.b16 %v1271, %v1269
  %v1892 = vpack.c.b16 %v1274, %v1272
  %v1893 = vpack.c.b16 %v1275, %v1273
  %v1894 = vpack.c.b16 %v1278, %v1276
  %v1895 = vpack.c.b16 %v1279, %v1277
  %v1896 = vpack.c.b16 %v1282, %v1280
  %v1897 = vpack.c.b16 %v1283, %v1281
  %v1898 = vpack.c.b16 %v1286, %v1284
  %v1899 = vpack.c.b16 %v1287, %v1285
  %v1900 = vpack.c.b16 %v1290, %v1288
  %v1901 = vpack.c.b16 %v1291, %v1289
  %v1902 = vpack.c.b16 %v1294, %v1292
  %v1903 = vpack.c.b16 %v1295, %v1293
  %v1904 = vpack.c.b16 %v1298, %v1296
  %v1905 = vpack.c.b16 %v1299, %v1297
  %v1906 = vpack.c.b16 %v1302, %v1300
  %v1907 = vpack.c.b16 %v1303, %v1301
  %v1908 = vpack.c.b16 %v1306, %v1304
  %v1909 = vpack.c.b16 %v1307, %v1305
  %v1910 = vpack.c.b16 %v1310, %v1308
  %v1911 = vpack.c.b16 %v1311, %v1309
  %v1912 = vpack.c.b16 %v1314, %v1312
  %v1913 = vpack.c.b16 %v1315, %v1313
  %v1914 = vpack.c.b16 %v1318, %v1316
  %v1915 = vpack.c.b16 %v1319, %v1317
  %v1916 = vpack.c.b16 %v1322, %v1320
  %v1917 = vpack.c.b16 %v1323, %v1321
  %v1918 = vpack.c.b16 %v1326, %v1324
  %v1919 = vpack.c.b16 %v1327, %v1325
  %v1920 = vpack.c.b16 %v1330, %v1328
  %v1921 = vpack.c.b16 %v1331, %v1329
  %v1922 = vpack.c.b16 %v1334, %v1332
  %v1923 = vpack.c.b16 %v1335, %v1333
  %v1924 = vpack.c.b16 %v1338, %v1336
  %v1925 = vpack.c.b16 %v1339, %v1337
  %v1926 = vpack.c.b16 %v1342, %v1340
  %v1927 = vpack.c.b16 %v1343, %v1341
  %v1928 = vpack.c.b16 %v1346, %v1344
  %v1929 = vpack.c.b16 %v1347, %v1345
  %v1930 = vpack.c.b16 %v1350, %v1348
  %v1931 = vpack.c.b16 %v1351, %v1349
  %v1932 = vpack.c.b16 %v1354, %v1352
  %v1933 = vpack.c.b16 %v1355, %v1353
  %v1934 = vpack.c.b16 %v1358, %v1356
  %v1935 = vpack.c.b16 %v1359, %v1357
  %v1936 = vpack.c.b16 %v1362, %v1360
  %v1937 = vpack.c.b16 %v1363, %v1361
  %v1938 = vpack.c.b16 %v1366, %v1364
  %v1939 = vpack.c.b16 %v1367, %v1365
  %v1940 = vpack.c.b16 %v1370, %v1368
  %v1941 = vpack.c.b16 %v1371, %v1369
  %v1942 = vpack.c.b16 %v1374, %v1372
  %v1943 = vpack.c.b16 %v1375, %v1373
  %v1944 = vpack.c.b16 %v1378, %v1376
  %v1945 = vpack.c.b16 %v1379, %v1377
  %v1946 = vpack.c.b16 %v1382, %v1380
  %v1947 = vpack.c.b16 %v1383, %v1381
  %v1948 = vpack.c.b16 %v1386, %v1384
  %v1949 = vpack.c.b16 %v1387, %v1385
  %v1950 = vpack.c.b16 %v1390, %v1388
  %v1951 = vpack.c.b16 %v1391, %v1389
  %v1952 = vpack.c.b16 %v1394, %v1392
  %v1953 = vpack.c.b16 %v1395, %v1393
  %v1954 = vpack.c.b16 %v1398, %v1396
  %v1955 = vpack.c.b16 %v1399, %v1397
  %v1956 = vpack.c.b16 %v1402, %v1400
  %v1957 = vpack.c.b16 %v1403, %v1401
  %v1958 = vpack.c.b16 %v1406, %v1404
  %v1959 = vpack.c.b16 %v1407, %v1405
  %v1960 = vpack.c.b16 %v1410, %v1408
  %v1961 = vpack.c.b16 %v1411, %v1409
  %v1962 = vpack.c.b16 %v1414, %v1412
  %v1963 = vpack.c.b16 %v1415, %v1413
  %v1964 = vpack.c.b16 %v1418, %v1416
  %v1965 = vpack.c.b16 %v1419, %v1417
  %v1966 = vpack.c.b16 %v1422, %v1420
  %v1967 = vpack.c.b16 %v1423, %v1421
  %v1968 = vpack.c.b16 %v1426, %v1424
  %v1969 = vpack.c.b16 %v1427, %v1425
  %v1970 = vpack.c.b16 %v1430, %v1428
  %v1971 = vpack.c.b16 %v1431, %v1429
  %v1972 = vpack.c.b16 %v1434, %v1432
  %v1973 = vpack.c.b16 %v1435, %v1433
  %v1974 = vpack.c.b16 %v1438, %v1436
  %v1975 = vpack.c.b16 %v1439, %v1437
  %v1976 = vpack.c.b16 %v1442, %v1440
  %v1977 = vpack.c.b16 %v1443, %v1441
  %v1978 = vpack.c.b16 %v1446, %v1444
  %v1979 = vpack.c.b16 %v1447, %v1445
  %v1980 = vpack.c.b16 %v1450, %v1448
  %v1981 = vpack.c.b16 %v1451, %v1449
  %v1982 = vpack.c.b16 %v1454, %v1452
  %v1983 = vpack.c.b16 %v1455, %v1453
  %v1984 = vpack.c.b16 %v1458, %v1456
  %v1985 = vpack.c.b16 %v1459, %v1457
  %v1986 = vpack.c.b16 %v1462, %v1460
  %v1987 = vpack.c.b16 %v1463, %v1461
  %v1988 = vpack.c.b16 %v1466, %v1464
  %v1989 = vpack.c.b16 %v1467, %v1465
  %v1990 = vpack.c.b16 %v1470, %v1468
  %v1991 = vpack.c.b16 %v1471, %v1469
  %v1992 = vpack.c.b16 %v1474, %v1472
  %v1993 = vpack.c.b16 %v1475, %v1473
  %v1994 = vpack.c.b16 %v1478, %v1476
  %v1995 = vpack.c.b16 %v1479, %v1477
  %v1996 = vpack.c.b16 %v1482, %v1480
  %v1997 = vpack.c.b16 %v1483, %v1481
  %v1998 = vpack.c.b16 %v1486, %v1484
  %v1999 = vpack.c.b16 %v1487, %v1485
  %v2000 = vpack.c.b16 %v1490, %v1488
  %v2001 = vpack.c.b16 %v1491, %v1489
  %v2002 = vpack.c.b16 %v1494, %v1492
  %v2003 = vpack.c.b16 %v1495, %v1493
  %v2004 = vpack.c.b16 %v1498, %v1496
  %v2005 = vpack.c.b16 %v1499, %v1497
  %v2006 = vpack.c.b16 %v1502, %v1500
  %v2007 = vpack.c.b16 %v1503, %v1501
  %v2008 = vpack.c.b16 %v1506, %v1504
  %v2009 = vpack.c.b16 %v1507, %v1505
  %v2010 = vpack.c.b16 %v1510, %v1508
  %v2011 = vpack.c.b16 %v1511, %v1509
  %v2012 = vpack.c.b16 %v1514, %v1512
  %v2013 = vpack.c.b16 %v1515, %v1513
  %v2014 = vpack.c.b16 %v1518, %v1516
  %v2015 = vpack.c.b16 %v1519, %v1517
  %v2016 = vpack.c.b16 %v1522, %v1520
  %v2017 = vpack.c.b16 %v1523, %v1521
  %v2018 = vpack.c.b16 %v1526, %v1524
  %v2019 = vpack.c.b16 %v1527, %v1525
  %v2020 = vpack.c.b16 %v1530, %v1528
  %v2021 = vpack.c.b16 %v1531, %v1529
  %v2022 = vpack.c.b16 %v1534, %v1532
  %v2023 = vpack.c.b16 %v1535, %v1533
  %v2024 = vpack.c.b16 %v1538, %v1536
  %v2025 = vpack.c.b16 %v1539, %v1537
  %v2026 = vpack.c.b16 %v1542, %v1540
  %v2027 = vpack.c.b16 %v1543, %v1541
  %v2028 = vpack.c.b16 %v1546, %v1544
  %v2029 = vpack.c.b16 %v1547, %v1545
  %v2030 = vpack.c.b16 %v1550, %v1548
  %v2031 = vpack.c.b16 %v1551, %v1549
  %v2032 = vpack.c.b16 %v1554, %v1552
  %v2033 = vpack.c.b16 %v1555, %v1553
  %v2034 = vpack.c.b16 %v1558, %v1556
  %v2035 = vpack.c.b16 %v1559, %v1557
  %v2036 = vpack.c.b16 %v1562, %v1560
  %v2037 = vpack.c.b16 %v1563, %v1561
  %v2038 = vpack.c.b16 %v1566, %v1564
  %v2039 = vpack.c.b16 %v1567, %v1565
  %v2040 = vpack.c.b16 %v1570, %v1568
  %v2041 = vpack.c.b16 %v1571, %v1569
  %v2042 = vpack.c.b16 %v1574, %v1572
  %v2043 = vpack.c.b16 %v1575, %v1573
  %v2044 = vpack.c.b16 %v1578, %v1576
  %v2045 = vpack.c.b16 %v1579, %v1577
  %v2046 = vpack.c.b16 %v1582, %v1580
  %v2047 = vpack.c.b16 %v1583, %v1581
  %v2048 = vpack.c.b16 %v1586, %v1584
  %v2049 = vpack.c.b16 %v1587, %v1585
  %v2050 = vpack.c.b16 %v1590, %v1588
  %v2051 = vpack.c.b16 %v1591, %v1589
  %v2052 = vpack.c.b16 %v1594, %v1592
  %v2053 = vpack.c.b16 %v1595, %v1593
  %v2054 = vpack.c.b16 %v1598, %v1596
  %v2055 = vpack.c.b16 %v1599, %v1597
  %v2056 = vpack.c.b16 %v1602, %v1600
  %v2057 = vpack.c.b16 %v1603, %v1601
  %v2058 = vpack.c.b16 %v1606, %v1604
  %v2059 = vpack.c.b16 %v1607, %v1605
  %v2060 = vpack.c.b16 %v1610, %v1608
  %v2061 = vpack.c.b16 %v1611, %v1609
  %v2062 = vpack.c.b16 %v1614, %v1612
  %v2063 = vpack.c.b16 %v1615, %v1613
  %v2064 = vpack.c.b16 %v1618, %v1616
  %v2065 = vpack.c.b16 %v1619, %v1617
  %v2066 = vpack.c.b16 %v1622, %v1620
  %v2067 = vpack.c.b16 %v1623, %v1621
  %v2068 = vpack.c.b16 %v1626, %v1624
  %v2069 = vpack.c.b16 %v1627, %v1625
  %v2070 = vpack.c.b16 %v1630, %v1628
  %v2071 = vpack.c.b16 %v1631, %v1629
  %v2072 = vpack.c.b16 %v1634, %v1632
  %v2073 = vpack.c.b16 %v1635, %v1633
  %v2074 = vpack.c.b16 %v1638, %v1636
  %v2075 = vpack.c.b16 %v1639, %v1637
  %v2076 = vpack.c.b16 %v1642, %v1640
  %v2077 = vpack.c.b16 %v1643, %v1641
  %v2078 = vpack.c.b16 %v1646, %v1644
  %v2079 = vpack.c.b16 %v1647, %v1645
  %v2080 = vpack.c.b16 %v1650, %v1648
  %v2081 = vpack.c.b16 %v1651, %v1649
  %v2082 = vpack.c.b16 %v1654, %v1652
  %v2083 = vpack.c.b16 %v1655, %v1653
  %v2084 = vpack.c.b16 %v1658, %v1656
  %v2085 = vpack.c.b16 %v1659, %v1657
  %v2086 = vpack.c.b16 %v1662, %v1660
  %v2087 = vpack.c.b16 %v1663, %v1661
  %v2088 = vpack.c.b16 %v1666, %v1664
  %v2089 = vpack.c.b16 %v1667, %v1665
  %v2090 = vpack.c.b16 %v1670, %v1668
  %v2091 = vpack.c.b16 %v1671, %v1669
  %v2092 = vpack.c.b16 %v1674, %v1672
  %v2093 = vpack.c.b16 %v1675, %v1673
  %v2094 = vpack.c.b16 %v1678, %v1676
  %v2095 = vpack.c.b16 %v1679, %v1677
  %v2096 = vpack.c.b16 %v1682, %v1680
  %v2097 = vpack.c.b16 %v1683, %v1681
  %v2098 = vpack.c.b16 %v1686, %v1684
  %v2099 = vpack.c.b16 %v1687, %v1685
  %v2100 = vpack.c.b16 %v1690, %v1688
  %v2101 = vpack.c.b16 %v1691, %v1689
  %v2102 = vpack.c.b16 %v1694, %v1692
  %v2103 = vpack.c.b16 %v1695, %v1693
  %v2104 = vpack.c.b16 %v1698, %v1696
  %v2105 = vpack.c.b16 %v1699, %v1697
  %v2106 = vpack.c.b16 %v1702, %v1700
  %v2107 = vpack.c.b16 %v1703, %v1701
  %v2108 = vpack.c.b16 %v1706, %v1704
  %v2109 = vpack.c.b16 %v1707, %v1705
  %v2110 = vpack.c.b16 %v1710, %v1708
  %v2111 = vpack.c.b16 %v1711, %v1709
  %2512 = vmatpush.bf16.msra.mxu0 %v1726
  %2513 = vmatpush.bf16.msra.mxu0 %v1724
  %2514 = vmatpush.bf16.msra.mxu0 %v1722
  %2515 = vmatpush.bf16.msra.mxu0 %v1720
  %2516 = vmatpush.bf16.msra.mxu0 %v1718
  %2517 = vmatpush.bf16.msra.mxu0 %v1716
  %2518 = vmatpush.bf16.msra.mxu0 %v1714
  %2519 = vmatpush.bf16.msra.mxu0 %v1712
  %2520 = vmatmul.bf16.gmra.mxu0 %v452
  %v2521 = vpop.f32.mrf.mxu0
  %v2522 = vadd.f32 %v443, %v2521
  %v2523 = vpop.f32.mrf.mxu0
  %2524 = vdwg.mxu0
  %2525 = vmatpush.bf16.msra.mxu0 %v1742
  %2526 = vmatpush.bf16.msra.mxu0 %v1740
  %2527 = vmatpush.bf16.msra.mxu0 %v1738
  %2528 = vmatpush.bf16.msra.mxu0 %v1736
  %2529 = vmatpush.bf16.msra.mxu0 %v1734
  %2530 = vmatpush.bf16.msra.mxu0 %v1732
  %2531 = vmatpush.bf16.msra.mxu0 %v1730
  %2532 = vmatpush.bf16.msra.mxu0 %v1728
  %2533 = vmatmul.bf16.gmra.mxu0 %v453
  %v2534 = vpop.f32.mrf.mxu0
  %v2535 = vadd.f32 %v2522, %v2534
  %v2536 = vpop.f32.mrf.mxu0
  %2537 = vdwg.mxu0
  %2538 = vmatpush.bf16.msra.mxu0 %v1758
  %2539 = vmatpush.bf16.msra.mxu0 %v1756
  %2540 = vmatpush.bf16.msra.mxu0 %v1754
  %2541 = vmatpush.bf16.msra.mxu0 %v1752
  %2542 = vmatpush.bf16.msra.mxu0 %v1750
  %2543 = vmatpush.bf16.msra.mxu0 %v1748
  %2544 = vmatpush.bf16.msra.mxu0 %v1746
  %2545 = vmatpush.bf16.msra.mxu0 %v1744
  %2546 = vmatmul.bf16.gmra.mxu0 %v454
  %v2547 = vpop.f32.mrf.mxu0
  %v2548 = vadd.f32 %v2535, %v2547
  %v2549 = vpop.f32.mrf.mxu0
  %2550 = vdwg.mxu0
  %2551 = vmatpush.bf16.msra.mxu0 %v1774
  %2552 = vmatpush.bf16.msra.mxu0 %v1772
  %2553 = vmatpush.bf16.msra.mxu0 %v1770
  %2554 = vmatpush.bf16.msra.mxu0 %v1768
  %2555 = vmatpush.bf16.msra.mxu0 %v1766
  %2556 = vmatpush.bf16.msra.mxu0 %v1764
  %2557 = vmatpush.bf16.msra.mxu0 %v1762
  %2558 = vmatpush.bf16.msra.mxu0 %v1760
  %2559 = vmatmul.bf16.gmra.mxu0 %v455
  %v2560 = vpop.f32.mrf.mxu0
  %v2561 = vadd.f32 %v2548, %v2560
  %v2562 = vpop.f32.mrf.mxu0
  %2563 = vdwg.mxu0
  %2564 = vmatpush.bf16.msra.mxu0 %v1790
  %2565 = vmatpush.bf16.msra.mxu0 %v1788
  %2566 = vmatpush.bf16.msra.mxu0 %v1786
  %2567 = vmatpush.bf16.msra.mxu0 %v1784
  %2568 = vmatpush.bf16.msra.mxu0 %v1782
  %2569 = vmatpush.bf16.msra.mxu0 %v1780
  %2570 = vmatpush.bf16.msra.mxu0 %v1778
  %2571 = vmatpush.bf16.msra.mxu0 %v1776
  %2572 = vmatmul.bf16.gmra.mxu0 %v456
  %v2573 = vpop.f32.mrf.mxu0
  %v2574 = vadd.f32 %v2561, %v2573
  %v2575 = vpop.f32.mrf.mxu0
  %2576 = vdwg.mxu0
  %2577 = vmatpush.bf16.msra.mxu0 %v1806
  %2578 = vmatpush.bf16.msra.mxu0 %v1804
  %2579 = vmatpush.bf16.msra.mxu0 %v1802
  %2580 = vmatpush.bf16.msra.mxu0 %v1800
  %2581 = vmatpush.bf16.msra.mxu0 %v1798
  %2582 = vmatpush.bf16.msra.mxu0 %v1796
  %2583 = vmatpush.bf16.msra.mxu0 %v1794
  %2584 = vmatpush.bf16.msra.mxu0 %v1792
  %2585 = vmatmul.bf16.gmra.mxu0 %v457
  %v2586 = vpop.f32.mrf.mxu0
  %v2587 = vadd.f32 %v2574, %v2586
  %v2588 = vpop.f32.mrf.mxu0
  %2589 = vdwg.mxu0
  %2590 = vmatpush.bf16.msra.mxu0 %v1822
  %2591 = vmatpush.bf16.msra.mxu0 %v1820
  %2592 = vmatpush.bf16.msra.mxu0 %v1818
  %2593 = vmatpush.bf16.msra.mxu0 %v1816
  %2594 = vmatpush.bf16.msra.mxu0 %v1814
  %2595 = vmatpush.bf16.msra.mxu0 %v1812
  %2596 = vmatpush.bf16.msra.mxu0 %v1810
  %2597 = vmatpush.bf16.msra.mxu0 %v1808
  %2598 = vmatmul.bf16.gmra.mxu0 %v458
  %v2599 = vpop.f32.mrf.mxu0
  %v2600 = vadd.f32 %v2587, %v2599
  %v2601 = vpop.f32.mrf.mxu0
  %2602 = vdwg.mxu0
  %2603 = vmatpush.bf16.msra.mxu0 %v1838
  %2604 = vmatpush.bf16.msra.mxu0 %v1836
  %2605 = vmatpush.bf16.msra.mxu0 %v1834
  %2606 = vmatpush.bf16.msra.mxu0 %v1832
  %2607 = vmatpush.bf16.msra.mxu0 %v1830
  %2608 = vmatpush.bf16.msra.mxu0 %v1828
  %2609 = vmatpush.bf16.msra.mxu0 %v1826
  %2610 = vmatpush.bf16.msra.mxu0 %v1824
  %2611 = vmatmul.bf16.gmra.mxu0 %v459
  %v2612 = vpop.f32.mrf.mxu0
  %v2613 = vadd.f32 %v2600, %v2612
  %v2614 = vpop.f32.mrf.mxu0
  %2615 = vdwg.mxu0
  %2616 = vmatpush.bf16.msra.mxu0 %v1854
  %2617 = vmatpush.bf16.msra.mxu0 %v1852
  %2618 = vmatpush.bf16.msra.mxu0 %v1850
  %2619 = vmatpush.bf16.msra.mxu0 %v1848
  %2620 = vmatpush.bf16.msra.mxu0 %v1846
  %2621 = vmatpush.bf16.msra.mxu0 %v1844
  %2622 = vmatpush.bf16.msra.mxu0 %v1842
  %2623 = vmatpush.bf16.msra.mxu0 %v1840
  %2624 = vmatmul.bf16.gmra.mxu0 %v464
  %v2625 = vpop.f32.mrf.mxu0
  %v2626 = vadd.f32 %v2613, %v2625
  %v2627 = vpop.f32.mrf.mxu0
  %2628 = vdwg.mxu0
  %2629 = vmatpush.bf16.msra.mxu0 %v1870
  %2630 = vmatpush.bf16.msra.mxu0 %v1868
  %2631 = vmatpush.bf16.msra.mxu0 %v1866
  %2632 = vmatpush.bf16.msra.mxu0 %v1864
  %2633 = vmatpush.bf16.msra.mxu0 %v1862
  %2634 = vmatpush.bf16.msra.mxu0 %v1860
  %2635 = vmatpush.bf16.msra.mxu0 %v1858
  %2636 = vmatpush.bf16.msra.mxu0 %v1856
  %2637 = vmatmul.bf16.gmra.mxu0 %v465
  %v2638 = vpop.f32.mrf.mxu0
  %v2639 = vadd.f32 %v2626, %v2638
  %v2640 = vpop.f32.mrf.mxu0
  %2641 = vdwg.mxu0
  %2642 = vmatpush.bf16.msra.mxu0 %v1886
  %2643 = vmatpush.bf16.msra.mxu0 %v1884
  %2644 = vmatpush.bf16.msra.mxu0 %v1882
  %2645 = vmatpush.bf16.msra.mxu0 %v1880
  %2646 = vmatpush.bf16.msra.mxu0 %v1878
  %2647 = vmatpush.bf16.msra.mxu0 %v1876
  %2648 = vmatpush.bf16.msra.mxu0 %v1874
  %2649 = vmatpush.bf16.msra.mxu0 %v1872
  %2650 = vmatmul.bf16.gmra.mxu0 %v466
  %v2651 = vpop.f32.mrf.mxu0
  %v2652 = vadd.f32 %v2639, %v2651
  %v2653 = vpop.f32.mrf.mxu0
  %2654 = vdwg.mxu0
  %2655 = vmatpush.bf16.msra.mxu0 %v1902
  %2656 = vmatpush.bf16.msra.mxu0 %v1900
  %2657 = vmatpush.bf16.msra.mxu0 %v1898
  %2658 = vmatpush.bf16.msra.mxu0 %v1896
  %2659 = vmatpush.bf16.msra.mxu0 %v1894
  %2660 = vmatpush.bf16.msra.mxu0 %v1892
  %2661 = vmatpush.bf16.msra.mxu0 %v1890
  %2662 = vmatpush.bf16.msra.mxu0 %v1888
  %2663 = vmatmul.bf16.gmra.mxu0 %v467
  %v2664 = vpop.f32.mrf.mxu0
  %v2665 = vadd.f32 %v2652, %v2664
  %v2666 = vpop.f32.mrf.mxu0
  %2667 = vdwg.mxu0
  %2668 = vmatpush.bf16.msra.mxu0 %v1918
  %2669 = vmatpush.bf16.msra.mxu0 %v1916
  %2670 = vmatpush.bf16.msra.mxu0 %v1914
  %2671 = vmatpush.bf16.msra.mxu0 %v1912
  %2672 = vmatpush.bf16.msra.mxu0 %v1910
  %2673 = vmatpush.bf16.msra.mxu0 %v1908
  %2674 = vmatpush.bf16.msra.mxu0 %v1906
  %2675 = vmatpush.bf16.msra.mxu0 %v1904
  %2676 = vmatmul.bf16.gmra.mxu0 %v468
  %v2677 = vpop.f32.mrf.mxu0
  %v2678 = vadd.f32 %v2665, %v2677
  %v2679 = vpop.f32.mrf.mxu0
  %2680 = vdwg.mxu0
  %2681 = vmatpush.bf16.msra.mxu0 %v1934
  %2682 = vmatpush.bf16.msra.mxu0 %v1932
  %2683 = vmatpush.bf16.msra.mxu0 %v1930
  %2684 = vmatpush.bf16.msra.mxu0 %v1928
  %2685 = vmatpush.bf16.msra.mxu0 %v1926
  %2686 = vmatpush.bf16.msra.mxu0 %v1924
  %2687 = vmatpush.bf16.msra.mxu0 %v1922
  %2688 = vmatpush.bf16.msra.mxu0 %v1920
  %2689 = vmatmul.bf16.gmra.mxu0 %v469
  %v2690 = vpop.f32.mrf.mxu0
  %v2691 = vadd.f32 %v2678, %v2690
  %v2692 = vpop.f32.mrf.mxu0
  %2693 = vdwg.mxu0
  %2694 = vmatpush.bf16.msra.mxu0 %v1950
  %2695 = vmatpush.bf16.msra.mxu0 %v1948
  %2696 = vmatpush.bf16.msra.mxu0 %v1946
  %2697 = vmatpush.bf16.msra.mxu0 %v1944
  %2698 = vmatpush.bf16.msra.mxu0 %v1942
  %2699 = vmatpush.bf16.msra.mxu0 %v1940
  %2700 = vmatpush.bf16.msra.mxu0 %v1938
  %2701 = vmatpush.bf16.msra.mxu0 %v1936
  %2702 = vmatmul.bf16.gmra.mxu0 %v470
  %v2703 = vpop.f32.mrf.mxu0
  %v2704 = vadd.f32 %v2691, %v2703
  %v2705 = vpop.f32.mrf.mxu0
  %2706 = vdwg.mxu0
  %2707 = vmatpush.bf16.msra.mxu0 %v1966
  %2708 = vmatpush.bf16.msra.mxu0 %v1964
  %2709 = vmatpush.bf16.msra.mxu0 %v1962
  %2710 = vmatpush.bf16.msra.mxu0 %v1960
  %2711 = vmatpush.bf16.msra.mxu0 %v1958
  %2712 = vmatpush.bf16.msra.mxu0 %v1956
  %2713 = vmatpush.bf16.msra.mxu0 %v1954
  %2714 = vmatpush.bf16.msra.mxu0 %v1952
  %2715 = vmatmul.bf16.gmra.mxu0 %v471
  %v2716 = vpop.f32.mrf.mxu0
  %v2717 = vadd.f32 %v2704, %v2716
  %v2718 = vpop.f32.mrf.mxu0
  %2719 = vdwg.mxu0
  %2720 = vmatpush.bf16.msra.mxu0 %v1982
  %2721 = vmatpush.bf16.msra.mxu0 %v1980
  %2722 = vmatpush.bf16.msra.mxu0 %v1978
  %2723 = vmatpush.bf16.msra.mxu0 %v1976
  %2724 = vmatpush.bf16.msra.mxu0 %v1974
  %2725 = vmatpush.bf16.msra.mxu0 %v1972
  %2726 = vmatpush.bf16.msra.mxu0 %v1970
  %2727 = vmatpush.bf16.msra.mxu0 %v1968
  %2728 = vmatmul.bf16.gmra.mxu0 %v476
  %v2729 = vpop.f32.mrf.mxu0
  %v2730 = vadd.f32 %v2717, %v2729
  %v2731 = vpop.f32.mrf.mxu0
  %2732 = vdwg.mxu0
  %2733 = vmatpush.bf16.msra.mxu0 %v1998
  %2734 = vmatpush.bf16.msra.mxu0 %v1996
  %2735 = vmatpush.bf16.msra.mxu0 %v1994
  %2736 = vmatpush.bf16.msra.mxu0 %v1992
  %2737 = vmatpush.bf16.msra.mxu0 %v1990
  %2738 = vmatpush.bf16.msra.mxu0 %v1988
  %2739 = vmatpush.bf16.msra.mxu0 %v1986
  %2740 = vmatpush.bf16.msra.mxu0 %v1984
  %2741 = vmatmul.bf16.gmra.mxu0 %v477
  %v2742 = vpop.f32.mrf.mxu0
  %v2743 = vadd.f32 %v2730, %v2742
  %v2744 = vpop.f32.mrf.mxu0
  %2745 = vdwg.mxu0
  %2746 = vmatpush.bf16.msra.mxu0 %v2014
  %2747 = vmatpush.bf16.msra.mxu0 %v2012
  %2748 = vmatpush.bf16.msra.mxu0 %v2010
  %2749 = vmatpush.bf16.msra.mxu0 %v2008
  %2750 = vmatpush.bf16.msra.mxu0 %v2006
  %2751 = vmatpush.bf16.msra.mxu0 %v2004
  %2752 = vmatpush.bf16.msra.mxu0 %v2002
  %2753 = vmatpush.bf16.msra.mxu0 %v2000
  %2754 = vmatmul.bf16.gmra.mxu0 %v478
  %v2755 = vpop.f32.mrf.mxu0
  %v2756 = vadd.f32 %v2743, %v2755
  %v2757 = vpop.f32.mrf.mxu0
  %2758 = vdwg.mxu0
  %2759 = vmatpush.bf16.msra.mxu0 %v2030
  %2760 = vmatpush.bf16.msra.mxu0 %v2028
  %2761 = vmatpush.bf16.msra.mxu0 %v2026
  %2762 = vmatpush.bf16.msra.mxu0 %v2024
  %2763 = vmatpush.bf16.msra.mxu0 %v2022
  %2764 = vmatpush.bf16.msra.mxu0 %v2020
  %2765 = vmatpush.bf16.msra.mxu0 %v2018
  %2766 = vmatpush.bf16.msra.mxu0 %v2016
  %2767 = vmatmul.bf16.gmra.mxu0 %v479
  %v2768 = vpop.f32.mrf.mxu0
  %v2769 = vadd.f32 %v2756, %v2768
  %v2770 = vpop.f32.mrf.mxu0
  %2771 = vdwg.mxu0
  %2772 = vmatpush.bf16.msra.mxu0 %v2046
  %2773 = vmatpush.bf16.msra.mxu0 %v2044
  %2774 = vmatpush.bf16.msra.mxu0 %v2042
  %2775 = vmatpush.bf16.msra.mxu0 %v2040
  %2776 = vmatpush.bf16.msra.mxu0 %v2038
  %2777 = vmatpush.bf16.msra.mxu0 %v2036
  %2778 = vmatpush.bf16.msra.mxu0 %v2034
  %2779 = vmatpush.bf16.msra.mxu0 %v2032
  %2780 = vmatmul.bf16.gmra.mxu0 %v480
  %v2781 = vpop.f32.mrf.mxu0
  %v2782 = vadd.f32 %v2769, %v2781
  %v2783 = vpop.f32.mrf.mxu0
  %2784 = vdwg.mxu0
  %2785 = vmatpush.bf16.msra.mxu0 %v2062
  %2786 = vmatpush.bf16.msra.mxu0 %v2060
  %2787 = vmatpush.bf16.msra.mxu0 %v2058
  %2788 = vmatpush.bf16.msra.mxu0 %v2056
  %2789 = vmatpush.bf16.msra.mxu0 %v2054
  %2790 = vmatpush.bf16.msra.mxu0 %v2052
  %2791 = vmatpush.bf16.msra.mxu0 %v2050
  %2792 = vmatpush.bf16.msra.mxu0 %v2048
  %2793 = vmatmul.bf16.gmra.mxu0 %v481
  %v2794 = vpop.f32.mrf.mxu0
  %v2795 = vadd.f32 %v2782, %v2794
  %v2796 = vpop.f32.mrf.mxu0
  %2797 = vdwg.mxu0
  %2798 = vmatpush.bf16.msra.mxu0 %v2078
  %2799 = vmatpush.bf16.msra.mxu0 %v2076
  %2800 = vmatpush.bf16.msra.mxu0 %v2074
  %2801 = vmatpush.bf16.msra.mxu0 %v2072
  %2802 = vmatpush.bf16.msra.mxu0 %v2070
  %2803 = vmatpush.bf16.msra.mxu0 %v2068
  %2804 = vmatpush.bf16.msra.mxu0 %v2066
  %2805 = vmatpush.bf16.msra.mxu0 %v2064
  %2806 = vmatmul.bf16.gmra.mxu0 %v482
  %v2807 = vpop.f32.mrf.mxu0
  %v2808 = vadd.f32 %v2795, %v2807
  %v2809 = vpop.f32.mrf.mxu0
  %2810 = vdwg.mxu0
  %2811 = vmatpush.bf16.msra.mxu0 %v2094
  %2812 = vmatpush.bf16.msra.mxu0 %v2092
  %2813 = vmatpush.bf16.msra.mxu0 %v2090
  %2814 = vmatpush.bf16.msra.mxu0 %v2088
  %2815 = vmatpush.bf16.msra.mxu0 %v2086
  %2816 = vmatpush.bf16.msra.mxu0 %v2084
  %2817 = vmatpush.bf16.msra.mxu0 %v2082
  %2818 = vmatpush.bf16.msra.mxu0 %v2080
  %2819 = vmatmul.bf16.gmra.mxu0 %v483
  %v2820 = vpop.f32.mrf.mxu0
  %v2821 = vadd.f32 %v2808, %v2820
  %v2822 = vpop.f32.mrf.mxu0
  %2823 = vdwg.mxu0
  %2824 = vmatpush.bf16.msra.mxu0 %v2110
  %2825 = vmatpush.bf16.msra.mxu0 %v2108
  %2826 = vmatpush.bf16.msra.mxu0 %v2106
  %2827 = vmatpush.bf16.msra.mxu0 %v2104
  %2828 = vmatpush.bf16.msra.mxu0 %v2102
  %2829 = vmatpush.bf16.msra.mxu0 %v2100
  %2830 = vmatpush.bf16.msra.mxu0 %v2098
  %2831 = vmatpush.bf16.msra.mxu0 %v2096
  %2832 = vmatmul.bf16.gmra.mxu0 %v486
  %v2833 = vpop.f32.mrf.mxu0
  %v2834 = vadd.f32 %v2821, %v2833
  %v2835 = vpop.f32.mrf.mxu0
  %2836 = vdwg.mxu0
  %2837 = vmatpush.bf16.msra.mxu0 %v1727
  %2838 = vmatpush.bf16.msra.mxu0 %v1725
  %2839 = vmatpush.bf16.msra.mxu0 %v1723
  %2840 = vmatpush.bf16.msra.mxu0 %v1721
  %2841 = vmatpush.bf16.msra.mxu0 %v1719
  %2842 = vmatpush.bf16.msra.mxu0 %v1717
  %2843 = vmatpush.bf16.msra.mxu0 %v1715
  %2844 = vmatpush.bf16.msra.mxu0 %v1713
  %2845 = vmatmul.bf16.gmra.mxu0 %v452
  %v2846 = vpop.f32.mrf.mxu0
  %v2847 = vadd.f32 %v444, %v2846
  %v2848 = vpop.f32.mrf.mxu0
  %2849 = vdwg.mxu0
  %2850 = vmatpush.bf16.msra.mxu0 %v1743
  %2851 = vmatpush.bf16.msra.mxu0 %v1741
  %2852 = vmatpush.bf16.msra.mxu0 %v1739
  %2853 = vmatpush.bf16.msra.mxu0 %v1737
  %2854 = vmatpush.bf16.msra.mxu0 %v1735
  %2855 = vmatpush.bf16.msra.mxu0 %v1733
  %2856 = vmatpush.bf16.msra.mxu0 %v1731
  %2857 = vmatpush.bf16.msra.mxu0 %v1729
  %2858 = vmatmul.bf16.gmra.mxu0 %v453
  %v2859 = vpop.f32.mrf.mxu0
  %v2860 = vadd.f32 %v2847, %v2859
  %v2861 = vpop.f32.mrf.mxu0
  %2862 = vdwg.mxu0
  %2863 = vmatpush.bf16.msra.mxu0 %v1759
  %2864 = vmatpush.bf16.msra.mxu0 %v1757
  %2865 = vmatpush.bf16.msra.mxu0 %v1755
  %2866 = vmatpush.bf16.msra.mxu0 %v1753
  %2867 = vmatpush.bf16.msra.mxu0 %v1751
  %2868 = vmatpush.bf16.msra.mxu0 %v1749
  %2869 = vmatpush.bf16.msra.mxu0 %v1747
  %2870 = vmatpush.bf16.msra.mxu0 %v1745
  %2871 = vmatmul.bf16.gmra.mxu0 %v454
  %v2872 = vpop.f32.mrf.mxu0
  %v2873 = vadd.f32 %v2860, %v2872
  %v2874 = vpop.f32.mrf.mxu0
  %2875 = vdwg.mxu0
  %2876 = vmatpush.bf16.msra.mxu0 %v1775
  %2877 = vmatpush.bf16.msra.mxu0 %v1773
  %2878 = vmatpush.bf16.msra.mxu0 %v1771
  %2879 = vmatpush.bf16.msra.mxu0 %v1769
  %2880 = vmatpush.bf16.msra.mxu0 %v1767
  %2881 = vmatpush.bf16.msra.mxu0 %v1765
  %2882 = vmatpush.bf16.msra.mxu0 %v1763
  %2883 = vmatpush.bf16.msra.mxu0 %v1761
  %2884 = vmatmul.bf16.gmra.mxu0 %v455
  %v2885 = vpop.f32.mrf.mxu0
  %v2886 = vadd.f32 %v2873, %v2885
  %v2887 = vpop.f32.mrf.mxu0
  %2888 = vdwg.mxu0
  %2889 = vmatpush.bf16.msra.mxu0 %v1791
  %2890 = vmatpush.bf16.msra.mxu0 %v1789
  %2891 = vmatpush.bf16.msra.mxu0 %v1787
  %2892 = vmatpush.bf16.msra.mxu0 %v1785
  %2893 = vmatpush.bf16.msra.mxu0 %v1783
  %2894 = vmatpush.bf16.msra.mxu0 %v1781
  %2895 = vmatpush.bf16.msra.mxu0 %v1779
  %2896 = vmatpush.bf16.msra.mxu0 %v1777
  %2897 = vmatmul.bf16.gmra.mxu0 %v456
  %v2898 = vpop.f32.mrf.mxu0
  %v2899 = vadd.f32 %v2886, %v2898
  %v2900 = vpop.f32.mrf.mxu0
  %2901 = vdwg.mxu0
  %2902 = vmatpush.bf16.msra.mxu0 %v1807
  %2903 = vmatpush.bf16.msra.mxu0 %v1805
  %2904 = vmatpush.bf16.msra.mxu0 %v1803
  %2905 = vmatpush.bf16.msra.mxu0 %v1801
  %2906 = vmatpush.bf16.msra.mxu0 %v1799
  %2907 = vmatpush.bf16.msra.mxu0 %v1797
  %2908 = vmatpush.bf16.msra.mxu0 %v1795
  %2909 = vmatpush.bf16.msra.mxu0 %v1793
  %2910 = vmatmul.bf16.gmra.mxu0 %v457
  %v2911 = vpop.f32.mrf.mxu0
  %v2912 = vadd.f32 %v2899, %v2911
  %v2913 = vpop.f32.mrf.mxu0
  %2914 = vdwg.mxu0
  %2915 = vmatpush.bf16.msra.mxu0 %v1823
  %2916 = vmatpush.bf16.msra.mxu0 %v1821
  %2917 = vmatpush.bf16.msra.mxu0 %v1819
  %2918 = vmatpush.bf16.msra.mxu0 %v1817
  %2919 = vmatpush.bf16.msra.mxu0 %v1815
  %2920 = vmatpush.bf16.msra.mxu0 %v1813
  %2921 = vmatpush.bf16.msra.mxu0 %v1811
  %2922 = vmatpush.bf16.msra.mxu0 %v1809
  %2923 = vmatmul.bf16.gmra.mxu0 %v458
  %v2924 = vpop.f32.mrf.mxu0
  %v2925 = vadd.f32 %v2912, %v2924
  %v2926 = vpop.f32.mrf.mxu0
  %2927 = vdwg.mxu0
  %2928 = vmatpush.bf16.msra.mxu0 %v1839
  %2929 = vmatpush.bf16.msra.mxu0 %v1837
  %2930 = vmatpush.bf16.msra.mxu0 %v1835
  %2931 = vmatpush.bf16.msra.mxu0 %v1833
  %2932 = vmatpush.bf16.msra.mxu0 %v1831
  %2933 = vmatpush.bf16.msra.mxu0 %v1829
  %2934 = vmatpush.bf16.msra.mxu0 %v1827
  %2935 = vmatpush.bf16.msra.mxu0 %v1825
  %2936 = vmatmul.bf16.gmra.mxu0 %v459
  %v2937 = vpop.f32.mrf.mxu0
  %v2938 = vadd.f32 %v2925, %v2937
  %v2939 = vpop.f32.mrf.mxu0
  %2940 = vdwg.mxu0
  %2941 = vmatpush.bf16.msra.mxu0 %v1855
  %2942 = vmatpush.bf16.msra.mxu0 %v1853
  %2943 = vmatpush.bf16.msra.mxu0 %v1851
  %2944 = vmatpush.bf16.msra.mxu0 %v1849
  %2945 = vmatpush.bf16.msra.mxu0 %v1847
  %2946 = vmatpush.bf16.msra.mxu0 %v1845
  %2947 = vmatpush.bf16.msra.mxu0 %v1843
  %2948 = vmatpush.bf16.msra.mxu0 %v1841
  %2949 = vmatmul.bf16.gmra.mxu0 %v464
  %v2950 = vpop.f32.mrf.mxu0
  %v2951 = vadd.f32 %v2938, %v2950
  %v2952 = vpop.f32.mrf.mxu0
  %2953 = vdwg.mxu0
  %2954 = vmatpush.bf16.msra.mxu0 %v1871
  %2955 = vmatpush.bf16.msra.mxu0 %v1869
  %2956 = vmatpush.bf16.msra.mxu0 %v1867
  %2957 = vmatpush.bf16.msra.mxu0 %v1865
  %2958 = vmatpush.bf16.msra.mxu0 %v1863
  %2959 = vmatpush.bf16.msra.mxu0 %v1861
  %2960 = vmatpush.bf16.msra.mxu0 %v1859
  %2961 = vmatpush.bf16.msra.mxu0 %v1857
  %2962 = vmatmul.bf16.gmra.mxu0 %v465
  %v2963 = vpop.f32.mrf.mxu0
  %v2964 = vadd.f32 %v2951, %v2963
  %v2965 = vpop.f32.mrf.mxu0
  %2966 = vdwg.mxu0
  %2967 = vmatpush.bf16.msra.mxu0 %v1887
  %2968 = vmatpush.bf16.msra.mxu0 %v1885
  %2969 = vmatpush.bf16.msra.mxu0 %v1883
  %2970 = vmatpush.bf16.msra.mxu0 %v1881
  %2971 = vmatpush.bf16.msra.mxu0 %v1879
  %2972 = vmatpush.bf16.msra.mxu0 %v1877
  %2973 = vmatpush.bf16.msra.mxu0 %v1875
  %2974 = vmatpush.bf16.msra.mxu0 %v1873
  %2975 = vmatmul.bf16.gmra.mxu0 %v466
  %v2976 = vpop.f32.mrf.mxu0
  %v2977 = vadd.f32 %v2964, %v2976
  %v2978 = vpop.f32.mrf.mxu0
  %2979 = vdwg.mxu0
  %2980 = vmatpush.bf16.msra.mxu0 %v1903
  %2981 = vmatpush.bf16.msra.mxu0 %v1901
  %2982 = vmatpush.bf16.msra.mxu0 %v1899
  %2983 = vmatpush.bf16.msra.mxu0 %v1897
  %2984 = vmatpush.bf16.msra.mxu0 %v1895
  %2985 = vmatpush.bf16.msra.mxu0 %v1893
  %2986 = vmatpush.bf16.msra.mxu0 %v1891
  %2987 = vmatpush.bf16.msra.mxu0 %v1889
  %2988 = vmatmul.bf16.gmra.mxu0 %v467
  %v2989 = vpop.f32.mrf.mxu0
  %v2990 = vadd.f32 %v2977, %v2989
  %v2991 = vpop.f32.mrf.mxu0
  %2992 = vdwg.mxu0
  %2993 = vmatpush.bf16.msra.mxu0 %v1919
  %2994 = vmatpush.bf16.msra.mxu0 %v1917
  %2995 = vmatpush.bf16.msra.mxu0 %v1915
  %2996 = vmatpush.bf16.msra.mxu0 %v1913
  %2997 = vmatpush.bf16.msra.mxu0 %v1911
  %2998 = vmatpush.bf16.msra.mxu0 %v1909
  %2999 = vmatpush.bf16.msra.mxu0 %v1907
  %3000 = vmatpush.bf16.msra.mxu0 %v1905
  %3001 = vmatmul.bf16.gmra.mxu0 %v468
  %v3002 = vpop.f32.mrf.mxu0
  %v3003 = vadd.f32 %v2990, %v3002
  %v3004 = vpop.f32.mrf.mxu0
  %3005 = vdwg.mxu0
  %3006 = vmatpush.bf16.msra.mxu0 %v1935
  %3007 = vmatpush.bf16.msra.mxu0 %v1933
  %3008 = vmatpush.bf16.msra.mxu0 %v1931
  %3009 = vmatpush.bf16.msra.mxu0 %v1929
  %3010 = vmatpush.bf16.msra.mxu0 %v1927
  %3011 = vmatpush.bf16.msra.mxu0 %v1925
  %3012 = vmatpush.bf16.msra.mxu0 %v1923
  %3013 = vmatpush.bf16.msra.mxu0 %v1921
  %3014 = vmatmul.bf16.gmra.mxu0 %v469
  %v3015 = vpop.f32.mrf.mxu0
  %v3016 = vadd.f32 %v3003, %v3015
  %v3017 = vpop.f32.mrf.mxu0
  %3018 = vdwg.mxu0
  %3019 = vmatpush.bf16.msra.mxu0 %v1951
  %3020 = vmatpush.bf16.msra.mxu0 %v1949
  %3021 = vmatpush.bf16.msra.mxu0 %v1947
  %3022 = vmatpush.bf16.msra.mxu0 %v1945
  %3023 = vmatpush.bf16.msra.mxu0 %v1943
  %3024 = vmatpush.bf16.msra.mxu0 %v1941
  %3025 = vmatpush.bf16.msra.mxu0 %v1939
  %3026 = vmatpush.bf16.msra.mxu0 %v1937
  %3027 = vmatmul.bf16.gmra.mxu0 %v470
  %v3028 = vpop.f32.mrf.mxu0
  %v3029 = vadd.f32 %v3016, %v3028
  %v3030 = vpop.f32.mrf.mxu0
  %3031 = vdwg.mxu0
  %3032 = vmatpush.bf16.msra.mxu0 %v1967
  %3033 = vmatpush.bf16.msra.mxu0 %v1965
  %3034 = vmatpush.bf16.msra.mxu0 %v1963
  %3035 = vmatpush.bf16.msra.mxu0 %v1961
  %3036 = vmatpush.bf16.msra.mxu0 %v1959
  %3037 = vmatpush.bf16.msra.mxu0 %v1957
  %3038 = vmatpush.bf16.msra.mxu0 %v1955
  %3039 = vmatpush.bf16.msra.mxu0 %v1953
  %3040 = vmatmul.bf16.gmra.mxu0 %v471
  %v3041 = vpop.f32.mrf.mxu0
  %v3042 = vadd.f32 %v3029, %v3041
  %v3043 = vpop.f32.mrf.mxu0
  %3044 = vdwg.mxu0
  %3045 = vmatpush.bf16.msra.mxu0 %v1983
  %3046 = vmatpush.bf16.msra.mxu0 %v1981
  %3047 = vmatpush.bf16.msra.mxu0 %v1979
  %3048 = vmatpush.bf16.msra.mxu0 %v1977
  %3049 = vmatpush.bf16.msra.mxu0 %v1975
  %3050 = vmatpush.bf16.msra.mxu0 %v1973
  %3051 = vmatpush.bf16.msra.mxu0 %v1971
  %3052 = vmatpush.bf16.msra.mxu0 %v1969
  %3053 = vmatmul.bf16.gmra.mxu0 %v476
  %v3054 = vpop.f32.mrf.mxu0
  %v3055 = vadd.f32 %v3042, %v3054
  %v3056 = vpop.f32.mrf.mxu0
  %3057 = vdwg.mxu0
  %3058 = vmatpush.bf16.msra.mxu0 %v1999
  %3059 = vmatpush.bf16.msra.mxu0 %v1997
  %3060 = vmatpush.bf16.msra.mxu0 %v1995
  %3061 = vmatpush.bf16.msra.mxu0 %v1993
  %3062 = vmatpush.bf16.msra.mxu0 %v1991
  %3063 = vmatpush.bf16.msra.mxu0 %v1989
  %3064 = vmatpush.bf16.msra.mxu0 %v1987
  %3065 = vmatpush.bf16.msra.mxu0 %v1985
  %3066 = vmatmul.bf16.gmra.mxu0 %v477
  %v3067 = vpop.f32.mrf.mxu0
  %v3068 = vadd.f32 %v3055, %v3067
  %v3069 = vpop.f32.mrf.mxu0
  %3070 = vdwg.mxu0
  %3071 = vmatpush.bf16.msra.mxu0 %v2015
  %3072 = vmatpush.bf16.msra.mxu0 %v2013
  %3073 = vmatpush.bf16.msra.mxu0 %v2011
  %3074 = vmatpush.bf16.msra.mxu0 %v2009
  %3075 = vmatpush.bf16.msra.mxu0 %v2007
  %3076 = vmatpush.bf16.msra.mxu0 %v2005
  %3077 = vmatpush.bf16.msra.mxu0 %v2003
  %3078 = vmatpush.bf16.msra.mxu0 %v2001
  %3079 = vmatmul.bf16.gmra.mxu0 %v478
  %v3080 = vpop.f32.mrf.mxu0
  %v3081 = vadd.f32 %v3068, %v3080
  %v3082 = vpop.f32.mrf.mxu0
  %3083 = vdwg.mxu0
  %3084 = vmatpush.bf16.msra.mxu0 %v2031
  %3085 = vmatpush.bf16.msra.mxu0 %v2029
  %3086 = vmatpush.bf16.msra.mxu0 %v2027
  %3087 = vmatpush.bf16.msra.mxu0 %v2025
  %3088 = vmatpush.bf16.msra.mxu0 %v2023
  %3089 = vmatpush.bf16.msra.mxu0 %v2021
  %3090 = vmatpush.bf16.msra.mxu0 %v2019
  %3091 = vmatpush.bf16.msra.mxu0 %v2017
  %3092 = vmatmul.bf16.gmra.mxu0 %v479
  %v3093 = vpop.f32.mrf.mxu0
  %v3094 = vadd.f32 %v3081, %v3093
  %v3095 = vpop.f32.mrf.mxu0
  %3096 = vdwg.mxu0
  %3097 = vmatpush.bf16.msra.mxu0 %v2047
  %3098 = vmatpush.bf16.msra.mxu0 %v2045
  %3099 = vmatpush.bf16.msra.mxu0 %v2043
  %3100 = vmatpush.bf16.msra.mxu0 %v2041
  %3101 = vmatpush.bf16.msra.mxu0 %v2039
  %3102 = vmatpush.bf16.msra.mxu0 %v2037
  %3103 = vmatpush.bf16.msra.mxu0 %v2035
  %3104 = vmatpush.bf16.msra.mxu0 %v2033
  %3105 = vmatmul.bf16.gmra.mxu0 %v480
  %v3106 = vpop.f32.mrf.mxu0
  %v3107 = vadd.f32 %v3094, %v3106
  %v3108 = vpop.f32.mrf.mxu0
  %3109 = vdwg.mxu0
  %3110 = vmatpush.bf16.msra.mxu0 %v2063
  %3111 = vmatpush.bf16.msra.mxu0 %v2061
  %3112 = vmatpush.bf16.msra.mxu0 %v2059
  %3113 = vmatpush.bf16.msra.mxu0 %v2057
  %3114 = vmatpush.bf16.msra.mxu0 %v2055
  %3115 = vmatpush.bf16.msra.mxu0 %v2053
  %3116 = vmatpush.bf16.msra.mxu0 %v2051
  %3117 = vmatpush.bf16.msra.mxu0 %v2049
  %3118 = vmatmul.bf16.gmra.mxu0 %v481
  %v3119 = vpop.f32.mrf.mxu0
  %v3120 = vadd.f32 %v3107, %v3119
  %v3121 = vpop.f32.mrf.mxu0
  %3122 = vdwg.mxu0
  %3123 = vmatpush.bf16.msra.mxu0 %v2079
  %3124 = vmatpush.bf16.msra.mxu0 %v2077
  %3125 = vmatpush.bf16.msra.mxu0 %v2075
  %3126 = vmatpush.bf16.msra.mxu0 %v2073
  %3127 = vmatpush.bf16.msra.mxu0 %v2071
  %3128 = vmatpush.bf16.msra.mxu0 %v2069
  %3129 = vmatpush.bf16.msra.mxu0 %v2067
  %3130 = vmatpush.bf16.msra.mxu0 %v2065
  %3131 = vmatmul.bf16.gmra.mxu0 %v482
  %v3132 = vpop.f32.mrf.mxu0
  %v3133 = vadd.f32 %v3120, %v3132
  %v3134 = vpop.f32.mrf.mxu0
  %3135 = vdwg.mxu0
  %3136 = vmatpush.bf16.msra.mxu0 %v2095
  %3137 = vmatpush.bf16.msra.mxu0 %v2093
  %3138 = vmatpush.bf16.msra.mxu0 %v2091
  %3139 = vmatpush.bf16.msra.mxu0 %v2089
  %3140 = vmatpush.bf16.msra.mxu0 %v2087
  %3141 = vmatpush.bf16.msra.mxu0 %v2085
  %3142 = vmatpush.bf16.msra.mxu0 %v2083
  %3143 = vmatpush.bf16.msra.mxu0 %v2081
  %3144 = vmatmul.bf16.gmra.mxu0 %v483
  %v3145 = vpop.f32.mrf.mxu0
  %v3146 = vadd.f32 %v3133, %v3145
  %v3147 = vpop.f32.mrf.mxu0
  %3148 = vdwg.mxu0
  %3149 = vmatpush.bf16.msra.mxu0 %v2111
  %3150 = vmatpush.bf16.msra.mxu0 %v2109
  %3151 = vmatpush.bf16.msra.mxu0 %v2107
  %3152 = vmatpush.bf16.msra.mxu0 %v2105
  %3153 = vmatpush.bf16.msra.mxu0 %v2103
  %3154 = vmatpush.bf16.msra.mxu0 %v2101
  %3155 = vmatpush.bf16.msra.mxu0 %v2099
  %3156 = vmatpush.bf16.msra.mxu0 %v2097
  %3157 = vmatmul.bf16.gmra.mxu0 %v486
  %v3158 = vpop.f32.mrf.mxu0
  %v3159 = vadd.f32 %v3146, %v3158
  %v3160 = vpop.f32.mrf.mxu0
  %3161 = vdwg.mxu0
  %v3162 = vpack.c.bf16 %v2834, %v2834
  %v3163 = vpack.c.bf16 %v3159, %v3159
  %v3164 = vld [vmem:[%s3] sm:$0xff]
  %v3165 = vld [vmem:[%s3 + $0x8] sm:$0xff]
  %v3166 = vld [vmem:[%s3 + $0x10] sm:$0xff]
  %v3167 = vld [vmem:[%s3 + $0x18] sm:$0xff]
  %v3168 = vld [vmem:[%s3 + $0x20] sm:$0xff]
  %v3169 = vld [vmem:[%s3 + $0x28] sm:$0xff]
  %v3170 = vld [vmem:[%s3 + $0x30] sm:$0xff]
  %v3171 = vld [vmem:[%s3 + $0x38] sm:$0xff]
  %v3172 = vld [vmem:[%s3 + $0x40] sm:$0xff]
  %v3173 = vld [vmem:[%s3 + $0x48] sm:$0xff]
  %v3174 = vld [vmem:[%s3 + $0x50] sm:$0xff]
  %v3175 = vld [vmem:[%s3 + $0x58] sm:$0xff]
  %v3176 = vld [vmem:[%s3 + $0x60] sm:$0xff]
  %v3177 = vld [vmem:[%s3 + $0x68] sm:$0xff]
  %v3178 = vld [vmem:[%s3 + $0x70] sm:$0xff]
  %v3179 = vld [vmem:[%s3 + $0x78] sm:$0xff]
  %v3180 = vld [vmem:[%s3 + $0x80] sm:$0xff]
  %v3181 = vld [vmem:[%s3 + $0x88] sm:$0xff]
  %v3182 = vld [vmem:[%s3 + $0x90] sm:$0xff]
  %v3183 = vld [vmem:[%s3 + $0x98] sm:$0xff]
  %v3184 = vld [vmem:[%s3 + $0xa0] sm:$0xff]
  %v3185 = vld [vmem:[%s3 + $0xa8] sm:$0xff]
  %v3186 = vld [vmem:[%s3 + $0xb0] sm:$0xff]
  %v3187 = vld [vmem:[%s3 + $0xb8] sm:$0xff]
  %v3188 = vld [vmem:[%s3 + $0xc0] sm:$0xff]
  %v3189 = vld [vmem:[%s3 + $0xc8] sm:$0xff]
  %v3190 = vld [vmem:[%s3 + $0xd0] sm:$0xff]
  %v3191 = vld [vmem:[%s3 + $0xd8] sm:$0xff]
  %v3192 = vld [vmem:[%s3 + $0xe0] sm:$0xff]
  %v3193 = vld [vmem:[%s3 + $0xe8] sm:$0xff]
  %v3194 = vld [vmem:[%s3 + $0xf0] sm:$0xff]
  %v3195 = vld [vmem:[%s3 + $0xf8] sm:$0xff]
  %v3196 = vld [vmem:[%s3 + $0x100] sm:$0xff]
  %v3197 = vld [vmem:[%s3 + $0x108] sm:$0xff]
  %v3198 = vld [vmem:[%s3 + $0x110] sm:$0xff]
  %v3199 = vld [vmem:[%s3 + $0x118] sm:$0xff]
  %v3200 = vld [vmem:[%s3 + $0x120] sm:$0xff]
  %v3201 = vld [vmem:[%s3 + $0x128] sm:$0xff]
  %v3202 = vld [vmem:[%s3 + $0x130] sm:$0xff]
  %v3203 = vld [vmem:[%s3 + $0x138] sm:$0xff]
  %v3204 = vld [vmem:[%s3 + $0x140] sm:$0xff]
  %v3205 = vld [vmem:[%s3 + $0x148] sm:$0xff]
  %v3206 = vld [vmem:[%s3 + $0x150] sm:$0xff]
  %v3207 = vld [vmem:[%s3 + $0x158] sm:$0xff]
  %v3208 = vld [vmem:[%s3 + $0x160] sm:$0xff]
  %v3209 = vld [vmem:[%s3 + $0x168] sm:$0xff]
  %v3210 = vld [vmem:[%s3 + $0x170] sm:$0xff]
  %v3211 = vld [vmem:[%s3 + $0x178] sm:$0xff]
  %v3212 = vld [vmem:[%s3 + $0x180] sm:$0xff]
  %v3213 = vld [vmem:[%s3 + $0x188] sm:$0xff]
  %v3214 = vld [vmem:[%s3 + $0x190] sm:$0xff]
  %v3215 = vld [vmem:[%s3 + $0x198] sm:$0xff]
  %v3216 = vld [vmem:[%s3 + $0x1a0] sm:$0xff]
  %v3217 = vld [vmem:[%s3 + $0x1a8] sm:$0xff]
  %v3218 = vld [vmem:[%s3 + $0x1b0] sm:$0xff]
  %v3219 = vld [vmem:[%s3 + $0x1b8] sm:$0xff]
  %v3220 = vld [vmem:[%s3 + $0x1c0] sm:$0xff]
  %v3221 = vld [vmem:[%s3 + $0x1c8] sm:$0xff]
  %v3222 = vld [vmem:[%s3 + $0x1d0] sm:$0xff]
  %v3223 = vld [vmem:[%s3 + $0x1d8] sm:$0xff]
  %v3224 = vld [vmem:[%s3 + $0x1e0] sm:$0xff]
  %v3225 = vld [vmem:[%s3 + $0x1e8] sm:$0xff]
  %v3226 = vld [vmem:[%s3 + $0x1f0] sm:$0xff]
  %v3227 = vld [vmem:[%s3 + $0x1f8] sm:$0xff]
  %v3228 = vld [vmem:[%s4] sm:$0xf]
  %v3230 = vperm.slane %v3228, 0
  %v3231 = vperm.slane %v3228, 1
  %v3232 = vperm.slane %v3228, 2
  %v3233 = vperm.slane %v3228, 3
  %v3302 = vunpack.c.l.b16 %v3164
  %v3303 = vunpack.c.h.b16 %v3164
  %v3304 = vunpack.c.l.b16 %v3165
  %v3305 = vunpack.c.h.b16 %v3165
  %v3306 = vunpack.c.l.b16 %v3166
  %v3307 = vunpack.c.h.b16 %v3166
  %v3308 = vunpack.c.l.b16 %v3167
  %v3309 = vunpack.c.h.b16 %v3167
  %v3310 = vunpack.c.l.b16 %v3168
  %v3311 = vunpack.c.h.b16 %v3168
  %v3312 = vunpack.c.l.b16 %v3169
  %v3313 = vunpack.c.h.b16 %v3169
  %v3314 = vunpack.c.l.b16 %v3170
  %v3315 = vunpack.c.h.b16 %v3170
  %v3316 = vunpack.c.l.b16 %v3171
  %v3317 = vunpack.c.h.b16 %v3171
  %v3318 = vunpack.c.l.b16 %v3172
  %v3319 = vunpack.c.h.b16 %v3172
  %v3320 = vunpack.c.l.b16 %v3173
  %v3321 = vunpack.c.h.b16 %v3173
  %v3322 = vunpack.c.l.b16 %v3174
  %v3323 = vunpack.c.h.b16 %v3174
  %v3324 = vunpack.c.l.b16 %v3175
  %v3325 = vunpack.c.h.b16 %v3175
  %v3326 = vunpack.c.l.b16 %v3176
  %v3327 = vunpack.c.h.b16 %v3176
  %v3328 = vunpack.c.l.b16 %v3177
  %v3329 = vunpack.c.h.b16 %v3177
  %v3330 = vunpack.c.l.b16 %v3178
  %v3331 = vunpack.c.h.b16 %v3178
  %v3332 = vunpack.c.l.b16 %v3179
  %v3333 = vunpack.c.h.b16 %v3179
  %v3334 = vunpack.c.l.b16 %v3180
  %v3335 = vunpack.c.h.b16 %v3180
  %v3336 = vunpack.c.l.b16 %v3181
  %v3337 = vunpack.c.h.b16 %v3181
  %v3338 = vunpack.c.l.b16 %v3182
  %v3339 = vunpack.c.h.b16 %v3182
  %v3340 = vunpack.c.l.b16 %v3183
  %v3341 = vunpack.c.h.b16 %v3183
  %v3342 = vunpack.c.l.b16 %v3184
  %v3343 = vunpack.c.h.b16 %v3184
  %v3344 = vunpack.c.l.b16 %v3185
  %v3345 = vunpack.c.h.b16 %v3185
  %v3346 = vunpack.c.l.b16 %v3186
  %v3347 = vunpack.c.h.b16 %v3186
  %v3348 = vunpack.c.l.b16 %v3187
  %v3349 = vunpack.c.h.b16 %v3187
  %v3350 = vunpack.c.l.b16 %v3188
  %v3351 = vunpack.c.h.b16 %v3188
  %v3352 = vunpack.c.l.b16 %v3189
  %v3353 = vunpack.c.h.b16 %v3189
  %v3354 = vunpack.c.l.b16 %v3190
  %v3355 = vunpack.c.h.b16 %v3190
  %v3356 = vunpack.c.l.b16 %v3191
  %v3357 = vunpack.c.h.b16 %v3191
  %v3358 = vunpack.c.l.b16 %v3192
  %v3359 = vunpack.c.h.b16 %v3192
  %v3360 = vunpack.c.l.b16 %v3193
  %v3361 = vunpack.c.h.b16 %v3193
  %v3362 = vunpack.c.l.b16 %v3194
  %v3363 = vunpack.c.h.b16 %v3194
  %v3364 = vunpack.c.l.b16 %v3195
  %v3365 = vunpack.c.h.b16 %v3195
  %v3366 = vunpack.c.l.b16 %v3196
  %v3367 = vunpack.c.h.b16 %v3196
  %v3368 = vunpack.c.l.b16 %v3197
  %v3369 = vunpack.c.h.b16 %v3197
  %v3370 = vunpack.c.l.b16 %v3198
  %v3371 = vunpack.c.h.b16 %v3198
  %v3372 = vunpack.c.l.b16 %v3199
  %v3373 = vunpack.c.h.b16 %v3199
  %v3374 = vunpack.c.l.b16 %v3200
  %v3375 = vunpack.c.h.b16 %v3200
  %v3376 = vunpack.c.l.b16 %v3201
  %v3377 = vunpack.c.h.b16 %v3201
  %v3378 = vunpack.c.l.b16 %v3202
  %v3379 = vunpack.c.h.b16 %v3202
  %v3380 = vunpack.c.l.b16 %v3203
  %v3381 = vunpack.c.h.b16 %v3203
  %v3382 = vunpack.c.l.b16 %v3204
  %v3383 = vunpack.c.h.b16 %v3204
  %v3384 = vunpack.c.l.b16 %v3205
  %v3385 = vunpack.c.h.b16 %v3205
  %v3386 = vunpack.c.l.b16 %v3206
  %v3387 = vunpack.c.h.b16 %v3206
  %v3388 = vunpack.c.l.b16 %v3207
  %v3389 = vunpack.c.h.b16 %v3207
  %v3390 = vunpack.c.l.b16 %v3208
  %v3391 = vunpack.c.h.b16 %v3208
  %v3392 = vunpack.c.l.b16 %v3209
  %v3393 = vunpack.c.h.b16 %v3209
  %v3394 = vunpack.c.l.b16 %v3210
  %v3395 = vunpack.c.h.b16 %v3210
  %v3396 = vunpack.c.l.b16 %v3211
  %v3397 = vunpack.c.h.b16 %v3211
  %v3398 = vunpack.c.l.b16 %v3212
  %v3399 = vunpack.c.h.b16 %v3212
  %v3400 = vunpack.c.l.b16 %v3213
  %v3401 = vunpack.c.h.b16 %v3213
  %v3402 = vunpack.c.l.b16 %v3214
  %v3403 = vunpack.c.h.b16 %v3214
  %v3404 = vunpack.c.l.b16 %v3215
  %v3405 = vunpack.c.h.b16 %v3215
  %v3406 = vunpack.c.l.b16 %v3216
  %v3407 = vunpack.c.h.b16 %v3216
  %v3408 = vunpack.c.l.b16 %v3217
  %v3409 = vunpack.c.h.b16 %v3217
  %v3410 = vunpack.c.l.b16 %v3218
  %v3411 = vunpack.c.h.b16 %v3218
  %v3412 = vunpack.c.l.b16 %v3219
  %v3413 = vunpack.c.h.b16 %v3219
  %v3414 = vunpack.c.l.b16 %v3220
  %v3415 = vunpack.c.h.b16 %v3220
  %v3416 = vunpack.c.l.b16 %v3221
  %v3417 = vunpack.c.h.b16 %v3221
  %v3418 = vunpack.c.l.b16 %v3222
  %v3419 = vunpack.c.h.b16 %v3222
  %v3420 = vunpack.c.l.b16 %v3223
  %v3421 = vunpack.c.h.b16 %v3223
  %v3422 = vunpack.c.l.b16 %v3224
  %v3423 = vunpack.c.h.b16 %v3224
  %v3424 = vunpack.c.l.b16 %v3225
  %v3425 = vunpack.c.h.b16 %v3225
  %v3426 = vunpack.c.l.b16 %v3226
  %v3427 = vunpack.c.h.b16 %v3226
  %v3428 = vunpack.c.l.b16 %v3227
  %v3429 = vunpack.c.h.b16 %v3227
  %v3430 = vpack.c.b16 %v3306, %v3302
  %v3431 = vpack.c.b16 %v3307, %v3303
  %v3432 = vpack.c.b16 %v3308, %v3304
  %v3433 = vpack.c.b16 %v3309, %v3305
  %v3434 = vpack.c.b16 %v3314, %v3310
  %v3435 = vpack.c.b16 %v3315, %v3311
  %v3436 = vpack.c.b16 %v3316, %v3312
  %v3437 = vpack.c.b16 %v3317, %v3313
  %v3438 = vpack.c.b16 %v3322, %v3318
  %v3439 = vpack.c.b16 %v3323, %v3319
  %v3440 = vpack.c.b16 %v3324, %v3320
  %v3441 = vpack.c.b16 %v3325, %v3321
  %v3442 = vpack.c.b16 %v3330, %v3326
  %v3443 = vpack.c.b16 %v3331, %v3327
  %v3444 = vpack.c.b16 %v3332, %v3328
  %v3445 = vpack.c.b16 %v3333, %v3329
  %v3446 = vpack.c.b16 %v3338, %v3334
  %v3447 = vpack.c.b16 %v3339, %v3335
  %v3448 = vpack.c.b16 %v3340, %v3336
  %v3449 = vpack.c.b16 %v3341, %v3337
  %v3450 = vpack.c.b16 %v3346, %v3342
  %v3451 = vpack.c.b16 %v3347, %v3343
  %v3452 = vpack.c.b16 %v3348, %v3344
  %v3453 = vpack.c.b16 %v3349, %v3345
  %v3454 = vpack.c.b16 %v3354, %v3350
  %v3455 = vpack.c.b16 %v3355, %v3351
  %v3456 = vpack.c.b16 %v3356, %v3352
  %v3457 = vpack.c.b16 %v3357, %v3353
  %v3458 = vpack.c.b16 %v3362, %v3358
  %v3459 = vpack.c.b16 %v3363, %v3359
  %v3460 = vpack.c.b16 %v3364, %v3360
  %v3461 = vpack.c.b16 %v3365, %v3361
  %v3462 = vpack.c.b16 %v3370, %v3366
  %v3463 = vpack.c.b16 %v3371, %v3367
  %v3464 = vpack.c.b16 %v3372, %v3368
  %v3465 = vpack.c.b16 %v3373, %v3369
  %v3466 = vpack.c.b16 %v3378, %v3374
  %v3467 = vpack.c.b16 %v3379, %v3375
  %v3468 = vpack.c.b16 %v3380, %v3376
  %v3469 = vpack.c.b16 %v3381, %v3377
  %v3470 = vpack.c.b16 %v3386, %v3382
  %v3471 = vpack.c.b16 %v3387, %v3383
  %v3472 = vpack.c.b16 %v3388, %v3384
  %v3473 = vpack.c.b16 %v3389, %v3385
  %v3474 = vpack.c.b16 %v3394, %v3390
  %v3475 = vpack.c.b16 %v3395, %v3391
  %v3476 = vpack.c.b16 %v3396, %v3392
  %v3477 = vpack.c.b16 %v3397, %v3393
  %v3478 = vpack.c.b16 %v3402, %v3398
  %v3479 = vpack.c.b16 %v3403, %v3399
  %v3480 = vpack.c.b16 %v3404, %v3400
  %v3481 = vpack.c.b16 %v3405, %v3401
  %v3482 = vpack.c.b16 %v3410, %v3406
  %v3483 = vpack.c.b16 %v3411, %v3407
  %v3484 = vpack.c.b16 %v3412, %v3408
  %v3485 = vpack.c.b16 %v3413, %v3409
  %v3486 = vpack.c.b16 %v3418, %v3414
  %v3487 = vpack.c.b16 %v3419, %v3415
  %v3488 = vpack.c.b16 %v3420, %v3416
  %v3489 = vpack.c.b16 %v3421, %v3417
  %v3490 = vpack.c.b16 %v3426, %v3422
  %v3491 = vpack.c.b16 %v3427, %v3423
  %v3492 = vpack.c.b16 %v3428, %v3424
  %v3493 = vpack.c.b16 %v3429, %v3425
  %3558 = vmatpush.bf16.msra.mxu0 %v3458
  %3559 = vmatpush.bf16.msra.mxu0 %v3454
  %3560 = vmatpush.bf16.msra.mxu0 %v3450
  %3561 = vmatpush.bf16.msra.mxu0 %v3446
  %3562 = vmatpush.bf16.msra.mxu0 %v3442
  %3563 = vmatpush.bf16.msra.mxu0 %v3438
  %3564 = vmatpush.bf16.msra.mxu0 %v3434
  %3565 = vmatpush.bf16.msra.mxu0 %v3430
  %3566 = vmatmul.bf16.gmra.mxu0 %v3162
  %v3567 = vpop.f32.mrf.mxu0
  %v3568 = vadd.f32 %v3230, %v3567
  %v3569 = vpop.f32.mrf.mxu0
  %3570 = vdwg.mxu0
  %3571 = vmatpush.bf16.msra.mxu0 %v3490
  %3572 = vmatpush.bf16.msra.mxu0 %v3486
  %3573 = vmatpush.bf16.msra.mxu0 %v3482
  %3574 = vmatpush.bf16.msra.mxu0 %v3478
  %3575 = vmatpush.bf16.msra.mxu0 %v3474
  %3576 = vmatpush.bf16.msra.mxu0 %v3470
  %3577 = vmatpush.bf16.msra.mxu0 %v3466
  %3578 = vmatpush.bf16.msra.mxu0 %v3462
  %3579 = vmatmul.bf16.gmra.mxu0 %v3163
  %v3580 = vpop.f32.mrf.mxu0
  %v3581 = vadd.f32 %v3568, %v3580
  %v3582 = vpop.f32.mrf.mxu0
  %3583 = vdwg.mxu0
  %3584 = vmatpush.bf16.msra.mxu0 %v3459
  %3585 = vmatpush.bf16.msra.mxu0 %v3455
  %3586 = vmatpush.bf16.msra.mxu0 %v3451
  %3587 = vmatpush.bf16.msra.mxu0 %v3447
  %3588 = vmatpush.bf16.msra.mxu0 %v3443
  %3589 = vmatpush.bf16.msra.mxu0 %v3439
  %3590 = vmatpush.bf16.msra.mxu0 %v3435
  %3591 = vmatpush.bf16.msra.mxu0 %v3431
  %3592 = vmatmul.bf16.gmra.mxu0 %v3162
  %v3593 = vpop.f32.mrf.mxu0
  %v3594 = vadd.f32 %v3231, %v3593
  %v3595 = vpop.f32.mrf.mxu0
  %3596 = vdwg.mxu0
  %3597 = vmatpush.bf16.msra.mxu0 %v3491
  %3598 = vmatpush.bf16.msra.mxu0 %v3487
  %3599 = vmatpush.bf16.msra.mxu0 %v3483
  %3600 = vmatpush.bf16.msra.mxu0 %v3479
  %3601 = vmatpush.bf16.msra.mxu0 %v3475
  %3602 = vmatpush.bf16.msra.mxu0 %v3471
  %3603 = vmatpush.bf16.msra.mxu0 %v3467
  %3604 = vmatpush.bf16.msra.mxu0 %v3463
  %3605 = vmatmul.bf16.gmra.mxu0 %v3163
  %v3606 = vpop.f32.mrf.mxu0
  %v3607 = vadd.f32 %v3594, %v3606
  %v3608 = vpop.f32.mrf.mxu0
  %3609 = vdwg.mxu0
  %3610 = vmatpush.bf16.msra.mxu0 %v3460
  %3611 = vmatpush.bf16.msra.mxu0 %v3456
  %3612 = vmatpush.bf16.msra.mxu0 %v3452
  %3613 = vmatpush.bf16.msra.mxu0 %v3448
  %3614 = vmatpush.bf16.msra.mxu0 %v3444
  %3615 = vmatpush.bf16.msra.mxu0 %v3440
  %3616 = vmatpush.bf16.msra.mxu0 %v3436
  %3617 = vmatpush.bf16.msra.mxu0 %v3432
  %3618 = vmatmul.bf16.gmra.mxu0 %v3162
  %v3619 = vpop.f32.mrf.mxu0
  %v3620 = vadd.f32 %v3232, %v3619
  %v3621 = vpop.f32.mrf.mxu0
  %3622 = vdwg.mxu0
  %3623 = vmatpush.bf16.msra.mxu0 %v3492
  %3624 = vmatpush.bf16.msra.mxu0 %v3488
  %3625 = vmatpush.bf16.msra.mxu0 %v3484
  %3626 = vmatpush.bf16.msra.mxu0 %v3480
  %3627 = vmatpush.bf16.msra.mxu0 %v3476
  %3628 = vmatpush.bf16.msra.mxu0 %v3472
  %3629 = vmatpush.bf16.msra.mxu0 %v3468
  %3630 = vmatpush.bf16.msra.mxu0 %v3464
  %3631 = vmatmul.bf16.gmra.mxu0 %v3163
  %v3632 = vpop.f32.mrf.mxu0
  %v3633 = vadd.f32 %v3620, %v3632
  %v3634 = vpop.f32.mrf.mxu0
  %3635 = vdwg.mxu0
  %3636 = vmatpush.bf16.msra.mxu0 %v3461
  %3637 = vmatpush.bf16.msra.mxu0 %v3457
  %3638 = vmatpush.bf16.msra.mxu0 %v3453
  %3639 = vmatpush.bf16.msra.mxu0 %v3449
  %3640 = vmatpush.bf16.msra.mxu0 %v3445
  %3641 = vmatpush.bf16.msra.mxu0 %v3441
  %3642 = vmatpush.bf16.msra.mxu0 %v3437
  %3643 = vmatpush.bf16.msra.mxu0 %v3433
  %3644 = vmatmul.bf16.gmra.mxu0 %v3162
  %v3645 = vpop.f32.mrf.mxu0
  %v3646 = vadd.f32 %v3233, %v3645
  %v3647 = vpop.f32.mrf.mxu0
  %3648 = vdwg.mxu0
  %3649 = vmatpush.bf16.msra.mxu0 %v3493
  %3650 = vmatpush.bf16.msra.mxu0 %v3489
  %3651 = vmatpush.bf16.msra.mxu0 %v3485
  %3652 = vmatpush.bf16.msra.mxu0 %v3481
  %3653 = vmatpush.bf16.msra.mxu0 %v3477
  %3654 = vmatpush.bf16.msra.mxu0 %v3473
  %3655 = vmatpush.bf16.msra.mxu0 %v3469
  %3656 = vmatpush.bf16.msra.mxu0 %v3465
  %3657 = vmatmul.bf16.gmra.mxu0 %v3163
  %v3658 = vpop.f32.mrf.mxu0
  %v3659 = vadd.f32 %v3646, %v3658
  %v3660 = vpop.f32.mrf.mxu0
  %3661 = vdwg.mxu0
  %v3662 = vpack.c.bf16 %v3581, %v3581
  %v3663 = vpack.c.bf16 %v3607, %v3607
  %v3664 = vpack.c.bf16 %v3633, %v3633
  %v3665 = vpack.c.bf16 %v3659, %v3659
  %v3666 = vld [vmem:[%s5] sm:$0xff]
  %v3667 = vld [vmem:[%s5 + $0x8] sm:$0xff]
  %v3668 = vld [vmem:[%s5 + $0x10] sm:$0xff]
  %v3669 = vld [vmem:[%s5 + $0x18] sm:$0xff]
  %v3670 = vld [vmem:[%s5 + $0x20] sm:$0xff]
  %v3671 = vld [vmem:[%s5 + $0x28] sm:$0xff]
  %v3672 = vld [vmem:[%s5 + $0x30] sm:$0xff]
  %v3673 = vld [vmem:[%s5 + $0x38] sm:$0xff]
  %v3674 = vld [vmem:[%s5 + $0x40] sm:$0xff]
  %v3675 = vld [vmem:[%s5 + $0x48] sm:$0xff]
  %v3676 = vld [vmem:[%s5 + $0x50] sm:$0xff]
  %v3677 = vld [vmem:[%s5 + $0x58] sm:$0xff]
  %v3678 = vld [vmem:[%s5 + $0x60] sm:$0xff]
  %v3679 = vld [vmem:[%s5 + $0x68] sm:$0xff]
  %v3680 = vld [vmem:[%s5 + $0x70] sm:$0xff]
  %v3681 = vld [vmem:[%s5 + $0x78] sm:$0xff]
  %v3682 = vld [vmem:[%s5 + $0x80] sm:$0xff]
  %v3683 = vld [vmem:[%s5 + $0x88] sm:$0xff]
  %v3684 = vld [vmem:[%s5 + $0x90] sm:$0xff]
  %v3685 = vld [vmem:[%s5 + $0x98] sm:$0xff]
  %v3686 = vld [vmem:[%s5 + $0xa0] sm:$0xff]
  %v3687 = vld [vmem:[%s5 + $0xa8] sm:$0xff]
  %v3688 = vld [vmem:[%s5 + $0xb0] sm:$0xff]
  %v3689 = vld [vmem:[%s5 + $0xb8] sm:$0xff]
  %v3690 = vld [vmem:[%s5 + $0xc0] sm:$0xff]
  %v3691 = vld [vmem:[%s5 + $0xc8] sm:$0xff]
  %v3692 = vld [vmem:[%s5 + $0xd0] sm:$0xff]
  %v3693 = vld [vmem:[%s5 + $0xd8] sm:$0xff]
  %v3694 = vld [vmem:[%s5 + $0xe0] sm:$0xff]
  %v3695 = vld [vmem:[%s5 + $0xe8] sm:$0xff]
  %v3696 = vld [vmem:[%s5 + $0xf0] sm:$0xff]
  %v3697 = vld [vmem:[%s5 + $0xf8] sm:$0xff]
  %v3698 = vld [vmem:[%s5 + $0x100] sm:$0xff]
  %v3699 = vld [vmem:[%s5 + $0x108] sm:$0xff]
  %v3700 = vld [vmem:[%s5 + $0x110] sm:$0xff]
  %v3701 = vld [vmem:[%s5 + $0x118] sm:$0xff]
  %v3702 = vld [vmem:[%s5 + $0x120] sm:$0xff]
  %v3703 = vld [vmem:[%s5 + $0x128] sm:$0xff]
  %v3704 = vld [vmem:[%s5 + $0x130] sm:$0xff]
  %v3705 = vld [vmem:[%s5 + $0x138] sm:$0xff]
  %v3706 = vld [vmem:[%s5 + $0x140] sm:$0xff]
  %v3707 = vld [vmem:[%s5 + $0x148] sm:$0xff]
  %v3708 = vld [vmem:[%s5 + $0x150] sm:$0xff]
  %v3709 = vld [vmem:[%s5 + $0x158] sm:$0xff]
  %v3710 = vld [vmem:[%s5 + $0x160] sm:$0xff]
  %v3711 = vld [vmem:[%s5 + $0x168] sm:$0xff]
  %v3712 = vld [vmem:[%s5 + $0x170] sm:$0xff]
  %v3713 = vld [vmem:[%s5 + $0x178] sm:$0xff]
  %v3714 = vld [vmem:[%s5 + $0x180] sm:$0xff]
  %v3715 = vld [vmem:[%s5 + $0x188] sm:$0xff]
  %v3716 = vld [vmem:[%s5 + $0x190] sm:$0xff]
  %v3717 = vld [vmem:[%s5 + $0x198] sm:$0xff]
  %v3718 = vld [vmem:[%s5 + $0x1a0] sm:$0xff]
  %v3719 = vld [vmem:[%s5 + $0x1a8] sm:$0xff]
  %v3720 = vld [vmem:[%s5 + $0x1b0] sm:$0xff]
  %v3721 = vld [vmem:[%s5 + $0x1b8] sm:$0xff]
  %v3722 = vld [vmem:[%s5 + $0x1c0] sm:$0xff]
  %v3723 = vld [vmem:[%s5 + $0x1c8] sm:$0xff]
  %v3724 = vld [vmem:[%s5 + $0x1d0] sm:$0xff]
  %v3725 = vld [vmem:[%s5 + $0x1d8] sm:$0xff]
  %v3726 = vld [vmem:[%s5 + $0x1e0] sm:$0xff]
  %v3727 = vld [vmem:[%s5 + $0x1e8] sm:$0xff]
  %v3728 = vld [vmem:[%s5 + $0x1f0] sm:$0xff]
  %v3729 = vld [vmem:[%s5 + $0x1f8] sm:$0xff]
  %v3730 = vld [vmem:[%s6] sm:$0x3]
  %v3732 = vperm.slane %v3730, 0
  %v3733 = vperm.slane %v3730, 1
  %v3800 = vunpack.c.l.b16 %v3666
  %v3801 = vunpack.c.h.b16 %v3666
  %v3802 = vunpack.c.l.b16 %v3667
  %v3803 = vunpack.c.h.b16 %v3667
  %v3804 = vunpack.c.l.b16 %v3668
  %v3805 = vunpack.c.h.b16 %v3668
  %v3806 = vunpack.c.l.b16 %v3669
  %v3807 = vunpack.c.h.b16 %v3669
  %v3808 = vunpack.c.l.b16 %v3670
  %v3809 = vunpack.c.h.b16 %v3670
  %v3810 = vunpack.c.l.b16 %v3671
  %v3811 = vunpack.c.h.b16 %v3671
  %v3812 = vunpack.c.l.b16 %v3672
  %v3813 = vunpack.c.h.b16 %v3672
  %v3814 = vunpack.c.l.b16 %v3673
  %v3815 = vunpack.c.h.b16 %v3673
  %v3816 = vunpack.c.l.b16 %v3674
  %v3817 = vunpack.c.h.b16 %v3674
  %v3818 = vunpack.c.l.b16 %v3675
  %v3819 = vunpack.c.h.b16 %v3675
  %v3820 = vunpack.c.l.b16 %v3676
  %v3821 = vunpack.c.h.b16 %v3676
  %v3822 = vunpack.c.l.b16 %v3677
  %v3823 = vunpack.c.h.b16 %v3677
  %v3824 = vunpack.c.l.b16 %v3678
  %v3825 = vunpack.c.h.b16 %v3678
  %v3826 = vunpack.c.l.b16 %v3679
  %v3827 = vunpack.c.h.b16 %v3679
  %v3828 = vunpack.c.l.b16 %v3680
  %v3829 = vunpack.c.h.b16 %v3680
  %v3830 = vunpack.c.l.b16 %v3681
  %v3831 = vunpack.c.h.b16 %v3681
  %v3832 = vunpack.c.l.b16 %v3682
  %v3833 = vunpack.c.h.b16 %v3682
  %v3834 = vunpack.c.l.b16 %v3683
  %v3835 = vunpack.c.h.b16 %v3683
  %v3836 = vunpack.c.l.b16 %v3684
  %v3837 = vunpack.c.h.b16 %v3684
  %v3838 = vunpack.c.l.b16 %v3685
  %v3839 = vunpack.c.h.b16 %v3685
  %v3840 = vunpack.c.l.b16 %v3686
  %v3841 = vunpack.c.h.b16 %v3686
  %v3842 = vunpack.c.l.b16 %v3687
  %v3843 = vunpack.c.h.b16 %v3687
  %v3844 = vunpack.c.l.b16 %v3688
  %v3845 = vunpack.c.h.b16 %v3688
  %v3846 = vunpack.c.l.b16 %v3689
  %v3847 = vunpack.c.h.b16 %v3689
  %v3848 = vunpack.c.l.b16 %v3690
  %v3849 = vunpack.c.h.b16 %v3690
  %v3850 = vunpack.c.l.b16 %v3691
  %v3851 = vunpack.c.h.b16 %v3691
  %v3852 = vunpack.c.l.b16 %v3692
  %v3853 = vunpack.c.h.b16 %v3692
  %v3854 = vunpack.c.l.b16 %v3693
  %v3855 = vunpack.c.h.b16 %v3693
  %v3856 = vunpack.c.l.b16 %v3694
  %v3857 = vunpack.c.h.b16 %v3694
  %v3858 = vunpack.c.l.b16 %v3695
  %v3859 = vunpack.c.h.b16 %v3695
  %v3860 = vunpack.c.l.b16 %v3696
  %v3861 = vunpack.c.h.b16 %v3696
  %v3862 = vunpack.c.l.b16 %v3697
  %v3863 = vunpack.c.h.b16 %v3697
  %v3864 = vunpack.c.l.b16 %v3698
  %v3865 = vunpack.c.h.b16 %v3698
  %v3866 = vunpack.c.l.b16 %v3699
  %v3867 = vunpack.c.h.b16 %v3699
  %v3868 = vunpack.c.l.b16 %v3700
  %v3869 = vunpack.c.h.b16 %v3700
  %v3870 = vunpack.c.l.b16 %v3701
  %v3871 = vunpack.c.h.b16 %v3701
  %v3872 = vunpack.c.l.b16 %v3702
  %v3873 = vunpack.c.h.b16 %v3702
  %v3874 = vunpack.c.l.b16 %v3703
  %v3875 = vunpack.c.h.b16 %v3703
  %v3876 = vunpack.c.l.b16 %v3704
  %v3877 = vunpack.c.h.b16 %v3704
  %v3878 = vunpack.c.l.b16 %v3705
  %v3879 = vunpack.c.h.b16 %v3705
  %v3880 = vunpack.c.l.b16 %v3706
  %v3881 = vunpack.c.h.b16 %v3706
  %v3882 = vunpack.c.l.b16 %v3707
  %v3883 = vunpack.c.h.b16 %v3707
  %v3884 = vunpack.c.l.b16 %v3708
  %v3885 = vunpack.c.h.b16 %v3708
  %v3886 = vunpack.c.l.b16 %v3709
  %v3887 = vunpack.c.h.b16 %v3709
  %v3888 = vunpack.c.l.b16 %v3710
  %v3889 = vunpack.c.h.b16 %v3710
  %v3890 = vunpack.c.l.b16 %v3711
  %v3891 = vunpack.c.h.b16 %v3711
  %v3892 = vunpack.c.l.b16 %v3712
  %v3893 = vunpack.c.h.b16 %v3712
  %v3894 = vunpack.c.l.b16 %v3713
  %v3895 = vunpack.c.h.b16 %v3713
  %v3896 = vunpack.c.l.b16 %v3714
  %v3897 = vunpack.c.h.b16 %v3714
  %v3898 = vunpack.c.l.b16 %v3715
  %v3899 = vunpack.c.h.b16 %v3715
  %v3900 = vunpack.c.l.b16 %v3716
  %v3901 = vunpack.c.h.b16 %v3716
  %v3902 = vunpack.c.l.b16 %v3717
  %v3903 = vunpack.c.h.b16 %v3717
  %v3904 = vunpack.c.l.b16 %v3718
  %v3905 = vunpack.c.h.b16 %v3718
  %v3906 = vunpack.c.l.b16 %v3719
  %v3907 = vunpack.c.h.b16 %v3719
  %v3908 = vunpack.c.l.b16 %v3720
  %v3909 = vunpack.c.h.b16 %v3720
  %v3910 = vunpack.c.l.b16 %v3721
  %v3911 = vunpack.c.h.b16 %v3721
  %v3912 = vunpack.c.l.b16 %v3722
  %v3913 = vunpack.c.h.b16 %v3722
  %v3914 = vunpack.c.l.b16 %v3723
  %v3915 = vunpack.c.h.b16 %v3723
  %v3916 = vunpack.c.l.b16 %v3724
  %v3917 = vunpack.c.h.b16 %v3724
  %v3918 = vunpack.c.l.b16 %v3725
  %v3919 = vunpack.c.h.b16 %v3725
  %v3920 = vunpack.c.l.b16 %v3726
  %v3921 = vunpack.c.h.b16 %v3726
  %v3922 = vunpack.c.l.b16 %v3727
  %v3923 = vunpack.c.h.b16 %v3727
  %v3924 = vunpack.c.l.b16 %v3728
  %v3925 = vunpack.c.h.b16 %v3728
  %v3926 = vunpack.c.l.b16 %v3729
  %v3927 = vunpack.c.h.b16 %v3729
  %v3928 = vpack.c.b16 %v3802, %v3800
  %v3929 = vpack.c.b16 %v3803, %v3801
  %v3930 = vpack.c.b16 %v3806, %v3804
  %v3931 = vpack.c.b16 %v3807, %v3805
  %v3932 = vpack.c.b16 %v3810, %v3808
  %v3933 = vpack.c.b16 %v3811, %v3809
  %v3934 = vpack.c.b16 %v3814, %v3812
  %v3935 = vpack.c.b16 %v3815, %v3813
  %v3936 = vpack.c.b16 %v3818, %v3816
  %v3937 = vpack.c.b16 %v3819, %v3817
  %v3938 = vpack.c.b16 %v3822, %v3820
  %v3939 = vpack.c.b16 %v3823, %v3821
  %v3940 = vpack.c.b16 %v3826, %v3824
  %v3941 = vpack.c.b16 %v3827, %v3825
  %v3942 = vpack.c.b16 %v3830, %v3828
  %v3943 = vpack.c.b16 %v3831, %v3829
  %v3944 = vpack.c.b16 %v3834, %v3832
  %v3945 = vpack.c.b16 %v3835, %v3833
  %v3946 = vpack.c.b16 %v3838, %v3836
  %v3947 = vpack.c.b16 %v3839, %v3837
  %v3948 = vpack.c.b16 %v3842, %v3840
  %v3949 = vpack.c.b16 %v3843, %v3841
  %v3950 = vpack.c.b16 %v3846, %v3844
  %v3951 = vpack.c.b16 %v3847, %v3845
  %v3952 = vpack.c.b16 %v3850, %v3848
  %v3953 = vpack.c.b16 %v3851, %v3849
  %v3954 = vpack.c.b16 %v3854, %v3852
  %v3955 = vpack.c.b16 %v3855, %v3853
  %v3956 = vpack.c.b16 %v3858, %v3856
  %v3957 = vpack.c.b16 %v3859, %v3857
  %v3958 = vpack.c.b16 %v3862, %v3860
  %v3959 = vpack.c.b16 %v3863, %v3861
  %v3960 = vpack.c.b16 %v3866, %v3864
  %v3961 = vpack.c.b16 %v3867, %v3865
  %v3962 = vpack.c.b16 %v3870, %v3868
  %v3963 = vpack.c.b16 %v3871, %v3869
  %v3964 = vpack.c.b16 %v3874, %v3872
  %v3965 = vpack.c.b16 %v3875, %v3873
  %v3966 = vpack.c.b16 %v3878, %v3876
  %v3967 = vpack.c.b16 %v3879, %v3877
  %v3968 = vpack.c.b16 %v3882, %v3880
  %v3969 = vpack.c.b16 %v3883, %v3881
  %v3970 = vpack.c.b16 %v3886, %v3884
  %v3971 = vpack.c.b16 %v3887, %v3885
  %v3972 = vpack.c.b16 %v3890, %v3888
  %v3973 = vpack.c.b16 %v3891, %v3889
  %v3974 = vpack.c.b16 %v3894, %v3892
  %v3975 = vpack.c.b16 %v3895, %v3893
  %v3976 = vpack.c.b16 %v3898, %v3896
  %v3977 = vpack.c.b16 %v3899, %v3897
  %v3978 = vpack.c.b16 %v3902, %v3900
  %v3979 = vpack.c.b16 %v3903, %v3901
  %v3980 = vpack.c.b16 %v3906, %v3904
  %v3981 = vpack.c.b16 %v3907, %v3905
  %v3982 = vpack.c.b16 %v3910, %v3908
  %v3983 = vpack.c.b16 %v3911, %v3909
  %v3984 = vpack.c.b16 %v3914, %v3912
  %v3985 = vpack.c.b16 %v3915, %v3913
  %v3986 = vpack.c.b16 %v3918, %v3916
  %v3987 = vpack.c.b16 %v3919, %v3917
  %v3988 = vpack.c.b16 %v3922, %v3920
  %v3989 = vpack.c.b16 %v3923, %v3921
  %v3990 = vpack.c.b16 %v3926, %v3924
  %v3991 = vpack.c.b16 %v3927, %v3925
  %4056 = vmatpush.bf16.msra.mxu0 %v3942
  %4057 = vmatpush.bf16.msra.mxu0 %v3940
  %4058 = vmatpush.bf16.msra.mxu0 %v3938
  %4059 = vmatpush.bf16.msra.mxu0 %v3936
  %4060 = vmatpush.bf16.msra.mxu0 %v3934
  %4061 = vmatpush.bf16.msra.mxu0 %v3932
  %4062 = vmatpush.bf16.msra.mxu0 %v3930
  %4063 = vmatpush.bf16.msra.mxu0 %v3928
  %4064 = vmatmul.bf16.gmra.mxu0 %v3662
  %v4065 = vpop.f32.mrf.mxu0
  %v4066 = vadd.f32 %v3732, %v4065
  %v4067 = vpop.f32.mrf.mxu0
  %4068 = vdwg.mxu0
  %4069 = vmatpush.bf16.msra.mxu0 %v3958
  %4070 = vmatpush.bf16.msra.mxu0 %v3956
  %4071 = vmatpush.bf16.msra.mxu0 %v3954
  %4072 = vmatpush.bf16.msra.mxu0 %v3952
  %4073 = vmatpush.bf16.msra.mxu0 %v3950
  %4074 = vmatpush.bf16.msra.mxu0 %v3948
  %4075 = vmatpush.bf16.msra.mxu0 %v3946
  %4076 = vmatpush.bf16.msra.mxu0 %v3944
  %4077 = vmatmul.bf16.gmra.mxu0 %v3663
  %v4078 = vpop.f32.mrf.mxu0
  %v4079 = vadd.f32 %v4066, %v4078
  %v4080 = vpop.f32.mrf.mxu0
  %4081 = vdwg.mxu0
  %4082 = vmatpush.bf16.msra.mxu0 %v3974
  %4083 = vmatpush.bf16.msra.mxu0 %v3972
  %4084 = vmatpush.bf16.msra.mxu0 %v3970
  %4085 = vmatpush.bf16.msra.mxu0 %v3968
  %4086 = vmatpush.bf16.msra.mxu0 %v3966
  %4087 = vmatpush.bf16.msra.mxu0 %v3964
  %4088 = vmatpush.bf16.msra.mxu0 %v3962
  %4089 = vmatpush.bf16.msra.mxu0 %v3960
  %4090 = vmatmul.bf16.gmra.mxu0 %v3664
  %v4091 = vpop.f32.mrf.mxu0
  %v4092 = vadd.f32 %v4079, %v4091
  %v4093 = vpop.f32.mrf.mxu0
  %4094 = vdwg.mxu0
  %4095 = vmatpush.bf16.msra.mxu0 %v3990
  %4096 = vmatpush.bf16.msra.mxu0 %v3988
  %4097 = vmatpush.bf16.msra.mxu0 %v3986
  %4098 = vmatpush.bf16.msra.mxu0 %v3984
  %4099 = vmatpush.bf16.msra.mxu0 %v3982
  %4100 = vmatpush.bf16.msra.mxu0 %v3980
  %4101 = vmatpush.bf16.msra.mxu0 %v3978
  %4102 = vmatpush.bf16.msra.mxu0 %v3976
  %4103 = vmatmul.bf16.gmra.mxu0 %v3665
  %v4104 = vpop.f32.mrf.mxu0
  %v4105 = vadd.f32 %v4092, %v4104
  %v4106 = vpop.f32.mrf.mxu0
  %4107 = vdwg.mxu0
  %4108 = vmatpush.bf16.msra.mxu0 %v3943
  %4109 = vmatpush.bf16.msra.mxu0 %v3941
  %4110 = vmatpush.bf16.msra.mxu0 %v3939
  %4111 = vmatpush.bf16.msra.mxu0 %v3937
  %4112 = vmatpush.bf16.msra.mxu0 %v3935
  %4113 = vmatpush.bf16.msra.mxu0 %v3933
  %4114 = vmatpush.bf16.msra.mxu0 %v3931
  %4115 = vmatpush.bf16.msra.mxu0 %v3929
  %4116 = vmatmul.bf16.gmra.mxu0 %v3662
  %v4117 = vpop.f32.mrf.mxu0
  %v4118 = vadd.f32 %v3733, %v4117
  %v4119 = vpop.f32.mrf.mxu0
  %4120 = vdwg.mxu0
  %4121 = vmatpush.bf16.msra.mxu0 %v3959
  %4122 = vmatpush.bf16.msra.mxu0 %v3957
  %4123 = vmatpush.bf16.msra.mxu0 %v3955
  %4124 = vmatpush.bf16.msra.mxu0 %v3953
  %4125 = vmatpush.bf16.msra.mxu0 %v3951
  %4126 = vmatpush.bf16.msra.mxu0 %v3949
  %4127 = vmatpush.bf16.msra.mxu0 %v3947
  %4128 = vmatpush.bf16.msra.mxu0 %v3945
  %4129 = vmatmul.bf16.gmra.mxu0 %v3663
  %v4130 = vpop.f32.mrf.mxu0
  %v4131 = vadd.f32 %v4118, %v4130
  %v4132 = vpop.f32.mrf.mxu0
  %4133 = vdwg.mxu0
  %4134 = vmatpush.bf16.msra.mxu0 %v3975
  %4135 = vmatpush.bf16.msra.mxu0 %v3973
  %4136 = vmatpush.bf16.msra.mxu0 %v3971
  %4137 = vmatpush.bf16.msra.mxu0 %v3969
  %4138 = vmatpush.bf16.msra.mxu0 %v3967
  %4139 = vmatpush.bf16.msra.mxu0 %v3965
  %4140 = vmatpush.bf16.msra.mxu0 %v3963
  %4141 = vmatpush.bf16.msra.mxu0 %v3961
  %4142 = vmatmul.bf16.gmra.mxu0 %v3664
  %v4143 = vpop.f32.mrf.mxu0
  %v4144 = vadd.f32 %v4131, %v4143
  %v4145 = vpop.f32.mrf.mxu0
  %4146 = vdwg.mxu0
  %4147 = vmatpush.bf16.msra.mxu0 %v3991
  %4148 = vmatpush.bf16.msra.mxu0 %v3989
  %4149 = vmatpush.bf16.msra.mxu0 %v3987
  %4150 = vmatpush.bf16.msra.mxu0 %v3985
  %4151 = vmatpush.bf16.msra.mxu0 %v3983
  %4152 = vmatpush.bf16.msra.mxu0 %v3981
  %4153 = vmatpush.bf16.msra.mxu0 %v3979
  %4154 = vmatpush.bf16.msra.mxu0 %v3977
  %4155 = vmatmul.bf16.gmra.mxu0 %v3665
  %v4156 = vpop.f32.mrf.mxu0
  %v4157 = vadd.f32 %v4144, %v4156
  %v4158 = vpop.f32.mrf.mxu0
  %4159 = vdwg.mxu0
  %v4160 = vld [vmem:[%s7] sm:$0x3]
  %v4162 = vperm.slane %v4160, 0
  %v4163 = vperm.slane %v4160, 1
  %v4166 = vmul.f32 %v4105, %v4162
  %v4167 = vmul.f32 %v4157, %v4163
  %vm4168 = vcmask 1043456
  %v4169 = vsel %vm4168, %v4166, 0.0
  %v4170 = vsel %vm4168, %v4167, 0.0
  %v4171 = vadd.f32 %v4169, %v4170
  %4172 = vadd.xlane.f32.xlu0 %v4171
  %v4173 = vpop.xlane.xlu0 %4172
  %v4174 = vld [vmem:[#allocation2] sm:$0x1]
  %v4176 = vperm.slane %v4174, 0
  %v4178 = vadd.f32 %v4173, %v4176
  %v4180 = vrot.slane %v4178, 1
  %v4182 = vmax.f32 %v4178, %v4180
  %v4184 = vrot.slane %v4182, 1
  %vm4186 = vcmask 1040384
  %v4187 = vsel %vm4186, %v4182, %v4184
  %vm4188 = vcmask 1024
  %4189 = vst.msk [vmem:[%s9] sm:$0x3] %vm4188, %v4187
  // Predicated region
  $region38: #{kws_net_forward.7} parent=0 // pred_check
    _
  $region39: #{kws_net_forward.7} parent=0 // pred_check_branch
    %4191 = sbr.rel (0) target = $region41
  $region40: #{kws_net_forward.7} parent=0 // pred_region
    _
  $region41: #{kws_net_forward.7} parent=0 // pred_fallthru
    _
  // Predicated region
  $region42: #{kws_net_forward.7} parent=0 // pred_check
    _
  $region43: #{kws_net_forward.7} parent=0 // pred_check_branch
    %4193 = sbr.rel (0) target = $region45
  $region44: #{kws_net_forward.7} parent=0 // pred_region
    _
  $region45: #{kws_net_forward.7} parent=0 // pred_fallthru
    _

</llo_original>
